<compile_context>
chip_gen: v6e
topology: v6e:2x2x1
jax: 0.10.0
libtpu: 0.0.40
codegen_flags: <defaults>
</compile_context>

<pallas_src>
import numpy as np

import jax
import jax.numpy as jnp
from jax.experimental import pallas as pl
from jax.experimental.pallas import tpu as pltpu


# ---------------------------------------------------------------------------
# Kernel
# ---------------------------------------------------------------------------
def _net_kernel(x_ref, band1_ref, band2_ref, band3_ref,
                brow1_ref, brow2_ref, brow3_ref,
                s1_ref, t1_ref, s2_ref, t2_ref, s3_ref, t3_ref,
                w1_ref, b1_ref, w2_ref, b2_ref, w3_ref, b3_ref,
                out_ref,
                act2_ref, act3_ref):
    f32, bf16 = jnp.float32, jnp.bfloat16

    def conv_bias_relu(act_ref, band_ref, brow_ref):
        """Conv3x3(pad=1)+BN(folded)+ReLU on a batch-stacked padded act buffer.

        act_ref : [B*(H+2), Cin*W] f32, per-image blocks [pad, H rows, pad].
        band_ref: [3, Cin*W, Cout*W] bf16 banded weights (horizontal taps +
                  channel contraction folded in; horizontal pad implicit).
        Returns bf16 [B*(H+2)-2, Cout*W]; row b*(H+2)+r is valid for r < H.
        """
        m = act_ref.shape[0] - 2
        acc = jnp.dot(act_ref[0:m, :].astype(bf16), band_ref[0],
                      preferred_element_type=f32)
        for di in (1, 2):
            acc = acc + jnp.dot(act_ref[di:di + m, :].astype(bf16),
                                band_ref[di], preferred_element_type=f32)
        return jnp.maximum(acc + brow_ref[...], 0.0).astype(bf16)

    def max_pool(yb, s_ref, t_ref):
        """2x2 max pool via host-built bf16 one-hot selector matmuls.

        Row selectors (s_ref) also fold in valid-row selection and repack the
        result directly into the next layer's padded row layout (pad rows of
        the output are exact zeros).  Column selectors (t_ref) halve W per
        channel in the (c, j) lane layout.  Returns f32.
        """
        v = jnp.maximum(jnp.dot(s_ref[0], yb, preferred_element_type=f32),
                        jnp.dot(s_ref[1], yb, preferred_element_type=f32))
        vb = v.astype(bf16)
        return jnp.maximum(jnp.dot(vb, t_ref[0], preferred_element_type=f32),
                           jnp.dot(vb, t_ref[1], preferred_element_type=f32))

    # ---- block 1: input already vertically padded + flattened on the host.
    y1 = conv_bias_relu(x_ref, band1_ref, brow1_ref)       # [B*26-2, 384]
    act2_ref[...] = max_pool(y1, s1_ref, t1_ref)            # [B*14, 192]

    # ---- block 2
    y2 = conv_bias_relu(act2_ref, band2_ref, brow2_ref)     # [B*14-2, 384]
    act3_ref[...] = max_pool(y2, s2_ref, t2_ref)             # [B*8, 192]

    # ---- block 3 (row-pool output grouped as (spatial_row i, image b))
    y3 = conv_bias_relu(act3_ref, band3_ref, brow3_ref)     # [B*8-2, 192]
    p3 = max_pool(y3, s3_ref, t3_ref)                        # [3*B, 96]

    # Dropout(0.2 / 0.2 / 0.25) is identity in eval mode.

    # ---- classifier: fc1(288->256)+ReLU, fc2(256->128)+ReLU, fc3(128->pad).
    # fc1 rows were host-permuted to (i, c, j) order so the three row groups
    # of p3 accumulate into one logically-[B,288]x[288,256] matmul.
    bt = out_ref.shape[0]
    h = jnp.dot(p3[0:bt, :].astype(bf16), w1_ref[0:96, :],
                preferred_element_type=f32)
    for i in (1, 2):
        h = h + jnp.dot(p3[i * bt:(i + 1) * bt, :].astype(bf16),
                        w1_ref[i * 96:(i + 1) * 96, :],
                        preferred_element_type=f32)
    h = jnp.maximum(h + b1_ref[...], 0.0)
    h = jnp.maximum(jnp.dot(h.astype(bf16), w2_ref[...],
                            preferred_element_type=f32) + b2_ref[...], 0.0)
    out_ref[...] = jnp.dot(h.astype(bf16), w3_ref[...],
                           preferred_element_type=f32) + b3_ref[...]


# ---------------------------------------------------------------------------
# Wrapper: one fused pallas_call, B_TILE images per grid step
# ---------------------------------------------------------------------------
_WEIGHT_KEYS = ("band1", "band2", "band3", "brow1", "brow2", "brow3",
                "s1", "t1", "s2", "t2", "s3", "t3",
                "w1", "b1", "w2", "b2", "w3", "b3")


def net_forward(kp, x_nchw, label_num, b_tile=8):
    assert x_nchw.shape[1:] == (1, 24, 24)
    B0 = x_nchw.shape[0]
    npad = kp["b3"].shape[1]

    # Pad batch to a multiple of b_tile, add the vertical conv pad rows once,
    # flatten to the kernel's stacked [B*(24+2), 24] layout (layout plumbing).
    bp = ((B0 + b_tile - 1) // b_tile) * b_tile
    x = x_nchw.reshape(B0, 24, 24).astype(jnp.float32)
    if bp != B0:
        x = jnp.pad(x, ((0, bp - B0), (0, 0), (0, 0)))
    x = jnp.pad(x, ((0, 0), (1, 1), (0, 0))).reshape(bp * 26, 24)

    def _const_spec(arr):
        zeros = (0,) * arr.ndim
        return pl.BlockSpec(arr.shape, lambda t, _z=zeros: _z)

    in_specs = [pl.BlockSpec((b_tile * 26, 24), lambda t: (t, 0))] + \
               [_const_spec(kp[k]) for k in _WEIGHT_KEYS]

    out = pl.pallas_call(
        _net_kernel,
        out_shape=jax.ShapeDtypeStruct((bp, npad), jnp.float32),
        grid=(bp // b_tile,),
        in_specs=in_specs,
        out_specs=pl.BlockSpec((b_tile, npad), lambda t: (t, 0)),
        scratch_shapes=[
            pltpu.VMEM((b_tile * 14, 192), jnp.float32),   # padded act, block 2
            pltpu.VMEM((b_tile * 8, 192), jnp.float32),    # padded act, block 3
        ],
        compiler_params=pltpu.CompilerParams(
            dimension_semantics=("parallel",)),             # v7x: tiles across TCs
    )(x, *[kp[k] for k in _WEIGHT_KEYS])

    return out[:B0, :label_num]


# ---------------------------------------------------------------------------
# Host-side parameter preparation
# ---------------------------------------------------------------------------
def _band_for(bp, win, eps):
    """Banded conv weights [3, Cin*W, Cout*W] with BN(eval) folded in."""
    w = np.asarray(bp["w"], np.float32)                    # [O, C, 3, 3]
    b = np.asarray(bp["b"], np.float32)
    gamma = np.asarray(bp["gamma"], np.float32)
    beta = np.asarray(bp["beta"], np.float32)
    rmean = np.asarray(bp["rmean"], np.float32)
    rvar = np.asarray(bp["rvar"], np.float32)
    scale = gamma / np.sqrt(rvar + eps)
    b_eff = (b - rmean) * scale + beta
    ws = w * scale[:, None, None, None]
    o_n, c_n = w.shape[0], w.shape[1]
    band = np.zeros((3, c_n * win, o_n * win), np.float32)
    j_out = np.arange(win)
    for di in range(3):
        for dj in range(3):
            j_in = j_out + dj - 1
            m = (j_in >= 0) & (j_in < win)                 # implicit horizontal pad
            jo, ji = j_out[m], j_in[m]
            for c in range(c_n):
                for o in range(o_n):
                    band[di, c * win + ji, o * win + jo] = ws[o, c, di, dj]
    brow = np.repeat(b_eff, win)[None, :]
    return band, brow


def _row_pool_selectors(b_tile, h_in, next_pad):
    """One-hot row-pool selectors for the batch-stacked conv output.

    Input rows: p = b*(h_in+2) + r (valid for r < h_in), p < b_tile*(h_in+2)-2.
    next_pad=True : output is the next block's padded act layout
                    (per-image stride h_out+2, pad rows are all-zero rows).
    next_pad=False: output rows grouped as (i, b) -> row i*b_tile + b.
    """
    h_out = h_in // 2
    m_in = b_tile * (h_in + 2) - 2
    if next_pad:
        m_out = b_tile * (h_out + 2)
        se = np.zeros((m_out, m_in), np.float32)
        so = np.zeros((m_out, m_in), np.float32)
        for b in range(b_tile):
            for i in range(h_out):
                se[b * (h_out + 2) + 1 + i, b * (h_in + 2) + 2 * i] = 1.0
                so[b * (h_out + 2) + 1 + i, b * (h_in + 2) + 2 * i + 1] = 1.0
    else:
        m_out = h_out * b_tile
        se = np.zeros((m_out, m_in), np.float32)
        so = np.zeros((m_out, m_in), np.float32)
        for b in range(b_tile):
            for i in range(h_out):
                se[i * b_tile + b, b * (h_in + 2) + 2 * i] = 1.0
                so[i * b_tile + b, b * (h_in + 2) + 2 * i + 1] = 1.0
    return np.stack([se, so])


def _col_pool_selectors(c_out, w_in):
    """One-hot column-pool selectors: lanes (c, j) -> (c, j//2)."""
    w_out = w_in // 2
    te = np.zeros((c_out * w_in, c_out * w_out), np.float32)
    to = np.zeros_like(te)
    for c in range(c_out):
        for j in range(w_out):
            te[c * w_in + 2 * j, c * w_out + j] = 1.0
            to[c * w_in + 2 * j + 1, c * w_out + j] = 1.0
    return np.stack([te, to])


def prepare_kernel_params(params, label_num, b_tile=8, eps=1e-5):
    band1, brow1 = _band_for(params["conv1"], 24, eps)
    band2, brow2 = _band_for(params["conv2"], 12, eps)
    band3, brow3 = _band_for(params["conv3"], 6, eps)

    c1 = params["conv1"]["w"].shape[0]
    c2 = params["conv2"]["w"].shape[0]
    c3 = params["conv3"]["w"].shape[0]

    s1 = _row_pool_selectors(b_tile, 24, next_pad=True)
    s2 = _row_pool_selectors(b_tile, 12, next_pad=True)
    s3 = _row_pool_selectors(b_tile, 6, next_pad=False)
    t1 = _col_pool_selectors(c1, 24)
    t2 = _col_pool_selectors(c2, 12)
    t3 = _col_pool_selectors(c3, 6)

    # fc1: permute rows from NCHW flatten order (c,i,j) to kernel order (i,c,j)
    w1 = np.asarray(params["fc1"]["w"], np.float32)          # [256, 288]
    w1e = np.transpose(w1.reshape(256, 32, 3, 3), (2, 1, 3, 0)).reshape(288, 256)
    b1 = np.asarray(params["fc1"]["b"], np.float32)[None, :]
    w2 = np.asarray(params["fc2"]["w"], np.float32).T        # [256, 128]
    b2 = np.asarray(params["fc2"]["b"], np.float32)[None, :]

    npad = ((label_num + 127) // 128) * 128                  # lane-dense fc3
    w3 = np.zeros((128, npad), np.float32)
    w3[:, :label_num] = np.asarray(params["fc3"]["w"], np.float32).T
    b3 = np.zeros((1, npad), np.float32)
    b3[0, :label_num] = np.asarray(params["fc3"]["b"], np.float32)

    bf = jnp.bfloat16
    return dict(
        band1=jnp.asarray(band1, bf), band2=jnp.asarray(band2, bf),
        band3=jnp.asarray(band3, bf),
        brow1=jnp.asarray(brow1), brow2=jnp.asarray(brow2),
        brow3=jnp.asarray(brow3),
        s1=jnp.asarray(s1, bf), s2=jnp.asarray(s2, bf), s3=jnp.asarray(s3, bf),
        t1=jnp.asarray(t1, bf), t2=jnp.asarray(t2, bf), t3=jnp.asarray(t3, bf),
        w1=jnp.asarray(w1e, bf), b1=jnp.asarray(b1),
        w2=jnp.asarray(w2, bf), b2=jnp.asarray(b2),
        w3=jnp.asarray(w3, bf), b3=jnp.asarray(b3),
    )


# ---------------------------------------------------------------------------
# Deterministic "PyTorch-layout" parameters + pure-JAX reference
# ---------------------------------------------------------------------------
def init_params(label_num=200):
    key = jax.random.PRNGKey(42)
    ks = jax.random.split(key, 6)

    def conv_block_params(k, cin, cout):
        k0, k1, k2, k3, k4, k5 = jax.random.split(k, 6)
        return dict(
            w=0.05 * jax.random.normal(k0, (cout, cin, 3, 3), jnp.float32),
            b=0.01 * jax.random.normal(k1, (cout,), jnp.float32),
            gamma=1.0 + 0.1 * jax.random.normal(k2, (cout,), jnp.float32),
            beta=0.1 * jax.random.normal(k3, (cout,), jnp.float32),
            rmean=0.1 * jax.random.normal(k4, (cout,), jnp.float32),
            rvar=1.0 + 0.1 * jax.random.uniform(k5, (cout,), jnp.float32),
        )

    def linear_params(k, fin, fout):
        k0, k1 = jax.random.split(k)
        return dict(
            w=0.05 * jax.random.normal(k0, (fout, fin), jnp.float32),
            b=0.01 * jax.random.normal(k1, (fout,), jnp.float32),
        )

    return dict(
        conv1=conv_block_params(ks[0], 1, 16),
        conv2=conv_block_params(ks[1], 16, 32),
        conv3=conv_block_params(ks[2], 32, 32),
        fc1=linear_params(ks[3], 288, 256),
        fc2=linear_params(ks[4], 256, 128),
        fc3=linear_params(ks[5], 128, label_num),
    )


def reference_forward(params, x_nchw, eps=1e-5):
    x = x_nchw.astype(jnp.float32)
    for name in ("conv1", "conv2", "conv3"):
        p = params[name]
        y = jax.lax.conv_general_dilated(
            x, p["w"], window_strides=(1, 1), padding=((1, 1), (1, 1)),
            dimension_numbers=("NCHW", "OIHW", "NCHW"))
        y = y + p["b"][None, :, None, None]
        scale = p["gamma"] / jnp.sqrt(p["rvar"] + eps)
        y = (y - p["rmean"][None, :, None, None]) * scale[None, :, None, None] \
            + p["beta"][None, :, None, None]
        y = jnp.maximum(y, 0.0)
        x = jax.lax.reduce_window(y, -jnp.inf, jax.lax.max,
                                  (1, 1, 2, 2), (1, 1, 2, 2), "VALID")
    flat = x.reshape(x.shape[0], -1)
    h = jnp.maximum(flat @ params["fc1"]["w"].T + params["fc1"]["b"], 0.0)
    h = jnp.maximum(h @ params["fc2"]["w"].T + params["fc2"]["b"], 0.0)
    return h @ params["fc3"]["w"].T + params["fc3"]["b"]


if __name__ == "__main__":
    label_num = 200
    b_tile = 8                      # images per grid step (M-fill for the MXU)
    params = init_params(label_num)
    kp = prepare_kernel_params(params, label_num, b_tile=b_tile)

    # Input must be 1x24x24 so three MaxPool2d(2) stages give 3x3 -> 288 feats.
    key = jax.random.PRNGKey(0)
    x = jax.random.normal(key, (20, 1, 24, 24), dtype=jnp.float32)

    fwd = jax.jit(net_forward, static_argnums=(2, 3))
    out = jax.block_until_ready(fwd(kp, x, label_num, b_tile))
    assert out.shape == (20, label_num)

    # Loose check vs. pure-JAX f32 reference (kernel matmuls use bf16 operands).
    ref = reference_forward(params, x)
    err = float(jnp.max(jnp.abs(out - ref)))
    scale = float(jnp.max(jnp.abs(ref))) + 1e-6
    assert err <= 5e-2 * scale, f"mismatch: max|err|={err}, max|ref|={scale}"

    print("KERNEL_OK")
</pallas_src>

<mosaic_0001>
module attributes {stable_mosaic.version = 11 : i64} {
  func.func @_net_kernel(%arg0: i32, %arg1: memref<208x24xf32, #tpu.memory_space<vmem>>, %arg2: memref<3x24x384xbf16, #tpu.memory_space<vmem>>, %arg3: memref<3x192x384xbf16, #tpu.memory_space<vmem>>, %arg4: memref<3x192x192xbf16, #tpu.memory_space<vmem>>, %arg5: memref<1x384xf32, #tpu.memory_space<vmem>>, %arg6: memref<1x384xf32, #tpu.memory_space<vmem>>, %arg7: memref<1x192xf32, #tpu.memory_space<vmem>>, %arg8: memref<2x112x206xbf16, #tpu.memory_space<vmem>>, %arg9: memref<2x384x192xbf16, #tpu.memory_space<vmem>>, %arg10: memref<2x64x110xbf16, #tpu.memory_space<vmem>>, %arg11: memref<2x384x192xbf16, #tpu.memory_space<vmem>>, %arg12: memref<2x24x62xbf16, #tpu.memory_space<vmem>>, %arg13: memref<2x192x96xbf16, #tpu.memory_space<vmem>>, %arg14: memref<288x256xbf16, #tpu.memory_space<vmem>>, %arg15: memref<1x256xf32, #tpu.memory_space<vmem>>, %arg16: memref<256x128xbf16, #tpu.memory_space<vmem>>, %arg17: memref<1x128xf32, #tpu.memory_space<vmem>>, %arg18: memref<128x256xbf16, #tpu.memory_space<vmem>>, %arg19: memref<1x256xf32, #tpu.memory_space<vmem>>, %arg20: memref<8x256xf32, #tpu.memory_space<vmem>>, %arg21: memref<112x192xf32, #tpu.memory_space<vmem>>, %arg22: memref<64x192xf32, #tpu.memory_space<vmem>>) attributes {dimension_semantics = [#tpu.dimension_semantics<parallel>], iteration_bounds = array<i64: 3>, scalar_prefetch = 0 : i64, scratch_operands = 2 : i64, tpu.core_type = #tpu.core_type<tc>, window_params = [{transform_indices = @transform_0, window_bounds = array<i64: 208, 24>}, {pipeline_mode = #tpu.pipeline_mode<synchronous>, transform_indices = @transform_1, window_bounds = array<i64: 3, 24, 384>}, {pipeline_mode = #tpu.pipeline_mode<synchronous>, transform_indices = @transform_2, window_bounds = array<i64: 3, 192, 384>}, {pipeline_mode = #tpu.pipeline_mode<synchronous>, transform_indices = @transform_3, window_bounds = array<i64: 3, 192, 192>}, {pipeline_mode = #tpu.pipeline_mode<synchronous>, transform_indices = @transform_4, window_bounds = array<i64: 1, 384>}, {pipeline_mode = #tpu.pipeline_mode<synchronous>, transform_indices = @transform_5, window_bounds = array<i64: 1, 384>}, {pipeline_mode = #tpu.pipeline_mode<synchronous>, transform_indices = @transform_6, window_bounds = array<i64: 1, 192>}, {pipeline_mode = #tpu.pipeline_mode<synchronous>, transform_indices = @transform_7, window_bounds = array<i64: 2, 112, 206>}, {pipeline_mode = #tpu.pipeline_mode<synchronous>, transform_indices = @transform_8, window_bounds = array<i64: 2, 384, 192>}, {pipeline_mode = #tpu.pipeline_mode<synchronous>, transform_indices = @transform_9, window_bounds = array<i64: 2, 64, 110>}, {pipeline_mode = #tpu.pipeline_mode<synchronous>, transform_indices = @transform_10, window_bounds = array<i64: 2, 384, 192>}, {pipeline_mode = #tpu.pipeline_mode<synchronous>, transform_indices = @transform_11, window_bounds = array<i64: 2, 24, 62>}, {pipeline_mode = #tpu.pipeline_mode<synchronous>, transform_indices = @transform_12, window_bounds = array<i64: 2, 192, 96>}, {pipeline_mode = #tpu.pipeline_mode<synchronous>, transform_indices = @transform_13, window_bounds = array<i64: 288, 256>}, {pipeline_mode = #tpu.pipeline_mode<synchronous>, transform_indices = @transform_14, window_bounds = array<i64: 1, 256>}, {pipeline_mode = #tpu.pipeline_mode<synchronous>, transform_indices = @transform_15, window_bounds = array<i64: 256, 128>}, {pipeline_mode = #tpu.pipeline_mode<synchronous>, transform_indices = @transform_16, window_bounds = array<i64: 1, 128>}, {pipeline_mode = #tpu.pipeline_mode<synchronous>, transform_indices = @transform_17, window_bounds = array<i64: 128, 256>}, {pipeline_mode = #tpu.pipeline_mode<synchronous>, transform_indices = @transform_18, window_bounds = array<i64: 1, 256>}, {transform_indices = @transform_19, window_bounds = array<i64: 8, 256>}]} {
    %c0 = arith.constant 0 : index
    %c0_0 = arith.constant 0 : index
    %0 = vector.load %arg1[%c0, %c0_0] : memref<208x24xf32, #tpu.memory_space<vmem>>, vector<206x24xf32>
    %1 = arith.truncf %0 : vector<206x24xf32> to vector<206x24xbf16>
    %c0_1 = arith.constant 0 : index
    %c0_2 = arith.constant 0 : index
    %c0_3 = arith.constant 0 : index
    %2 = vector.load %arg2[%c0_1, %c0_2, %c0_3] : memref<3x24x384xbf16, #tpu.memory_space<vmem>>, vector<1x24x384xbf16>
    %3 = vector.shape_cast %2 : vector<1x24x384xbf16> to vector<24x384xbf16>
    %cst = arith.constant dense<0.000000e+00> : vector<206x384xf32>
    %4 = tpu.matmul %1, %3, %cst {dimension_numbers = #tpu.dot_dimension_numbers<[1], [0], [0], [1], [0, 0, 1, 1], [], []>} : vector<206x24xbf16>, vector<24x384xbf16>, vector<206x384xf32> -> vector<206x384xf32>
    %c1 = arith.constant 1 : index
    %c0_4 = arith.constant 0 : index
    %5 = vector.load %arg1[%c1, %c0_4] : memref<208x24xf32, #tpu.memory_space<vmem>>, vector<206x24xf32>
    %6 = arith.truncf %5 : vector<206x24xf32> to vector<206x24xbf16>
    %c1_5 = arith.constant 1 : index
    %c0_6 = arith.constant 0 : index
    %c0_7 = arith.constant 0 : index
    %7 = vector.load %arg2[%c1_5, %c0_6, %c0_7] : memref<3x24x384xbf16, #tpu.memory_space<vmem>>, vector<1x24x384xbf16>
    %8 = vector.shape_cast %7 : vector<1x24x384xbf16> to vector<24x384xbf16>
    %cst_8 = arith.constant dense<0.000000e+00> : vector<206x384xf32>
    %9 = tpu.matmul %6, %8, %cst_8 {dimension_numbers = #tpu.dot_dimension_numbers<[1], [0], [0], [1], [0, 0, 1, 1], [], []>} : vector<206x24xbf16>, vector<24x384xbf16>, vector<206x384xf32> -> vector<206x384xf32>
    %10 = arith.addf %4, %9 : vector<206x384xf32>
    %c2 = arith.constant 2 : index
    %c0_9 = arith.constant 0 : index
    %11 = vector.load %arg1[%c2, %c0_9] : memref<208x24xf32, #tpu.memory_space<vmem>>, vector<206x24xf32>
    %12 = arith.truncf %11 : vector<206x24xf32> to vector<206x24xbf16>
    %c2_10 = arith.constant 2 : index
    %c0_11 = arith.constant 0 : index
    %c0_12 = arith.constant 0 : index
    %13 = vector.load %arg2[%c2_10, %c0_11, %c0_12] : memref<3x24x384xbf16, #tpu.memory_space<vmem>>, vector<1x24x384xbf16>
    %14 = vector.shape_cast %13 : vector<1x24x384xbf16> to vector<24x384xbf16>
    %cst_13 = arith.constant dense<0.000000e+00> : vector<206x384xf32>
    %15 = tpu.matmul %12, %14, %cst_13 {dimension_numbers = #tpu.dot_dimension_numbers<[1], [0], [0], [1], [0, 0, 1, 1], [], []>} : vector<206x24xbf16>, vector<24x384xbf16>, vector<206x384xf32> -> vector<206x384xf32>
    %16 = arith.addf %10, %15 : vector<206x384xf32>
    %c0_14 = arith.constant 0 : index
    %c0_15 = arith.constant 0 : index
    %17 = vector.load %arg5[%c0_14, %c0_15] : memref<1x384xf32, #tpu.memory_space<vmem>>, vector<1x384xf32>
    %18 = vector.broadcast %17 : vector<1x384xf32> to vector<206x384xf32>
    %19 = arith.addf %16, %18 : vector<206x384xf32>
    %cst_16 = arith.constant 0.000000e+00 : f32
    %20 = vector.broadcast %cst_16 : f32 to vector<206x384xf32>
    %21 = arith.maximumf %19, %20 : vector<206x384xf32>
    %22 = arith.truncf %21 : vector<206x384xf32> to vector<206x384xbf16>
    %c0_17 = arith.constant 0 : index
    %c0_18 = arith.constant 0 : index
    %c0_19 = arith.constant 0 : index
    %23 = vector.load %arg8[%c0_17, %c0_18, %c0_19] : memref<2x112x206xbf16, #tpu.memory_space<vmem>>, vector<1x112x206xbf16>
    %24 = vector.shape_cast %23 : vector<1x112x206xbf16> to vector<112x206xbf16>
    %cst_20 = arith.constant dense<0.000000e+00> : vector<112x384xf32>
    %25 = tpu.matmul %24, %22, %cst_20 {dimension_numbers = #tpu.dot_dimension_numbers<[1], [0], [0], [1], [0, 0, 1, 1], [], []>} : vector<112x206xbf16>, vector<206x384xbf16>, vector<112x384xf32> -> vector<112x384xf32>
    %c1_21 = arith.constant 1 : index
    %c0_22 = arith.constant 0 : index
    %c0_23 = arith.constant 0 : index
    %26 = vector.load %arg8[%c1_21, %c0_22, %c0_23] : memref<2x112x206xbf16, #tpu.memory_space<vmem>>, vector<1x112x206xbf16>
    %27 = vector.shape_cast %26 : vector<1x112x206xbf16> to vector<112x206xbf16>
    %cst_24 = arith.constant dense<0.000000e+00> : vector<112x384xf32>
    %28 = tpu.matmul %27, %22, %cst_24 {dimension_numbers = #tpu.dot_dimension_numbers<[1], [0], [0], [1], [0, 0, 1, 1], [], []>} : vector<112x206xbf16>, vector<206x384xbf16>, vector<112x384xf32> -> vector<112x384xf32>
    %29 = arith.maximumf %25, %28 : vector<112x384xf32>
    %30 = arith.truncf %29 : vector<112x384xf32> to vector<112x384xbf16>
    %c0_25 = arith.constant 0 : index
    %c0_26 = arith.constant 0 : index
    %c0_27 = arith.constant 0 : index
    %31 = vector.load %arg9[%c0_25, %c0_26, %c0_27] : memref<2x384x192xbf16, #tpu.memory_space<vmem>>, vector<1x384x192xbf16>
    %32 = vector.shape_cast %31 : vector<1x384x192xbf16> to vector<384x192xbf16>
    %cst_28 = arith.constant dense<0.000000e+00> : vector<112x192xf32>
    %33 = tpu.matmul %30, %32, %cst_28 {dimension_numbers = #tpu.dot_dimension_numbers<[1], [0], [0], [1], [0, 0, 1, 1], [], []>} : vector<112x384xbf16>, vector<384x192xbf16>, vector<112x192xf32> -> vector<112x192xf32>
    %c1_29 = arith.constant 1 : index
    %c0_30 = arith.constant 0 : index
    %c0_31 = arith.constant 0 : index
    %34 = vector.load %arg9[%c1_29, %c0_30, %c0_31] : memref<2x384x192xbf16, #tpu.memory_space<vmem>>, vector<1x384x192xbf16>
    %35 = vector.shape_cast %34 : vector<1x384x192xbf16> to vector<384x192xbf16>
    %cst_32 = arith.constant dense<0.000000e+00> : vector<112x192xf32>
    %36 = tpu.matmul %30, %35, %cst_32 {dimension_numbers = #tpu.dot_dimension_numbers<[1], [0], [0], [1], [0, 0, 1, 1], [], []>} : vector<112x384xbf16>, vector<384x192xbf16>, vector<112x192xf32> -> vector<112x192xf32>
    %37 = arith.maximumf %33, %36 : vector<112x192xf32>
    %c0_33 = arith.constant 0 : index
    %c0_34 = arith.constant 0 : index
    %38 = vector.load %arg21[%c0_33, %c0_34] : memref<112x192xf32, #tpu.memory_space<vmem>>, vector<112x192xf32>
    tpu.vector_store %arg21[%c0_33, %c0_34], %37 {strides = array<i32>} : memref<112x192xf32, #tpu.memory_space<vmem>>, vector<112x192xf32>,
    %c0_35 = arith.constant 0 : index
    %c0_36 = arith.constant 0 : index
    %39 = vector.load %arg21[%c0_35, %c0_36] : memref<112x192xf32, #tpu.memory_space<vmem>>, vector<110x192xf32>
    %40 = arith.truncf %39 : vector<110x192xf32> to vector<110x192xbf16>
    %c0_37 = arith.constant 0 : index
    %c0_38 = arith.constant 0 : index
    %c0_39 = arith.constant 0 : index
    %41 = vector.load %arg3[%c0_37, %c0_38, %c0_39] : memref<3x192x384xbf16, #tpu.memory_space<vmem>>, vector<1x192x384xbf16>
    %42 = vector.shape_cast %41 : vector<1x192x384xbf16> to vector<192x384xbf16>
    %cst_40 = arith.constant dense<0.000000e+00> : vector<110x384xf32>
    %43 = tpu.matmul %40, %42, %cst_40 {dimension_numbers = #tpu.dot_dimension_numbers<[1], [0], [0], [1], [0, 0, 1, 1], [], []>} : vector<110x192xbf16>, vector<192x384xbf16>, vector<110x384xf32> -> vector<110x384xf32>
    %c1_41 = arith.constant 1 : index
    %c0_42 = arith.constant 0 : index
    %44 = vector.load %arg21[%c1_41, %c0_42] : memref<112x192xf32, #tpu.memory_space<vmem>>, vector<110x192xf32>
    %45 = arith.truncf %44 : vector<110x192xf32> to vector<110x192xbf16>
    %c1_43 = arith.constant 1 : index
    %c0_44 = arith.constant 0 : index
    %c0_45 = arith.constant 0 : index
    %46 = vector.load %arg3[%c1_43, %c0_44, %c0_45] : memref<3x192x384xbf16, #tpu.memory_space<vmem>>, vector<1x192x384xbf16>
    %47 = vector.shape_cast %46 : vector<1x192x384xbf16> to vector<192x384xbf16>
    %cst_46 = arith.constant dense<0.000000e+00> : vector<110x384xf32>
    %48 = tpu.matmul %45, %47, %cst_46 {dimension_numbers = #tpu.dot_dimension_numbers<[1], [0], [0], [1], [0, 0, 1, 1], [], []>} : vector<110x192xbf16>, vector<192x384xbf16>, vector<110x384xf32> -> vector<110x384xf32>
    %49 = arith.addf %43, %48 : vector<110x384xf32>
    %c2_47 = arith.constant 2 : index
    %c0_48 = arith.constant 0 : index
    %50 = vector.load %arg21[%c2_47, %c0_48] : memref<112x192xf32, #tpu.memory_space<vmem>>, vector<110x192xf32>
    %51 = arith.truncf %50 : vector<110x192xf32> to vector<110x192xbf16>
    %c2_49 = arith.constant 2 : index
    %c0_50 = arith.constant 0 : index
    %c0_51 = arith.constant 0 : index
    %52 = vector.load %arg3[%c2_49, %c0_50, %c0_51] : memref<3x192x384xbf16, #tpu.memory_space<vmem>>, vector<1x192x384xbf16>
    %53 = vector.shape_cast %52 : vector<1x192x384xbf16> to vector<192x384xbf16>
    %cst_52 = arith.constant dense<0.000000e+00> : vector<110x384xf32>
    %54 = tpu.matmul %51, %53, %cst_52 {dimension_numbers = #tpu.dot_dimension_numbers<[1], [0], [0], [1], [0, 0, 1, 1], [], []>} : vector<110x192xbf16>, vector<192x384xbf16>, vector<110x384xf32> -> vector<110x384xf32>
    %55 = arith.addf %49, %54 : vector<110x384xf32>
    %c0_53 = arith.constant 0 : index
    %c0_54 = arith.constant 0 : index
    %56 = vector.load %arg6[%c0_53, %c0_54] : memref<1x384xf32, #tpu.memory_space<vmem>>, vector<1x384xf32>
    %57 = vector.broadcast %56 : vector<1x384xf32> to vector<110x384xf32>
    %58 = arith.addf %55, %57 : vector<110x384xf32>
    %cst_55 = arith.constant 0.000000e+00 : f32
    %59 = vector.broadcast %cst_55 : f32 to vector<110x384xf32>
    %60 = arith.maximumf %58, %59 : vector<110x384xf32>
    %61 = arith.truncf %60 : vector<110x384xf32> to vector<110x384xbf16>
    %c0_56 = arith.constant 0 : index
    %c0_57 = arith.constant 0 : index
    %c0_58 = arith.constant 0 : index
    %62 = vector.load %arg10[%c0_56, %c0_57, %c0_58] : memref<2x64x110xbf16, #tpu.memory_space<vmem>>, vector<1x64x110xbf16>
    %63 = vector.shape_cast %62 : vector<1x64x110xbf16> to vector<64x110xbf16>
    %cst_59 = arith.constant dense<0.000000e+00> : vector<64x384xf32>
    %64 = tpu.matmul %63, %61, %cst_59 {dimension_numbers = #tpu.dot_dimension_numbers<[1], [0], [0], [1], [0, 0, 1, 1], [], []>} : vector<64x110xbf16>, vector<110x384xbf16>, vector<64x384xf32> -> vector<64x384xf32>
    %c1_60 = arith.constant 1 : index
    %c0_61 = arith.constant 0 : index
    %c0_62 = arith.constant 0 : index
    %65 = vector.load %arg10[%c1_60, %c0_61, %c0_62] : memref<2x64x110xbf16, #tpu.memory_space<vmem>>, vector<1x64x110xbf16>
    %66 = vector.shape_cast %65 : vector<1x64x110xbf16> to vector<64x110xbf16>
    %cst_63 = arith.constant dense<0.000000e+00> : vector<64x384xf32>
    %67 = tpu.matmul %66, %61, %cst_63 {dimension_numbers = #tpu.dot_dimension_numbers<[1], [0], [0], [1], [0, 0, 1, 1], [], []>} : vector<64x110xbf16>, vector<110x384xbf16>, vector<64x384xf32> -> vector<64x384xf32>
    %68 = arith.maximumf %64, %67 : vector<64x384xf32>
    %69 = arith.truncf %68 : vector<64x384xf32> to vector<64x384xbf16>
    %c0_64 = arith.constant 0 : index
    %c0_65 = arith.constant 0 : index
    %c0_66 = arith.constant 0 : index
    %70 = vector.load %arg11[%c0_64, %c0_65, %c0_66] : memref<2x384x192xbf16, #tpu.memory_space<vmem>>, vector<1x384x192xbf16>
    %71 = vector.shape_cast %70 : vector<1x384x192xbf16> to vector<384x192xbf16>
    %cst_67 = arith.constant dense<0.000000e+00> : vector<64x192xf32>
    %72 = tpu.matmul %69, %71, %cst_67 {dimension_numbers = #tpu.dot_dimension_numbers<[1], [0], [0], [1], [0, 0, 1, 1], [], []>} : vector<64x384xbf16>, vector<384x192xbf16>, vector<64x192xf32> -> vector<64x192xf32>
    %c1_68 = arith.constant 1 : index
    %c0_69 = arith.constant 0 : index
    %c0_70 = arith.constant 0 : index
    %73 = vector.load %arg11[%c1_68, %c0_69, %c0_70] : memref<2x384x192xbf16, #tpu.memory_space<vmem>>, vector<1x384x192xbf16>
    %74 = vector.shape_cast %73 : vector<1x384x192xbf16> to vector<384x192xbf16>
    %cst_71 = arith.constant dense<0.000000e+00> : vector<64x192xf32>
    %75 = tpu.matmul %69, %74, %cst_71 {dimension_numbers = #tpu.dot_dimension_numbers<[1], [0], [0], [1], [0, 0, 1, 1], [], []>} : vector<64x384xbf16>, vector<384x192xbf16>, vector<64x192xf32> -> vector<64x192xf32>
    %76 = arith.maximumf %72, %75 : vector<64x192xf32>
    %c0_72 = arith.constant 0 : index
    %c0_73 = arith.constant 0 : index
    %77 = vector.load %arg22[%c0_72, %c0_73] : memref<64x192xf32, #tpu.memory_space<vmem>>, vector<64x192xf32>
    tpu.vector_store %arg22[%c0_72, %c0_73], %76 {strides = array<i32>} : memref<64x192xf32, #tpu.memory_space<vmem>>, vector<64x192xf32>,
    %c0_74 = arith.constant 0 : index
    %c0_75 = arith.constant 0 : index
    %78 = vector.load %arg22[%c0_74, %c0_75] : memref<64x192xf32, #tpu.memory_space<vmem>>, vector<62x192xf32>
    %79 = arith.truncf %78 : vector<62x192xf32> to vector<62x192xbf16>
    %c0_76 = arith.constant 0 : index
    %c0_77 = arith.constant 0 : index
    %c0_78 = arith.constant 0 : index
    %80 = vector.load %arg4[%c0_76, %c0_77, %c0_78] : memref<3x192x192xbf16, #tpu.memory_space<vmem>>, vector<1x192x192xbf16>
    %81 = vector.shape_cast %80 : vector<1x192x192xbf16> to vector<192x192xbf16>
    %cst_79 = arith.constant dense<0.000000e+00> : vector<62x192xf32>
    %82 = tpu.matmul %79, %81, %cst_79 {dimension_numbers = #tpu.dot_dimension_numbers<[1], [0], [0], [1], [0, 0, 1, 1], [], []>} : vector<62x192xbf16>, vector<192x192xbf16>, vector<62x192xf32> -> vector<62x192xf32>
    %c1_80 = arith.constant 1 : index
    %c0_81 = arith.constant 0 : index
    %83 = vector.load %arg22[%c1_80, %c0_81] : memref<64x192xf32, #tpu.memory_space<vmem>>, vector<62x192xf32>
    %84 = arith.truncf %83 : vector<62x192xf32> to vector<62x192xbf16>
    %c1_82 = arith.constant 1 : index
    %c0_83 = arith.constant 0 : index
    %c0_84 = arith.constant 0 : index
    %85 = vector.load %arg4[%c1_82, %c0_83, %c0_84] : memref<3x192x192xbf16, #tpu.memory_space<vmem>>, vector<1x192x192xbf16>
    %86 = vector.shape_cast %85 : vector<1x192x192xbf16> to vector<192x192xbf16>
    %cst_85 = arith.constant dense<0.000000e+00> : vector<62x192xf32>
    %87 = tpu.matmul %84, %86, %cst_85 {dimension_numbers = #tpu.dot_dimension_numbers<[1], [0], [0], [1], [0, 0, 1, 1], [], []>} : vector<62x192xbf16>, vector<192x192xbf16>, vector<62x192xf32> -> vector<62x192xf32>
    %88 = arith.addf %82, %87 : vector<62x192xf32>
    %c2_86 = arith.constant 2 : index
    %c0_87 = arith.constant 0 : index
    %89 = vector.load %arg22[%c2_86, %c0_87] : memref<64x192xf32, #tpu.memory_space<vmem>>, vector<62x192xf32>
    %90 = arith.truncf %89 : vector<62x192xf32> to vector<62x192xbf16>
    %c2_88 = arith.constant 2 : index
    %c0_89 = arith.constant 0 : index
    %c0_90 = arith.constant 0 : index
    %91 = vector.load %arg4[%c2_88, %c0_89, %c0_90] : memref<3x192x192xbf16, #tpu.memory_space<vmem>>, vector<1x192x192xbf16>
    %92 = vector.shape_cast %91 : vector<1x192x192xbf16> to vector<192x192xbf16>
    %cst_91 = arith.constant dense<0.000000e+00> : vector<62x192xf32>
    %93 = tpu.matmul %90, %92, %cst_91 {dimension_numbers = #tpu.dot_dimension_numbers<[1], [0], [0], [1], [0, 0, 1, 1], [], []>} : vector<62x192xbf16>, vector<192x192xbf16>, vector<62x192xf32> -> vector<62x192xf32>
    %94 = arith.addf %88, %93 : vector<62x192xf32>
    %c0_92 = arith.constant 0 : index
    %c0_93 = arith.constant 0 : index
    %95 = vector.load %arg7[%c0_92, %c0_93] : memref<1x192xf32, #tpu.memory_space<vmem>>, vector<1x192xf32>
    %96 = vector.broadcast %95 : vector<1x192xf32> to vector<62x192xf32>
    %97 = arith.addf %94, %96 : vector<62x192xf32>
    %cst_94 = arith.constant 0.000000e+00 : f32
    %98 = vector.broadcast %cst_94 : f32 to vector<62x192xf32>
    %99 = arith.maximumf %97, %98 : vector<62x192xf32>
    %100 = arith.truncf %99 : vector<62x192xf32> to vector<62x192xbf16>
    %c0_95 = arith.constant 0 : index
    %c0_96 = arith.constant 0 : index
    %c0_97 = arith.constant 0 : index
    %101 = vector.load %arg12[%c0_95, %c0_96, %c0_97] : memref<2x24x62xbf16, #tpu.memory_space<vmem>>, vector<1x24x62xbf16>
    %102 = vector.shape_cast %101 : vector<1x24x62xbf16> to vector<24x62xbf16>
    %cst_98 = arith.constant dense<0.000000e+00> : vector<24x192xf32>
    %103 = tpu.matmul %102, %100, %cst_98 {dimension_numbers = #tpu.dot_dimension_numbers<[1], [0], [0], [1], [0, 0, 1, 1], [], []>} : vector<24x62xbf16>, vector<62x192xbf16>, vector<24x192xf32> -> vector<24x192xf32>
    %c1_99 = arith.constant 1 : index
    %c0_100 = arith.constant 0 : index
    %c0_101 = arith.constant 0 : index
    %104 = vector.load %arg12[%c1_99, %c0_100, %c0_101] : memref<2x24x62xbf16, #tpu.memory_space<vmem>>, vector<1x24x62xbf16>
    %105 = vector.shape_cast %104 : vector<1x24x62xbf16> to vector<24x62xbf16>
    %cst_102 = arith.constant dense<0.000000e+00> : vector<24x192xf32>
    %106 = tpu.matmul %105, %100, %cst_102 {dimension_numbers = #tpu.dot_dimension_numbers<[1], [0], [0], [1], [0, 0, 1, 1], [], []>} : vector<24x62xbf16>, vector<62x192xbf16>, vector<24x192xf32> -> vector<24x192xf32>
    %107 = arith.maximumf %103, %106 : vector<24x192xf32>
    %108 = arith.truncf %107 : vector<24x192xf32> to vector<24x192xbf16>
    %c0_103 = arith.constant 0 : index
    %c0_104 = arith.constant 0 : index
    %c0_105 = arith.constant 0 : index
    %109 = vector.load %arg13[%c0_103, %c0_104, %c0_105] : memref<2x192x96xbf16, #tpu.memory_space<vmem>>, vector<1x192x96xbf16>
    %110 = vector.shape_cast %109 : vector<1x192x96xbf16> to vector<192x96xbf16>
    %cst_106 = arith.constant dense<0.000000e+00> : vector<24x96xf32>
    %111 = tpu.matmul %108, %110, %cst_106 {dimension_numbers = #tpu.dot_dimension_numbers<[1], [0], [0], [1], [0, 0, 1, 1], [], []>} : vector<24x192xbf16>, vector<192x96xbf16>, vector<24x96xf32> -> vector<24x96xf32>
    %c1_107 = arith.constant 1 : index
    %c0_108 = arith.constant 0 : index
    %c0_109 = arith.constant 0 : index
    %112 = vector.load %arg13[%c1_107, %c0_108, %c0_109] : memref<2x192x96xbf16, #tpu.memory_space<vmem>>, vector<1x192x96xbf16>
    %113 = vector.shape_cast %112 : vector<1x192x96xbf16> to vector<192x96xbf16>
    %cst_110 = arith.constant dense<0.000000e+00> : vector<24x96xf32>
    %114 = tpu.matmul %108, %113, %cst_110 {dimension_numbers = #tpu.dot_dimension_numbers<[1], [0], [0], [1], [0, 0, 1, 1], [], []>} : vector<24x192xbf16>, vector<192x96xbf16>, vector<24x96xf32> -> vector<24x96xf32>
    %115 = arith.maximumf %111, %114 : vector<24x96xf32>
    %116 = vector.extract_strided_slice %115 {offsets = [0, 0], sizes = [8, 96], strides = [1, 1]} : vector<24x96xf32> to vector<8x96xf32>
    %117 = arith.truncf %116 : vector<8x96xf32> to vector<8x96xbf16>
    %c0_111 = arith.constant 0 : index
    %c0_112 = arith.constant 0 : index
    %118 = vector.load %arg14[%c0_111, %c0_112] : memref<288x256xbf16, #tpu.memory_space<vmem>>, vector<96x256xbf16>
    %cst_113 = arith.constant dense<0.000000e+00> : vector<8x256xf32>
    %119 = tpu.matmul %117, %118, %cst_113 {dimension_numbers = #tpu.dot_dimension_numbers<[1], [0], [0], [1], [0, 0, 1, 1], [], []>} : vector<8x96xbf16>, vector<96x256xbf16>, vector<8x256xf32> -> vector<8x256xf32>
    %120 = vector.extract_strided_slice %115 {offsets = [8, 0], sizes = [8, 96], strides = [1, 1]} : vector<24x96xf32> to vector<8x96xf32>
    %121 = arith.truncf %120 : vector<8x96xf32> to vector<8x96xbf16>
    %c96 = arith.constant 96 : index
    %c0_114 = arith.constant 0 : index
    %122 = vector.load %arg14[%c96, %c0_114] : memref<288x256xbf16, #tpu.memory_space<vmem>>, vector<96x256xbf16>
    %cst_115 = arith.constant dense<0.000000e+00> : vector<8x256xf32>
    %123 = tpu.matmul %121, %122, %cst_115 {dimension_numbers = #tpu.dot_dimension_numbers<[1], [0], [0], [1], [0, 0, 1, 1], [], []>} : vector<8x96xbf16>, vector<96x256xbf16>, vector<8x256xf32> -> vector<8x256xf32>
    %124 = arith.addf %119, %123 : vector<8x256xf32>
    %125 = vector.extract_strided_slice %115 {offsets = [16, 0], sizes = [8, 96], strides = [1, 1]} : vector<24x96xf32> to vector<8x96xf32>
    %126 = arith.truncf %125 : vector<8x96xf32> to vector<8x96xbf16>
    %c192 = arith.constant 192 : index
    %c0_116 = arith.constant 0 : index
    %127 = vector.load %arg14[%c192, %c0_116] : memref<288x256xbf16, #tpu.memory_space<vmem>>, vector<96x256xbf16>
    %cst_117 = arith.constant dense<0.000000e+00> : vector<8x256xf32>
    %128 = tpu.matmul %126, %127, %cst_117 {dimension_numbers = #tpu.dot_dimension_numbers<[1], [0], [0], [1], [0, 0, 1, 1], [], []>} : vector<8x96xbf16>, vector<96x256xbf16>, vector<8x256xf32> -> vector<8x256xf32>
    %129 = arith.addf %124, %128 : vector<8x256xf32>
    %c0_118 = arith.constant 0 : index
    %c0_119 = arith.constant 0 : index
    %130 = vector.load %arg15[%c0_118, %c0_119] : memref<1x256xf32, #tpu.memory_space<vmem>>, vector<1x256xf32>
    %131 = vector.broadcast %130 : vector<1x256xf32> to vector<8x256xf32>
    %132 = arith.addf %129, %131 : vector<8x256xf32>
    %cst_120 = arith.constant 0.000000e+00 : f32
    %133 = vector.broadcast %cst_120 : f32 to vector<8x256xf32>
    %134 = arith.maximumf %132, %133 : vector<8x256xf32>
    %135 = arith.truncf %134 : vector<8x256xf32> to vector<8x256xbf16>
    %c0_121 = arith.constant 0 : index
    %c0_122 = arith.constant 0 : index
    %136 = vector.load %arg16[%c0_121, %c0_122] : memref<256x128xbf16, #tpu.memory_space<vmem>>, vector<256x128xbf16>
    %cst_123 = arith.constant dense<0.000000e+00> : vector<8x128xf32>
    %137 = tpu.matmul %135, %136, %cst_123 {dimension_numbers = #tpu.dot_dimension_numbers<[1], [0], [0], [1], [0, 0, 1, 1], [], []>} : vector<8x256xbf16>, vector<256x128xbf16>, vector<8x128xf32> -> vector<8x128xf32>
    %c0_124 = arith.constant 0 : index
    %c0_125 = arith.constant 0 : index
    %138 = vector.load %arg17[%c0_124, %c0_125] : memref<1x128xf32, #tpu.memory_space<vmem>>, vector<1x128xf32>
    %139 = vector.broadcast %138 : vector<1x128xf32> to vector<8x128xf32>
    %140 = arith.addf %137, %139 : vector<8x128xf32>
    %cst_126 = arith.constant 0.000000e+00 : f32
    %141 = vector.broadcast %cst_126 : f32 to vector<8x128xf32>
    %142 = arith.maximumf %140, %141 : vector<8x128xf32>
    %143 = arith.truncf %142 : vector<8x128xf32> to vector<8x128xbf16>
    %c0_127 = arith.constant 0 : index
    %c0_128 = arith.constant 0 : index
    %144 = vector.load %arg18[%c0_127, %c0_128] : memref<128x256xbf16, #tpu.memory_space<vmem>>, vector<128x256xbf16>
    %cst_129 = arith.constant dense<0.000000e+00> : vector<8x256xf32>
    %145 = tpu.matmul %143, %144, %cst_129 {dimension_numbers = #tpu.dot_dimension_numbers<[1], [0], [0], [1], [0, 0, 1, 1], [], []>} : vector<8x128xbf16>, vector<128x256xbf16>, vector<8x256xf32> -> vector<8x256xf32>
    %c0_130 = arith.constant 0 : index
    %c0_131 = arith.constant 0 : index
    %146 = vector.load %arg19[%c0_130, %c0_131] : memref<1x256xf32, #tpu.memory_space<vmem>>, vector<1x256xf32>
    %147 = vector.broadcast %146 : vector<1x256xf32> to vector<8x256xf32>
    %148 = arith.addf %145, %147 : vector<8x256xf32>
    %c0_132 = arith.constant 0 : index
    %c0_133 = arith.constant 0 : index
    %149 = vector.load %arg20[%c0_132, %c0_133] : memref<8x256xf32, #tpu.memory_space<vmem>>, vector<8x256xf32>
    tpu.vector_store %arg20[%c0_132, %c0_133], %148 {strides = array<i32>} : memref<8x256xf32, #tpu.memory_space<vmem>>, vector<8x256xf32>,
    return
  }
  func.func @transform_0(%arg0: i32) -> (i32, i32) {
    %c0_i32 = arith.constant 0 : i32
    %c0_i32_0 = arith.constant 0 : i32
    return %arg0, %c0_i32 : i32, i32
  }
  func.func @transform_1(%arg0: i32) -> (i32, i32, i32) {
    %c0_i32 = arith.constant 0 : i32
    %c0_i32_0 = arith.constant 0 : i32
    %c0_i32_1 = arith.constant 0 : i32
    %c0_i32_2 = arith.constant 0 : i32
    return %c0_i32, %c0_i32_0, %c0_i32_1 : i32, i32, i32
  }
  func.func @transform_2(%arg0: i32) -> (i32, i32, i32) {
    %c0_i32 = arith.constant 0 : i32
    %c0_i32_0 = arith.constant 0 : i32
    %c0_i32_1 = arith.constant 0 : i32
    %c0_i32_2 = arith.constant 0 : i32
    return %c0_i32, %c0_i32_0, %c0_i32_1 : i32, i32, i32
  }
  func.func @transform_3(%arg0: i32) -> (i32, i32, i32) {
    %c0_i32 = arith.constant 0 : i32
    %c0_i32_0 = arith.constant 0 : i32
    %c0_i32_1 = arith.constant 0 : i32
    %c0_i32_2 = arith.constant 0 : i32
    return %c0_i32, %c0_i32_0, %c0_i32_1 : i32, i32, i32
  }
  func.func @transform_4(%arg0: i32) -> (i32, i32) {
    %c0_i32 = arith.constant 0 : i32
    %c0_i32_0 = arith.constant 0 : i32
    %c0_i32_1 = arith.constant 0 : i32
    return %c0_i32, %c0_i32_0 : i32, i32
  }
  func.func @transform_5(%arg0: i32) -> (i32, i32) {
    %c0_i32 = arith.constant 0 : i32
    %c0_i32_0 = arith.constant 0 : i32
    %c0_i32_1 = arith.constant 0 : i32
    return %c0_i32, %c0_i32_0 : i32, i32
  }
  func.func @transform_6(%arg0: i32) -> (i32, i32) {
    %c0_i32 = arith.constant 0 : i32
    %c0_i32_0 = arith.constant 0 : i32
    %c0_i32_1 = arith.constant 0 : i32
    return %c0_i32, %c0_i32_0 : i32, i32
  }
  func.func @transform_7(%arg0: i32) -> (i32, i32, i32) {
    %c0_i32 = arith.constant 0 : i32
    %c0_i32_0 = arith.constant 0 : i32
    %c0_i32_1 = arith.constant 0 : i32
    %c0_i32_2 = arith.constant 0 : i32
    return %c0_i32, %c0_i32_0, %c0_i32_1 : i32, i32, i32
  }
  func.func @transform_8(%arg0: i32) -> (i32, i32, i32) {
    %c0_i32 = arith.constant 0 : i32
    %c0_i32_0 = arith.constant 0 : i32
    %c0_i32_1 = arith.constant 0 : i32
    %c0_i32_2 = arith.constant 0 : i32
    return %c0_i32, %c0_i32_0, %c0_i32_1 : i32, i32, i32
  }
  func.func @transform_9(%arg0: i32) -> (i32, i32, i32) {
    %c0_i32 = arith.constant 0 : i32
    %c0_i32_0 = arith.constant 0 : i32
    %c0_i32_1 = arith.constant 0 : i32
    %c0_i32_2 = arith.constant 0 : i32
    return %c0_i32, %c0_i32_0, %c0_i32_1 : i32, i32, i32
  }
  func.func @transform_10(%arg0: i32) -> (i32, i32, i32) {
    %c0_i32 = arith.constant 0 : i32
    %c0_i32_0 = arith.constant 0 : i32
    %c0_i32_1 = arith.constant 0 : i32
    %c0_i32_2 = arith.constant 0 : i32
    return %c0_i32, %c0_i32_0, %c0_i32_1 : i32, i32, i32
  }
  func.func @transform_11(%arg0: i32) -> (i32, i32, i32) {
    %c0_i32 = arith.constant 0 : i32
    %c0_i32_0 = arith.constant 0 : i32
    %c0_i32_1 = arith.constant 0 : i32
    %c0_i32_2 = arith.constant 0 : i32
    return %c0_i32, %c0_i32_0, %c0_i32_1 : i32, i32, i32
  }
  func.func @transform_12(%arg0: i32) -> (i32, i32, i32) {
    %c0_i32 = arith.constant 0 : i32
    %c0_i32_0 = arith.constant 0 : i32
    %c0_i32_1 = arith.constant 0 : i32
    %c0_i32_2 = arith.constant 0 : i32
    return %c0_i32, %c0_i32_0, %c0_i32_1 : i32, i32, i32
  }
  func.func @transform_13(%arg0: i32) -> (i32, i32) {
    %c0_i32 = arith.constant 0 : i32
    %c0_i32_0 = arith.constant 0 : i32
    %c0_i32_1 = arith.constant 0 : i32
    return %c0_i32, %c0_i32_0 : i32, i32
  }
  func.func @transform_14(%arg0: i32) -> (i32, i32) {
    %c0_i32 = arith.constant 0 : i32
    %c0_i32_0 = arith.constant 0 : i32
    %c0_i32_1 = arith.constant 0 : i32
    return %c0_i32, %c0_i32_0 : i32, i32
  }
  func.func @transform_15(%arg0: i32) -> (i32, i32) {
    %c0_i32 = arith.constant 0 : i32
    %c0_i32_0 = arith.constant 0 : i32
    %c0_i32_1 = arith.constant 0 : i32
    return %c0_i32, %c0_i32_0 : i32, i32
  }
  func.func @transform_16(%arg0: i32) -> (i32, i32) {
    %c0_i32 = arith.constant 0 : i32
    %c0_i32_0 = arith.constant 0 : i32
    %c0_i32_1 = arith.constant 0 : i32
    return %c0_i32, %c0_i32_0 : i32, i32
  }
  func.func @transform_17(%arg0: i32) -> (i32, i32) {
    %c0_i32 = arith.constant 0 : i32
    %c0_i32_0 = arith.constant 0 : i32
    %c0_i32_1 = arith.constant 0 : i32
    return %c0_i32, %c0_i32_0 : i32, i32
  }
  func.func @transform_18(%arg0: i32) -> (i32, i32) {
    %c0_i32 = arith.constant 0 : i32
    %c0_i32_0 = arith.constant 0 : i32
    %c0_i32_1 = arith.constant 0 : i32
    return %c0_i32, %c0_i32_0 : i32, i32
  }
  func.func @transform_19(%arg0: i32) -> (i32, i32) {
    %c0_i32 = arith.constant 0 : i32
    %c0_i32_0 = arith.constant 0 : i32
    return %arg0, %c0_i32 : i32, i32
  }
}

</mosaic_0001>

<llo_original>
// kernel: net_forward.1
$region0: #{net_forward.1}
  #allocation0 [shape = 'u32[]', space=smem, size = 0x4, offset = 0x4, fixed_abs, tag = 'smem constant byte address 0x4 - core index']
  #allocation1 [shape = 'u32[144,128]{1,0:T(1,128)}', space=vmem, size = 0x12000, scoped, tag = 'internal scratch']
  #allocation2 [shape = 'f32[112,192]{1,0:T(8,128)}', space=vmem, size = 0x1c000, scoped, tag = 'scratch operand']
  #allocation3 [shape = 'f32[64,192]{1,0:T(8,128)}', space=vmem, size = 0x10000, scoped, tag = 'scratch operand']
  %s0 = inlined_call_operand.vmem [shape: f32[624,24], index: 0, kind: input, shape index: {}]
  %s1 = inlined_call_operand.vmem [shape: bf16[3,24,384], index: 1, kind: input, shape index: {}]
  %s2 = inlined_call_operand.vmem [shape: bf16[3,192,384], index: 2, kind: input, shape index: {}]
  %s3 = inlined_call_operand.vmem [shape: bf16[3,192,192], index: 3, kind: input, shape index: {}]
  %s4 = inlined_call_operand.vmem [shape: f32[1,384], index: 4, kind: input, shape index: {}]
  %s5 = inlined_call_operand.vmem [shape: f32[1,384], index: 5, kind: input, shape index: {}]
  %s6 = inlined_call_operand.vmem [shape: f32[1,192], index: 6, kind: input, shape index: {}]
  %s7 = inlined_call_operand.vmem [shape: bf16[2,112,206], index: 7, kind: input, shape index: {}]
  %s8 = inlined_call_operand.vmem [shape: bf16[2,384,192], index: 8, kind: input, shape index: {}]
  %s9 = inlined_call_operand.vmem [shape: bf16[2,64,110], index: 9, kind: input, shape index: {}]
  %s10 = inlined_call_operand.vmem [shape: bf16[2,384,192], index: 10, kind: input, shape index: {}]
  %s11 = inlined_call_operand.vmem [shape: bf16[2,24,62], index: 11, kind: input, shape index: {}]
  %s12 = inlined_call_operand.vmem [shape: bf16[2,192,96], index: 12, kind: input, shape index: {}]
  %s13 = inlined_call_operand.vmem [shape: bf16[288,256], index: 13, kind: input, shape index: {}]
  %s14 = inlined_call_operand.vmem [shape: f32[1,256], index: 14, kind: input, shape index: {}]
  %s15 = inlined_call_operand.vmem [shape: bf16[256,128], index: 15, kind: input, shape index: {}]
  %s16 = inlined_call_operand.vmem [shape: f32[1,128], index: 16, kind: input, shape index: {}]
  %s17 = inlined_call_operand.vmem [shape: bf16[128,256], index: 17, kind: input, shape index: {}]
  %s18 = inlined_call_operand.vmem [shape: f32[1,256], index: 18, kind: input, shape index: {}]
  %s19 = inlined_call_operand.hbm [shape: f32[24,256], index: 19, kind: output, shape index: {}]
  %s20 = sld [smem:[#allocation0]]
  $region109: #{net_forward.1} parent=0
    _
  %s22 = ssub.s32 1, %s20
  %s23 = scalar_select 0, %s22, %s20
  $region1: #{net_forward.1} parent=0
    #allocation4 [shape = 'u8[16384]{0}', space=vmem, size = 0x4000, scoped, tag = 'output window, operand 0']
    #allocation5 [shape = 's32[2]{0}', space=sflag, size = 0x8, scoped, tag = 'scoped memory for net_forward.1']
    %24 = vsyncpa [#allocation5], 0
    %s25 = scalar_lea.sflag [#allocation5], 1
    %26 = vsyncpa %s25, 0
    loop: start=0, step=1, limit=5
    $region2: #{net_forward.1} parent=1 // loop_pre_header
      _
    $region3: #{net_forward.1} parent=1 // loop_header
      %s28 = sphi 0, %s32
      %p29 = scmp.ge.s32.totalorder %s28, 5
      %s38 = sphi 0, %s40
      %s41 = sphi 0, %s38
      %s42 = sphi 0, %s41
      %s58 = sphi 0, %s42
      %s62 = sphi 0, %s62
      %s64 = sphi 0, %s62
      %s65 = sphi 0, %s64
      %s79 = sphi 0, %s65
      %s83 = sphi 0, %s83
      %s85 = sphi 0, %s83
      %s86 = sphi 0, %s85
      %s100 = sphi 0, %s86
      %s104 = sphi 0, %s104
      %s106 = sphi 0, %s104
      %s107 = sphi 0, %s106
      %s121 = sphi 0, %s107
      %s125 = sphi 0, %s125
      %s127 = sphi 0, %s125
      %s128 = sphi 0, %s127
      %s142 = sphi 0, %s128
      %s146 = sphi 0, %s146
      %s148 = sphi 0, %s146
      %s149 = sphi 0, %s148
      %s163 = sphi 0, %s149
      %s167 = sphi 0, %s167
      %s169 = sphi 0, %s167
      %s170 = sphi 0, %s169
      %s184 = sphi 0, %s170
      %s188 = sphi 0, %s188
      %s190 = sphi 0, %s188
      %s191 = sphi 0, %s190
      %s205 = sphi 0, %s191
      %s209 = sphi 0, %s209
      %s211 = sphi 0, %s209
      %s212 = sphi 0, %s211
      %s226 = sphi 0, %s212
      %s230 = sphi 0, %s230
      %s232 = sphi 0, %s230
      %s233 = sphi 0, %s232
      %s247 = sphi 0, %s233
      %s251 = sphi 0, %s251
      %s253 = sphi 0, %s251
      %s254 = sphi 0, %s253
      %s268 = sphi 0, %s254
      %s272 = sphi 0, %s272
      %s274 = sphi 0, %s272
      %s275 = sphi 0, %s274
      %s289 = sphi 0, %s275
      %s293 = sphi 0, %s293
      %s295 = sphi 0, %s293
      %s296 = sphi 0, %s295
      %s310 = sphi 0, %s296
      %s314 = sphi 0, %s314
      %s316 = sphi 0, %s314
      %s317 = sphi 0, %s316
      %s331 = sphi 0, %s317
      %s335 = sphi 0, %s335
      %s337 = sphi 0, %s335
      %s338 = sphi 0, %s337
      %s352 = sphi 0, %s338
      %s356 = sphi 0, %s356
      %s358 = sphi 0, %s356
      %s359 = sphi 0, %s358
      %s373 = sphi 0, %s359
      %s377 = sphi 0, %s377
      %s379 = sphi 0, %s377
      %s380 = sphi 0, %s379
      %s394 = sphi 0, %s380
      %s398 = sphi 0, %s398
      %s400 = sphi 0, %s398
      %s401 = sphi 0, %s400
      %s415 = sphi 0, %s401
      %s419 = sphi 0, %s419
      %s421 = sphi 0, %s419
      %s422 = sphi 0, %s421
      %s436 = sphi 0, %s422
      %s442 = sphi 0, %s444
      %s445 = sphi 0, %s442
      %s446 = sphi 0, %s445
      %s462 = sphi 0, %s446
    $region4: #{net_forward.1} parent=1 // loop_header_branch
      %31 = sbr.rel (%p29) target = $region8
    $region5: #{net_forward.1} parent=1 // loop_body
      %s33 = ssub.s32 %s28, 1
      %s34 = ssub.s32 %s28, 2
      %s35 = sadd.s32 %s28, 1
      %s36 = ssub.s32 %s28, %s35
      %p37 = scmp.eq.s32.totalorder %s36, 0
      %s39 = sadd.s32 %s38, 1
      %s40 = scalar_select %p37, %s38, %s39
      %p43 = pneg %p37
      %p44 = scmp.eq.s32.totalorder %s28, 2
      %p45 = por %p43, %p44
      %p46 = scmp.ne.s32.totalorder %s38, %s41
      %p47 = scmp.eq.s32.totalorder %s28, 0
      %p48 = por %p46, %p47
      %p49 = scmp.ne.s32.totalorder %s38, %s41
      %p50 = scmp.eq.s32.totalorder %s33, 2
      %p51 = por %p49, %p50
      %p52 = scmp.ne.s32.totalorder %s41, %s42
      %p53 = scmp.eq.s32.totalorder %s33, 0
      %p54 = por %p52, %p53
      %p55 = scmp.ne.s32.totalorder %s41, %s42
      %p56 = scmp.eq.s32.totalorder %s34, 2
      %p57 = por %p55, %p56
      %p59 = scmp.ne.s32.totalorder %s42, %s58
      %p60 = scmp.eq.s32.totalorder %s34, 0
      %p61 = por %p59, %p60
      %s63 = sadd.s32 %s62, 1
      %p66 = scmp.eq.s32.totalorder %s28, 2
      %p67 = scmp.ne.s32.totalorder %s62, %s64
      %p68 = scmp.eq.s32.totalorder %s28, 0
      %p69 = por %p67, %p68
      %p70 = scmp.ne.s32.totalorder %s62, %s64
      %p71 = scmp.eq.s32.totalorder %s33, 2
      %p72 = por %p70, %p71
      %p73 = scmp.ne.s32.totalorder %s64, %s65
      %p74 = scmp.eq.s32.totalorder %s33, 0
      %p75 = por %p73, %p74
      %p76 = scmp.ne.s32.totalorder %s64, %s65
      %p77 = scmp.eq.s32.totalorder %s34, 2
      %p78 = por %p76, %p77
      %p80 = scmp.ne.s32.totalorder %s65, %s79
      %p81 = scmp.eq.s32.totalorder %s34, 0
      %p82 = por %p80, %p81
      %s84 = sadd.s32 %s83, 1
      %p87 = scmp.eq.s32.totalorder %s28, 2
      %p88 = scmp.ne.s32.totalorder %s83, %s85
      %p89 = scmp.eq.s32.totalorder %s28, 0
      %p90 = por %p88, %p89
      %p91 = scmp.ne.s32.totalorder %s83, %s85
      %p92 = scmp.eq.s32.totalorder %s33, 2
      %p93 = por %p91, %p92
      %p94 = scmp.ne.s32.totalorder %s85, %s86
      %p95 = scmp.eq.s32.totalorder %s33, 0
      %p96 = por %p94, %p95
      %p97 = scmp.ne.s32.totalorder %s85, %s86
      %p98 = scmp.eq.s32.totalorder %s34, 2
      %p99 = por %p97, %p98
      %p101 = scmp.ne.s32.totalorder %s86, %s100
      %p102 = scmp.eq.s32.totalorder %s34, 0
      %p103 = por %p101, %p102
      %s105 = sadd.s32 %s104, 1
      %p108 = scmp.eq.s32.totalorder %s28, 2
      %p109 = scmp.ne.s32.totalorder %s104, %s106
      %p110 = scmp.eq.s32.totalorder %s28, 0
      %p111 = por %p109, %p110
      %p112 = scmp.ne.s32.totalorder %s104, %s106
      %p113 = scmp.eq.s32.totalorder %s33, 2
      %p114 = por %p112, %p113
      %p115 = scmp.ne.s32.totalorder %s106, %s107
      %p116 = scmp.eq.s32.totalorder %s33, 0
      %p117 = por %p115, %p116
      %p118 = scmp.ne.s32.totalorder %s106, %s107
      %p119 = scmp.eq.s32.totalorder %s34, 2
      %p120 = por %p118, %p119
      %p122 = scmp.ne.s32.totalorder %s107, %s121
      %p123 = scmp.eq.s32.totalorder %s34, 0
      %p124 = por %p122, %p123
      %s126 = sadd.s32 %s125, 1
      %p129 = scmp.eq.s32.totalorder %s28, 2
      %p130 = scmp.ne.s32.totalorder %s125, %s127
      %p131 = scmp.eq.s32.totalorder %s28, 0
      %p132 = por %p130, %p131
      %p133 = scmp.ne.s32.totalorder %s125, %s127
      %p134 = scmp.eq.s32.totalorder %s33, 2
      %p135 = por %p133, %p134
      %p136 = scmp.ne.s32.totalorder %s127, %s128
      %p137 = scmp.eq.s32.totalorder %s33, 0
      %p138 = por %p136, %p137
      %p139 = scmp.ne.s32.totalorder %s127, %s128
      %p140 = scmp.eq.s32.totalorder %s34, 2
      %p141 = por %p139, %p140
      %p143 = scmp.ne.s32.totalorder %s128, %s142
      %p144 = scmp.eq.s32.totalorder %s34, 0
      %p145 = por %p143, %p144
      %s147 = sadd.s32 %s146, 1
      %p150 = scmp.eq.s32.totalorder %s28, 2
      %p151 = scmp.ne.s32.totalorder %s146, %s148
      %p152 = scmp.eq.s32.totalorder %s28, 0
      %p153 = por %p151, %p152
      %p154 = scmp.ne.s32.totalorder %s146, %s148
      %p155 = scmp.eq.s32.totalorder %s33, 2
      %p156 = por %p154, %p155
      %p157 = scmp.ne.s32.totalorder %s148, %s149
      %p158 = scmp.eq.s32.totalorder %s33, 0
      %p159 = por %p157, %p158
      %p160 = scmp.ne.s32.totalorder %s148, %s149
      %p161 = scmp.eq.s32.totalorder %s34, 2
      %p162 = por %p160, %p161
      %p164 = scmp.ne.s32.totalorder %s149, %s163
      %p165 = scmp.eq.s32.totalorder %s34, 0
      %p166 = por %p164, %p165
      %s168 = sadd.s32 %s167, 1
      %p171 = scmp.eq.s32.totalorder %s28, 2
      %p172 = scmp.ne.s32.totalorder %s167, %s169
      %p173 = scmp.eq.s32.totalorder %s28, 0
      %p174 = por %p172, %p173
      %p175 = scmp.ne.s32.totalorder %s167, %s169
      %p176 = scmp.eq.s32.totalorder %s33, 2
      %p177 = por %p175, %p176
      %p178 = scmp.ne.s32.totalorder %s169, %s170
      %p179 = scmp.eq.s32.totalorder %s33, 0
      %p180 = por %p178, %p179
      %p181 = scmp.ne.s32.totalorder %s169, %s170
      %p182 = scmp.eq.s32.totalorder %s34, 2
      %p183 = por %p181, %p182
      %p185 = scmp.ne.s32.totalorder %s170, %s184
      %p186 = scmp.eq.s32.totalorder %s34, 0
      %p187 = por %p185, %p186
      %s189 = sadd.s32 %s188, 1
      %p192 = scmp.eq.s32.totalorder %s28, 2
      %p193 = scmp.ne.s32.totalorder %s188, %s190
      %p194 = scmp.eq.s32.totalorder %s28, 0
      %p195 = por %p193, %p194
      %p196 = scmp.ne.s32.totalorder %s188, %s190
      %p197 = scmp.eq.s32.totalorder %s33, 2
      %p198 = por %p196, %p197
      %p199 = scmp.ne.s32.totalorder %s190, %s191
      %p200 = scmp.eq.s32.totalorder %s33, 0
      %p201 = por %p199, %p200
      %p202 = scmp.ne.s32.totalorder %s190, %s191
      %p203 = scmp.eq.s32.totalorder %s34, 2
      %p204 = por %p202, %p203
      %p206 = scmp.ne.s32.totalorder %s191, %s205
      %p207 = scmp.eq.s32.totalorder %s34, 0
      %p208 = por %p206, %p207
      %s210 = sadd.s32 %s209, 1
      %p213 = scmp.eq.s32.totalorder %s28, 2
      %p214 = scmp.ne.s32.totalorder %s209, %s211
      %p215 = scmp.eq.s32.totalorder %s28, 0
      %p216 = por %p214, %p215
      %p217 = scmp.ne.s32.totalorder %s209, %s211
      %p218 = scmp.eq.s32.totalorder %s33, 2
      %p219 = por %p217, %p218
      %p220 = scmp.ne.s32.totalorder %s211, %s212
      %p221 = scmp.eq.s32.totalorder %s33, 0
      %p222 = por %p220, %p221
      %p223 = scmp.ne.s32.totalorder %s211, %s212
      %p224 = scmp.eq.s32.totalorder %s34, 2
      %p225 = por %p223, %p224
      %p227 = scmp.ne.s32.totalorder %s212, %s226
      %p228 = scmp.eq.s32.totalorder %s34, 0
      %p229 = por %p227, %p228
      %s231 = sadd.s32 %s230, 1
      %p234 = scmp.eq.s32.totalorder %s28, 2
      %p235 = scmp.ne.s32.totalorder %s230, %s232
      %p236 = scmp.eq.s32.totalorder %s28, 0
      %p237 = por %p235, %p236
      %p238 = scmp.ne.s32.totalorder %s230, %s232
      %p239 = scmp.eq.s32.totalorder %s33, 2
      %p240 = por %p238, %p239
      %p241 = scmp.ne.s32.totalorder %s232, %s233
      %p242 = scmp.eq.s32.totalorder %s33, 0
      %p243 = por %p241, %p242
      %p244 = scmp.ne.s32.totalorder %s232, %s233
      %p245 = scmp.eq.s32.totalorder %s34, 2
      %p246 = por %p244, %p245
      %p248 = scmp.ne.s32.totalorder %s233, %s247
      %p249 = scmp.eq.s32.totalorder %s34, 0
      %p250 = por %p248, %p249
      %s252 = sadd.s32 %s251, 1
      %p255 = scmp.eq.s32.totalorder %s28, 2
      %p256 = scmp.ne.s32.totalorder %s251, %s253
      %p257 = scmp.eq.s32.totalorder %s28, 0
      %p258 = por %p256, %p257
      %p259 = scmp.ne.s32.totalorder %s251, %s253
      %p260 = scmp.eq.s32.totalorder %s33, 2
      %p261 = por %p259, %p260
      %p262 = scmp.ne.s32.totalorder %s253, %s254
      %p263 = scmp.eq.s32.totalorder %s33, 0
      %p264 = por %p262, %p263
      %p265 = scmp.ne.s32.totalorder %s253, %s254
      %p266 = scmp.eq.s32.totalorder %s34, 2
      %p267 = por %p265, %p266
      %p269 = scmp.ne.s32.totalorder %s254, %s268
      %p270 = scmp.eq.s32.totalorder %s34, 0
      %p271 = por %p269, %p270
      %s273 = sadd.s32 %s272, 1
      %p276 = scmp.eq.s32.totalorder %s28, 2
      %p277 = scmp.ne.s32.totalorder %s272, %s274
      %p278 = scmp.eq.s32.totalorder %s28, 0
      %p279 = por %p277, %p278
      %p280 = scmp.ne.s32.totalorder %s272, %s274
      %p281 = scmp.eq.s32.totalorder %s33, 2
      %p282 = por %p280, %p281
      %p283 = scmp.ne.s32.totalorder %s274, %s275
      %p284 = scmp.eq.s32.totalorder %s33, 0
      %p285 = por %p283, %p284
      %p286 = scmp.ne.s32.totalorder %s274, %s275
      %p287 = scmp.eq.s32.totalorder %s34, 2
      %p288 = por %p286, %p287
      %p290 = scmp.ne.s32.totalorder %s275, %s289
      %p291 = scmp.eq.s32.totalorder %s34, 0
      %p292 = por %p290, %p291
      %s294 = sadd.s32 %s293, 1
      %p297 = scmp.eq.s32.totalorder %s28, 2
      %p298 = scmp.ne.s32.totalorder %s293, %s295
      %p299 = scmp.eq.s32.totalorder %s28, 0
      %p300 = por %p298, %p299
      %p301 = scmp.ne.s32.totalorder %s293, %s295
      %p302 = scmp.eq.s32.totalorder %s33, 2
      %p303 = por %p301, %p302
      %p304 = scmp.ne.s32.totalorder %s295, %s296
      %p305 = scmp.eq.s32.totalorder %s33, 0
      %p306 = por %p304, %p305
      %p307 = scmp.ne.s32.totalorder %s295, %s296
      %p308 = scmp.eq.s32.totalorder %s34, 2
      %p309 = por %p307, %p308
      %p311 = scmp.ne.s32.totalorder %s296, %s310
      %p312 = scmp.eq.s32.totalorder %s34, 0
      %p313 = por %p311, %p312
      %s315 = sadd.s32 %s314, 1
      %p318 = scmp.eq.s32.totalorder %s28, 2
      %p319 = scmp.ne.s32.totalorder %s314, %s316
      %p320 = scmp.eq.s32.totalorder %s28, 0
      %p321 = por %p319, %p320
      %p322 = scmp.ne.s32.totalorder %s314, %s316
      %p323 = scmp.eq.s32.totalorder %s33, 2
      %p324 = por %p322, %p323
      %p325 = scmp.ne.s32.totalorder %s316, %s317
      %p326 = scmp.eq.s32.totalorder %s33, 0
      %p327 = por %p325, %p326
      %p328 = scmp.ne.s32.totalorder %s316, %s317
      %p329 = scmp.eq.s32.totalorder %s34, 2
      %p330 = por %p328, %p329
      %p332 = scmp.ne.s32.totalorder %s317, %s331
      %p333 = scmp.eq.s32.totalorder %s34, 0
      %p334 = por %p332, %p333
      %s336 = sadd.s32 %s335, 1
      %p339 = scmp.eq.s32.totalorder %s28, 2
      %p340 = scmp.ne.s32.totalorder %s335, %s337
      %p341 = scmp.eq.s32.totalorder %s28, 0
      %p342 = por %p340, %p341
      %p343 = scmp.ne.s32.totalorder %s335, %s337
      %p344 = scmp.eq.s32.totalorder %s33, 2
      %p345 = por %p343, %p344
      %p346 = scmp.ne.s32.totalorder %s337, %s338
      %p347 = scmp.eq.s32.totalorder %s33, 0
      %p348 = por %p346, %p347
      %p349 = scmp.ne.s32.totalorder %s337, %s338
      %p350 = scmp.eq.s32.totalorder %s34, 2
      %p351 = por %p349, %p350
      %p353 = scmp.ne.s32.totalorder %s338, %s352
      %p354 = scmp.eq.s32.totalorder %s34, 0
      %p355 = por %p353, %p354
      %s357 = sadd.s32 %s356, 1
      %p360 = scmp.eq.s32.totalorder %s28, 2
      %p361 = scmp.ne.s32.totalorder %s356, %s358
      %p362 = scmp.eq.s32.totalorder %s28, 0
      %p363 = por %p361, %p362
      %p364 = scmp.ne.s32.totalorder %s356, %s358
      %p365 = scmp.eq.s32.totalorder %s33, 2
      %p366 = por %p364, %p365
      %p367 = scmp.ne.s32.totalorder %s358, %s359
      %p368 = scmp.eq.s32.totalorder %s33, 0
      %p369 = por %p367, %p368
      %p370 = scmp.ne.s32.totalorder %s358, %s359
      %p371 = scmp.eq.s32.totalorder %s34, 2
      %p372 = por %p370, %p371
      %p374 = scmp.ne.s32.totalorder %s359, %s373
      %p375 = scmp.eq.s32.totalorder %s34, 0
      %p376 = por %p374, %p375
      %s378 = sadd.s32 %s377, 1
      %p381 = scmp.eq.s32.totalorder %s28, 2
      %p382 = scmp.ne.s32.totalorder %s377, %s379
      %p383 = scmp.eq.s32.totalorder %s28, 0
      %p384 = por %p382, %p383
      %p385 = scmp.ne.s32.totalorder %s377, %s379
      %p386 = scmp.eq.s32.totalorder %s33, 2
      %p387 = por %p385, %p386
      %p388 = scmp.ne.s32.totalorder %s379, %s380
      %p389 = scmp.eq.s32.totalorder %s33, 0
      %p390 = por %p388, %p389
      %p391 = scmp.ne.s32.totalorder %s379, %s380
      %p392 = scmp.eq.s32.totalorder %s34, 2
      %p393 = por %p391, %p392
      %p395 = scmp.ne.s32.totalorder %s380, %s394
      %p396 = scmp.eq.s32.totalorder %s34, 0
      %p397 = por %p395, %p396
      %s399 = sadd.s32 %s398, 1
      %p402 = scmp.eq.s32.totalorder %s28, 2
      %p403 = scmp.ne.s32.totalorder %s398, %s400
      %p404 = scmp.eq.s32.totalorder %s28, 0
      %p405 = por %p403, %p404
      %p406 = scmp.ne.s32.totalorder %s398, %s400
      %p407 = scmp.eq.s32.totalorder %s33, 2
      %p408 = por %p406, %p407
      %p409 = scmp.ne.s32.totalorder %s400, %s401
      %p410 = scmp.eq.s32.totalorder %s33, 0
      %p411 = por %p409, %p410
      %p412 = scmp.ne.s32.totalorder %s400, %s401
      %p413 = scmp.eq.s32.totalorder %s34, 2
      %p414 = por %p412, %p413
      %p416 = scmp.ne.s32.totalorder %s401, %s415
      %p417 = scmp.eq.s32.totalorder %s34, 0
      %p418 = por %p416, %p417
      %s420 = sadd.s32 %s419, 1
      %p423 = scmp.eq.s32.totalorder %s28, 2
      %p424 = scmp.ne.s32.totalorder %s419, %s421
      %p425 = scmp.eq.s32.totalorder %s28, 0
      %p426 = por %p424, %p425
      %p427 = scmp.ne.s32.totalorder %s419, %s421
      %p428 = scmp.eq.s32.totalorder %s33, 2
      %p429 = por %p427, %p428
      %p430 = scmp.ne.s32.totalorder %s421, %s422
      %p431 = scmp.eq.s32.totalorder %s33, 0
      %p432 = por %p430, %p431
      %p433 = scmp.ne.s32.totalorder %s421, %s422
      %p434 = scmp.eq.s32.totalorder %s34, 2
      %p435 = por %p433, %p434
      %p437 = scmp.ne.s32.totalorder %s422, %s436
      %p438 = scmp.eq.s32.totalorder %s34, 0
      %p439 = por %p437, %p438
      %s440 = ssub.s32 %s28, %s35
      %p441 = scmp.eq.s32.totalorder %s440, 0
      %s443 = sadd.s32 %s442, 1
      %s444 = scalar_select %p441, %s442, %s443
      %p447 = pneg %p441
      %p448 = scmp.eq.s32.totalorder %s28, 2
      %p449 = por %p447, %p448
      %p450 = scmp.ne.s32.totalorder %s442, %s445
      %p451 = scmp.eq.s32.totalorder %s28, 0
      %p452 = por %p450, %p451
      %p453 = scmp.ne.s32.totalorder %s442, %s445
      %p454 = scmp.eq.s32.totalorder %s33, 2
      %p455 = por %p453, %p454
      %p456 = scmp.ne.s32.totalorder %s445, %s446
      %p457 = scmp.eq.s32.totalorder %s33, 0
      %p458 = por %p456, %p457
      %p459 = scmp.ne.s32.totalorder %s445, %s446
      %p460 = scmp.eq.s32.totalorder %s34, 2
      %p461 = por %p459, %p460
      %p463 = scmp.ne.s32.totalorder %s446, %s462
      %p464 = scmp.eq.s32.totalorder %s34, 0
      %p465 = por %p463, %p464
      %p466 = scmp.le.s32.totalorder 1, %s28
      %p467 = scmp.lt.s32.totalorder %s28, 4
      %p468 = pnand %p466, %p467
      %p469 = pneg %p468
      // Predicated region
      $region9: #{net_forward.1} parent=5 // pred_check
        _
      $region10: #{net_forward.1} parent=5 // pred_check_branch
        %471 = sbr.rel (%p468) target = $region12
      $region11: #{net_forward.1} parent=5 // pred_region
        %s472 = ssub.s32 %s28, 1
        // Predicated region
        $region13: #{net_forward.1} parent=11 // pred_check
          %p473 = pneg %p75
        $region14: #{net_forward.1} parent=11 // pred_check_branch
          %475 = sbr.rel (%p473) target = $region16
        $region15: #{net_forward.1} parent=11 // pred_region
          _
        $region16: #{net_forward.1} parent=11 // pred_fallthru
          _
        // Predicated region
        $region17: #{net_forward.1} parent=11 // pred_check
          %p476 = pneg %p96
        $region18: #{net_forward.1} parent=11 // pred_check_branch
          %478 = sbr.rel (%p476) target = $region20
        $region19: #{net_forward.1} parent=11 // pred_region
          _
        $region20: #{net_forward.1} parent=11 // pred_fallthru
          _
        // Predicated region
        $region21: #{net_forward.1} parent=11 // pred_check
          %p479 = pneg %p117
        $region22: #{net_forward.1} parent=11 // pred_check_branch
          %481 = sbr.rel (%p479) target = $region24
        $region23: #{net_forward.1} parent=11 // pred_region
          _
        $region24: #{net_forward.1} parent=11 // pred_fallthru
          _
        // Predicated region
        $region25: #{net_forward.1} parent=11 // pred_check
          %p482 = pneg %p138
        $region26: #{net_forward.1} parent=11 // pred_check_branch
          %484 = sbr.rel (%p482) target = $region28
        $region27: #{net_forward.1} parent=11 // pred_region
          _
        $region28: #{net_forward.1} parent=11 // pred_fallthru
          _
        // Predicated region
        $region29: #{net_forward.1} parent=11 // pred_check
          %p485 = pneg %p159
        $region30: #{net_forward.1} parent=11 // pred_check_branch
          %487 = sbr.rel (%p485) target = $region32
        $region31: #{net_forward.1} parent=11 // pred_region
          _
        $region32: #{net_forward.1} parent=11 // pred_fallthru
          _
        // Predicated region
        $region33: #{net_forward.1} parent=11 // pred_check
          %p488 = pneg %p180
        $region34: #{net_forward.1} parent=11 // pred_check_branch
          %490 = sbr.rel (%p488) target = $region36
        $region35: #{net_forward.1} parent=11 // pred_region
          _
        $region36: #{net_forward.1} parent=11 // pred_fallthru
          _
        // Predicated region
        $region37: #{net_forward.1} parent=11 // pred_check
          %p491 = pneg %p201
        $region38: #{net_forward.1} parent=11 // pred_check_branch
          %493 = sbr.rel (%p491) target = $region40
        $region39: #{net_forward.1} parent=11 // pred_region
          _
        $region40: #{net_forward.1} parent=11 // pred_fallthru
          _
        // Predicated region
        $region41: #{net_forward.1} parent=11 // pred_check
          %p494 = pneg %p222
        $region42: #{net_forward.1} parent=11 // pred_check_branch
          %496 = sbr.rel (%p494) target = $region44
        $region43: #{net_forward.1} parent=11 // pred_region
          _
        $region44: #{net_forward.1} parent=11 // pred_fallthru
          _
        // Predicated region
        $region45: #{net_forward.1} parent=11 // pred_check
          %p497 = pneg %p243
        $region46: #{net_forward.1} parent=11 // pred_check_branch
          %499 = sbr.rel (%p497) target = $region48
        $region47: #{net_forward.1} parent=11 // pred_region
          _
        $region48: #{net_forward.1} parent=11 // pred_fallthru
          _
        // Predicated region
        $region49: #{net_forward.1} parent=11 // pred_check
          %p500 = pneg %p264
        $region50: #{net_forward.1} parent=11 // pred_check_branch
          %502 = sbr.rel (%p500) target = $region52
        $region51: #{net_forward.1} parent=11 // pred_region
          _
        $region52: #{net_forward.1} parent=11 // pred_fallthru
          _
        // Predicated region
        $region53: #{net_forward.1} parent=11 // pred_check
          %p503 = pneg %p285
        $region54: #{net_forward.1} parent=11 // pred_check_branch
          %505 = sbr.rel (%p503) target = $region56
        $region55: #{net_forward.1} parent=11 // pred_region
          _
        $region56: #{net_forward.1} parent=11 // pred_fallthru
          _
        // Predicated region
        $region57: #{net_forward.1} parent=11 // pred_check
          %p506 = pneg %p306
        $region58: #{net_forward.1} parent=11 // pred_check_branch
          %508 = sbr.rel (%p506) target = $region60
        $region59: #{net_forward.1} parent=11 // pred_region
          _
        $region60: #{net_forward.1} parent=11 // pred_fallthru
          _
        // Predicated region
        $region61: #{net_forward.1} parent=11 // pred_check
          %p509 = pneg %p327
        $region62: #{net_forward.1} parent=11 // pred_check_branch
          %511 = sbr.rel (%p509) target = $region64
        $region63: #{net_forward.1} parent=11 // pred_region
          _
        $region64: #{net_forward.1} parent=11 // pred_fallthru
          _
        // Predicated region
        $region65: #{net_forward.1} parent=11 // pred_check
          %p512 = pneg %p348
        $region66: #{net_forward.1} parent=11 // pred_check_branch
          %514 = sbr.rel (%p512) target = $region68
        $region67: #{net_forward.1} parent=11 // pred_region
          _
        $region68: #{net_forward.1} parent=11 // pred_fallthru
          _
        // Predicated region
        $region69: #{net_forward.1} parent=11 // pred_check
          %p515 = pneg %p369
        $region70: #{net_forward.1} parent=11 // pred_check_branch
          %517 = sbr.rel (%p515) target = $region72
        $region71: #{net_forward.1} parent=11 // pred_region
          _
        $region72: #{net_forward.1} parent=11 // pred_fallthru
          _
        // Predicated region
        $region73: #{net_forward.1} parent=11 // pred_check
          %p518 = pneg %p390
        $region74: #{net_forward.1} parent=11 // pred_check_branch
          %520 = sbr.rel (%p518) target = $region76
        $region75: #{net_forward.1} parent=11 // pred_region
          _
        $region76: #{net_forward.1} parent=11 // pred_fallthru
          _
        // Predicated region
        $region77: #{net_forward.1} parent=11 // pred_check
          %p521 = pneg %p411
        $region78: #{net_forward.1} parent=11 // pred_check_branch
          %523 = sbr.rel (%p521) target = $region80
        $region79: #{net_forward.1} parent=11 // pred_region
          _
        $region80: #{net_forward.1} parent=11 // pred_fallthru
          _
        // Predicated region
        $region81: #{net_forward.1} parent=11 // pred_check
          %p524 = pneg %p432
        $region82: #{net_forward.1} parent=11 // pred_check_branch
          %526 = sbr.rel (%p524) target = $region84
        $region83: #{net_forward.1} parent=11 // pred_region
          _
        $region84: #{net_forward.1} parent=11 // pred_fallthru
          _
      $region12: #{net_forward.1} parent=5 // pred_fallthru
        _
      %p527 = scmp.lt.s32.totalorder %s28, 3
      // Predicated region
      $region85: #{net_forward.1} parent=5 // pred_check
        %p528 = pneg %p527
      $region86: #{net_forward.1} parent=5 // pred_check_branch
        %530 = sbr.rel (%p528) target = $region88
      $region87: #{net_forward.1} parent=5 // pred_region
        // Predicated region
        $region89: #{net_forward.1} parent=87 // pred_check
          %p531 = pneg %p48
        $region90: #{net_forward.1} parent=87 // pred_check_branch
          %533 = sbr.rel (%p531) target = $region92
        $region91: #{net_forward.1} parent=87 // pred_region
          %s534 = smul.u32 26, %s28
          %p535 = scmp.lt.s32.totalorder %s534, 77
          %s536 = scalar_select %p535, %s534, 77
          %s537 = smul.addr %s536, 8
          %s538 = scalar_lea.vmem %s0, %s537
          %s539 = smul.u32 26, %s28
        $region92: #{net_forward.1} parent=87 // pred_fallthru
          _
      $region88: #{net_forward.1} parent=5 // pred_fallthru
        _
      %p540 = scmp.le.s32.totalorder 1, %s28
      %p541 = scmp.lt.s32.totalorder %s28, 4
      %p542 = pnand %p540, %p541
      %p543 = pneg %p542
      // Predicated region
      $region93: #{net_forward.1} parent=5 // pred_check
        _
      $region94: #{net_forward.1} parent=5 // pred_check_branch
        %545 = sbr.rel (%p542) target = $region96
      $region95: #{net_forward.1} parent=5 // pred_region
        %s546 = ssub.s32 %s28, 1
        %s547 = smul.u32 26, %s33
        %p548 = scmp.lt.s32.totalorder %s547, 77
        %s549 = scalar_select %p548, %s547, 77
        %s550 = smul.addr %s549, 8
        %s551 = scalar_lea.vmem %s0, %s550
        %p552 = pneg %p54
        %p553 = pneg %p51
        %p554 = pneg %p75
        %p555 = pneg %p72
        %p556 = pneg %p96
        %p557 = pneg %p93
        %p558 = pneg %p117
        %p559 = pneg %p114
        %p560 = pneg %p138
        %p561 = pneg %p135
        %p562 = pneg %p159
        %p563 = pneg %p156
        %p564 = pneg %p180
        %p565 = pneg %p177
        %p566 = pneg %p201
        %p567 = pneg %p198
        %p568 = pneg %p222
        %p569 = pneg %p219
        %p570 = pneg %p243
        %p571 = pneg %p240
        %p572 = pneg %p264
        %p573 = pneg %p261
        %p574 = pneg %p285
        %p575 = pneg %p282
        %p576 = pneg %p306
        %p577 = pneg %p303
        %p578 = pneg %p327
        %p579 = pneg %p324
        %p580 = pneg %p348
        %p581 = pneg %p345
        %p582 = pneg %p369
        %p583 = pneg %p366
        %p584 = pneg %p390
        %p585 = pneg %p387
        %p586 = pneg %p411
        %p587 = pneg %p408
        %p588 = pneg %p432
        %p589 = pneg %p429
        %p590 = pneg %p458
        %p591 = pneg %p455
        %s592 = sand.u32 %s445, 1
        %s593 = scalar_lea.sflag [#allocation5], %s592
        %s594 = sand.u32 %s445, 1
        %s595 = smul.addr %s594, 16
        %s596 = scalar_lea.vmem [#allocation4], %s595
        %s597 = smul.u32 26, %s33
        %p598 = scmp.lt.s32.totalorder %s597, 77
        %s599 = scalar_select %p598, %s597, 77
        %s600 = smul.addr %s599, 8
        %s601 = scalar_lea.vmem %s0, %s600
        %s602 = smul.u32 26, %s33
        %v604 = vld [vmem:[%s601] sm:$0xff]
        %v605 = vld [vmem:[%s601 + $0x8] sm:$0xff]
        %v606 = vld [vmem:[%s601 + $0x10] sm:$0xff]
        %v607 = vld [vmem:[%s601 + $0x18] sm:$0xff]
        %v608 = vld [vmem:[%s601 + $0x20] sm:$0xff]
        %v609 = vld [vmem:[%s601 + $0x28] sm:$0xff]
        %v610 = vld [vmem:[%s601 + $0x30] sm:$0xff]
        %v611 = vld [vmem:[%s601 + $0x38] sm:$0xff]
        %v612 = vld [vmem:[%s601 + $0x40] sm:$0xff]
        %v613 = vld [vmem:[%s601 + $0x48] sm:$0xff]
        %v614 = vld [vmem:[%s601 + $0x50] sm:$0xff]
        %v615 = vld [vmem:[%s601 + $0x58] sm:$0xff]
        %v616 = vld [vmem:[%s601 + $0x60] sm:$0xff]
        %v617 = vld [vmem:[%s601 + $0x68] sm:$0xff]
        %v618 = vld [vmem:[%s601 + $0x70] sm:$0xff]
        %v619 = vld [vmem:[%s601 + $0x78] sm:$0xff]
        %v620 = vld [vmem:[%s601 + $0x80] sm:$0xff]
        %v621 = vld [vmem:[%s601 + $0x88] sm:$0xff]
        %v622 = vld [vmem:[%s601 + $0x90] sm:$0xff]
        %v623 = vld [vmem:[%s601 + $0x98] sm:$0xff]
        %v624 = vld [vmem:[%s601 + $0xa0] sm:$0xff]
        %v625 = vld [vmem:[%s601 + $0xa8] sm:$0xff]
        %v626 = vld [vmem:[%s601 + $0xb0] sm:$0xff]
        %v627 = vld [vmem:[%s601 + $0xb8] sm:$0xff]
        %v628 = vld [vmem:[%s601 + $0xc0] sm:$0xff]
        %v629 = vld [vmem:[%s601 + $0xc8] sm:$0x3f]
        %v630 = vpack.c.bf16 %v605, %v604
        %v631 = vpack.c.bf16 %v607, %v606
        %v632 = vpack.c.bf16 %v609, %v608
        %v633 = vpack.c.bf16 %v611, %v610
        %v634 = vpack.c.bf16 %v613, %v612
        %v635 = vpack.c.bf16 %v615, %v614
        %v636 = vpack.c.bf16 %v617, %v616
        %v637 = vpack.c.bf16 %v619, %v618
        %v638 = vpack.c.bf16 %v621, %v620
        %v639 = vpack.c.bf16 %v623, %v622
        %v640 = vpack.c.bf16 %v625, %v624
        %v641 = vpack.c.bf16 %v627, %v626
        %v642 = vpack.c.bf16 %v629, %v628
        %v643 = vld [vmem:[%s1] sm:$0xff]
        %v644 = vld [vmem:[%s1 + $0x8] sm:$0xf]
        %v645 = vld [vmem:[%s1 + $0xc] sm:$0xff]
        %v646 = vld [vmem:[%s1 + $0x14] sm:$0xf]
        %v647 = vld [vmem:[%s1 + $0x18] sm:$0xff]
        %v648 = vld [vmem:[%s1 + $0x20] sm:$0xf]
        %v649 = vld [vmem:[%s601 + $0x1] sm:$0xff]
        %v650 = vld [vmem:[%s601 + $0x9] sm:$0xff]
        %v651 = vld [vmem:[%s601 + $0x11] sm:$0xff]
        %v652 = vld [vmem:[%s601 + $0x19] sm:$0xff]
        %v653 = vld [vmem:[%s601 + $0x21] sm:$0xff]
        %v654 = vld [vmem:[%s601 + $0x29] sm:$0xff]
        %v655 = vld [vmem:[%s601 + $0x31] sm:$0xff]
        %v656 = vld [vmem:[%s601 + $0x39] sm:$0xff]
        %v657 = vld [vmem:[%s601 + $0x41] sm:$0xff]
        %v658 = vld [vmem:[%s601 + $0x49] sm:$0xff]
        %v659 = vld [vmem:[%s601 + $0x51] sm:$0xff]
        %v660 = vld [vmem:[%s601 + $0x59] sm:$0xff]
        %v661 = vld [vmem:[%s601 + $0x61] sm:$0xff]
        %v662 = vld [vmem:[%s601 + $0x69] sm:$0xff]
        %v663 = vld [vmem:[%s601 + $0x71] sm:$0xff]
        %v664 = vld [vmem:[%s601 + $0x79] sm:$0xff]
        %v665 = vld [vmem:[%s601 + $0x81] sm:$0xff]
        %v666 = vld [vmem:[%s601 + $0x89] sm:$0xff]
        %v667 = vld [vmem:[%s601 + $0x91] sm:$0xff]
        %v668 = vld [vmem:[%s601 + $0x99] sm:$0xff]
        %v669 = vld [vmem:[%s601 + $0xa1] sm:$0xff]
        %v670 = vld [vmem:[%s601 + $0xa9] sm:$0xff]
        %v671 = vld [vmem:[%s601 + $0xb1] sm:$0xff]
        %v672 = vld [vmem:[%s601 + $0xb9] sm:$0xff]
        %v673 = vld [vmem:[%s601 + $0xc1] sm:$0xff]
        %v674 = vld [vmem:[%s601 + $0xc9] sm:$0x3f]
        %v675 = vpack.c.bf16 %v650, %v649
        %v676 = vpack.c.bf16 %v652, %v651
        %v677 = vpack.c.bf16 %v654, %v653
        %v678 = vpack.c.bf16 %v656, %v655
        %v679 = vpack.c.bf16 %v658, %v657
        %v680 = vpack.c.bf16 %v660, %v659
        %v681 = vpack.c.bf16 %v662, %v661
        %v682 = vpack.c.bf16 %v664, %v663
        %v683 = vpack.c.bf16 %v666, %v665
        %v684 = vpack.c.bf16 %v668, %v667
        %v685 = vpack.c.bf16 %v670, %v669
        %v686 = vpack.c.bf16 %v672, %v671
        %v687 = vpack.c.bf16 %v674, %v673
        %s688 = scalar_lea.vmem %s1, 36
        %v689 = vld [vmem:[%s688] sm:$0xff]
        %v690 = vld [vmem:[%s688 + $0x8] sm:$0xf]
        %v691 = vld [vmem:[%s688 + $0xc] sm:$0xff]
        %v692 = vld [vmem:[%s688 + $0x14] sm:$0xf]
        %v693 = vld [vmem:[%s688 + $0x18] sm:$0xff]
        %v694 = vld [vmem:[%s688 + $0x20] sm:$0xf]
        %v701 = vunpack.c.l.b16 %v689
        %v702 = vunpack.c.h.b16 %v689
        %v703 = vunpack.c.l.b16 %v690
        %v704 = vunpack.c.l.b16 %v691
        %v705 = vunpack.c.h.b16 %v691
        %v706 = vunpack.c.l.b16 %v692
        %v707 = vunpack.c.l.b16 %v693
        %v708 = vunpack.c.h.b16 %v693
        %v709 = vunpack.c.l.b16 %v694
        %v710 = vpack.c.b16 %v704, %v701
        %v711 = vpack.c.b16 %v705, %v702
        %v712 = vpack.c.b16 %v706, %v703
        %v713 = vpack.c.b16 %v707, %v707
        %v714 = vpack.c.b16 %v708, %v708
        %v715 = vpack.c.b16 %v709, %v709
        %vm719 = vcmask 195584
        %v721 = vsel %vm719, %v675, 0
        %v724 = vsel %vm719, %v676, 0
        %v727 = vsel %vm719, %v677, 0
        %v730 = vsel %vm719, %v678, 0
        %v733 = vsel %vm719, %v679, 0
        %v736 = vsel %vm719, %v680, 0
        %v739 = vsel %vm719, %v681, 0
        %v742 = vsel %vm719, %v682, 0
        %v745 = vsel %vm719, %v683, 0
        %v748 = vsel %vm719, %v684, 0
        %v751 = vsel %vm719, %v685, 0
        %v754 = vsel %vm719, %v686, 0
        %v757 = vsel %vm719, %v687, 0
        %vm759 = vcmask 1043456
        %v761 = vsel %vm759, %v713, 0
        %v764 = vsel %vm759, %v714, 0
        %v767 = vsel %vm759, %v715, 0
        %769 = vmatprep.subr.bf16.mxu0 0
        %770 = vmatpush1.bf16.msra.mxu0 0
        %771 = vmatprep.subr.bf16.mxu0 0
        %772 = vmatpush1.bf16.msra.mxu0 0
        %773 = vmatprep.subr.bf16.mxu0 0
        %774 = vmatpush1.bf16.msra.mxu0 0
        %775 = vmatprep.subr.bf16.mxu0 0
        %776 = vmatpush1.bf16.msra.mxu0 0
        %777 = vmatprep.subr.bf16.mxu0 0
        %778 = vmatpush1.bf16.msra.mxu0 0
        %779 = vmatprep.subr.bf16.mxu0 0
        %780 = vmatpush1.bf16.msra.mxu0 0
        %781 = vmatprep.subr.bf16.mxu0 %v764
        %782 = vmatpush1.bf16.msra.mxu0 %v761
        %783 = vmatprep.subr.bf16.mxu0 %v711
        %784 = vmatpush1.bf16.msra.mxu0 %v710
        %785 = vmatprep.subr.bf16.mxu0 0
        %786 = vmatpush2.bf16.msra.mxu0 0
        %787 = vmatprep.subr.bf16.mxu0 0
        %788 = vmatpush2.bf16.msra.mxu0 0
        %789 = vmatprep.subr.bf16.mxu0 0
        %790 = vmatpush2.bf16.msra.mxu0 0
        %791 = vmatprep.subr.bf16.mxu0 0
        %792 = vmatpush2.bf16.msra.mxu0 0
        %793 = vmatprep.subr.bf16.mxu0 0
        %794 = vmatpush2.bf16.msra.mxu0 0
        %795 = vmatprep.subr.bf16.mxu0 0
        %796 = vmatpush2.bf16.msra.mxu0 0
        %797 = vmatprep.subr.bf16.mxu0 0
        %798 = vmatpush2.bf16.msra.mxu0 0
        %799 = vmatprep.subr.bf16.mxu0 0
        %800 = vmatpush2.bf16.msra.mxu0 0
        %801 = vmatprep.mubr.bf16.mxu0 0
        %802 = vmatmul.mubr.bf16.gmra.mxu0 %v721
        %v803 = vpop.f32.mrf.mxu0
        %v804 = vadd.f32 0.0, %v803
        %v805 = vpop.f32.mrf.mxu0
        %v806 = vadd.f32 0.0, %v805
        %v807 = vpop.f32.mrf.mxu0
        %v808 = vadd.f32 0.0, %v807
        %v809 = vpop.f32.mrf.mxu0
        %v810 = vadd.f32 0.0, %v809
        %811 = vmatprep.mubr.bf16.mxu0 0
        %812 = vmatmul.mubr.bf16.gmra.mxu0 %v724
        %v813 = vpop.f32.mrf.mxu0
        %v814 = vadd.f32 0.0, %v813
        %v815 = vpop.f32.mrf.mxu0
        %v816 = vadd.f32 0.0, %v815
        %v817 = vpop.f32.mrf.mxu0
        %v818 = vadd.f32 0.0, %v817
        %v819 = vpop.f32.mrf.mxu0
        %v820 = vadd.f32 0.0, %v819
        %821 = vmatprep.mubr.bf16.mxu0 0
        %822 = vmatmul.mubr.bf16.gmra.mxu0 %v727
        %v823 = vpop.f32.mrf.mxu0
        %v824 = vadd.f32 0.0, %v823
        %v825 = vpop.f32.mrf.mxu0
        %v826 = vadd.f32 0.0, %v825
        %v827 = vpop.f32.mrf.mxu0
        %v828 = vadd.f32 0.0, %v827
        %v829 = vpop.f32.mrf.mxu0
        %v830 = vadd.f32 0.0, %v829
        %831 = vmatprep.mubr.bf16.mxu0 0
        %832 = vmatmul.mubr.bf16.gmra.mxu0 %v730
        %v833 = vpop.f32.mrf.mxu0
        %v834 = vadd.f32 0.0, %v833
        %v835 = vpop.f32.mrf.mxu0
        %v836 = vadd.f32 0.0, %v835
        %v837 = vpop.f32.mrf.mxu0
        %v838 = vadd.f32 0.0, %v837
        %v839 = vpop.f32.mrf.mxu0
        %v840 = vadd.f32 0.0, %v839
        %841 = vmatprep.mubr.bf16.mxu0 0
        %842 = vmatmul.mubr.bf16.gmra.mxu0 %v733
        %v843 = vpop.f32.mrf.mxu0
        %v844 = vadd.f32 0.0, %v843
        %v845 = vpop.f32.mrf.mxu0
        %v846 = vadd.f32 0.0, %v845
        %v847 = vpop.f32.mrf.mxu0
        %v848 = vadd.f32 0.0, %v847
        %v849 = vpop.f32.mrf.mxu0
        %v850 = vadd.f32 0.0, %v849
        %851 = vmatprep.mubr.bf16.mxu0 0
        %852 = vmatmul.mubr.bf16.gmra.mxu0 %v736
        %v853 = vpop.f32.mrf.mxu0
        %v854 = vadd.f32 0.0, %v853
        %v855 = vpop.f32.mrf.mxu0
        %v856 = vadd.f32 0.0, %v855
        %v857 = vpop.f32.mrf.mxu0
        %v858 = vadd.f32 0.0, %v857
        %v859 = vpop.f32.mrf.mxu0
        %v860 = vadd.f32 0.0, %v859
        %861 = vmatprep.mubr.bf16.mxu0 0
        %862 = vmatmul.mubr.bf16.gmra.mxu0 %v739
        %v863 = vpop.f32.mrf.mxu0
        %v864 = vadd.f32 0.0, %v863
        %v865 = vpop.f32.mrf.mxu0
        %v866 = vadd.f32 0.0, %v865
        %v867 = vpop.f32.mrf.mxu0
        %v868 = vadd.f32 0.0, %v867
        %v869 = vpop.f32.mrf.mxu0
        %v870 = vadd.f32 0.0, %v869
        %871 = vmatprep.mubr.bf16.mxu0 0
        %872 = vmatmul.mubr.bf16.gmra.mxu0 %v742
        %v873 = vpop.f32.mrf.mxu0
        %v874 = vadd.f32 0.0, %v873
        %v875 = vpop.f32.mrf.mxu0
        %v876 = vadd.f32 0.0, %v875
        %v877 = vpop.f32.mrf.mxu0
        %v878 = vadd.f32 0.0, %v877
        %v879 = vpop.f32.mrf.mxu0
        %v880 = vadd.f32 0.0, %v879
        %881 = vmatprep.mubr.bf16.mxu0 0
        %882 = vmatmul.mubr.bf16.gmra.mxu0 %v745
        %v883 = vpop.f32.mrf.mxu0
        %v884 = vadd.f32 0.0, %v883
        %v885 = vpop.f32.mrf.mxu0
        %v886 = vadd.f32 0.0, %v885
        %v887 = vpop.f32.mrf.mxu0
        %v888 = vadd.f32 0.0, %v887
        %v889 = vpop.f32.mrf.mxu0
        %v890 = vadd.f32 0.0, %v889
        %891 = vmatprep.mubr.bf16.mxu0 0
        %892 = vmatmul.mubr.bf16.gmra.mxu0 %v748
        %v893 = vpop.f32.mrf.mxu0
        %v894 = vadd.f32 0.0, %v893
        %v895 = vpop.f32.mrf.mxu0
        %v896 = vadd.f32 0.0, %v895
        %v897 = vpop.f32.mrf.mxu0
        %v898 = vadd.f32 0.0, %v897
        %v899 = vpop.f32.mrf.mxu0
        %v900 = vadd.f32 0.0, %v899
        %901 = vmatprep.mubr.bf16.mxu0 0
        %902 = vmatmul.mubr.bf16.gmra.mxu0 %v751
        %v903 = vpop.f32.mrf.mxu0
        %v904 = vadd.f32 0.0, %v903
        %v905 = vpop.f32.mrf.mxu0
        %v906 = vadd.f32 0.0, %v905
        %v907 = vpop.f32.mrf.mxu0
        %v908 = vadd.f32 0.0, %v907
        %v909 = vpop.f32.mrf.mxu0
        %v910 = vadd.f32 0.0, %v909
        %911 = vmatprep.mubr.bf16.mxu0 0
        %912 = vmatmul.mubr.bf16.gmra.mxu0 %v754
        %v913 = vpop.f32.mrf.mxu0
        %v914 = vadd.f32 0.0, %v913
        %v915 = vpop.f32.mrf.mxu0
        %v916 = vadd.f32 0.0, %v915
        %v917 = vpop.f32.mrf.mxu0
        %v918 = vadd.f32 0.0, %v917
        %v919 = vpop.f32.mrf.mxu0
        %v920 = vadd.f32 0.0, %v919
        %921 = vmatprep.mubr.bf16.mxu0 0
        %922 = vmatmul.mubr.bf16.gmra.mxu0 %v757
        %v923 = vpop.f32.mrf.mxu0
        %v924 = vadd.f32 0.0, %v923
        %v925 = vpop.f32.mrf.mxu0
        %v926 = vadd.f32 0.0, %v925
        %v927 = vpop.f32.mrf.mxu0
        %v928 = vadd.f32 0.0, %v927
        %v929 = vpop.f32.mrf.mxu0
        %v930 = vadd.f32 0.0, %v929
        %931 = vdwg.mxu0
        %932 = vmatprep.subr.bf16.mxu0 0
        %933 = vmatpush1.bf16.msra.mxu0 0
        %934 = vmatprep.subr.bf16.mxu0 0
        %935 = vmatpush1.bf16.msra.mxu0 0
        %936 = vmatprep.subr.bf16.mxu0 0
        %937 = vmatpush1.bf16.msra.mxu0 0
        %938 = vmatprep.subr.bf16.mxu0 0
        %939 = vmatpush1.bf16.msra.mxu0 0
        %940 = vmatprep.subr.bf16.mxu0 0
        %941 = vmatpush1.bf16.msra.mxu0 0
        %942 = vmatprep.subr.bf16.mxu0 0
        %943 = vmatpush1.bf16.msra.mxu0 0
        %944 = vmatprep.subr.bf16.mxu0 0
        %945 = vmatpush1.bf16.msra.mxu0 %v767
        %946 = vmatprep.subr.bf16.mxu0 0
        %947 = vmatpush1.bf16.msra.mxu0 %v712
        %948 = vmatprep.subr.bf16.mxu0 0
        %949 = vmatpush2.bf16.msra.mxu0 0
        %950 = vmatprep.subr.bf16.mxu0 0
        %951 = vmatpush2.bf16.msra.mxu0 0
        %952 = vmatprep.subr.bf16.mxu0 0
        %953 = vmatpush2.bf16.msra.mxu0 0
        %954 = vmatprep.subr.bf16.mxu0 0
        %955 = vmatpush2.bf16.msra.mxu0 0
        %956 = vmatprep.subr.bf16.mxu0 0
        %957 = vmatpush2.bf16.msra.mxu0 0
        %958 = vmatprep.subr.bf16.mxu0 0
        %959 = vmatpush2.bf16.msra.mxu0 0
        %960 = vmatprep.subr.bf16.mxu0 0
        %961 = vmatpush2.bf16.msra.mxu0 0
        %962 = vmatprep.subr.bf16.mxu0 0
        %963 = vmatpush2.bf16.msra.mxu0 0
        %964 = vmatprep.mubr.bf16.mxu0 0
        %965 = vmatmul.mubr.bf16.gmra.mxu0 %v721
        %v966 = vpop.f32.mrf.mxu0
        %v967 = vadd.f32 0.0, %v966
        %v968 = vpop.f32.mrf.mxu0
        %v969 = vpop.f32.mrf.mxu0
        %v970 = vadd.f32 0.0, %v969
        %v971 = vpop.f32.mrf.mxu0
        %972 = vmatprep.mubr.bf16.mxu0 0
        %973 = vmatmul.mubr.bf16.gmra.mxu0 %v724
        %v974 = vpop.f32.mrf.mxu0
        %v975 = vadd.f32 0.0, %v974
        %v976 = vpop.f32.mrf.mxu0
        %v977 = vpop.f32.mrf.mxu0
        %v978 = vadd.f32 0.0, %v977
        %v979 = vpop.f32.mrf.mxu0
        %980 = vmatprep.mubr.bf16.mxu0 0
        %981 = vmatmul.mubr.bf16.gmra.mxu0 %v727
        %v982 = vpop.f32.mrf.mxu0
        %v983 = vadd.f32 0.0, %v982
        %v984 = vpop.f32.mrf.mxu0
        %v985 = vpop.f32.mrf.mxu0
        %v986 = vadd.f32 0.0, %v985
        %v987 = vpop.f32.mrf.mxu0
        %988 = vmatprep.mubr.bf16.mxu0 0
        %989 = vmatmul.mubr.bf16.gmra.mxu0 %v730
        %v990 = vpop.f32.mrf.mxu0
        %v991 = vadd.f32 0.0, %v990
        %v992 = vpop.f32.mrf.mxu0
        %v993 = vpop.f32.mrf.mxu0
        %v994 = vadd.f32 0.0, %v993
        %v995 = vpop.f32.mrf.mxu0
        %996 = vmatprep.mubr.bf16.mxu0 0
        %997 = vmatmul.mubr.bf16.gmra.mxu0 %v733
        %v998 = vpop.f32.mrf.mxu0
        %v999 = vadd.f32 0.0, %v998
        %v1000 = vpop.f32.mrf.mxu0
        %v1001 = vpop.f32.mrf.mxu0
        %v1002 = vadd.f32 0.0, %v1001
        %v1003 = vpop.f32.mrf.mxu0
        %1004 = vmatprep.mubr.bf16.mxu0 0
        %1005 = vmatmul.mubr.bf16.gmra.mxu0 %v736
        %v1006 = vpop.f32.mrf.mxu0
        %v1007 = vadd.f32 0.0, %v1006
        %v1008 = vpop.f32.mrf.mxu0
        %v1009 = vpop.f32.mrf.mxu0
        %v1010 = vadd.f32 0.0, %v1009
        %v1011 = vpop.f32.mrf.mxu0
        %1012 = vmatprep.mubr.bf16.mxu0 0
        %1013 = vmatmul.mubr.bf16.gmra.mxu0 %v739
        %v1014 = vpop.f32.mrf.mxu0
        %v1015 = vadd.f32 0.0, %v1014
        %v1016 = vpop.f32.mrf.mxu0
        %v1017 = vpop.f32.mrf.mxu0
        %v1018 = vadd.f32 0.0, %v1017
        %v1019 = vpop.f32.mrf.mxu0
        %1020 = vmatprep.mubr.bf16.mxu0 0
        %1021 = vmatmul.mubr.bf16.gmra.mxu0 %v742
        %v1022 = vpop.f32.mrf.mxu0
        %v1023 = vadd.f32 0.0, %v1022
        %v1024 = vpop.f32.mrf.mxu0
        %v1025 = vpop.f32.mrf.mxu0
        %v1026 = vadd.f32 0.0, %v1025
        %v1027 = vpop.f32.mrf.mxu0
        %1028 = vmatprep.mubr.bf16.mxu0 0
        %1029 = vmatmul.mubr.bf16.gmra.mxu0 %v745
        %v1030 = vpop.f32.mrf.mxu0
        %v1031 = vadd.f32 0.0, %v1030
        %v1032 = vpop.f32.mrf.mxu0
        %v1033 = vpop.f32.mrf.mxu0
        %v1034 = vadd.f32 0.0, %v1033
        %v1035 = vpop.f32.mrf.mxu0
        %1036 = vmatprep.mubr.bf16.mxu0 0
        %1037 = vmatmul.mubr.bf16.gmra.mxu0 %v748
        %v1038 = vpop.f32.mrf.mxu0
        %v1039 = vadd.f32 0.0, %v1038
        %v1040 = vpop.f32.mrf.mxu0
        %v1041 = vpop.f32.mrf.mxu0
        %v1042 = vadd.f32 0.0, %v1041
        %v1043 = vpop.f32.mrf.mxu0
        %1044 = vmatprep.mubr.bf16.mxu0 0
        %1045 = vmatmul.mubr.bf16.gmra.mxu0 %v751
        %v1046 = vpop.f32.mrf.mxu0
        %v1047 = vadd.f32 0.0, %v1046
        %v1048 = vpop.f32.mrf.mxu0
        %v1049 = vpop.f32.mrf.mxu0
        %v1050 = vadd.f32 0.0, %v1049
        %v1051 = vpop.f32.mrf.mxu0
        %1052 = vmatprep.mubr.bf16.mxu0 0
        %1053 = vmatmul.mubr.bf16.gmra.mxu0 %v754
        %v1054 = vpop.f32.mrf.mxu0
        %v1055 = vadd.f32 0.0, %v1054
        %v1056 = vpop.f32.mrf.mxu0
        %v1057 = vpop.f32.mrf.mxu0
        %v1058 = vadd.f32 0.0, %v1057
        %v1059 = vpop.f32.mrf.mxu0
        %1060 = vmatprep.mubr.bf16.mxu0 0
        %1061 = vmatmul.mubr.bf16.gmra.mxu0 %v757
        %v1062 = vpop.f32.mrf.mxu0
        %v1063 = vadd.f32 0.0, %v1062
        %v1064 = vpop.f32.mrf.mxu0
        %v1065 = vpop.f32.mrf.mxu0
        %v1066 = vadd.f32 0.0, %v1065
        %v1067 = vpop.f32.mrf.mxu0
        %1068 = vdwg.mxu0
        %v1075 = vunpack.c.l.b16 %v643
        %v1076 = vunpack.c.h.b16 %v643
        %v1077 = vunpack.c.l.b16 %v644
        %v1078 = vunpack.c.l.b16 %v645
        %v1079 = vunpack.c.h.b16 %v645
        %v1080 = vunpack.c.l.b16 %v646
        %v1081 = vunpack.c.l.b16 %v647
        %v1082 = vunpack.c.h.b16 %v647
        %v1083 = vunpack.c.l.b16 %v648
        %v1084 = vpack.c.b16 %v1078, %v1075
        %v1085 = vpack.c.b16 %v1079, %v1076
        %v1086 = vpack.c.b16 %v1080, %v1077
        %v1087 = vpack.c.b16 %v1081, %v1081
        %v1088 = vpack.c.b16 %v1082, %v1082
        %v1089 = vpack.c.b16 %v1083, %v1083
        %v1094 = vsel %vm719, %v630, 0
        %v1097 = vsel %vm719, %v631, 0
        %v1100 = vsel %vm719, %v632, 0
        %v1103 = vsel %vm719, %v633, 0
        %v1106 = vsel %vm719, %v634, 0
        %v1109 = vsel %vm719, %v635, 0
        %v1112 = vsel %vm719, %v636, 0
        %v1115 = vsel %vm719, %v637, 0
        %v1118 = vsel %vm719, %v638, 0
        %v1121 = vsel %vm719, %v639, 0
        %v1124 = vsel %vm719, %v640, 0
        %v1127 = vsel %vm719, %v641, 0
        %v1130 = vsel %vm719, %v642, 0
        %v1133 = vsel %vm759, %v1087, 0
        %v1136 = vsel %vm759, %v1088, 0
        %v1139 = vsel %vm759, %v1089, 0
        %1141 = vmatprep.subr.bf16.mxu0 0
        %1142 = vmatpush1.bf16.msra.mxu0 0
        %1143 = vmatprep.subr.bf16.mxu0 0
        %1144 = vmatpush1.bf16.msra.mxu0 0
        %1145 = vmatprep.subr.bf16.mxu0 0
        %1146 = vmatpush1.bf16.msra.mxu0 0
        %1147 = vmatprep.subr.bf16.mxu0 0
        %1148 = vmatpush1.bf16.msra.mxu0 0
        %1149 = vmatprep.subr.bf16.mxu0 0
        %1150 = vmatpush1.bf16.msra.mxu0 0
        %1151 = vmatprep.subr.bf16.mxu0 0
        %1152 = vmatpush1.bf16.msra.mxu0 0
        %1153 = vmatprep.subr.bf16.mxu0 %v1136
        %1154 = vmatpush1.bf16.msra.mxu0 %v1133
        %1155 = vmatprep.subr.bf16.mxu0 %v1085
        %1156 = vmatpush1.bf16.msra.mxu0 %v1084
        %1157 = vmatprep.subr.bf16.mxu0 0
        %1158 = vmatpush2.bf16.msra.mxu0 0
        %1159 = vmatprep.subr.bf16.mxu0 0
        %1160 = vmatpush2.bf16.msra.mxu0 0
        %1161 = vmatprep.subr.bf16.mxu0 0
        %1162 = vmatpush2.bf16.msra.mxu0 0
        %1163 = vmatprep.subr.bf16.mxu0 0
        %1164 = vmatpush2.bf16.msra.mxu0 0
        %1165 = vmatprep.subr.bf16.mxu0 0
        %1166 = vmatpush2.bf16.msra.mxu0 0
        %1167 = vmatprep.subr.bf16.mxu0 0
        %1168 = vmatpush2.bf16.msra.mxu0 0
        %1169 = vmatprep.subr.bf16.mxu0 0
        %1170 = vmatpush2.bf16.msra.mxu0 0
        %1171 = vmatprep.subr.bf16.mxu0 0
        %1172 = vmatpush2.bf16.msra.mxu0 0
        %1173 = vmatprep.mubr.bf16.mxu0 0
        %1174 = vmatmul.mubr.bf16.gmra.mxu0 %v1094
        %v1175 = vpop.f32.mrf.mxu0
        %v1176 = vadd.f32 %v804, %v1175
        %v1177 = vpop.f32.mrf.mxu0
        %v1178 = vadd.f32 %v806, %v1177
        %v1179 = vpop.f32.mrf.mxu0
        %v1180 = vadd.f32 %v808, %v1179
        %v1181 = vpop.f32.mrf.mxu0
        %v1182 = vadd.f32 %v810, %v1181
        %1183 = vmatprep.mubr.bf16.mxu0 0
        %1184 = vmatmul.mubr.bf16.gmra.mxu0 %v1097
        %v1185 = vpop.f32.mrf.mxu0
        %v1186 = vadd.f32 %v814, %v1185
        %v1187 = vpop.f32.mrf.mxu0
        %v1188 = vadd.f32 %v816, %v1187
        %v1189 = vpop.f32.mrf.mxu0
        %v1190 = vadd.f32 %v818, %v1189
        %v1191 = vpop.f32.mrf.mxu0
        %v1192 = vadd.f32 %v820, %v1191
        %1193 = vmatprep.mubr.bf16.mxu0 0
        %1194 = vmatmul.mubr.bf16.gmra.mxu0 %v1100
        %v1195 = vpop.f32.mrf.mxu0
        %v1196 = vadd.f32 %v824, %v1195
        %v1197 = vpop.f32.mrf.mxu0
        %v1198 = vadd.f32 %v826, %v1197
        %v1199 = vpop.f32.mrf.mxu0
        %v1200 = vadd.f32 %v828, %v1199
        %v1201 = vpop.f32.mrf.mxu0
        %v1202 = vadd.f32 %v830, %v1201
        %1203 = vmatprep.mubr.bf16.mxu0 0
        %1204 = vmatmul.mubr.bf16.gmra.mxu0 %v1103
        %v1205 = vpop.f32.mrf.mxu0
        %v1206 = vadd.f32 %v834, %v1205
        %v1207 = vpop.f32.mrf.mxu0
        %v1208 = vadd.f32 %v836, %v1207
        %v1209 = vpop.f32.mrf.mxu0
        %v1210 = vadd.f32 %v838, %v1209
        %v1211 = vpop.f32.mrf.mxu0
        %v1212 = vadd.f32 %v840, %v1211
        %1213 = vmatprep.mubr.bf16.mxu0 0
        %1214 = vmatmul.mubr.bf16.gmra.mxu0 %v1106
        %v1215 = vpop.f32.mrf.mxu0
        %v1216 = vadd.f32 %v844, %v1215
        %v1217 = vpop.f32.mrf.mxu0
        %v1218 = vadd.f32 %v846, %v1217
        %v1219 = vpop.f32.mrf.mxu0
        %v1220 = vadd.f32 %v848, %v1219
        %v1221 = vpop.f32.mrf.mxu0
        %v1222 = vadd.f32 %v850, %v1221
        %1223 = vmatprep.mubr.bf16.mxu0 0
        %1224 = vmatmul.mubr.bf16.gmra.mxu0 %v1109
        %v1225 = vpop.f32.mrf.mxu0
        %v1226 = vadd.f32 %v854, %v1225
        %v1227 = vpop.f32.mrf.mxu0
        %v1228 = vadd.f32 %v856, %v1227
        %v1229 = vpop.f32.mrf.mxu0
        %v1230 = vadd.f32 %v858, %v1229
        %v1231 = vpop.f32.mrf.mxu0
        %v1232 = vadd.f32 %v860, %v1231
        %1233 = vmatprep.mubr.bf16.mxu0 0
        %1234 = vmatmul.mubr.bf16.gmra.mxu0 %v1112
        %v1235 = vpop.f32.mrf.mxu0
        %v1236 = vadd.f32 %v864, %v1235
        %v1237 = vpop.f32.mrf.mxu0
        %v1238 = vadd.f32 %v866, %v1237
        %v1239 = vpop.f32.mrf.mxu0
        %v1240 = vadd.f32 %v868, %v1239
        %v1241 = vpop.f32.mrf.mxu0
        %v1242 = vadd.f32 %v870, %v1241
        %1243 = vmatprep.mubr.bf16.mxu0 0
        %1244 = vmatmul.mubr.bf16.gmra.mxu0 %v1115
        %v1245 = vpop.f32.mrf.mxu0
        %v1246 = vadd.f32 %v874, %v1245
        %v1247 = vpop.f32.mrf.mxu0
        %v1248 = vadd.f32 %v876, %v1247
        %v1249 = vpop.f32.mrf.mxu0
        %v1250 = vadd.f32 %v878, %v1249
        %v1251 = vpop.f32.mrf.mxu0
        %v1252 = vadd.f32 %v880, %v1251
        %1253 = vmatprep.mubr.bf16.mxu0 0
        %1254 = vmatmul.mubr.bf16.gmra.mxu0 %v1118
        %v1255 = vpop.f32.mrf.mxu0
        %v1256 = vadd.f32 %v884, %v1255
        %v1257 = vpop.f32.mrf.mxu0
        %v1258 = vadd.f32 %v886, %v1257
        %v1259 = vpop.f32.mrf.mxu0
        %v1260 = vadd.f32 %v888, %v1259
        %v1261 = vpop.f32.mrf.mxu0
        %v1262 = vadd.f32 %v890, %v1261
        %1263 = vmatprep.mubr.bf16.mxu0 0
        %1264 = vmatmul.mubr.bf16.gmra.mxu0 %v1121
        %v1265 = vpop.f32.mrf.mxu0
        %v1266 = vadd.f32 %v894, %v1265
        %v1267 = vpop.f32.mrf.mxu0
        %v1268 = vadd.f32 %v896, %v1267
        %v1269 = vpop.f32.mrf.mxu0
        %v1270 = vadd.f32 %v898, %v1269
        %v1271 = vpop.f32.mrf.mxu0
        %v1272 = vadd.f32 %v900, %v1271
        %1273 = vmatprep.mubr.bf16.mxu0 0
        %1274 = vmatmul.mubr.bf16.gmra.mxu0 %v1124
        %v1275 = vpop.f32.mrf.mxu0
        %v1276 = vadd.f32 %v904, %v1275
        %v1277 = vpop.f32.mrf.mxu0
        %v1278 = vadd.f32 %v906, %v1277
        %v1279 = vpop.f32.mrf.mxu0
        %v1280 = vadd.f32 %v908, %v1279
        %v1281 = vpop.f32.mrf.mxu0
        %v1282 = vadd.f32 %v910, %v1281
        %1283 = vmatprep.mubr.bf16.mxu0 0
        %1284 = vmatmul.mubr.bf16.gmra.mxu0 %v1127
        %v1285 = vpop.f32.mrf.mxu0
        %v1286 = vadd.f32 %v914, %v1285
        %v1287 = vpop.f32.mrf.mxu0
        %v1288 = vadd.f32 %v916, %v1287
        %v1289 = vpop.f32.mrf.mxu0
        %v1290 = vadd.f32 %v918, %v1289
        %v1291 = vpop.f32.mrf.mxu0
        %v1292 = vadd.f32 %v920, %v1291
        %1293 = vmatprep.mubr.bf16.mxu0 0
        %1294 = vmatmul.mubr.bf16.gmra.mxu0 %v1130
        %v1295 = vpop.f32.mrf.mxu0
        %v1296 = vadd.f32 %v924, %v1295
        %v1297 = vpop.f32.mrf.mxu0
        %v1298 = vadd.f32 %v926, %v1297
        %v1299 = vpop.f32.mrf.mxu0
        %v1300 = vadd.f32 %v928, %v1299
        %v1301 = vpop.f32.mrf.mxu0
        %v1302 = vadd.f32 %v930, %v1301
        %1303 = vdwg.mxu0
        %1304 = vmatprep.subr.bf16.mxu0 0
        %1305 = vmatpush1.bf16.msra.mxu0 0
        %1306 = vmatprep.subr.bf16.mxu0 0
        %1307 = vmatpush1.bf16.msra.mxu0 0
        %1308 = vmatprep.subr.bf16.mxu0 0
        %1309 = vmatpush1.bf16.msra.mxu0 0
        %1310 = vmatprep.subr.bf16.mxu0 0
        %1311 = vmatpush1.bf16.msra.mxu0 0
        %1312 = vmatprep.subr.bf16.mxu0 0
        %1313 = vmatpush1.bf16.msra.mxu0 0
        %1314 = vmatprep.subr.bf16.mxu0 0
        %1315 = vmatpush1.bf16.msra.mxu0 0
        %1316 = vmatprep.subr.bf16.mxu0 0
        %1317 = vmatpush1.bf16.msra.mxu0 %v1139
        %1318 = vmatprep.subr.bf16.mxu0 0
        %1319 = vmatpush1.bf16.msra.mxu0 %v1086
        %1320 = vmatprep.subr.bf16.mxu0 0
        %1321 = vmatpush2.bf16.msra.mxu0 0
        %1322 = vmatprep.subr.bf16.mxu0 0
        %1323 = vmatpush2.bf16.msra.mxu0 0
        %1324 = vmatprep.subr.bf16.mxu0 0
        %1325 = vmatpush2.bf16.msra.mxu0 0
        %1326 = vmatprep.subr.bf16.mxu0 0
        %1327 = vmatpush2.bf16.msra.mxu0 0
        %1328 = vmatprep.subr.bf16.mxu0 0
        %1329 = vmatpush2.bf16.msra.mxu0 0
        %1330 = vmatprep.subr.bf16.mxu0 0
        %1331 = vmatpush2.bf16.msra.mxu0 0
        %1332 = vmatprep.subr.bf16.mxu0 0
        %1333 = vmatpush2.bf16.msra.mxu0 0
        %1334 = vmatprep.subr.bf16.mxu0 0
        %1335 = vmatpush2.bf16.msra.mxu0 0
        %1336 = vmatprep.mubr.bf16.mxu0 0
        %1337 = vmatmul.mubr.bf16.gmra.mxu0 %v1094
        %v1338 = vpop.f32.mrf.mxu0
        %v1339 = vadd.f32 %v967, %v1338
        %v1340 = vpop.f32.mrf.mxu0
        %v1341 = vpop.f32.mrf.mxu0
        %v1342 = vadd.f32 %v970, %v1341
        %v1343 = vpop.f32.mrf.mxu0
        %1344 = vmatprep.mubr.bf16.mxu0 0
        %1345 = vmatmul.mubr.bf16.gmra.mxu0 %v1097
        %v1346 = vpop.f32.mrf.mxu0
        %v1347 = vadd.f32 %v975, %v1346
        %v1348 = vpop.f32.mrf.mxu0
        %v1349 = vpop.f32.mrf.mxu0
        %v1350 = vadd.f32 %v978, %v1349
        %v1351 = vpop.f32.mrf.mxu0
        %1352 = vmatprep.mubr.bf16.mxu0 0
        %1353 = vmatmul.mubr.bf16.gmra.mxu0 %v1100
        %v1354 = vpop.f32.mrf.mxu0
        %v1355 = vadd.f32 %v983, %v1354
        %v1356 = vpop.f32.mrf.mxu0
        %v1357 = vpop.f32.mrf.mxu0
        %v1358 = vadd.f32 %v986, %v1357
        %v1359 = vpop.f32.mrf.mxu0
        %1360 = vmatprep.mubr.bf16.mxu0 0
        %1361 = vmatmul.mubr.bf16.gmra.mxu0 %v1103
        %v1362 = vpop.f32.mrf.mxu0
        %v1363 = vadd.f32 %v991, %v1362
        %v1364 = vpop.f32.mrf.mxu0
        %v1365 = vpop.f32.mrf.mxu0
        %v1366 = vadd.f32 %v994, %v1365
        %v1367 = vpop.f32.mrf.mxu0
        %1368 = vmatprep.mubr.bf16.mxu0 0
        %1369 = vmatmul.mubr.bf16.gmra.mxu0 %v1106
        %v1370 = vpop.f32.mrf.mxu0
        %v1371 = vadd.f32 %v999, %v1370
        %v1372 = vpop.f32.mrf.mxu0
        %v1373 = vpop.f32.mrf.mxu0
        %v1374 = vadd.f32 %v1002, %v1373
        %v1375 = vpop.f32.mrf.mxu0
        %1376 = vmatprep.mubr.bf16.mxu0 0
        %1377 = vmatmul.mubr.bf16.gmra.mxu0 %v1109
        %v1378 = vpop.f32.mrf.mxu0
        %v1379 = vadd.f32 %v1007, %v1378
        %v1380 = vpop.f32.mrf.mxu0
        %v1381 = vpop.f32.mrf.mxu0
        %v1382 = vadd.f32 %v1010, %v1381
        %v1383 = vpop.f32.mrf.mxu0
        %1384 = vmatprep.mubr.bf16.mxu0 0
        %1385 = vmatmul.mubr.bf16.gmra.mxu0 %v1112
        %v1386 = vpop.f32.mrf.mxu0
        %v1387 = vadd.f32 %v1015, %v1386
        %v1388 = vpop.f32.mrf.mxu0
        %v1389 = vpop.f32.mrf.mxu0
        %v1390 = vadd.f32 %v1018, %v1389
        %v1391 = vpop.f32.mrf.mxu0
        %1392 = vmatprep.mubr.bf16.mxu0 0
        %1393 = vmatmul.mubr.bf16.gmra.mxu0 %v1115
        %v1394 = vpop.f32.mrf.mxu0
        %v1395 = vadd.f32 %v1023, %v1394
        %v1396 = vpop.f32.mrf.mxu0
        %v1397 = vpop.f32.mrf.mxu0
        %v1398 = vadd.f32 %v1026, %v1397
        %v1399 = vpop.f32.mrf.mxu0
        %1400 = vmatprep.mubr.bf16.mxu0 0
        %1401 = vmatmul.mubr.bf16.gmra.mxu0 %v1118
        %v1402 = vpop.f32.mrf.mxu0
        %v1403 = vadd.f32 %v1031, %v1402
        %v1404 = vpop.f32.mrf.mxu0
        %v1405 = vpop.f32.mrf.mxu0
        %v1406 = vadd.f32 %v1034, %v1405
        %v1407 = vpop.f32.mrf.mxu0
        %1408 = vmatprep.mubr.bf16.mxu0 0
        %1409 = vmatmul.mubr.bf16.gmra.mxu0 %v1121
        %v1410 = vpop.f32.mrf.mxu0
        %v1411 = vadd.f32 %v1039, %v1410
        %v1412 = vpop.f32.mrf.mxu0
        %v1413 = vpop.f32.mrf.mxu0
        %v1414 = vadd.f32 %v1042, %v1413
        %v1415 = vpop.f32.mrf.mxu0
        %1416 = vmatprep.mubr.bf16.mxu0 0
        %1417 = vmatmul.mubr.bf16.gmra.mxu0 %v1124
        %v1418 = vpop.f32.mrf.mxu0
        %v1419 = vadd.f32 %v1047, %v1418
        %v1420 = vpop.f32.mrf.mxu0
        %v1421 = vpop.f32.mrf.mxu0
        %v1422 = vadd.f32 %v1050, %v1421
        %v1423 = vpop.f32.mrf.mxu0
        %1424 = vmatprep.mubr.bf16.mxu0 0
        %1425 = vmatmul.mubr.bf16.gmra.mxu0 %v1127
        %v1426 = vpop.f32.mrf.mxu0
        %v1427 = vadd.f32 %v1055, %v1426
        %v1428 = vpop.f32.mrf.mxu0
        %v1429 = vpop.f32.mrf.mxu0
        %v1430 = vadd.f32 %v1058, %v1429
        %v1431 = vpop.f32.mrf.mxu0
        %1432 = vmatprep.mubr.bf16.mxu0 0
        %1433 = vmatmul.mubr.bf16.gmra.mxu0 %v1130
        %v1434 = vpop.f32.mrf.mxu0
        %v1435 = vadd.f32 %v1063, %v1434
        %v1436 = vpop.f32.mrf.mxu0
        %v1437 = vpop.f32.mrf.mxu0
        %v1438 = vadd.f32 %v1066, %v1437
        %v1439 = vpop.f32.mrf.mxu0
        %1440 = vdwg.mxu0
        %v1441 = vld [vmem:[%s601 + $0x2] sm:$0xff]
        %v1442 = vld [vmem:[%s601 + $0xa] sm:$0xff]
        %v1443 = vld [vmem:[%s601 + $0x12] sm:$0xff]
        %v1444 = vld [vmem:[%s601 + $0x1a] sm:$0xff]
        %v1445 = vld [vmem:[%s601 + $0x22] sm:$0xff]
        %v1446 = vld [vmem:[%s601 + $0x2a] sm:$0xff]
        %v1447 = vld [vmem:[%s601 + $0x32] sm:$0xff]
        %v1448 = vld [vmem:[%s601 + $0x3a] sm:$0xff]
        %v1449 = vld [vmem:[%s601 + $0x42] sm:$0xff]
        %v1450 = vld [vmem:[%s601 + $0x4a] sm:$0xff]
        %v1451 = vld [vmem:[%s601 + $0x52] sm:$0xff]
        %v1452 = vld [vmem:[%s601 + $0x5a] sm:$0xff]
        %v1453 = vld [vmem:[%s601 + $0x62] sm:$0xff]
        %v1454 = vld [vmem:[%s601 + $0x6a] sm:$0xff]
        %v1455 = vld [vmem:[%s601 + $0x72] sm:$0xff]
        %v1456 = vld [vmem:[%s601 + $0x7a] sm:$0xff]
        %v1457 = vld [vmem:[%s601 + $0x82] sm:$0xff]
        %v1458 = vld [vmem:[%s601 + $0x8a] sm:$0xff]
        %v1459 = vld [vmem:[%s601 + $0x92] sm:$0xff]
        %v1460 = vld [vmem:[%s601 + $0x9a] sm:$0xff]
        %v1461 = vld [vmem:[%s601 + $0xa2] sm:$0xff]
        %v1462 = vld [vmem:[%s601 + $0xaa] sm:$0xff]
        %v1463 = vld [vmem:[%s601 + $0xb2] sm:$0xff]
        %v1464 = vld [vmem:[%s601 + $0xba] sm:$0xff]
        %v1465 = vld [vmem:[%s601 + $0xc2] sm:$0xff]
        %v1466 = vld [vmem:[%s601 + $0xca] sm:$0x3f]
        %v1467 = vpack.c.bf16 %v1442, %v1441
        %v1468 = vpack.c.bf16 %v1444, %v1443
        %v1469 = vpack.c.bf16 %v1446, %v1445
        %v1470 = vpack.c.bf16 %v1448, %v1447
        %v1471 = vpack.c.bf16 %v1450, %v1449
        %v1472 = vpack.c.bf16 %v1452, %v1451
        %v1473 = vpack.c.bf16 %v1454, %v1453
        %v1474 = vpack.c.bf16 %v1456, %v1455
        %v1475 = vpack.c.bf16 %v1458, %v1457
        %v1476 = vpack.c.bf16 %v1460, %v1459
        %v1477 = vpack.c.bf16 %v1462, %v1461
        %v1478 = vpack.c.bf16 %v1464, %v1463
        %v1479 = vpack.c.bf16 %v1466, %v1465
        %s1480 = scalar_lea.vmem %s1, 72
        %v1481 = vld [vmem:[%s1480] sm:$0xff]
        %v1482 = vld [vmem:[%s1480 + $0x8] sm:$0xf]
        %v1483 = vld [vmem:[%s1480 + $0xc] sm:$0xff]
        %v1484 = vld [vmem:[%s1480 + $0x14] sm:$0xf]
        %v1485 = vld [vmem:[%s1480 + $0x18] sm:$0xff]
        %v1486 = vld [vmem:[%s1480 + $0x20] sm:$0xf]
        %v1493 = vunpack.c.l.b16 %v1481
        %v1494 = vunpack.c.h.b16 %v1481
        %v1495 = vunpack.c.l.b16 %v1482
        %v1496 = vunpack.c.l.b16 %v1483
        %v1497 = vunpack.c.h.b16 %v1483
        %v1498 = vunpack.c.l.b16 %v1484
        %v1499 = vunpack.c.l.b16 %v1485
        %v1500 = vunpack.c.h.b16 %v1485
        %v1501 = vunpack.c.l.b16 %v1486
        %v1502 = vpack.c.b16 %v1496, %v1493
        %v1503 = vpack.c.b16 %v1497, %v1494
        %v1504 = vpack.c.b16 %v1498, %v1495
        %v1505 = vpack.c.b16 %v1499, %v1499
        %v1506 = vpack.c.b16 %v1500, %v1500
        %v1507 = vpack.c.b16 %v1501, %v1501
        %v1512 = vsel %vm719, %v1467, 0
        %v1515 = vsel %vm719, %v1468, 0
        %v1518 = vsel %vm719, %v1469, 0
        %v1521 = vsel %vm719, %v1470, 0
        %v1524 = vsel %vm719, %v1471, 0
        %v1527 = vsel %vm719, %v1472, 0
        %v1530 = vsel %vm719, %v1473, 0
        %v1533 = vsel %vm719, %v1474, 0
        %v1536 = vsel %vm719, %v1475, 0
        %v1539 = vsel %vm719, %v1476, 0
        %v1542 = vsel %vm719, %v1477, 0
        %v1545 = vsel %vm719, %v1478, 0
        %v1548 = vsel %vm719, %v1479, 0
        %v1551 = vsel %vm759, %v1505, 0
        %v1554 = vsel %vm759, %v1506, 0
        %v1557 = vsel %vm759, %v1507, 0
        %1559 = vmatprep.subr.bf16.mxu0 0
        %1560 = vmatpush1.bf16.msra.mxu0 0
        %1561 = vmatprep.subr.bf16.mxu0 0
        %1562 = vmatpush1.bf16.msra.mxu0 0
        %1563 = vmatprep.subr.bf16.mxu0 0
        %1564 = vmatpush1.bf16.msra.mxu0 0
        %1565 = vmatprep.subr.bf16.mxu0 0
        %1566 = vmatpush1.bf16.msra.mxu0 0
        %1567 = vmatprep.subr.bf16.mxu0 0
        %1568 = vmatpush1.bf16.msra.mxu0 0
        %1569 = vmatprep.subr.bf16.mxu0 0
        %1570 = vmatpush1.bf16.msra.mxu0 0
        %1571 = vmatprep.subr.bf16.mxu0 %v1554
        %1572 = vmatpush1.bf16.msra.mxu0 %v1551
        %1573 = vmatprep.subr.bf16.mxu0 %v1503
        %1574 = vmatpush1.bf16.msra.mxu0 %v1502
        %1575 = vmatprep.subr.bf16.mxu0 0
        %1576 = vmatpush2.bf16.msra.mxu0 0
        %1577 = vmatprep.subr.bf16.mxu0 0
        %1578 = vmatpush2.bf16.msra.mxu0 0
        %1579 = vmatprep.subr.bf16.mxu0 0
        %1580 = vmatpush2.bf16.msra.mxu0 0
        %1581 = vmatprep.subr.bf16.mxu0 0
        %1582 = vmatpush2.bf16.msra.mxu0 0
        %1583 = vmatprep.subr.bf16.mxu0 0
        %1584 = vmatpush2.bf16.msra.mxu0 0
        %1585 = vmatprep.subr.bf16.mxu0 0
        %1586 = vmatpush2.bf16.msra.mxu0 0
        %1587 = vmatprep.subr.bf16.mxu0 0
        %1588 = vmatpush2.bf16.msra.mxu0 0
        %1589 = vmatprep.subr.bf16.mxu0 0
        %1590 = vmatpush2.bf16.msra.mxu0 0
        %1591 = vmatprep.mubr.bf16.mxu0 0
        %1592 = vmatmul.mubr.bf16.gmra.mxu0 %v1512
        %v1593 = vpop.f32.mrf.mxu0
        %v1594 = vadd.f32 0.0, %v1593
        %v1595 = vpop.f32.mrf.mxu0
        %v1596 = vadd.f32 0.0, %v1595
        %v1597 = vpop.f32.mrf.mxu0
        %v1598 = vadd.f32 0.0, %v1597
        %v1599 = vpop.f32.mrf.mxu0
        %v1600 = vadd.f32 0.0, %v1599
        %1601 = vmatprep.mubr.bf16.mxu0 0
        %1602 = vmatmul.mubr.bf16.gmra.mxu0 %v1515
        %v1603 = vpop.f32.mrf.mxu0
        %v1604 = vadd.f32 0.0, %v1603
        %v1605 = vpop.f32.mrf.mxu0
        %v1606 = vadd.f32 0.0, %v1605
        %v1607 = vpop.f32.mrf.mxu0
        %v1608 = vadd.f32 0.0, %v1607
        %v1609 = vpop.f32.mrf.mxu0
        %v1610 = vadd.f32 0.0, %v1609
        %1611 = vmatprep.mubr.bf16.mxu0 0
        %1612 = vmatmul.mubr.bf16.gmra.mxu0 %v1518
        %v1613 = vpop.f32.mrf.mxu0
        %v1614 = vadd.f32 0.0, %v1613
        %v1615 = vpop.f32.mrf.mxu0
        %v1616 = vadd.f32 0.0, %v1615
        %v1617 = vpop.f32.mrf.mxu0
        %v1618 = vadd.f32 0.0, %v1617
        %v1619 = vpop.f32.mrf.mxu0
        %v1620 = vadd.f32 0.0, %v1619
        %1621 = vmatprep.mubr.bf16.mxu0 0
        %1622 = vmatmul.mubr.bf16.gmra.mxu0 %v1521
        %v1623 = vpop.f32.mrf.mxu0
        %v1624 = vadd.f32 0.0, %v1623
        %v1625 = vpop.f32.mrf.mxu0
        %v1626 = vadd.f32 0.0, %v1625
        %v1627 = vpop.f32.mrf.mxu0
        %v1628 = vadd.f32 0.0, %v1627
        %v1629 = vpop.f32.mrf.mxu0
        %v1630 = vadd.f32 0.0, %v1629
        %1631 = vmatprep.mubr.bf16.mxu0 0
        %1632 = vmatmul.mubr.bf16.gmra.mxu0 %v1524
        %v1633 = vpop.f32.mrf.mxu0
        %v1634 = vadd.f32 0.0, %v1633
        %v1635 = vpop.f32.mrf.mxu0
        %v1636 = vadd.f32 0.0, %v1635
        %v1637 = vpop.f32.mrf.mxu0
        %v1638 = vadd.f32 0.0, %v1637
        %v1639 = vpop.f32.mrf.mxu0
        %v1640 = vadd.f32 0.0, %v1639
        %1641 = vmatprep.mubr.bf16.mxu0 0
        %1642 = vmatmul.mubr.bf16.gmra.mxu0 %v1527
        %v1643 = vpop.f32.mrf.mxu0
        %v1644 = vadd.f32 0.0, %v1643
        %v1645 = vpop.f32.mrf.mxu0
        %v1646 = vadd.f32 0.0, %v1645
        %v1647 = vpop.f32.mrf.mxu0
        %v1648 = vadd.f32 0.0, %v1647
        %v1649 = vpop.f32.mrf.mxu0
        %v1650 = vadd.f32 0.0, %v1649
        %1651 = vmatprep.mubr.bf16.mxu0 0
        %1652 = vmatmul.mubr.bf16.gmra.mxu0 %v1530
        %v1653 = vpop.f32.mrf.mxu0
        %v1654 = vadd.f32 0.0, %v1653
        %v1655 = vpop.f32.mrf.mxu0
        %v1656 = vadd.f32 0.0, %v1655
        %v1657 = vpop.f32.mrf.mxu0
        %v1658 = vadd.f32 0.0, %v1657
        %v1659 = vpop.f32.mrf.mxu0
        %v1660 = vadd.f32 0.0, %v1659
        %1661 = vmatprep.mubr.bf16.mxu0 0
        %1662 = vmatmul.mubr.bf16.gmra.mxu0 %v1533
        %v1663 = vpop.f32.mrf.mxu0
        %v1664 = vadd.f32 0.0, %v1663
        %v1665 = vpop.f32.mrf.mxu0
        %v1666 = vadd.f32 0.0, %v1665
        %v1667 = vpop.f32.mrf.mxu0
        %v1668 = vadd.f32 0.0, %v1667
        %v1669 = vpop.f32.mrf.mxu0
        %v1670 = vadd.f32 0.0, %v1669
        %1671 = vmatprep.mubr.bf16.mxu0 0
        %1672 = vmatmul.mubr.bf16.gmra.mxu0 %v1536
        %v1673 = vpop.f32.mrf.mxu0
        %v1674 = vadd.f32 0.0, %v1673
        %v1675 = vpop.f32.mrf.mxu0
        %v1676 = vadd.f32 0.0, %v1675
        %v1677 = vpop.f32.mrf.mxu0
        %v1678 = vadd.f32 0.0, %v1677
        %v1679 = vpop.f32.mrf.mxu0
        %v1680 = vadd.f32 0.0, %v1679
        %1681 = vmatprep.mubr.bf16.mxu0 0
        %1682 = vmatmul.mubr.bf16.gmra.mxu0 %v1539
        %v1683 = vpop.f32.mrf.mxu0
        %v1684 = vadd.f32 0.0, %v1683
        %v1685 = vpop.f32.mrf.mxu0
        %v1686 = vadd.f32 0.0, %v1685
        %v1687 = vpop.f32.mrf.mxu0
        %v1688 = vadd.f32 0.0, %v1687
        %v1689 = vpop.f32.mrf.mxu0
        %v1690 = vadd.f32 0.0, %v1689
        %1691 = vmatprep.mubr.bf16.mxu0 0
        %1692 = vmatmul.mubr.bf16.gmra.mxu0 %v1542
        %v1693 = vpop.f32.mrf.mxu0
        %v1694 = vadd.f32 0.0, %v1693
        %v1695 = vpop.f32.mrf.mxu0
        %v1696 = vadd.f32 0.0, %v1695
        %v1697 = vpop.f32.mrf.mxu0
        %v1698 = vadd.f32 0.0, %v1697
        %v1699 = vpop.f32.mrf.mxu0
        %v1700 = vadd.f32 0.0, %v1699
        %1701 = vmatprep.mubr.bf16.mxu0 0
        %1702 = vmatmul.mubr.bf16.gmra.mxu0 %v1545
        %v1703 = vpop.f32.mrf.mxu0
        %v1704 = vadd.f32 0.0, %v1703
        %v1705 = vpop.f32.mrf.mxu0
        %v1706 = vadd.f32 0.0, %v1705
        %v1707 = vpop.f32.mrf.mxu0
        %v1708 = vadd.f32 0.0, %v1707
        %v1709 = vpop.f32.mrf.mxu0
        %v1710 = vadd.f32 0.0, %v1709
        %1711 = vmatprep.mubr.bf16.mxu0 0
        %1712 = vmatmul.mubr.bf16.gmra.mxu0 %v1548
        %v1713 = vpop.f32.mrf.mxu0
        %v1714 = vadd.f32 0.0, %v1713
        %v1715 = vpop.f32.mrf.mxu0
        %v1716 = vadd.f32 0.0, %v1715
        %v1717 = vpop.f32.mrf.mxu0
        %v1718 = vadd.f32 0.0, %v1717
        %v1719 = vpop.f32.mrf.mxu0
        %v1720 = vadd.f32 0.0, %v1719
        %1721 = vdwg.mxu0
        %1722 = vmatprep.subr.bf16.mxu0 0
        %1723 = vmatpush1.bf16.msra.mxu0 0
        %1724 = vmatprep.subr.bf16.mxu0 0
        %1725 = vmatpush1.bf16.msra.mxu0 0
        %1726 = vmatprep.subr.bf16.mxu0 0
        %1727 = vmatpush1.bf16.msra.mxu0 0
        %1728 = vmatprep.subr.bf16.mxu0 0
        %1729 = vmatpush1.bf16.msra.mxu0 0
        %1730 = vmatprep.subr.bf16.mxu0 0
        %1731 = vmatpush1.bf16.msra.mxu0 0
        %1732 = vmatprep.subr.bf16.mxu0 0
        %1733 = vmatpush1.bf16.msra.mxu0 0
        %1734 = vmatprep.subr.bf16.mxu0 0
        %1735 = vmatpush1.bf16.msra.mxu0 %v1557
        %1736 = vmatprep.subr.bf16.mxu0 0
        %1737 = vmatpush1.bf16.msra.mxu0 %v1504
        %1738 = vmatprep.subr.bf16.mxu0 0
        %1739 = vmatpush2.bf16.msra.mxu0 0
        %1740 = vmatprep.subr.bf16.mxu0 0
        %1741 = vmatpush2.bf16.msra.mxu0 0
        %1742 = vmatprep.subr.bf16.mxu0 0
        %1743 = vmatpush2.bf16.msra.mxu0 0
        %1744 = vmatprep.subr.bf16.mxu0 0
        %1745 = vmatpush2.bf16.msra.mxu0 0
        %1746 = vmatprep.subr.bf16.mxu0 0
        %1747 = vmatpush2.bf16.msra.mxu0 0
        %1748 = vmatprep.subr.bf16.mxu0 0
        %1749 = vmatpush2.bf16.msra.mxu0 0
        %1750 = vmatprep.subr.bf16.mxu0 0
        %1751 = vmatpush2.bf16.msra.mxu0 0
        %1752 = vmatprep.subr.bf16.mxu0 0
        %1753 = vmatpush2.bf16.msra.mxu0 0
        %1754 = vmatprep.mubr.bf16.mxu0 0
        %1755 = vmatmul.mubr.bf16.gmra.mxu0 %v1512
        %v1756 = vpop.f32.mrf.mxu0
        %v1757 = vadd.f32 0.0, %v1756
        %v1758 = vpop.f32.mrf.mxu0
        %v1759 = vpop.f32.mrf.mxu0
        %v1760 = vadd.f32 0.0, %v1759
        %v1761 = vpop.f32.mrf.mxu0
        %1762 = vmatprep.mubr.bf16.mxu0 0
        %1763 = vmatmul.mubr.bf16.gmra.mxu0 %v1515
        %v1764 = vpop.f32.mrf.mxu0
        %v1765 = vadd.f32 0.0, %v1764
        %v1766 = vpop.f32.mrf.mxu0
        %v1767 = vpop.f32.mrf.mxu0
        %v1768 = vadd.f32 0.0, %v1767
        %v1769 = vpop.f32.mrf.mxu0
        %1770 = vmatprep.mubr.bf16.mxu0 0
        %1771 = vmatmul.mubr.bf16.gmra.mxu0 %v1518
        %v1772 = vpop.f32.mrf.mxu0
        %v1773 = vadd.f32 0.0, %v1772
        %v1774 = vpop.f32.mrf.mxu0
        %v1775 = vpop.f32.mrf.mxu0
        %v1776 = vadd.f32 0.0, %v1775
        %v1777 = vpop.f32.mrf.mxu0
        %1778 = vmatprep.mubr.bf16.mxu0 0
        %1779 = vmatmul.mubr.bf16.gmra.mxu0 %v1521
        %v1780 = vpop.f32.mrf.mxu0
        %v1781 = vadd.f32 0.0, %v1780
        %v1782 = vpop.f32.mrf.mxu0
        %v1783 = vpop.f32.mrf.mxu0
        %v1784 = vadd.f32 0.0, %v1783
        %v1785 = vpop.f32.mrf.mxu0
        %1786 = vmatprep.mubr.bf16.mxu0 0
        %1787 = vmatmul.mubr.bf16.gmra.mxu0 %v1524
        %v1788 = vpop.f32.mrf.mxu0
        %v1789 = vadd.f32 0.0, %v1788
        %v1790 = vpop.f32.mrf.mxu0
        %v1791 = vpop.f32.mrf.mxu0
        %v1792 = vadd.f32 0.0, %v1791
        %v1793 = vpop.f32.mrf.mxu0
        %1794 = vmatprep.mubr.bf16.mxu0 0
        %1795 = vmatmul.mubr.bf16.gmra.mxu0 %v1527
        %v1796 = vpop.f32.mrf.mxu0
        %v1797 = vadd.f32 0.0, %v1796
        %v1798 = vpop.f32.mrf.mxu0
        %v1799 = vpop.f32.mrf.mxu0
        %v1800 = vadd.f32 0.0, %v1799
        %v1801 = vpop.f32.mrf.mxu0
        %1802 = vmatprep.mubr.bf16.mxu0 0
        %1803 = vmatmul.mubr.bf16.gmra.mxu0 %v1530
        %v1804 = vpop.f32.mrf.mxu0
        %v1805 = vadd.f32 0.0, %v1804
        %v1806 = vpop.f32.mrf.mxu0
        %v1807 = vpop.f32.mrf.mxu0
        %v1808 = vadd.f32 0.0, %v1807
        %v1809 = vpop.f32.mrf.mxu0
        %1810 = vmatprep.mubr.bf16.mxu0 0
        %1811 = vmatmul.mubr.bf16.gmra.mxu0 %v1533
        %v1812 = vpop.f32.mrf.mxu0
        %v1813 = vadd.f32 0.0, %v1812
        %v1814 = vpop.f32.mrf.mxu0
        %v1815 = vpop.f32.mrf.mxu0
        %v1816 = vadd.f32 0.0, %v1815
        %v1817 = vpop.f32.mrf.mxu0
        %1818 = vmatprep.mubr.bf16.mxu0 0
        %1819 = vmatmul.mubr.bf16.gmra.mxu0 %v1536
        %v1820 = vpop.f32.mrf.mxu0
        %v1821 = vadd.f32 0.0, %v1820
        %v1822 = vpop.f32.mrf.mxu0
        %v1823 = vpop.f32.mrf.mxu0
        %v1824 = vadd.f32 0.0, %v1823
        %v1825 = vpop.f32.mrf.mxu0
        %1826 = vmatprep.mubr.bf16.mxu0 0
        %1827 = vmatmul.mubr.bf16.gmra.mxu0 %v1539
        %v1828 = vpop.f32.mrf.mxu0
        %v1829 = vadd.f32 0.0, %v1828
        %v1830 = vpop.f32.mrf.mxu0
        %v1831 = vpop.f32.mrf.mxu0
        %v1832 = vadd.f32 0.0, %v1831
        %v1833 = vpop.f32.mrf.mxu0
        %1834 = vmatprep.mubr.bf16.mxu0 0
        %1835 = vmatmul.mubr.bf16.gmra.mxu0 %v1542
        %v1836 = vpop.f32.mrf.mxu0
        %v1837 = vadd.f32 0.0, %v1836
        %v1838 = vpop.f32.mrf.mxu0
        %v1839 = vpop.f32.mrf.mxu0
        %v1840 = vadd.f32 0.0, %v1839
        %v1841 = vpop.f32.mrf.mxu0
        %1842 = vmatprep.mubr.bf16.mxu0 0
        %1843 = vmatmul.mubr.bf16.gmra.mxu0 %v1545
        %v1844 = vpop.f32.mrf.mxu0
        %v1845 = vadd.f32 0.0, %v1844
        %v1846 = vpop.f32.mrf.mxu0
        %v1847 = vpop.f32.mrf.mxu0
        %v1848 = vadd.f32 0.0, %v1847
        %v1849 = vpop.f32.mrf.mxu0
        %1850 = vmatprep.mubr.bf16.mxu0 0
        %1851 = vmatmul.mubr.bf16.gmra.mxu0 %v1548
        %v1852 = vpop.f32.mrf.mxu0
        %v1853 = vadd.f32 0.0, %v1852
        %v1854 = vpop.f32.mrf.mxu0
        %v1855 = vpop.f32.mrf.mxu0
        %v1856 = vadd.f32 0.0, %v1855
        %v1857 = vpop.f32.mrf.mxu0
        %1858 = vdwg.mxu0
        %v1859 = vadd.f32 %v1176, %v1594
        %v1860 = vadd.f32 %v1178, %v1596
        %v1861 = vadd.f32 %v1339, %v1757
        %v1862 = vadd.f32 %v1180, %v1598
        %v1863 = vadd.f32 %v1182, %v1600
        %v1864 = vadd.f32 %v1342, %v1760
        %v1865 = vadd.f32 %v1186, %v1604
        %v1866 = vadd.f32 %v1188, %v1606
        %v1867 = vadd.f32 %v1347, %v1765
        %v1868 = vadd.f32 %v1190, %v1608
        %v1869 = vadd.f32 %v1192, %v1610
        %v1870 = vadd.f32 %v1350, %v1768
        %v1871 = vadd.f32 %v1196, %v1614
        %v1872 = vadd.f32 %v1198, %v1616
        %v1873 = vadd.f32 %v1355, %v1773
        %v1874 = vadd.f32 %v1200, %v1618
        %v1875 = vadd.f32 %v1202, %v1620
        %v1876 = vadd.f32 %v1358, %v1776
        %v1877 = vadd.f32 %v1206, %v1624
        %v1878 = vadd.f32 %v1208, %v1626
        %v1879 = vadd.f32 %v1363, %v1781
        %v1880 = vadd.f32 %v1210, %v1628
        %v1881 = vadd.f32 %v1212, %v1630
        %v1882 = vadd.f32 %v1366, %v1784
        %v1883 = vadd.f32 %v1216, %v1634
        %v1884 = vadd.f32 %v1218, %v1636
        %v1885 = vadd.f32 %v1371, %v1789
        %v1886 = vadd.f32 %v1220, %v1638
        %v1887 = vadd.f32 %v1222, %v1640
        %v1888 = vadd.f32 %v1374, %v1792
        %v1889 = vadd.f32 %v1226, %v1644
        %v1890 = vadd.f32 %v1228, %v1646
        %v1891 = vadd.f32 %v1379, %v1797
        %v1892 = vadd.f32 %v1230, %v1648
        %v1893 = vadd.f32 %v1232, %v1650
        %v1894 = vadd.f32 %v1382, %v1800
        %v1895 = vadd.f32 %v1236, %v1654
        %v1896 = vadd.f32 %v1238, %v1656
        %v1897 = vadd.f32 %v1387, %v1805
        %v1898 = vadd.f32 %v1240, %v1658
        %v1899 = vadd.f32 %v1242, %v1660
        %v1900 = vadd.f32 %v1390, %v1808
        %v1901 = vadd.f32 %v1246, %v1664
        %v1902 = vadd.f32 %v1248, %v1666
        %v1903 = vadd.f32 %v1395, %v1813
        %v1904 = vadd.f32 %v1250, %v1668
        %v1905 = vadd.f32 %v1252, %v1670
        %v1906 = vadd.f32 %v1398, %v1816
        %v1907 = vadd.f32 %v1256, %v1674
        %v1908 = vadd.f32 %v1258, %v1676
        %v1909 = vadd.f32 %v1403, %v1821
        %v1910 = vadd.f32 %v1260, %v1678
        %v1911 = vadd.f32 %v1262, %v1680
        %v1912 = vadd.f32 %v1406, %v1824
        %v1913 = vadd.f32 %v1266, %v1684
        %v1914 = vadd.f32 %v1268, %v1686
        %v1915 = vadd.f32 %v1411, %v1829
        %v1916 = vadd.f32 %v1270, %v1688
        %v1917 = vadd.f32 %v1272, %v1690
        %v1918 = vadd.f32 %v1414, %v1832
        %v1919 = vadd.f32 %v1276, %v1694
        %v1920 = vadd.f32 %v1278, %v1696
        %v1921 = vadd.f32 %v1419, %v1837
        %v1922 = vadd.f32 %v1280, %v1698
        %v1923 = vadd.f32 %v1282, %v1700
        %v1924 = vadd.f32 %v1422, %v1840
        %v1925 = vadd.f32 %v1286, %v1704
        %v1926 = vadd.f32 %v1288, %v1706
        %v1927 = vadd.f32 %v1427, %v1845
        %v1928 = vadd.f32 %v1290, %v1708
        %v1929 = vadd.f32 %v1292, %v1710
        %v1930 = vadd.f32 %v1430, %v1848
        %v1931 = vadd.f32 %v1296, %v1714
        %v1932 = vadd.f32 %v1298, %v1716
        %v1933 = vadd.f32 %v1435, %v1853
        %v1934 = vadd.f32 %v1300, %v1718
        %v1935 = vadd.f32 %v1302, %v1720
        %v1936 = vadd.f32 %v1438, %v1856
        %v1937 = vld [vmem:[%s4] sm:$0x7]
        %v1939 = vlaneseq
        %v1940 = vshrl.u32 %v1939, 7
        %v1941 = vsub.s32 0, %v1940
        %v1942 = vrot.slane %v1937, %v1941
        %v1943 = vlaneseq
        %v1944 = vshrl.u32 %v1943, 7
        %v1945 = vsub.s32 1, %v1944
        %v1946 = vrot.slane %v1937, %v1945
        %v1947 = vlaneseq
        %v1948 = vshrl.u32 %v1947, 7
        %v1949 = vsub.s32 2, %v1948
        %v1950 = vrot.slane %v1937, %v1949
        %v1954 = vadd.f32 %v1859, %v1942
        %v1955 = vadd.f32 %v1860, %v1946
        %v1956 = vadd.f32 %v1861, %v1950
        %v1957 = vadd.f32 %v1862, %v1942
        %v1958 = vadd.f32 %v1863, %v1946
        %v1959 = vadd.f32 %v1864, %v1950
        %v1960 = vadd.f32 %v1865, %v1942
        %v1961 = vadd.f32 %v1866, %v1946
        %v1962 = vadd.f32 %v1867, %v1950
        %v1963 = vadd.f32 %v1868, %v1942
        %v1964 = vadd.f32 %v1869, %v1946
        %v1965 = vadd.f32 %v1870, %v1950
        %v1966 = vadd.f32 %v1871, %v1942
        %v1967 = vadd.f32 %v1872, %v1946
        %v1968 = vadd.f32 %v1873, %v1950
        %v1969 = vadd.f32 %v1874, %v1942
        %v1970 = vadd.f32 %v1875, %v1946
        %v1971 = vadd.f32 %v1876, %v1950
        %v1972 = vadd.f32 %v1877, %v1942
        %v1973 = vadd.f32 %v1878, %v1946
        %v1974 = vadd.f32 %v1879, %v1950
        %v1975 = vadd.f32 %v1880, %v1942
        %v1976 = vadd.f32 %v1881, %v1946
        %v1977 = vadd.f32 %v1882, %v1950
        %v1978 = vadd.f32 %v1883, %v1942
        %v1979 = vadd.f32 %v1884, %v1946
        %v1980 = vadd.f32 %v1885, %v1950
        %v1981 = vadd.f32 %v1886, %v1942
        %v1982 = vadd.f32 %v1887, %v1946
        %v1983 = vadd.f32 %v1888, %v1950
        %v1984 = vadd.f32 %v1889, %v1942
        %v1985 = vadd.f32 %v1890, %v1946
        %v1986 = vadd.f32 %v1891, %v1950
        %v1987 = vadd.f32 %v1892, %v1942
        %v1988 = vadd.f32 %v1893, %v1946
        %v1989 = vadd.f32 %v1894, %v1950
        %v1990 = vadd.f32 %v1895, %v1942
        %v1991 = vadd.f32 %v1896, %v1946
        %v1992 = vadd.f32 %v1897, %v1950
        %v1993 = vadd.f32 %v1898, %v1942
        %v1994 = vadd.f32 %v1899, %v1946
        %v1995 = vadd.f32 %v1900, %v1950
        %v1996 = vadd.f32 %v1901, %v1942
        %v1997 = vadd.f32 %v1902, %v1946
        %v1998 = vadd.f32 %v1903, %v1950
        %v1999 = vadd.f32 %v1904, %v1942
        %v2000 = vadd.f32 %v1905, %v1946
        %v2001 = vadd.f32 %v1906, %v1950
        %v2002 = vadd.f32 %v1907, %v1942
        %v2003 = vadd.f32 %v1908, %v1946
        %v2004 = vadd.f32 %v1909, %v1950
        %v2005 = vadd.f32 %v1910, %v1942
        %v2006 = vadd.f32 %v1911, %v1946
        %v2007 = vadd.f32 %v1912, %v1950
        %v2008 = vadd.f32 %v1913, %v1942
        %v2009 = vadd.f32 %v1914, %v1946
        %v2010 = vadd.f32 %v1915, %v1950
        %v2011 = vadd.f32 %v1916, %v1942
        %v2012 = vadd.f32 %v1917, %v1946
        %v2013 = vadd.f32 %v1918, %v1950
        %v2014 = vadd.f32 %v1919, %v1942
        %v2015 = vadd.f32 %v1920, %v1946
        %v2016 = vadd.f32 %v1921, %v1950
        %v2017 = vadd.f32 %v1922, %v1942
        %v2018 = vadd.f32 %v1923, %v1946
        %v2019 = vadd.f32 %v1924, %v1950
        %v2020 = vadd.f32 %v1925, %v1942
        %v2021 = vadd.f32 %v1926, %v1946
        %v2022 = vadd.f32 %v1927, %v1950
        %v2023 = vadd.f32 %v1928, %v1942
        %v2024 = vadd.f32 %v1929, %v1946
        %v2025 = vadd.f32 %v1930, %v1950
        %v2026 = vadd.f32 %v1931, %v1942
        %v2027 = vadd.f32 %v1932, %v1946
        %v2028 = vadd.f32 %v1933, %v1950
        %v2029 = vadd.f32 %v1934, %v1942
        %v2030 = vadd.f32 %v1935, %v1946
        %v2031 = vadd.f32 %v1936, %v1950
        %v2032 = vmax.f32 %v1954, 0.0
        %v2033 = vmax.f32 %v1955, 0.0
        %v2034 = vmax.f32 %v1956, 0.0
        %v2035 = vmax.f32 %v1957, 0.0
        %v2036 = vmax.f32 %v1958, 0.0
        %v2037 = vmax.f32 %v1959, 0.0
        %v2038 = vmax.f32 %v1960, 0.0
        %v2039 = vmax.f32 %v1961, 0.0
        %v2040 = vmax.f32 %v1962, 0.0
        %v2041 = vmax.f32 %v1963, 0.0
        %v2042 = vmax.f32 %v1964, 0.0
        %v2043 = vmax.f32 %v1965, 0.0
        %v2044 = vmax.f32 %v1966, 0.0
        %v2045 = vmax.f32 %v1967, 0.0
        %v2046 = vmax.f32 %v1968, 0.0
        %v2047 = vmax.f32 %v1969, 0.0
        %v2048 = vmax.f32 %v1970, 0.0
        %v2049 = vmax.f32 %v1971, 0.0
        %v2050 = vmax.f32 %v1972, 0.0
        %v2051 = vmax.f32 %v1973, 0.0
        %v2052 = vmax.f32 %v1974, 0.0
        %v2053 = vmax.f32 %v1975, 0.0
        %v2054 = vmax.f32 %v1976, 0.0
        %v2055 = vmax.f32 %v1977, 0.0
        %v2056 = vmax.f32 %v1978, 0.0
        %v2057 = vmax.f32 %v1979, 0.0
        %v2058 = vmax.f32 %v1980, 0.0
        %v2059 = vmax.f32 %v1981, 0.0
        %v2060 = vmax.f32 %v1982, 0.0
        %v2061 = vmax.f32 %v1983, 0.0
        %v2062 = vmax.f32 %v1984, 0.0
        %v2063 = vmax.f32 %v1985, 0.0
        %v2064 = vmax.f32 %v1986, 0.0
        %v2065 = vmax.f32 %v1987, 0.0
        %v2066 = vmax.f32 %v1988, 0.0
        %v2067 = vmax.f32 %v1989, 0.0
        %v2068 = vmax.f32 %v1990, 0.0
        %v2069 = vmax.f32 %v1991, 0.0
        %v2070 = vmax.f32 %v1992, 0.0
        %v2071 = vmax.f32 %v1993, 0.0
        %v2072 = vmax.f32 %v1994, 0.0
        %v2073 = vmax.f32 %v1995, 0.0
        %v2074 = vmax.f32 %v1996, 0.0
        %v2075 = vmax.f32 %v1997, 0.0
        %v2076 = vmax.f32 %v1998, 0.0
        %v2077 = vmax.f32 %v1999, 0.0
        %v2078 = vmax.f32 %v2000, 0.0
        %v2079 = vmax.f32 %v2001, 0.0
        %v2080 = vmax.f32 %v2002, 0.0
        %v2081 = vmax.f32 %v2003, 0.0
        %v2082 = vmax.f32 %v2004, 0.0
        %v2083 = vmax.f32 %v2005, 0.0
        %v2084 = vmax.f32 %v2006, 0.0
        %v2085 = vmax.f32 %v2007, 0.0
        %v2086 = vmax.f32 %v2008, 0.0
        %v2087 = vmax.f32 %v2009, 0.0
        %v2088 = vmax.f32 %v2010, 0.0
        %v2089 = vmax.f32 %v2011, 0.0
        %v2090 = vmax.f32 %v2012, 0.0
        %v2091 = vmax.f32 %v2013, 0.0
        %v2092 = vmax.f32 %v2014, 0.0
        %v2093 = vmax.f32 %v2015, 0.0
        %v2094 = vmax.f32 %v2016, 0.0
        %v2095 = vmax.f32 %v2017, 0.0
        %v2096 = vmax.f32 %v2018, 0.0
        %v2097 = vmax.f32 %v2019, 0.0
        %v2098 = vmax.f32 %v2020, 0.0
        %v2099 = vmax.f32 %v2021, 0.0
        %v2100 = vmax.f32 %v2022, 0.0
        %v2101 = vmax.f32 %v2023, 0.0
        %v2102 = vmax.f32 %v2024, 0.0
        %v2103 = vmax.f32 %v2025, 0.0
        %v2104 = vmax.f32 %v2026, 0.0
        %v2105 = vmax.f32 %v2027, 0.0
        %v2106 = vmax.f32 %v2028, 0.0
        %v2107 = vmax.f32 %v2029, 0.0
        %v2108 = vmax.f32 %v2030, 0.0
        %v2109 = vmax.f32 %v2031, 0.0
        %v2110 = vpack.c.bf16 %v2035, %v2032
        %v2111 = vpack.c.bf16 %v2036, %v2033
        %v2112 = vpack.c.bf16 %v2037, %v2034
        %v2113 = vpack.c.bf16 %v2041, %v2038
        %v2114 = vpack.c.bf16 %v2042, %v2039
        %v2115 = vpack.c.bf16 %v2043, %v2040
        %v2116 = vpack.c.bf16 %v2047, %v2044
        %v2117 = vpack.c.bf16 %v2048, %v2045
        %v2118 = vpack.c.bf16 %v2049, %v2046
        %v2119 = vpack.c.bf16 %v2053, %v2050
        %v2120 = vpack.c.bf16 %v2054, %v2051
        %v2121 = vpack.c.bf16 %v2055, %v2052
        %v2122 = vpack.c.bf16 %v2059, %v2056
        %v2123 = vpack.c.bf16 %v2060, %v2057
        %v2124 = vpack.c.bf16 %v2061, %v2058
        %v2125 = vpack.c.bf16 %v2065, %v2062
        %v2126 = vpack.c.bf16 %v2066, %v2063
        %v2127 = vpack.c.bf16 %v2067, %v2064
        %v2128 = vpack.c.bf16 %v2071, %v2068
        %v2129 = vpack.c.bf16 %v2072, %v2069
        %v2130 = vpack.c.bf16 %v2073, %v2070
        %v2131 = vpack.c.bf16 %v2077, %v2074
        %v2132 = vpack.c.bf16 %v2078, %v2075
        %v2133 = vpack.c.bf16 %v2079, %v2076
        %v2134 = vpack.c.bf16 %v2083, %v2080
        %v2135 = vpack.c.bf16 %v2084, %v2081
        %v2136 = vpack.c.bf16 %v2085, %v2082
        %v2137 = vpack.c.bf16 %v2089, %v2086
        %v2138 = vpack.c.bf16 %v2090, %v2087
        %v2139 = vpack.c.bf16 %v2091, %v2088
        %v2140 = vpack.c.bf16 %v2095, %v2092
        %v2141 = vpack.c.bf16 %v2096, %v2093
        %v2142 = vpack.c.bf16 %v2097, %v2094
        %v2143 = vpack.c.bf16 %v2101, %v2098
        %v2144 = vpack.c.bf16 %v2102, %v2099
        %v2145 = vpack.c.bf16 %v2103, %v2100
        %v2146 = vpack.c.bf16 %v2107, %v2104
        %v2147 = vpack.c.bf16 %v2108, %v2105
        %v2148 = vpack.c.bf16 %v2109, %v2106
        %v2149 = vld [vmem:[%s7] sm:$0xff]
        %v2150 = vld [vmem:[%s7 + $0x8] sm:$0xff]
        %v2151 = vld [vmem:[%s7 + $0x10] sm:$0xff]
        %v2152 = vld [vmem:[%s7 + $0x18] sm:$0xff]
        %v2153 = vld [vmem:[%s7 + $0x20] sm:$0xff]
        %v2154 = vld [vmem:[%s7 + $0x28] sm:$0xff]
        %v2155 = vld [vmem:[%s7 + $0x30] sm:$0xff]
        %v2156 = vld [vmem:[%s7 + $0x38] sm:$0xff]
        %v2157 = vld [vmem:[%s7 + $0x40] sm:$0xff]
        %v2158 = vld [vmem:[%s7 + $0x48] sm:$0xff]
        %v2159 = vld [vmem:[%s7 + $0x50] sm:$0xff]
        %v2160 = vld [vmem:[%s7 + $0x58] sm:$0xff]
        %v2161 = vld [vmem:[%s7 + $0x60] sm:$0xff]
        %v2162 = vld [vmem:[%s7 + $0x68] sm:$0xff]
        %v2177 = vunpack.c.l.b16 %v2149
        %v2178 = vunpack.c.h.b16 %v2149
        %v2179 = vunpack.c.l.b16 %v2150
        %v2180 = vunpack.c.h.b16 %v2150
        %v2181 = vunpack.c.l.b16 %v2151
        %v2182 = vunpack.c.h.b16 %v2151
        %v2183 = vunpack.c.l.b16 %v2152
        %v2184 = vunpack.c.h.b16 %v2152
        %v2185 = vunpack.c.l.b16 %v2153
        %v2186 = vunpack.c.h.b16 %v2153
        %v2187 = vunpack.c.l.b16 %v2154
        %v2188 = vunpack.c.h.b16 %v2154
        %v2189 = vunpack.c.l.b16 %v2155
        %v2190 = vunpack.c.h.b16 %v2155
        %v2191 = vunpack.c.l.b16 %v2156
        %v2192 = vunpack.c.h.b16 %v2156
        %v2193 = vunpack.c.l.b16 %v2157
        %v2194 = vunpack.c.h.b16 %v2157
        %v2195 = vunpack.c.l.b16 %v2158
        %v2196 = vunpack.c.h.b16 %v2158
        %v2197 = vunpack.c.l.b16 %v2159
        %v2198 = vunpack.c.h.b16 %v2159
        %v2199 = vunpack.c.l.b16 %v2160
        %v2200 = vunpack.c.h.b16 %v2160
        %v2201 = vunpack.c.l.b16 %v2161
        %v2202 = vunpack.c.h.b16 %v2161
        %v2203 = vunpack.c.l.b16 %v2162
        %v2204 = vunpack.c.h.b16 %v2162
        %v2205 = vpack.c.b16 %v2179, %v2177
        %v2206 = vpack.c.b16 %v2180, %v2178
        %v2207 = vpack.c.b16 %v2183, %v2181
        %v2208 = vpack.c.b16 %v2184, %v2182
        %v2209 = vpack.c.b16 %v2187, %v2185
        %v2210 = vpack.c.b16 %v2188, %v2186
        %v2211 = vpack.c.b16 %v2191, %v2189
        %v2212 = vpack.c.b16 %v2192, %v2190
        %v2213 = vpack.c.b16 %v2195, %v2193
        %v2214 = vpack.c.b16 %v2196, %v2194
        %v2215 = vpack.c.b16 %v2199, %v2197
        %v2216 = vpack.c.b16 %v2200, %v2198
        %v2217 = vpack.c.b16 %v2203, %v2201
        %v2218 = vpack.c.b16 %v2204, %v2202
        %vm2226 = vcmask 637952
        %v2228 = vsel %vm2226, %v2206, 0
        %v2231 = vsel %vm2226, %v2208, 0
        %v2234 = vsel %vm2226, %v2210, 0
        %v2237 = vsel %vm2226, %v2212, 0
        %v2240 = vsel %vm2226, %v2214, 0
        %v2243 = vsel %vm2226, %v2216, 0
        %v2246 = vsel %vm2226, %v2218, 0
        %vm2248 = vcmask 1046528
        %v2250 = vsel %vm2248, %v2146, 0
        %v2253 = vsel %vm2248, %v2147, 0
        %v2256 = vsel %vm2248, %v2148, 0
        %2258 = vmatprep.subr.bf16.mxu0 %v2132
        %2259 = vmatpush1.bf16.msra.mxu0 %v2131
        %2260 = vmatprep.subr.bf16.mxu0 %v2129
        %2261 = vmatpush1.bf16.msra.mxu0 %v2128
        %2262 = vmatprep.subr.bf16.mxu0 %v2126
        %2263 = vmatpush1.bf16.msra.mxu0 %v2125
        %2264 = vmatprep.subr.bf16.mxu0 %v2123
        %2265 = vmatpush1.bf16.msra.mxu0 %v2122
        %2266 = vmatprep.subr.bf16.mxu0 %v2120
        %2267 = vmatpush1.bf16.msra.mxu0 %v2119
        %2268 = vmatprep.subr.bf16.mxu0 %v2117
        %2269 = vmatpush1.bf16.msra.mxu0 %v2116
        %2270 = vmatprep.subr.bf16.mxu0 %v2114
        %2271 = vmatpush1.bf16.msra.mxu0 %v2113
        %2272 = vmatprep.subr.bf16.mxu0 %v2111
        %2273 = vmatpush1.bf16.msra.mxu0 %v2110
        %2274 = vmatprep.subr.bf16.mxu0 0
        %2275 = vmatpush2.bf16.msra.mxu0 0
        %2276 = vmatprep.subr.bf16.mxu0 0
        %2277 = vmatpush2.bf16.msra.mxu0 0
        %2278 = vmatprep.subr.bf16.mxu0 0
        %2279 = vmatpush2.bf16.msra.mxu0 0
        %2280 = vmatprep.subr.bf16.mxu0 %v2253
        %2281 = vmatpush2.bf16.msra.mxu0 %v2250
        %2282 = vmatprep.subr.bf16.mxu0 %v2144
        %2283 = vmatpush2.bf16.msra.mxu0 %v2143
        %2284 = vmatprep.subr.bf16.mxu0 %v2141
        %2285 = vmatpush2.bf16.msra.mxu0 %v2140
        %2286 = vmatprep.subr.bf16.mxu0 %v2138
        %2287 = vmatpush2.bf16.msra.mxu0 %v2137
        %2288 = vmatprep.subr.bf16.mxu0 %v2135
        %2289 = vmatpush2.bf16.msra.mxu0 %v2134
        %2290 = vmatprep.mubr.bf16.mxu0 %v2228
        %2291 = vmatmul.mubr.bf16.gmra.mxu0 %v2205
        %v2292 = vpop.f32.mrf.mxu0
        %v2293 = vadd.f32 0.0, %v2292
        %v2294 = vpop.f32.mrf.mxu0
        %v2295 = vadd.f32 0.0, %v2294
        %v2296 = vpop.f32.mrf.mxu0
        %v2297 = vadd.f32 0.0, %v2296
        %v2298 = vpop.f32.mrf.mxu0
        %v2299 = vadd.f32 0.0, %v2298
        %2300 = vmatprep.mubr.bf16.mxu0 %v2231
        %2301 = vmatmul.mubr.bf16.gmra.mxu0 %v2207
        %v2302 = vpop.f32.mrf.mxu0
        %v2303 = vadd.f32 0.0, %v2302
        %v2304 = vpop.f32.mrf.mxu0
        %v2305 = vadd.f32 0.0, %v2304
        %v2306 = vpop.f32.mrf.mxu0
        %v2307 = vadd.f32 0.0, %v2306
        %v2308 = vpop.f32.mrf.mxu0
        %v2309 = vadd.f32 0.0, %v2308
        %2310 = vmatprep.mubr.bf16.mxu0 %v2234
        %2311 = vmatmul.mubr.bf16.gmra.mxu0 %v2209
        %v2312 = vpop.f32.mrf.mxu0
        %v2313 = vadd.f32 0.0, %v2312
        %v2314 = vpop.f32.mrf.mxu0
        %v2315 = vadd.f32 0.0, %v2314
        %v2316 = vpop.f32.mrf.mxu0
        %v2317 = vadd.f32 0.0, %v2316
        %v2318 = vpop.f32.mrf.mxu0
        %v2319 = vadd.f32 0.0, %v2318
        %2320 = vmatprep.mubr.bf16.mxu0 %v2237
        %2321 = vmatmul.mubr.bf16.gmra.mxu0 %v2211
        %v2322 = vpop.f32.mrf.mxu0
        %v2323 = vadd.f32 0.0, %v2322
        %v2324 = vpop.f32.mrf.mxu0
        %v2325 = vadd.f32 0.0, %v2324
        %v2326 = vpop.f32.mrf.mxu0
        %v2327 = vadd.f32 0.0, %v2326
        %v2328 = vpop.f32.mrf.mxu0
        %v2329 = vadd.f32 0.0, %v2328
        %2330 = vmatprep.mubr.bf16.mxu0 %v2240
        %2331 = vmatmul.mubr.bf16.gmra.mxu0 %v2213
        %v2332 = vpop.f32.mrf.mxu0
        %v2333 = vadd.f32 0.0, %v2332
        %v2334 = vpop.f32.mrf.mxu0
        %v2335 = vadd.f32 0.0, %v2334
        %v2336 = vpop.f32.mrf.mxu0
        %v2337 = vadd.f32 0.0, %v2336
        %v2338 = vpop.f32.mrf.mxu0
        %v2339 = vadd.f32 0.0, %v2338
        %2340 = vmatprep.mubr.bf16.mxu0 %v2243
        %2341 = vmatmul.mubr.bf16.gmra.mxu0 %v2215
        %v2342 = vpop.f32.mrf.mxu0
        %v2343 = vadd.f32 0.0, %v2342
        %v2344 = vpop.f32.mrf.mxu0
        %v2345 = vadd.f32 0.0, %v2344
        %v2346 = vpop.f32.mrf.mxu0
        %v2347 = vadd.f32 0.0, %v2346
        %v2348 = vpop.f32.mrf.mxu0
        %v2349 = vadd.f32 0.0, %v2348
        %2350 = vmatprep.mubr.bf16.mxu0 %v2246
        %2351 = vmatmul.mubr.bf16.gmra.mxu0 %v2217
        %v2352 = vpop.f32.mrf.mxu0
        %v2353 = vadd.f32 0.0, %v2352
        %v2354 = vpop.f32.mrf.mxu0
        %v2355 = vadd.f32 0.0, %v2354
        %v2356 = vpop.f32.mrf.mxu0
        %v2357 = vadd.f32 0.0, %v2356
        %v2358 = vpop.f32.mrf.mxu0
        %v2359 = vadd.f32 0.0, %v2358
        %2360 = vdwg.mxu0
        %2361 = vmatprep.subr.bf16.mxu0 0
        %2362 = vmatpush1.bf16.msra.mxu0 %v2133
        %2363 = vmatprep.subr.bf16.mxu0 0
        %2364 = vmatpush1.bf16.msra.mxu0 %v2130
        %2365 = vmatprep.subr.bf16.mxu0 0
        %2366 = vmatpush1.bf16.msra.mxu0 %v2127
        %2367 = vmatprep.subr.bf16.mxu0 0
        %2368 = vmatpush1.bf16.msra.mxu0 %v2124
        %2369 = vmatprep.subr.bf16.mxu0 0
        %2370 = vmatpush1.bf16.msra.mxu0 %v2121
        %2371 = vmatprep.subr.bf16.mxu0 0
        %2372 = vmatpush1.bf16.msra.mxu0 %v2118
        %2373 = vmatprep.subr.bf16.mxu0 0
        %2374 = vmatpush1.bf16.msra.mxu0 %v2115
        %2375 = vmatprep.subr.bf16.mxu0 0
        %2376 = vmatpush1.bf16.msra.mxu0 %v2112
        %2377 = vmatprep.subr.bf16.mxu0 0
        %2378 = vmatpush2.bf16.msra.mxu0 0
        %2379 = vmatprep.subr.bf16.mxu0 0
        %2380 = vmatpush2.bf16.msra.mxu0 0
        %2381 = vmatprep.subr.bf16.mxu0 0
        %2382 = vmatpush2.bf16.msra.mxu0 0
        %2383 = vmatprep.subr.bf16.mxu0 0
        %2384 = vmatpush2.bf16.msra.mxu0 %v2256
        %2385 = vmatprep.subr.bf16.mxu0 0
        %2386 = vmatpush2.bf16.msra.mxu0 %v2145
        %2387 = vmatprep.subr.bf16.mxu0 0
        %2388 = vmatpush2.bf16.msra.mxu0 %v2142
        %2389 = vmatprep.subr.bf16.mxu0 0
        %2390 = vmatpush2.bf16.msra.mxu0 %v2139
        %2391 = vmatprep.subr.bf16.mxu0 0
        %2392 = vmatpush2.bf16.msra.mxu0 %v2136
        %2393 = vmatprep.mubr.bf16.mxu0 %v2228
        %2394 = vmatmul.mubr.bf16.gmra.mxu0 %v2205
        %v2395 = vpop.f32.mrf.mxu0
        %v2396 = vadd.f32 0.0, %v2395
        %v2397 = vpop.f32.mrf.mxu0
        %v2398 = vpop.f32.mrf.mxu0
        %v2399 = vadd.f32 0.0, %v2398
        %v2400 = vpop.f32.mrf.mxu0
        %2401 = vmatprep.mubr.bf16.mxu0 %v2231
        %2402 = vmatmul.mubr.bf16.gmra.mxu0 %v2207
        %v2403 = vpop.f32.mrf.mxu0
        %v2404 = vadd.f32 0.0, %v2403
        %v2405 = vpop.f32.mrf.mxu0
        %v2406 = vpop.f32.mrf.mxu0
        %v2407 = vadd.f32 0.0, %v2406
        %v2408 = vpop.f32.mrf.mxu0
        %2409 = vmatprep.mubr.bf16.mxu0 %v2234
        %2410 = vmatmul.mubr.bf16.gmra.mxu0 %v2209
        %v2411 = vpop.f32.mrf.mxu0
        %v2412 = vadd.f32 0.0, %v2411
        %v2413 = vpop.f32.mrf.mxu0
        %v2414 = vpop.f32.mrf.mxu0
        %v2415 = vadd.f32 0.0, %v2414
        %v2416 = vpop.f32.mrf.mxu0
        %2417 = vmatprep.mubr.bf16.mxu0 %v2237
        %2418 = vmatmul.mubr.bf16.gmra.mxu0 %v2211
        %v2419 = vpop.f32.mrf.mxu0
        %v2420 = vadd.f32 0.0, %v2419
        %v2421 = vpop.f32.mrf.mxu0
        %v2422 = vpop.f32.mrf.mxu0
        %v2423 = vadd.f32 0.0, %v2422
        %v2424 = vpop.f32.mrf.mxu0
        %2425 = vmatprep.mubr.bf16.mxu0 %v2240
        %2426 = vmatmul.mubr.bf16.gmra.mxu0 %v2213
        %v2427 = vpop.f32.mrf.mxu0
        %v2428 = vadd.f32 0.0, %v2427
        %v2429 = vpop.f32.mrf.mxu0
        %v2430 = vpop.f32.mrf.mxu0
        %v2431 = vadd.f32 0.0, %v2430
        %v2432 = vpop.f32.mrf.mxu0
        %2433 = vmatprep.mubr.bf16.mxu0 %v2243
        %2434 = vmatmul.mubr.bf16.gmra.mxu0 %v2215
        %v2435 = vpop.f32.mrf.mxu0
        %v2436 = vadd.f32 0.0, %v2435
        %v2437 = vpop.f32.mrf.mxu0
        %v2438 = vpop.f32.mrf.mxu0
        %v2439 = vadd.f32 0.0, %v2438
        %v2440 = vpop.f32.mrf.mxu0
        %2441 = vmatprep.mubr.bf16.mxu0 %v2246
        %2442 = vmatmul.mubr.bf16.gmra.mxu0 %v2217
        %v2443 = vpop.f32.mrf.mxu0
        %v2444 = vadd.f32 0.0, %v2443
        %v2445 = vpop.f32.mrf.mxu0
        %v2446 = vpop.f32.mrf.mxu0
        %v2447 = vadd.f32 0.0, %v2446
        %v2448 = vpop.f32.mrf.mxu0
        %2449 = vdwg.mxu0
        %s2450 = scalar_lea.vmem %s7, 112
        %v2451 = vld [vmem:[%s2450] sm:$0xff]
        %v2452 = vld [vmem:[%s2450 + $0x8] sm:$0xff]
        %v2453 = vld [vmem:[%s2450 + $0x10] sm:$0xff]
        %v2454 = vld [vmem:[%s2450 + $0x18] sm:$0xff]
        %v2455 = vld [vmem:[%s2450 + $0x20] sm:$0xff]
        %v2456 = vld [vmem:[%s2450 + $0x28] sm:$0xff]
        %v2457 = vld [vmem:[%s2450 + $0x30] sm:$0xff]
        %v2458 = vld [vmem:[%s2450 + $0x38] sm:$0xff]
        %v2459 = vld [vmem:[%s2450 + $0x40] sm:$0xff]
        %v2460 = vld [vmem:[%s2450 + $0x48] sm:$0xff]
        %v2461 = vld [vmem:[%s2450 + $0x50] sm:$0xff]
        %v2462 = vld [vmem:[%s2450 + $0x58] sm:$0xff]
        %v2463 = vld [vmem:[%s2450 + $0x60] sm:$0xff]
        %v2464 = vld [vmem:[%s2450 + $0x68] sm:$0xff]
        %v2479 = vunpack.c.l.b16 %v2451
        %v2480 = vunpack.c.h.b16 %v2451
        %v2481 = vunpack.c.l.b16 %v2452
        %v2482 = vunpack.c.h.b16 %v2452
        %v2483 = vunpack.c.l.b16 %v2453
        %v2484 = vunpack.c.h.b16 %v2453
        %v2485 = vunpack.c.l.b16 %v2454
        %v2486 = vunpack.c.h.b16 %v2454
        %v2487 = vunpack.c.l.b16 %v2455
        %v2488 = vunpack.c.h.b16 %v2455
        %v2489 = vunpack.c.l.b16 %v2456
        %v2490 = vunpack.c.h.b16 %v2456
        %v2491 = vunpack.c.l.b16 %v2457
        %v2492 = vunpack.c.h.b16 %v2457
        %v2493 = vunpack.c.l.b16 %v2458
        %v2494 = vunpack.c.h.b16 %v2458
        %v2495 = vunpack.c.l.b16 %v2459
        %v2496 = vunpack.c.h.b16 %v2459
        %v2497 = vunpack.c.l.b16 %v2460
        %v2498 = vunpack.c.h.b16 %v2460
        %v2499 = vunpack.c.l.b16 %v2461
        %v2500 = vunpack.c.h.b16 %v2461
        %v2501 = vunpack.c.l.b16 %v2462
        %v2502 = vunpack.c.h.b16 %v2462
        %v2503 = vunpack.c.l.b16 %v2463
        %v2504 = vunpack.c.h.b16 %v2463
        %v2505 = vunpack.c.l.b16 %v2464
        %v2506 = vunpack.c.h.b16 %v2464
        %v2507 = vpack.c.b16 %v2481, %v2479
        %v2508 = vpack.c.b16 %v2482, %v2480
        %v2509 = vpack.c.b16 %v2485, %v2483
        %v2510 = vpack.c.b16 %v2486, %v2484
        %v2511 = vpack.c.b16 %v2489, %v2487
        %v2512 = vpack.c.b16 %v2490, %v2488
        %v2513 = vpack.c.b16 %v2493, %v2491
        %v2514 = vpack.c.b16 %v2494, %v2492
        %v2515 = vpack.c.b16 %v2497, %v2495
        %v2516 = vpack.c.b16 %v2498, %v2496
        %v2517 = vpack.c.b16 %v2501, %v2499
        %v2518 = vpack.c.b16 %v2502, %v2500
        %v2519 = vpack.c.b16 %v2505, %v2503
        %v2520 = vpack.c.b16 %v2506, %v2504
        %v2529 = vsel %vm2226, %v2508, 0
        %v2532 = vsel %vm2226, %v2510, 0
        %v2535 = vsel %vm2226, %v2512, 0
        %v2538 = vsel %vm2226, %v2514, 0
        %v2541 = vsel %vm2226, %v2516, 0
        %v2544 = vsel %vm2226, %v2518, 0
        %v2547 = vsel %vm2226, %v2520, 0
        %2549 = vmatprep.subr.bf16.mxu0 %v2132
        %2550 = vmatpush1.bf16.msra.mxu0 %v2131
        %2551 = vmatprep.subr.bf16.mxu0 %v2129
        %2552 = vmatpush1.bf16.msra.mxu0 %v2128
        %2553 = vmatprep.subr.bf16.mxu0 %v2126
        %2554 = vmatpush1.bf16.msra.mxu0 %v2125
        %2555 = vmatprep.subr.bf16.mxu0 %v2123
        %2556 = vmatpush1.bf16.msra.mxu0 %v2122
        %2557 = vmatprep.subr.bf16.mxu0 %v2120
        %2558 = vmatpush1.bf16.msra.mxu0 %v2119
        %2559 = vmatprep.subr.bf16.mxu0 %v2117
        %2560 = vmatpush1.bf16.msra.mxu0 %v2116
        %2561 = vmatprep.subr.bf16.mxu0 %v2114
        %2562 = vmatpush1.bf16.msra.mxu0 %v2113
        %2563 = vmatprep.subr.bf16.mxu0 %v2111
        %2564 = vmatpush1.bf16.msra.mxu0 %v2110
        %2565 = vmatprep.subr.bf16.mxu0 0
        %2566 = vmatpush2.bf16.msra.mxu0 0
        %2567 = vmatprep.subr.bf16.mxu0 0
        %2568 = vmatpush2.bf16.msra.mxu0 0
        %2569 = vmatprep.subr.bf16.mxu0 0
        %2570 = vmatpush2.bf16.msra.mxu0 0
        %2571 = vmatprep.subr.bf16.mxu0 %v2253
        %2572 = vmatpush2.bf16.msra.mxu0 %v2250
        %2573 = vmatprep.subr.bf16.mxu0 %v2144
        %2574 = vmatpush2.bf16.msra.mxu0 %v2143
        %2575 = vmatprep.subr.bf16.mxu0 %v2141
        %2576 = vmatpush2.bf16.msra.mxu0 %v2140
        %2577 = vmatprep.subr.bf16.mxu0 %v2138
        %2578 = vmatpush2.bf16.msra.mxu0 %v2137
        %2579 = vmatprep.subr.bf16.mxu0 %v2135
        %2580 = vmatpush2.bf16.msra.mxu0 %v2134
        %2581 = vmatprep.mubr.bf16.mxu0 %v2529
        %2582 = vmatmul.mubr.bf16.gmra.mxu0 %v2507
        %v2583 = vpop.f32.mrf.mxu0
        %v2584 = vadd.f32 0.0, %v2583
        %v2585 = vpop.f32.mrf.mxu0
        %v2586 = vadd.f32 0.0, %v2585
        %v2587 = vpop.f32.mrf.mxu0
        %v2588 = vadd.f32 0.0, %v2587
        %v2589 = vpop.f32.mrf.mxu0
        %v2590 = vadd.f32 0.0, %v2589
        %2591 = vmatprep.mubr.bf16.mxu0 %v2532
        %2592 = vmatmul.mubr.bf16.gmra.mxu0 %v2509
        %v2593 = vpop.f32.mrf.mxu0
        %v2594 = vadd.f32 0.0, %v2593
        %v2595 = vpop.f32.mrf.mxu0
        %v2596 = vadd.f32 0.0, %v2595
        %v2597 = vpop.f32.mrf.mxu0
        %v2598 = vadd.f32 0.0, %v2597
        %v2599 = vpop.f32.mrf.mxu0
        %v2600 = vadd.f32 0.0, %v2599
        %2601 = vmatprep.mubr.bf16.mxu0 %v2535
        %2602 = vmatmul.mubr.bf16.gmra.mxu0 %v2511
        %v2603 = vpop.f32.mrf.mxu0
        %v2604 = vadd.f32 0.0, %v2603
        %v2605 = vpop.f32.mrf.mxu0
        %v2606 = vadd.f32 0.0, %v2605
        %v2607 = vpop.f32.mrf.mxu0
        %v2608 = vadd.f32 0.0, %v2607
        %v2609 = vpop.f32.mrf.mxu0
        %v2610 = vadd.f32 0.0, %v2609
        %2611 = vmatprep.mubr.bf16.mxu0 %v2538
        %2612 = vmatmul.mubr.bf16.gmra.mxu0 %v2513
        %v2613 = vpop.f32.mrf.mxu0
        %v2614 = vadd.f32 0.0, %v2613
        %v2615 = vpop.f32.mrf.mxu0
        %v2616 = vadd.f32 0.0, %v2615
        %v2617 = vpop.f32.mrf.mxu0
        %v2618 = vadd.f32 0.0, %v2617
        %v2619 = vpop.f32.mrf.mxu0
        %v2620 = vadd.f32 0.0, %v2619
        %2621 = vmatprep.mubr.bf16.mxu0 %v2541
        %2622 = vmatmul.mubr.bf16.gmra.mxu0 %v2515
        %v2623 = vpop.f32.mrf.mxu0
        %v2624 = vadd.f32 0.0, %v2623
        %v2625 = vpop.f32.mrf.mxu0
        %v2626 = vadd.f32 0.0, %v2625
        %v2627 = vpop.f32.mrf.mxu0
        %v2628 = vadd.f32 0.0, %v2627
        %v2629 = vpop.f32.mrf.mxu0
        %v2630 = vadd.f32 0.0, %v2629
        %2631 = vmatprep.mubr.bf16.mxu0 %v2544
        %2632 = vmatmul.mubr.bf16.gmra.mxu0 %v2517
        %v2633 = vpop.f32.mrf.mxu0
        %v2634 = vadd.f32 0.0, %v2633
        %v2635 = vpop.f32.mrf.mxu0
        %v2636 = vadd.f32 0.0, %v2635
        %v2637 = vpop.f32.mrf.mxu0
        %v2638 = vadd.f32 0.0, %v2637
        %v2639 = vpop.f32.mrf.mxu0
        %v2640 = vadd.f32 0.0, %v2639
        %2641 = vmatprep.mubr.bf16.mxu0 %v2547
        %2642 = vmatmul.mubr.bf16.gmra.mxu0 %v2519
        %v2643 = vpop.f32.mrf.mxu0
        %v2644 = vadd.f32 0.0, %v2643
        %v2645 = vpop.f32.mrf.mxu0
        %v2646 = vadd.f32 0.0, %v2645
        %v2647 = vpop.f32.mrf.mxu0
        %v2648 = vadd.f32 0.0, %v2647
        %v2649 = vpop.f32.mrf.mxu0
        %v2650 = vadd.f32 0.0, %v2649
        %2651 = vdwg.mxu0
        %2652 = vmatprep.subr.bf16.mxu0 0
        %2653 = vmatpush1.bf16.msra.mxu0 %v2133
        %2654 = vmatprep.subr.bf16.mxu0 0
        %2655 = vmatpush1.bf16.msra.mxu0 %v2130
        %2656 = vmatprep.subr.bf16.mxu0 0
        %2657 = vmatpush1.bf16.msra.mxu0 %v2127
        %2658 = vmatprep.subr.bf16.mxu0 0
        %2659 = vmatpush1.bf16.msra.mxu0 %v2124
        %2660 = vmatprep.subr.bf16.mxu0 0
        %2661 = vmatpush1.bf16.msra.mxu0 %v2121
        %2662 = vmatprep.subr.bf16.mxu0 0
        %2663 = vmatpush1.bf16.msra.mxu0 %v2118
        %2664 = vmatprep.subr.bf16.mxu0 0
        %2665 = vmatpush1.bf16.msra.mxu0 %v2115
        %2666 = vmatprep.subr.bf16.mxu0 0
        %2667 = vmatpush1.bf16.msra.mxu0 %v2112
        %2668 = vmatprep.subr.bf16.mxu0 0
        %2669 = vmatpush2.bf16.msra.mxu0 0
        %2670 = vmatprep.subr.bf16.mxu0 0
        %2671 = vmatpush2.bf16.msra.mxu0 0
        %2672 = vmatprep.subr.bf16.mxu0 0
        %2673 = vmatpush2.bf16.msra.mxu0 0
        %2674 = vmatprep.subr.bf16.mxu0 0
        %2675 = vmatpush2.bf16.msra.mxu0 %v2256
        %2676 = vmatprep.subr.bf16.mxu0 0
        %2677 = vmatpush2.bf16.msra.mxu0 %v2145
        %2678 = vmatprep.subr.bf16.mxu0 0
        %2679 = vmatpush2.bf16.msra.mxu0 %v2142
        %2680 = vmatprep.subr.bf16.mxu0 0
        %2681 = vmatpush2.bf16.msra.mxu0 %v2139
        %2682 = vmatprep.subr.bf16.mxu0 0
        %2683 = vmatpush2.bf16.msra.mxu0 %v2136
        %2684 = vmatprep.mubr.bf16.mxu0 %v2529
        %2685 = vmatmul.mubr.bf16.gmra.mxu0 %v2507
        %v2686 = vpop.f32.mrf.mxu0
        %v2687 = vadd.f32 0.0, %v2686
        %v2688 = vpop.f32.mrf.mxu0
        %v2689 = vpop.f32.mrf.mxu0
        %v2690 = vadd.f32 0.0, %v2689
        %v2691 = vpop.f32.mrf.mxu0
        %2692 = vmatprep.mubr.bf16.mxu0 %v2532
        %2693 = vmatmul.mubr.bf16.gmra.mxu0 %v2509
        %v2694 = vpop.f32.mrf.mxu0
        %v2695 = vadd.f32 0.0, %v2694
        %v2696 = vpop.f32.mrf.mxu0
        %v2697 = vpop.f32.mrf.mxu0
        %v2698 = vadd.f32 0.0, %v2697
        %v2699 = vpop.f32.mrf.mxu0
        %2700 = vmatprep.mubr.bf16.mxu0 %v2535
        %2701 = vmatmul.mubr.bf16.gmra.mxu0 %v2511
        %v2702 = vpop.f32.mrf.mxu0
        %v2703 = vadd.f32 0.0, %v2702
        %v2704 = vpop.f32.mrf.mxu0
        %v2705 = vpop.f32.mrf.mxu0
        %v2706 = vadd.f32 0.0, %v2705
        %v2707 = vpop.f32.mrf.mxu0
        %2708 = vmatprep.mubr.bf16.mxu0 %v2538
        %2709 = vmatmul.mubr.bf16.gmra.mxu0 %v2513
        %v2710 = vpop.f32.mrf.mxu0
        %v2711 = vadd.f32 0.0, %v2710
        %v2712 = vpop.f32.mrf.mxu0
        %v2713 = vpop.f32.mrf.mxu0
        %v2714 = vadd.f32 0.0, %v2713
        %v2715 = vpop.f32.mrf.mxu0
        %2716 = vmatprep.mubr.bf16.mxu0 %v2541
        %2717 = vmatmul.mubr.bf16.gmra.mxu0 %v2515
        %v2718 = vpop.f32.mrf.mxu0
        %v2719 = vadd.f32 0.0, %v2718
        %v2720 = vpop.f32.mrf.mxu0
        %v2721 = vpop.f32.mrf.mxu0
        %v2722 = vadd.f32 0.0, %v2721
        %v2723 = vpop.f32.mrf.mxu0
        %2724 = vmatprep.mubr.bf16.mxu0 %v2544
        %2725 = vmatmul.mubr.bf16.gmra.mxu0 %v2517
        %v2726 = vpop.f32.mrf.mxu0
        %v2727 = vadd.f32 0.0, %v2726
        %v2728 = vpop.f32.mrf.mxu0
        %v2729 = vpop.f32.mrf.mxu0
        %v2730 = vadd.f32 0.0, %v2729
        %v2731 = vpop.f32.mrf.mxu0
        %2732 = vmatprep.mubr.bf16.mxu0 %v2547
        %2733 = vmatmul.mubr.bf16.gmra.mxu0 %v2519
        %v2734 = vpop.f32.mrf.mxu0
        %v2735 = vadd.f32 0.0, %v2734
        %v2736 = vpop.f32.mrf.mxu0
        %v2737 = vpop.f32.mrf.mxu0
        %v2738 = vadd.f32 0.0, %v2737
        %v2739 = vpop.f32.mrf.mxu0
        %2740 = vdwg.mxu0
        %v2741 = vmax.f32 %v2293, %v2584
        %v2742 = vmax.f32 %v2295, %v2586
        %v2743 = vmax.f32 %v2396, %v2687
        %v2744 = vmax.f32 %v2297, %v2588
        %v2745 = vmax.f32 %v2299, %v2590
        %v2746 = vmax.f32 %v2399, %v2690
        %v2747 = vmax.f32 %v2303, %v2594
        %v2748 = vmax.f32 %v2305, %v2596
        %v2749 = vmax.f32 %v2404, %v2695
        %v2750 = vmax.f32 %v2307, %v2598
        %v2751 = vmax.f32 %v2309, %v2600
        %v2752 = vmax.f32 %v2407, %v2698
        %v2753 = vmax.f32 %v2313, %v2604
        %v2754 = vmax.f32 %v2315, %v2606
        %v2755 = vmax.f32 %v2412, %v2703
        %v2756 = vmax.f32 %v2317, %v2608
        %v2757 = vmax.f32 %v2319, %v2610
        %v2758 = vmax.f32 %v2415, %v2706
        %v2759 = vmax.f32 %v2323, %v2614
        %v2760 = vmax.f32 %v2325, %v2616
        %v2761 = vmax.f32 %v2420, %v2711
        %v2762 = vmax.f32 %v2327, %v2618
        %v2763 = vmax.f32 %v2329, %v2620
        %v2764 = vmax.f32 %v2423, %v2714
        %v2765 = vmax.f32 %v2333, %v2624
        %v2766 = vmax.f32 %v2335, %v2626
        %v2767 = vmax.f32 %v2428, %v2719
        %v2768 = vmax.f32 %v2337, %v2628
        %v2769 = vmax.f32 %v2339, %v2630
        %v2770 = vmax.f32 %v2431, %v2722
        %v2771 = vmax.f32 %v2343, %v2634
        %v2772 = vmax.f32 %v2345, %v2636
        %v2773 = vmax.f32 %v2436, %v2727
        %v2774 = vmax.f32 %v2347, %v2638
        %v2775 = vmax.f32 %v2349, %v2640
        %v2776 = vmax.f32 %v2439, %v2730
        %v2777 = vmax.f32 %v2353, %v2644
        %v2778 = vmax.f32 %v2355, %v2646
        %v2779 = vmax.f32 %v2444, %v2735
        %v2780 = vmax.f32 %v2357, %v2648
        %v2781 = vmax.f32 %v2359, %v2650
        %v2782 = vmax.f32 %v2447, %v2738
        %v2783 = vpack.c.bf16 %v2744, %v2741
        %v2784 = vpack.c.bf16 %v2745, %v2742
        %v2785 = vpack.c.bf16 %v2746, %v2743
        %v2786 = vpack.c.bf16 %v2750, %v2747
        %v2787 = vpack.c.bf16 %v2751, %v2748
        %v2788 = vpack.c.bf16 %v2752, %v2749
        %v2789 = vpack.c.bf16 %v2756, %v2753
        %v2790 = vpack.c.bf16 %v2757, %v2754
        %v2791 = vpack.c.bf16 %v2758, %v2755
        %v2792 = vpack.c.bf16 %v2762, %v2759
        %v2793 = vpack.c.bf16 %v2763, %v2760
        %v2794 = vpack.c.bf16 %v2764, %v2761
        %v2795 = vpack.c.bf16 %v2768, %v2765
        %v2796 = vpack.c.bf16 %v2769, %v2766
        %v2797 = vpack.c.bf16 %v2770, %v2767
        %v2798 = vpack.c.bf16 %v2774, %v2771
        %v2799 = vpack.c.bf16 %v2775, %v2772
        %v2800 = vpack.c.bf16 %v2776, %v2773
        %v2801 = vpack.c.bf16 %v2780, %v2777
        %v2802 = vpack.c.bf16 %v2781, %v2778
        %v2803 = vpack.c.bf16 %v2782, %v2779
        %v2804 = vld [vmem:[%s8] sm:$0xff]
        %v2805 = vld [vmem:[%s8 + $0x8] sm:$0xff]
        %v2806 = vld [vmem:[%s8 + $0x10] sm:$0xff]
        %v2807 = vld [vmem:[%s8 + $0x18] sm:$0xff]
        %v2808 = vld [vmem:[%s8 + $0x20] sm:$0xff]
        %v2809 = vld [vmem:[%s8 + $0x28] sm:$0xff]
        %v2810 = vld [vmem:[%s8 + $0x30] sm:$0xff]
        %v2811 = vld [vmem:[%s8 + $0x38] sm:$0xff]
        %v2812 = vld [vmem:[%s8 + $0x40] sm:$0xff]
        %v2813 = vld [vmem:[%s8 + $0x48] sm:$0xff]
        %v2814 = vld [vmem:[%s8 + $0x50] sm:$0xff]
        %v2815 = vld [vmem:[%s8 + $0x58] sm:$0xff]
        %v2816 = vld [vmem:[%s8 + $0x60] sm:$0xff]
        %v2817 = vld [vmem:[%s8 + $0x68] sm:$0xff]
        %v2818 = vld [vmem:[%s8 + $0x70] sm:$0xff]
        %v2819 = vld [vmem:[%s8 + $0x78] sm:$0xff]
        %v2820 = vld [vmem:[%s8 + $0x80] sm:$0xff]
        %v2821 = vld [vmem:[%s8 + $0x88] sm:$0xff]
        %v2822 = vld [vmem:[%s8 + $0x90] sm:$0xff]
        %v2823 = vld [vmem:[%s8 + $0x98] sm:$0xff]
        %v2824 = vld [vmem:[%s8 + $0xa0] sm:$0xff]
        %v2825 = vld [vmem:[%s8 + $0xa8] sm:$0xff]
        %v2826 = vld [vmem:[%s8 + $0xb0] sm:$0xff]
        %v2827 = vld [vmem:[%s8 + $0xb8] sm:$0xff]
        %v2828 = vld [vmem:[%s8 + $0xc0] sm:$0xff]
        %v2829 = vld [vmem:[%s8 + $0xc8] sm:$0xff]
        %v2830 = vld [vmem:[%s8 + $0xd0] sm:$0xff]
        %v2831 = vld [vmem:[%s8 + $0xd8] sm:$0xff]
        %v2832 = vld [vmem:[%s8 + $0xe0] sm:$0xff]
        %v2833 = vld [vmem:[%s8 + $0xe8] sm:$0xff]
        %v2834 = vld [vmem:[%s8 + $0xf0] sm:$0xff]
        %v2835 = vld [vmem:[%s8 + $0xf8] sm:$0xff]
        %v2836 = vld [vmem:[%s8 + $0x100] sm:$0xff]
        %v2837 = vld [vmem:[%s8 + $0x108] sm:$0xff]
        %v2838 = vld [vmem:[%s8 + $0x110] sm:$0xff]
        %v2839 = vld [vmem:[%s8 + $0x118] sm:$0xff]
        %v2840 = vld [vmem:[%s8 + $0x120] sm:$0xff]
        %v2841 = vld [vmem:[%s8 + $0x128] sm:$0xff]
        %v2842 = vld [vmem:[%s8 + $0x130] sm:$0xff]
        %v2843 = vld [vmem:[%s8 + $0x138] sm:$0xff]
        %v2844 = vld [vmem:[%s8 + $0x140] sm:$0xff]
        %v2845 = vld [vmem:[%s8 + $0x148] sm:$0xff]
        %v2846 = vld [vmem:[%s8 + $0x150] sm:$0xff]
        %v2847 = vld [vmem:[%s8 + $0x158] sm:$0xff]
        %v2848 = vld [vmem:[%s8 + $0x160] sm:$0xff]
        %v2849 = vld [vmem:[%s8 + $0x168] sm:$0xff]
        %v2850 = vld [vmem:[%s8 + $0x170] sm:$0xff]
        %v2851 = vld [vmem:[%s8 + $0x178] sm:$0xff]
        %v2900 = vunpack.c.l.b16 %v2804
        %v2901 = vunpack.c.h.b16 %v2804
        %v2902 = vunpack.c.l.b16 %v2805
        %v2903 = vunpack.c.h.b16 %v2805
        %v2904 = vunpack.c.l.b16 %v2806
        %v2905 = vunpack.c.h.b16 %v2806
        %v2906 = vunpack.c.l.b16 %v2807
        %v2907 = vunpack.c.h.b16 %v2807
        %v2908 = vunpack.c.l.b16 %v2808
        %v2909 = vunpack.c.h.b16 %v2808
        %v2910 = vunpack.c.l.b16 %v2809
        %v2911 = vunpack.c.h.b16 %v2809
        %v2912 = vunpack.c.l.b16 %v2810
        %v2913 = vunpack.c.h.b16 %v2810
        %v2914 = vunpack.c.l.b16 %v2811
        %v2915 = vunpack.c.h.b16 %v2811
        %v2916 = vunpack.c.l.b16 %v2812
        %v2917 = vunpack.c.h.b16 %v2812
        %v2918 = vunpack.c.l.b16 %v2813
        %v2919 = vunpack.c.h.b16 %v2813
        %v2920 = vunpack.c.l.b16 %v2814
        %v2921 = vunpack.c.h.b16 %v2814
        %v2922 = vunpack.c.l.b16 %v2815
        %v2923 = vunpack.c.h.b16 %v2815
        %v2924 = vunpack.c.l.b16 %v2816
        %v2925 = vunpack.c.h.b16 %v2816
        %v2926 = vunpack.c.l.b16 %v2817
        %v2927 = vunpack.c.h.b16 %v2817
        %v2928 = vunpack.c.l.b16 %v2818
        %v2929 = vunpack.c.h.b16 %v2818
        %v2930 = vunpack.c.l.b16 %v2819
        %v2931 = vunpack.c.h.b16 %v2819
        %v2932 = vunpack.c.l.b16 %v2820
        %v2933 = vunpack.c.h.b16 %v2820
        %v2934 = vunpack.c.l.b16 %v2821
        %v2935 = vunpack.c.h.b16 %v2821
        %v2936 = vunpack.c.l.b16 %v2822
        %v2937 = vunpack.c.h.b16 %v2822
        %v2938 = vunpack.c.l.b16 %v2823
        %v2939 = vunpack.c.h.b16 %v2823
        %v2940 = vunpack.c.l.b16 %v2824
        %v2941 = vunpack.c.h.b16 %v2824
        %v2942 = vunpack.c.l.b16 %v2825
        %v2943 = vunpack.c.h.b16 %v2825
        %v2944 = vunpack.c.l.b16 %v2826
        %v2945 = vunpack.c.h.b16 %v2826
        %v2946 = vunpack.c.l.b16 %v2827
        %v2947 = vunpack.c.h.b16 %v2827
        %v2948 = vunpack.c.l.b16 %v2828
        %v2949 = vunpack.c.h.b16 %v2828
        %v2950 = vunpack.c.l.b16 %v2829
        %v2951 = vunpack.c.h.b16 %v2829
        %v2952 = vunpack.c.l.b16 %v2830
        %v2953 = vunpack.c.h.b16 %v2830
        %v2954 = vunpack.c.l.b16 %v2831
        %v2955 = vunpack.c.h.b16 %v2831
        %v2956 = vunpack.c.l.b16 %v2832
        %v2957 = vunpack.c.h.b16 %v2832
        %v2958 = vunpack.c.l.b16 %v2833
        %v2959 = vunpack.c.h.b16 %v2833
        %v2960 = vunpack.c.l.b16 %v2834
        %v2961 = vunpack.c.h.b16 %v2834
        %v2962 = vunpack.c.l.b16 %v2835
        %v2963 = vunpack.c.h.b16 %v2835
        %v2964 = vunpack.c.l.b16 %v2836
        %v2965 = vunpack.c.h.b16 %v2836
        %v2966 = vunpack.c.l.b16 %v2837
        %v2967 = vunpack.c.h.b16 %v2837
        %v2968 = vunpack.c.l.b16 %v2838
        %v2969 = vunpack.c.h.b16 %v2838
        %v2970 = vunpack.c.l.b16 %v2839
        %v2971 = vunpack.c.h.b16 %v2839
        %v2972 = vunpack.c.l.b16 %v2840
        %v2973 = vunpack.c.h.b16 %v2840
        %v2974 = vunpack.c.l.b16 %v2841
        %v2975 = vunpack.c.h.b16 %v2841
        %v2976 = vunpack.c.l.b16 %v2842
        %v2977 = vunpack.c.h.b16 %v2842
        %v2978 = vunpack.c.l.b16 %v2843
        %v2979 = vunpack.c.h.b16 %v2843
        %v2980 = vunpack.c.l.b16 %v2844
        %v2981 = vunpack.c.h.b16 %v2844
        %v2982 = vunpack.c.l.b16 %v2845
        %v2983 = vunpack.c.h.b16 %v2845
        %v2984 = vunpack.c.l.b16 %v2846
        %v2985 = vunpack.c.h.b16 %v2846
        %v2986 = vunpack.c.l.b16 %v2847
        %v2987 = vunpack.c.h.b16 %v2847
        %v2988 = vunpack.c.l.b16 %v2848
        %v2989 = vunpack.c.h.b16 %v2848
        %v2990 = vunpack.c.l.b16 %v2849
        %v2991 = vunpack.c.h.b16 %v2849
        %v2992 = vunpack.c.l.b16 %v2850
        %v2993 = vunpack.c.h.b16 %v2850
        %v2994 = vunpack.c.l.b16 %v2851
        %v2995 = vunpack.c.h.b16 %v2851
        %v2996 = vpack.c.b16 %v2902, %v2900
        %v2997 = vpack.c.b16 %v2903, %v2901
        %v2998 = vpack.c.b16 %v2906, %v2904
        %v2999 = vpack.c.b16 %v2907, %v2905
        %v3000 = vpack.c.b16 %v2910, %v2908
        %v3001 = vpack.c.b16 %v2911, %v2909
        %v3002 = vpack.c.b16 %v2914, %v2912
        %v3003 = vpack.c.b16 %v2915, %v2913
        %v3004 = vpack.c.b16 %v2918, %v2916
        %v3005 = vpack.c.b16 %v2919, %v2917
        %v3006 = vpack.c.b16 %v2922, %v2920
        %v3007 = vpack.c.b16 %v2923, %v2921
        %v3008 = vpack.c.b16 %v2926, %v2924
        %v3009 = vpack.c.b16 %v2927, %v2925
        %v3010 = vpack.c.b16 %v2930, %v2928
        %v3011 = vpack.c.b16 %v2931, %v2929
        %v3012 = vpack.c.b16 %v2934, %v2932
        %v3013 = vpack.c.b16 %v2935, %v2933
        %v3014 = vpack.c.b16 %v2938, %v2936
        %v3015 = vpack.c.b16 %v2939, %v2937
        %v3016 = vpack.c.b16 %v2942, %v2940
        %v3017 = vpack.c.b16 %v2943, %v2941
        %v3018 = vpack.c.b16 %v2946, %v2944
        %v3019 = vpack.c.b16 %v2947, %v2945
        %v3020 = vpack.c.b16 %v2950, %v2948
        %v3021 = vpack.c.b16 %v2951, %v2949
        %v3022 = vpack.c.b16 %v2954, %v2952
        %v3023 = vpack.c.b16 %v2955, %v2953
        %v3024 = vpack.c.b16 %v2958, %v2956
        %v3025 = vpack.c.b16 %v2959, %v2957
        %v3026 = vpack.c.b16 %v2962, %v2960
        %v3027 = vpack.c.b16 %v2963, %v2961
        %v3028 = vpack.c.b16 %v2966, %v2964
        %v3029 = vpack.c.b16 %v2967, %v2965
        %v3030 = vpack.c.b16 %v2970, %v2968
        %v3031 = vpack.c.b16 %v2971, %v2969
        %v3032 = vpack.c.b16 %v2974, %v2972
        %v3033 = vpack.c.b16 %v2975, %v2973
        %v3034 = vpack.c.b16 %v2978, %v2976
        %v3035 = vpack.c.b16 %v2979, %v2977
        %v3036 = vpack.c.b16 %v2982, %v2980
        %v3037 = vpack.c.b16 %v2983, %v2981
        %v3038 = vpack.c.b16 %v2986, %v2984
        %v3039 = vpack.c.b16 %v2987, %v2985
        %v3040 = vpack.c.b16 %v2990, %v2988
        %v3041 = vpack.c.b16 %v2991, %v2989
        %v3042 = vpack.c.b16 %v2994, %v2992
        %v3043 = vpack.c.b16 %v2995, %v2993
        %3092 = vmatprep.subr.bf16.mxu0 %v3011
        %3093 = vmatpush1.bf16.msra.mxu0 %v3010
        %3094 = vmatprep.subr.bf16.mxu0 %v3009
        %3095 = vmatpush1.bf16.msra.mxu0 %v3008
        %3096 = vmatprep.subr.bf16.mxu0 %v3007
        %3097 = vmatpush1.bf16.msra.mxu0 %v3006
        %3098 = vmatprep.subr.bf16.mxu0 %v3005
        %3099 = vmatpush1.bf16.msra.mxu0 %v3004
        %3100 = vmatprep.subr.bf16.mxu0 %v3003
        %3101 = vmatpush1.bf16.msra.mxu0 %v3002
        %3102 = vmatprep.subr.bf16.mxu0 %v3001
        %3103 = vmatpush1.bf16.msra.mxu0 %v3000
        %3104 = vmatprep.subr.bf16.mxu0 %v2999
        %3105 = vmatpush1.bf16.msra.mxu0 %v2998
        %3106 = vmatprep.subr.bf16.mxu0 %v2997
        %3107 = vmatpush1.bf16.msra.mxu0 %v2996
        %3108 = vmatprep.subr.bf16.mxu0 %v3027
        %3109 = vmatpush2.bf16.msra.mxu0 %v3026
        %3110 = vmatprep.subr.bf16.mxu0 %v3025
        %3111 = vmatpush2.bf16.msra.mxu0 %v3024
        %3112 = vmatprep.subr.bf16.mxu0 %v3023
        %3113 = vmatpush2.bf16.msra.mxu0 %v3022
        %3114 = vmatprep.subr.bf16.mxu0 %v3021
        %3115 = vmatpush2.bf16.msra.mxu0 %v3020
        %3116 = vmatprep.subr.bf16.mxu0 %v3019
        %3117 = vmatpush2.bf16.msra.mxu0 %v3018
        %3118 = vmatprep.subr.bf16.mxu0 %v3017
        %3119 = vmatpush2.bf16.msra.mxu0 %v3016
        %3120 = vmatprep.subr.bf16.mxu0 %v3015
        %3121 = vmatpush2.bf16.msra.mxu0 %v3014
        %3122 = vmatprep.subr.bf16.mxu0 %v3013
        %3123 = vmatpush2.bf16.msra.mxu0 %v3012
        %3124 = vmatprep.mubr.bf16.mxu0 %v2784
        %3125 = vmatmul.mubr.bf16.gmra.mxu0 %v2783
        %v3126 = vpop.f32.mrf.mxu0
        %v3127 = vadd.f32 0.0, %v3126
        %v3128 = vpop.f32.mrf.mxu0
        %v3129 = vadd.f32 0.0, %v3128
        %v3130 = vpop.f32.mrf.mxu0
        %v3131 = vadd.f32 0.0, %v3130
        %v3132 = vpop.f32.mrf.mxu0
        %v3133 = vadd.f32 0.0, %v3132
        %3134 = vmatprep.mubr.bf16.mxu0 %v2787
        %3135 = vmatmul.mubr.bf16.gmra.mxu0 %v2786
        %v3136 = vpop.f32.mrf.mxu0
        %v3137 = vadd.f32 0.0, %v3136
        %v3138 = vpop.f32.mrf.mxu0
        %v3139 = vadd.f32 0.0, %v3138
        %v3140 = vpop.f32.mrf.mxu0
        %v3141 = vadd.f32 0.0, %v3140
        %v3142 = vpop.f32.mrf.mxu0
        %v3143 = vadd.f32 0.0, %v3142
        %3144 = vmatprep.mubr.bf16.mxu0 %v2790
        %3145 = vmatmul.mubr.bf16.gmra.mxu0 %v2789
        %v3146 = vpop.f32.mrf.mxu0
        %v3147 = vadd.f32 0.0, %v3146
        %v3148 = vpop.f32.mrf.mxu0
        %v3149 = vadd.f32 0.0, %v3148
        %v3150 = vpop.f32.mrf.mxu0
        %v3151 = vadd.f32 0.0, %v3150
        %v3152 = vpop.f32.mrf.mxu0
        %v3153 = vadd.f32 0.0, %v3152
        %3154 = vmatprep.mubr.bf16.mxu0 %v2793
        %3155 = vmatmul.mubr.bf16.gmra.mxu0 %v2792
        %v3156 = vpop.f32.mrf.mxu0
        %v3157 = vadd.f32 0.0, %v3156
        %v3158 = vpop.f32.mrf.mxu0
        %v3159 = vadd.f32 0.0, %v3158
        %v3160 = vpop.f32.mrf.mxu0
        %v3161 = vadd.f32 0.0, %v3160
        %v3162 = vpop.f32.mrf.mxu0
        %v3163 = vadd.f32 0.0, %v3162
        %3164 = vmatprep.mubr.bf16.mxu0 %v2796
        %3165 = vmatmul.mubr.bf16.gmra.mxu0 %v2795
        %v3166 = vpop.f32.mrf.mxu0
        %v3167 = vadd.f32 0.0, %v3166
        %v3168 = vpop.f32.mrf.mxu0
        %v3169 = vadd.f32 0.0, %v3168
        %v3170 = vpop.f32.mrf.mxu0
        %v3171 = vadd.f32 0.0, %v3170
        %v3172 = vpop.f32.mrf.mxu0
        %v3173 = vadd.f32 0.0, %v3172
        %3174 = vmatprep.mubr.bf16.mxu0 %v2799
        %3175 = vmatmul.mubr.bf16.gmra.mxu0 %v2798
        %v3176 = vpop.f32.mrf.mxu0
        %v3177 = vadd.f32 0.0, %v3176
        %v3178 = vpop.f32.mrf.mxu0
        %v3179 = vadd.f32 0.0, %v3178
        %v3180 = vpop.f32.mrf.mxu0
        %v3181 = vadd.f32 0.0, %v3180
        %v3182 = vpop.f32.mrf.mxu0
        %v3183 = vadd.f32 0.0, %v3182
        %3184 = vmatprep.mubr.bf16.mxu0 %v2802
        %3185 = vmatmul.mubr.bf16.gmra.mxu0 %v2801
        %v3186 = vpop.f32.mrf.mxu0
        %v3187 = vadd.f32 0.0, %v3186
        %v3188 = vpop.f32.mrf.mxu0
        %v3189 = vadd.f32 0.0, %v3188
        %v3190 = vpop.f32.mrf.mxu0
        %v3191 = vadd.f32 0.0, %v3190
        %v3192 = vpop.f32.mrf.mxu0
        %v3193 = vadd.f32 0.0, %v3192
        %3194 = vdwg.mxu0
        %3195 = vmatprep.subr.bf16.mxu0 %v3043
        %3196 = vmatpush1.bf16.msra.mxu0 %v3042
        %3197 = vmatprep.subr.bf16.mxu0 %v3041
        %3198 = vmatpush1.bf16.msra.mxu0 %v3040
        %3199 = vmatprep.subr.bf16.mxu0 %v3039
        %3200 = vmatpush1.bf16.msra.mxu0 %v3038
        %3201 = vmatprep.subr.bf16.mxu0 %v3037
        %3202 = vmatpush1.bf16.msra.mxu0 %v3036
        %3203 = vmatprep.subr.bf16.mxu0 %v3035
        %3204 = vmatpush1.bf16.msra.mxu0 %v3034
        %3205 = vmatprep.subr.bf16.mxu0 %v3033
        %3206 = vmatpush1.bf16.msra.mxu0 %v3032
        %3207 = vmatprep.subr.bf16.mxu0 %v3031
        %3208 = vmatpush1.bf16.msra.mxu0 %v3030
        %3209 = vmatprep.subr.bf16.mxu0 %v3029
        %3210 = vmatpush1.bf16.msra.mxu0 %v3028
        %3211 = vmatprep.subr.bf16.mxu0 0
        %3212 = vmatpush2.bf16.msra.mxu0 0
        %3213 = vmatprep.subr.bf16.mxu0 0
        %3214 = vmatpush2.bf16.msra.mxu0 0
        %3215 = vmatprep.subr.bf16.mxu0 0
        %3216 = vmatpush2.bf16.msra.mxu0 0
        %3217 = vmatprep.subr.bf16.mxu0 0
        %3218 = vmatpush2.bf16.msra.mxu0 0
        %3219 = vmatprep.subr.bf16.mxu0 0
        %3220 = vmatpush2.bf16.msra.mxu0 0
        %3221 = vmatprep.subr.bf16.mxu0 0
        %3222 = vmatpush2.bf16.msra.mxu0 0
        %3223 = vmatprep.subr.bf16.mxu0 0
        %3224 = vmatpush2.bf16.msra.mxu0 0
        %3225 = vmatprep.subr.bf16.mxu0 0
        %3226 = vmatpush2.bf16.msra.mxu0 0
        %3227 = vmatprep.mubr.bf16.mxu0 0
        %3228 = vmatmul.mubr.bf16.gmra.mxu0 %v2785
        %v3229 = vpop.f32.mrf.mxu0
        %v3230 = vadd.f32 %v3127, %v3229
        %v3231 = vpop.f32.mrf.mxu0
        %v3232 = vadd.f32 %v3129, %v3231
        %v3233 = vpop.f32.mrf.mxu0
        %v3234 = vadd.f32 %v3131, %v3233
        %v3235 = vpop.f32.mrf.mxu0
        %v3236 = vadd.f32 %v3133, %v3235
        %3237 = vmatprep.mubr.bf16.mxu0 0
        %3238 = vmatmul.mubr.bf16.gmra.mxu0 %v2788
        %v3239 = vpop.f32.mrf.mxu0
        %v3240 = vadd.f32 %v3137, %v3239
        %v3241 = vpop.f32.mrf.mxu0
        %v3242 = vadd.f32 %v3139, %v3241
        %v3243 = vpop.f32.mrf.mxu0
        %v3244 = vadd.f32 %v3141, %v3243
        %v3245 = vpop.f32.mrf.mxu0
        %v3246 = vadd.f32 %v3143, %v3245
        %3247 = vmatprep.mubr.bf16.mxu0 0
        %3248 = vmatmul.mubr.bf16.gmra.mxu0 %v2791
        %v3249 = vpop.f32.mrf.mxu0
        %v3250 = vadd.f32 %v3147, %v3249
        %v3251 = vpop.f32.mrf.mxu0
        %v3252 = vadd.f32 %v3149, %v3251
        %v3253 = vpop.f32.mrf.mxu0
        %v3254 = vadd.f32 %v3151, %v3253
        %v3255 = vpop.f32.mrf.mxu0
        %v3256 = vadd.f32 %v3153, %v3255
        %3257 = vmatprep.mubr.bf16.mxu0 0
        %3258 = vmatmul.mubr.bf16.gmra.mxu0 %v2794
        %v3259 = vpop.f32.mrf.mxu0
        %v3260 = vadd.f32 %v3157, %v3259
        %v3261 = vpop.f32.mrf.mxu0
        %v3262 = vadd.f32 %v3159, %v3261
        %v3263 = vpop.f32.mrf.mxu0
        %v3264 = vadd.f32 %v3161, %v3263
        %v3265 = vpop.f32.mrf.mxu0
        %v3266 = vadd.f32 %v3163, %v3265
        %3267 = vmatprep.mubr.bf16.mxu0 0
        %3268 = vmatmul.mubr.bf16.gmra.mxu0 %v2797
        %v3269 = vpop.f32.mrf.mxu0
        %v3270 = vadd.f32 %v3167, %v3269
        %v3271 = vpop.f32.mrf.mxu0
        %v3272 = vadd.f32 %v3169, %v3271
        %v3273 = vpop.f32.mrf.mxu0
        %v3274 = vadd.f32 %v3171, %v3273
        %v3275 = vpop.f32.mrf.mxu0
        %v3276 = vadd.f32 %v3173, %v3275
        %3277 = vmatprep.mubr.bf16.mxu0 0
        %3278 = vmatmul.mubr.bf16.gmra.mxu0 %v2800
        %v3279 = vpop.f32.mrf.mxu0
        %v3280 = vadd.f32 %v3177, %v3279
        %v3281 = vpop.f32.mrf.mxu0
        %v3282 = vadd.f32 %v3179, %v3281
        %v3283 = vpop.f32.mrf.mxu0
        %v3284 = vadd.f32 %v3181, %v3283
        %v3285 = vpop.f32.mrf.mxu0
        %v3286 = vadd.f32 %v3183, %v3285
        %3287 = vmatprep.mubr.bf16.mxu0 0
        %3288 = vmatmul.mubr.bf16.gmra.mxu0 %v2803
        %v3289 = vpop.f32.mrf.mxu0
        %v3290 = vadd.f32 %v3187, %v3289
        %v3291 = vpop.f32.mrf.mxu0
        %v3292 = vadd.f32 %v3189, %v3291
        %v3293 = vpop.f32.mrf.mxu0
        %v3294 = vadd.f32 %v3191, %v3293
        %v3295 = vpop.f32.mrf.mxu0
        %v3296 = vadd.f32 %v3193, %v3295
        %3297 = vdwg.mxu0
        %s3298 = scalar_lea.vmem %s8, 384
        %v3299 = vld [vmem:[%s3298] sm:$0xff]
        %v3300 = vld [vmem:[%s3298 + $0x8] sm:$0xff]
        %v3301 = vld [vmem:[%s3298 + $0x10] sm:$0xff]
        %v3302 = vld [vmem:[%s3298 + $0x18] sm:$0xff]
        %v3303 = vld [vmem:[%s3298 + $0x20] sm:$0xff]
        %v3304 = vld [vmem:[%s3298 + $0x28] sm:$0xff]
        %v3305 = vld [vmem:[%s3298 + $0x30] sm:$0xff]
        %v3306 = vld [vmem:[%s3298 + $0x38] sm:$0xff]
        %v3307 = vld [vmem:[%s3298 + $0x40] sm:$0xff]
        %v3308 = vld [vmem:[%s3298 + $0x48] sm:$0xff]
        %v3309 = vld [vmem:[%s3298 + $0x50] sm:$0xff]
        %v3310 = vld [vmem:[%s3298 + $0x58] sm:$0xff]
        %v3311 = vld [vmem:[%s3298 + $0x60] sm:$0xff]
        %v3312 = vld [vmem:[%s3298 + $0x68] sm:$0xff]
        %v3313 = vld [vmem:[%s3298 + $0x70] sm:$0xff]
        %v3314 = vld [vmem:[%s3298 + $0x78] sm:$0xff]
        %v3315 = vld [vmem:[%s3298 + $0x80] sm:$0xff]
        %v3316 = vld [vmem:[%s3298 + $0x88] sm:$0xff]
        %v3317 = vld [vmem:[%s3298 + $0x90] sm:$0xff]
        %v3318 = vld [vmem:[%s3298 + $0x98] sm:$0xff]
        %v3319 = vld [vmem:[%s3298 + $0xa0] sm:$0xff]
        %v3320 = vld [vmem:[%s3298 + $0xa8] sm:$0xff]
        %v3321 = vld [vmem:[%s3298 + $0xb0] sm:$0xff]
        %v3322 = vld [vmem:[%s3298 + $0xb8] sm:$0xff]
        %v3323 = vld [vmem:[%s3298 + $0xc0] sm:$0xff]
        %v3324 = vld [vmem:[%s3298 + $0xc8] sm:$0xff]
        %v3325 = vld [vmem:[%s3298 + $0xd0] sm:$0xff]
        %v3326 = vld [vmem:[%s3298 + $0xd8] sm:$0xff]
        %v3327 = vld [vmem:[%s3298 + $0xe0] sm:$0xff]
        %v3328 = vld [vmem:[%s3298 + $0xe8] sm:$0xff]
        %v3329 = vld [vmem:[%s3298 + $0xf0] sm:$0xff]
        %v3330 = vld [vmem:[%s3298 + $0xf8] sm:$0xff]
        %v3331 = vld [vmem:[%s3298 + $0x100] sm:$0xff]
        %v3332 = vld [vmem:[%s3298 + $0x108] sm:$0xff]
        %v3333 = vld [vmem:[%s3298 + $0x110] sm:$0xff]
        %v3334 = vld [vmem:[%s3298 + $0x118] sm:$0xff]
        %v3335 = vld [vmem:[%s3298 + $0x120] sm:$0xff]
        %v3336 = vld [vmem:[%s3298 + $0x128] sm:$0xff]
        %v3337 = vld [vmem:[%s3298 + $0x130] sm:$0xff]
        %v3338 = vld [vmem:[%s3298 + $0x138] sm:$0xff]
        %v3339 = vld [vmem:[%s3298 + $0x140] sm:$0xff]
        %v3340 = vld [vmem:[%s3298 + $0x148] sm:$0xff]
        %v3341 = vld [vmem:[%s3298 + $0x150] sm:$0xff]
        %v3342 = vld [vmem:[%s3298 + $0x158] sm:$0xff]
        %v3343 = vld [vmem:[%s3298 + $0x160] sm:$0xff]
        %v3344 = vld [vmem:[%s3298 + $0x168] sm:$0xff]
        %v3345 = vld [vmem:[%s3298 + $0x170] sm:$0xff]
        %v3346 = vld [vmem:[%s3298 + $0x178] sm:$0xff]
        %v3395 = vunpack.c.l.b16 %v3299
        %v3396 = vunpack.c.h.b16 %v3299
        %v3397 = vunpack.c.l.b16 %v3300
        %v3398 = vunpack.c.h.b16 %v3300
        %v3399 = vunpack.c.l.b16 %v3301
        %v3400 = vunpack.c.h.b16 %v3301
        %v3401 = vunpack.c.l.b16 %v3302
        %v3402 = vunpack.c.h.b16 %v3302
        %v3403 = vunpack.c.l.b16 %v3303
        %v3404 = vunpack.c.h.b16 %v3303
        %v3405 = vunpack.c.l.b16 %v3304
        %v3406 = vunpack.c.h.b16 %v3304
        %v3407 = vunpack.c.l.b16 %v3305
        %v3408 = vunpack.c.h.b16 %v3305
        %v3409 = vunpack.c.l.b16 %v3306
        %v3410 = vunpack.c.h.b16 %v3306
        %v3411 = vunpack.c.l.b16 %v3307
        %v3412 = vunpack.c.h.b16 %v3307
        %v3413 = vunpack.c.l.b16 %v3308
        %v3414 = vunpack.c.h.b16 %v3308
        %v3415 = vunpack.c.l.b16 %v3309
        %v3416 = vunpack.c.h.b16 %v3309
        %v3417 = vunpack.c.l.b16 %v3310
        %v3418 = vunpack.c.h.b16 %v3310
        %v3419 = vunpack.c.l.b16 %v3311
        %v3420 = vunpack.c.h.b16 %v3311
        %v3421 = vunpack.c.l.b16 %v3312
        %v3422 = vunpack.c.h.b16 %v3312
        %v3423 = vunpack.c.l.b16 %v3313
        %v3424 = vunpack.c.h.b16 %v3313
        %v3425 = vunpack.c.l.b16 %v3314
        %v3426 = vunpack.c.h.b16 %v3314
        %v3427 = vunpack.c.l.b16 %v3315
        %v3428 = vunpack.c.h.b16 %v3315
        %v3429 = vunpack.c.l.b16 %v3316
        %v3430 = vunpack.c.h.b16 %v3316
        %v3431 = vunpack.c.l.b16 %v3317
        %v3432 = vunpack.c.h.b16 %v3317
        %v3433 = vunpack.c.l.b16 %v3318
        %v3434 = vunpack.c.h.b16 %v3318
        %v3435 = vunpack.c.l.b16 %v3319
        %v3436 = vunpack.c.h.b16 %v3319
        %v3437 = vunpack.c.l.b16 %v3320
        %v3438 = vunpack.c.h.b16 %v3320
        %v3439 = vunpack.c.l.b16 %v3321
        %v3440 = vunpack.c.h.b16 %v3321
        %v3441 = vunpack.c.l.b16 %v3322
        %v3442 = vunpack.c.h.b16 %v3322
        %v3443 = vunpack.c.l.b16 %v3323
        %v3444 = vunpack.c.h.b16 %v3323
        %v3445 = vunpack.c.l.b16 %v3324
        %v3446 = vunpack.c.h.b16 %v3324
        %v3447 = vunpack.c.l.b16 %v3325
        %v3448 = vunpack.c.h.b16 %v3325
        %v3449 = vunpack.c.l.b16 %v3326
        %v3450 = vunpack.c.h.b16 %v3326
        %v3451 = vunpack.c.l.b16 %v3327
        %v3452 = vunpack.c.h.b16 %v3327
        %v3453 = vunpack.c.l.b16 %v3328
        %v3454 = vunpack.c.h.b16 %v3328
        %v3455 = vunpack.c.l.b16 %v3329
        %v3456 = vunpack.c.h.b16 %v3329
        %v3457 = vunpack.c.l.b16 %v3330
        %v3458 = vunpack.c.h.b16 %v3330
        %v3459 = vunpack.c.l.b16 %v3331
        %v3460 = vunpack.c.h.b16 %v3331
        %v3461 = vunpack.c.l.b16 %v3332
        %v3462 = vunpack.c.h.b16 %v3332
        %v3463 = vunpack.c.l.b16 %v3333
        %v3464 = vunpack.c.h.b16 %v3333
        %v3465 = vunpack.c.l.b16 %v3334
        %v3466 = vunpack.c.h.b16 %v3334
        %v3467 = vunpack.c.l.b16 %v3335
        %v3468 = vunpack.c.h.b16 %v3335
        %v3469 = vunpack.c.l.b16 %v3336
        %v3470 = vunpack.c.h.b16 %v3336
        %v3471 = vunpack.c.l.b16 %v3337
        %v3472 = vunpack.c.h.b16 %v3337
        %v3473 = vunpack.c.l.b16 %v3338
        %v3474 = vunpack.c.h.b16 %v3338
        %v3475 = vunpack.c.l.b16 %v3339
        %v3476 = vunpack.c.h.b16 %v3339
        %v3477 = vunpack.c.l.b16 %v3340
        %v3478 = vunpack.c.h.b16 %v3340
        %v3479 = vunpack.c.l.b16 %v3341
        %v3480 = vunpack.c.h.b16 %v3341
        %v3481 = vunpack.c.l.b16 %v3342
        %v3482 = vunpack.c.h.b16 %v3342
        %v3483 = vunpack.c.l.b16 %v3343
        %v3484 = vunpack.c.h.b16 %v3343
        %v3485 = vunpack.c.l.b16 %v3344
        %v3486 = vunpack.c.h.b16 %v3344
        %v3487 = vunpack.c.l.b16 %v3345
        %v3488 = vunpack.c.h.b16 %v3345
        %v3489 = vunpack.c.l.b16 %v3346
        %v3490 = vunpack.c.h.b16 %v3346
        %v3491 = vpack.c.b16 %v3397, %v3395
        %v3492 = vpack.c.b16 %v3398, %v3396
        %v3493 = vpack.c.b16 %v3401, %v3399
        %v3494 = vpack.c.b16 %v3402, %v3400
        %v3495 = vpack.c.b16 %v3405, %v3403
        %v3496 = vpack.c.b16 %v3406, %v3404
        %v3497 = vpack.c.b16 %v3409, %v3407
        %v3498 = vpack.c.b16 %v3410, %v3408
        %v3499 = vpack.c.b16 %v3413, %v3411
        %v3500 = vpack.c.b16 %v3414, %v3412
        %v3501 = vpack.c.b16 %v3417, %v3415
        %v3502 = vpack.c.b16 %v3418, %v3416
        %v3503 = vpack.c.b16 %v3421, %v3419
        %v3504 = vpack.c.b16 %v3422, %v3420
        %v3505 = vpack.c.b16 %v3425, %v3423
        %v3506 = vpack.c.b16 %v3426, %v3424
        %v3507 = vpack.c.b16 %v3429, %v3427
        %v3508 = vpack.c.b16 %v3430, %v3428
        %v3509 = vpack.c.b16 %v3433, %v3431
        %v3510 = vpack.c.b16 %v3434, %v3432
        %v3511 = vpack.c.b16 %v3437, %v3435
        %v3512 = vpack.c.b16 %v3438, %v3436
        %v3513 = vpack.c.b16 %v3441, %v3439
        %v3514 = vpack.c.b16 %v3442, %v3440
        %v3515 = vpack.c.b16 %v3445, %v3443
        %v3516 = vpack.c.b16 %v3446, %v3444
        %v3517 = vpack.c.b16 %v3449, %v3447
        %v3518 = vpack.c.b16 %v3450, %v3448
        %v3519 = vpack.c.b16 %v3453, %v3451
        %v3520 = vpack.c.b16 %v3454, %v3452
        %v3521 = vpack.c.b16 %v3457, %v3455
        %v3522 = vpack.c.b16 %v3458, %v3456
        %v3523 = vpack.c.b16 %v3461, %v3459
        %v3524 = vpack.c.b16 %v3462, %v3460
        %v3525 = vpack.c.b16 %v3465, %v3463
        %v3526 = vpack.c.b16 %v3466, %v3464
        %v3527 = vpack.c.b16 %v3469, %v3467
        %v3528 = vpack.c.b16 %v3470, %v3468
        %v3529 = vpack.c.b16 %v3473, %v3471
        %v3530 = vpack.c.b16 %v3474, %v3472
        %v3531 = vpack.c.b16 %v3477, %v3475
        %v3532 = vpack.c.b16 %v3478, %v3476
        %v3533 = vpack.c.b16 %v3481, %v3479
        %v3534 = vpack.c.b16 %v3482, %v3480
        %v3535 = vpack.c.b16 %v3485, %v3483
        %v3536 = vpack.c.b16 %v3486, %v3484
        %v3537 = vpack.c.b16 %v3489, %v3487
        %v3538 = vpack.c.b16 %v3490, %v3488
        %3587 = vmatprep.subr.bf16.mxu0 %v3506
        %3588 = vmatpush1.bf16.msra.mxu0 %v3505
        %3589 = vmatprep.subr.bf16.mxu0 %v3504
        %3590 = vmatpush1.bf16.msra.mxu0 %v3503
        %3591 = vmatprep.subr.bf16.mxu0 %v3502
        %3592 = vmatpush1.bf16.msra.mxu0 %v3501
        %3593 = vmatprep.subr.bf16.mxu0 %v3500
        %3594 = vmatpush1.bf16.msra.mxu0 %v3499
        %3595 = vmatprep.subr.bf16.mxu0 %v3498
        %3596 = vmatpush1.bf16.msra.mxu0 %v3497
        %3597 = vmatprep.subr.bf16.mxu0 %v3496
        %3598 = vmatpush1.bf16.msra.mxu0 %v3495
        %3599 = vmatprep.subr.bf16.mxu0 %v3494
        %3600 = vmatpush1.bf16.msra.mxu0 %v3493
        %3601 = vmatprep.subr.bf16.mxu0 %v3492
        %3602 = vmatpush1.bf16.msra.mxu0 %v3491
        %3603 = vmatprep.subr.bf16.mxu0 %v3522
        %3604 = vmatpush2.bf16.msra.mxu0 %v3521
        %3605 = vmatprep.subr.bf16.mxu0 %v3520
        %3606 = vmatpush2.bf16.msra.mxu0 %v3519
        %3607 = vmatprep.subr.bf16.mxu0 %v3518
        %3608 = vmatpush2.bf16.msra.mxu0 %v3517
        %3609 = vmatprep.subr.bf16.mxu0 %v3516
        %3610 = vmatpush2.bf16.msra.mxu0 %v3515
        %3611 = vmatprep.subr.bf16.mxu0 %v3514
        %3612 = vmatpush2.bf16.msra.mxu0 %v3513
        %3613 = vmatprep.subr.bf16.mxu0 %v3512
        %3614 = vmatpush2.bf16.msra.mxu0 %v3511
        %3615 = vmatprep.subr.bf16.mxu0 %v3510
        %3616 = vmatpush2.bf16.msra.mxu0 %v3509
        %3617 = vmatprep.subr.bf16.mxu0 %v3508
        %3618 = vmatpush2.bf16.msra.mxu0 %v3507
        %3619 = vmatprep.mubr.bf16.mxu0 %v2784
        %3620 = vmatmul.mubr.bf16.gmra.mxu0 %v2783
        %v3621 = vpop.f32.mrf.mxu0
        %v3622 = vadd.f32 0.0, %v3621
        %v3623 = vpop.f32.mrf.mxu0
        %v3624 = vadd.f32 0.0, %v3623
        %v3625 = vpop.f32.mrf.mxu0
        %v3626 = vadd.f32 0.0, %v3625
        %v3627 = vpop.f32.mrf.mxu0
        %v3628 = vadd.f32 0.0, %v3627
        %3629 = vmatprep.mubr.bf16.mxu0 %v2787
        %3630 = vmatmul.mubr.bf16.gmra.mxu0 %v2786
        %v3631 = vpop.f32.mrf.mxu0
        %v3632 = vadd.f32 0.0, %v3631
        %v3633 = vpop.f32.mrf.mxu0
        %v3634 = vadd.f32 0.0, %v3633
        %v3635 = vpop.f32.mrf.mxu0
        %v3636 = vadd.f32 0.0, %v3635
        %v3637 = vpop.f32.mrf.mxu0
        %v3638 = vadd.f32 0.0, %v3637
        %3639 = vmatprep.mubr.bf16.mxu0 %v2790
        %3640 = vmatmul.mubr.bf16.gmra.mxu0 %v2789
        %v3641 = vpop.f32.mrf.mxu0
        %v3642 = vadd.f32 0.0, %v3641
        %v3643 = vpop.f32.mrf.mxu0
        %v3644 = vadd.f32 0.0, %v3643
        %v3645 = vpop.f32.mrf.mxu0
        %v3646 = vadd.f32 0.0, %v3645
        %v3647 = vpop.f32.mrf.mxu0
        %v3648 = vadd.f32 0.0, %v3647
        %3649 = vmatprep.mubr.bf16.mxu0 %v2793
        %3650 = vmatmul.mubr.bf16.gmra.mxu0 %v2792
        %v3651 = vpop.f32.mrf.mxu0
        %v3652 = vadd.f32 0.0, %v3651
        %v3653 = vpop.f32.mrf.mxu0
        %v3654 = vadd.f32 0.0, %v3653
        %v3655 = vpop.f32.mrf.mxu0
        %v3656 = vadd.f32 0.0, %v3655
        %v3657 = vpop.f32.mrf.mxu0
        %v3658 = vadd.f32 0.0, %v3657
        %3659 = vmatprep.mubr.bf16.mxu0 %v2796
        %3660 = vmatmul.mubr.bf16.gmra.mxu0 %v2795
        %v3661 = vpop.f32.mrf.mxu0
        %v3662 = vadd.f32 0.0, %v3661
        %v3663 = vpop.f32.mrf.mxu0
        %v3664 = vadd.f32 0.0, %v3663
        %v3665 = vpop.f32.mrf.mxu0
        %v3666 = vadd.f32 0.0, %v3665
        %v3667 = vpop.f32.mrf.mxu0
        %v3668 = vadd.f32 0.0, %v3667
        %3669 = vmatprep.mubr.bf16.mxu0 %v2799
        %3670 = vmatmul.mubr.bf16.gmra.mxu0 %v2798
        %v3671 = vpop.f32.mrf.mxu0
        %v3672 = vadd.f32 0.0, %v3671
        %v3673 = vpop.f32.mrf.mxu0
        %v3674 = vadd.f32 0.0, %v3673
        %v3675 = vpop.f32.mrf.mxu0
        %v3676 = vadd.f32 0.0, %v3675
        %v3677 = vpop.f32.mrf.mxu0
        %v3678 = vadd.f32 0.0, %v3677
        %3679 = vmatprep.mubr.bf16.mxu0 %v2802
        %3680 = vmatmul.mubr.bf16.gmra.mxu0 %v2801
        %v3681 = vpop.f32.mrf.mxu0
        %v3682 = vadd.f32 0.0, %v3681
        %v3683 = vpop.f32.mrf.mxu0
        %v3684 = vadd.f32 0.0, %v3683
        %v3685 = vpop.f32.mrf.mxu0
        %v3686 = vadd.f32 0.0, %v3685
        %v3687 = vpop.f32.mrf.mxu0
        %v3688 = vadd.f32 0.0, %v3687
        %3689 = vdwg.mxu0
        %3690 = vmatprep.subr.bf16.mxu0 %v3538
        %3691 = vmatpush1.bf16.msra.mxu0 %v3537
        %3692 = vmatprep.subr.bf16.mxu0 %v3536
        %3693 = vmatpush1.bf16.msra.mxu0 %v3535
        %3694 = vmatprep.subr.bf16.mxu0 %v3534
        %3695 = vmatpush1.bf16.msra.mxu0 %v3533
        %3696 = vmatprep.subr.bf16.mxu0 %v3532
        %3697 = vmatpush1.bf16.msra.mxu0 %v3531
        %3698 = vmatprep.subr.bf16.mxu0 %v3530
        %3699 = vmatpush1.bf16.msra.mxu0 %v3529
        %3700 = vmatprep.subr.bf16.mxu0 %v3528
        %3701 = vmatpush1.bf16.msra.mxu0 %v3527
        %3702 = vmatprep.subr.bf16.mxu0 %v3526
        %3703 = vmatpush1.bf16.msra.mxu0 %v3525
        %3704 = vmatprep.subr.bf16.mxu0 %v3524
        %3705 = vmatpush1.bf16.msra.mxu0 %v3523
        %3706 = vmatprep.subr.bf16.mxu0 0
        %3707 = vmatpush2.bf16.msra.mxu0 0
        %3708 = vmatprep.subr.bf16.mxu0 0
        %3709 = vmatpush2.bf16.msra.mxu0 0
        %3710 = vmatprep.subr.bf16.mxu0 0
        %3711 = vmatpush2.bf16.msra.mxu0 0
        %3712 = vmatprep.subr.bf16.mxu0 0
        %3713 = vmatpush2.bf16.msra.mxu0 0
        %3714 = vmatprep.subr.bf16.mxu0 0
        %3715 = vmatpush2.bf16.msra.mxu0 0
        %3716 = vmatprep.subr.bf16.mxu0 0
        %3717 = vmatpush2.bf16.msra.mxu0 0
        %3718 = vmatprep.subr.bf16.mxu0 0
        %3719 = vmatpush2.bf16.msra.mxu0 0
        %3720 = vmatprep.subr.bf16.mxu0 0
        %3721 = vmatpush2.bf16.msra.mxu0 0
        %3722 = vmatprep.mubr.bf16.mxu0 0
        %3723 = vmatmul.mubr.bf16.gmra.mxu0 %v2785
        %v3724 = vpop.f32.mrf.mxu0
        %v3725 = vadd.f32 %v3622, %v3724
        %v3726 = vpop.f32.mrf.mxu0
        %v3727 = vadd.f32 %v3624, %v3726
        %v3728 = vpop.f32.mrf.mxu0
        %v3729 = vadd.f32 %v3626, %v3728
        %v3730 = vpop.f32.mrf.mxu0
        %v3731 = vadd.f32 %v3628, %v3730
        %3732 = vmatprep.mubr.bf16.mxu0 0
        %3733 = vmatmul.mubr.bf16.gmra.mxu0 %v2788
        %v3734 = vpop.f32.mrf.mxu0
        %v3735 = vadd.f32 %v3632, %v3734
        %v3736 = vpop.f32.mrf.mxu0
        %v3737 = vadd.f32 %v3634, %v3736
        %v3738 = vpop.f32.mrf.mxu0
        %v3739 = vadd.f32 %v3636, %v3738
        %v3740 = vpop.f32.mrf.mxu0
        %v3741 = vadd.f32 %v3638, %v3740
        %3742 = vmatprep.mubr.bf16.mxu0 0
        %3743 = vmatmul.mubr.bf16.gmra.mxu0 %v2791
        %v3744 = vpop.f32.mrf.mxu0
        %v3745 = vadd.f32 %v3642, %v3744
        %v3746 = vpop.f32.mrf.mxu0
        %v3747 = vadd.f32 %v3644, %v3746
        %v3748 = vpop.f32.mrf.mxu0
        %v3749 = vadd.f32 %v3646, %v3748
        %v3750 = vpop.f32.mrf.mxu0
        %v3751 = vadd.f32 %v3648, %v3750
        %3752 = vmatprep.mubr.bf16.mxu0 0
        %3753 = vmatmul.mubr.bf16.gmra.mxu0 %v2794
        %v3754 = vpop.f32.mrf.mxu0
        %v3755 = vadd.f32 %v3652, %v3754
        %v3756 = vpop.f32.mrf.mxu0
        %v3757 = vadd.f32 %v3654, %v3756
        %v3758 = vpop.f32.mrf.mxu0
        %v3759 = vadd.f32 %v3656, %v3758
        %v3760 = vpop.f32.mrf.mxu0
        %v3761 = vadd.f32 %v3658, %v3760
        %3762 = vmatprep.mubr.bf16.mxu0 0
        %3763 = vmatmul.mubr.bf16.gmra.mxu0 %v2797
        %v3764 = vpop.f32.mrf.mxu0
        %v3765 = vadd.f32 %v3662, %v3764
        %v3766 = vpop.f32.mrf.mxu0
        %v3767 = vadd.f32 %v3664, %v3766
        %v3768 = vpop.f32.mrf.mxu0
        %v3769 = vadd.f32 %v3666, %v3768
        %v3770 = vpop.f32.mrf.mxu0
        %v3771 = vadd.f32 %v3668, %v3770
        %3772 = vmatprep.mubr.bf16.mxu0 0
        %3773 = vmatmul.mubr.bf16.gmra.mxu0 %v2800
        %v3774 = vpop.f32.mrf.mxu0
        %v3775 = vadd.f32 %v3672, %v3774
        %v3776 = vpop.f32.mrf.mxu0
        %v3777 = vadd.f32 %v3674, %v3776
        %v3778 = vpop.f32.mrf.mxu0
        %v3779 = vadd.f32 %v3676, %v3778
        %v3780 = vpop.f32.mrf.mxu0
        %v3781 = vadd.f32 %v3678, %v3780
        %3782 = vmatprep.mubr.bf16.mxu0 0
        %3783 = vmatmul.mubr.bf16.gmra.mxu0 %v2803
        %v3784 = vpop.f32.mrf.mxu0
        %v3785 = vadd.f32 %v3682, %v3784
        %v3786 = vpop.f32.mrf.mxu0
        %v3787 = vadd.f32 %v3684, %v3786
        %v3788 = vpop.f32.mrf.mxu0
        %v3789 = vadd.f32 %v3686, %v3788
        %v3790 = vpop.f32.mrf.mxu0
        %v3791 = vadd.f32 %v3688, %v3790
        %3792 = vdwg.mxu0
        %v3793 = vmax.f32 %v3230, %v3725
        %v3794 = vmax.f32 %v3232, %v3727
        %v3795 = vmax.f32 %v3234, %v3729
        %v3796 = vmax.f32 %v3236, %v3731
        %v3797 = vmax.f32 %v3240, %v3735
        %v3798 = vmax.f32 %v3242, %v3737
        %v3799 = vmax.f32 %v3244, %v3739
        %v3800 = vmax.f32 %v3246, %v3741
        %v3801 = vmax.f32 %v3250, %v3745
        %v3802 = vmax.f32 %v3252, %v3747
        %v3803 = vmax.f32 %v3254, %v3749
        %v3804 = vmax.f32 %v3256, %v3751
        %v3805 = vmax.f32 %v3260, %v3755
        %v3806 = vmax.f32 %v3262, %v3757
        %v3807 = vmax.f32 %v3264, %v3759
        %v3808 = vmax.f32 %v3266, %v3761
        %v3809 = vmax.f32 %v3270, %v3765
        %v3810 = vmax.f32 %v3272, %v3767
        %v3811 = vmax.f32 %v3274, %v3769
        %v3812 = vmax.f32 %v3276, %v3771
        %v3813 = vmax.f32 %v3280, %v3775
        %v3814 = vmax.f32 %v3282, %v3777
        %v3815 = vmax.f32 %v3284, %v3779
        %v3816 = vmax.f32 %v3286, %v3781
        %v3817 = vmax.f32 %v3290, %v3785
        %v3818 = vmax.f32 %v3292, %v3787
        %v3819 = vmax.f32 %v3294, %v3789
        %v3820 = vmax.f32 %v3296, %v3791
        %3821 = vst [vmem:[#allocation2] sm:$0xff] %v3793
        %vm3822 = vcmask 523264
        %3823 = vst.msk [vmem:[#allocation2 + $0x8] sm:$0xff] %vm3822, %v3794
        %3824 = vst [vmem:[#allocation2 + $0x10] sm:$0xff] %v3795
        %3825 = vst.msk [vmem:[#allocation2 + $0x18] sm:$0xff] %vm3822, %v3796
        %3826 = vst [vmem:[#allocation2 + $0x20] sm:$0xff] %v3797
        %3827 = vst.msk [vmem:[#allocation2 + $0x28] sm:$0xff] %vm3822, %v3798
        %3828 = vst [vmem:[#allocation2 + $0x30] sm:$0xff] %v3799
        %3829 = vst.msk [vmem:[#allocation2 + $0x38] sm:$0xff] %vm3822, %v3800
        %3830 = vst [vmem:[#allocation2 + $0x40] sm:$0xff] %v3801
        %3831 = vst.msk [vmem:[#allocation2 + $0x48] sm:$0xff] %vm3822, %v3802
        %3832 = vst [vmem:[#allocation2 + $0x50] sm:$0xff] %v3803
        %3833 = vst.msk [vmem:[#allocation2 + $0x58] sm:$0xff] %vm3822, %v3804
        %3834 = vst [vmem:[#allocation2 + $0x60] sm:$0xff] %v3805
        %3835 = vst.msk [vmem:[#allocation2 + $0x68] sm:$0xff] %vm3822, %v3806
        %3836 = vst [vmem:[#allocation2 + $0x70] sm:$0xff] %v3807
        %3837 = vst.msk [vmem:[#allocation2 + $0x78] sm:$0xff] %vm3822, %v3808
        %3838 = vst [vmem:[#allocation2 + $0x80] sm:$0xff] %v3809
        %3839 = vst.msk [vmem:[#allocation2 + $0x88] sm:$0xff] %vm3822, %v3810
        %3840 = vst [vmem:[#allocation2 + $0x90] sm:$0xff] %v3811
        %3841 = vst.msk [vmem:[#allocation2 + $0x98] sm:$0xff] %vm3822, %v3812
        %3842 = vst [vmem:[#allocation2 + $0xa0] sm:$0xff] %v3813
        %3843 = vst.msk [vmem:[#allocation2 + $0xa8] sm:$0xff] %vm3822, %v3814
        %3844 = vst [vmem:[#allocation2 + $0xb0] sm:$0xff] %v3815
        %3845 = vst.msk [vmem:[#allocation2 + $0xb8] sm:$0xff] %vm3822, %v3816
        %3846 = vst [vmem:[#allocation2 + $0xc0] sm:$0xff] %v3817
        %3847 = vst.msk [vmem:[#allocation2 + $0xc8] sm:$0xff] %vm3822, %v3818
        %3848 = vst [vmem:[#allocation2 + $0xd0] sm:$0xff] %v3819
        %3849 = vst.msk [vmem:[#allocation2 + $0xd8] sm:$0xff] %vm3822, %v3820
        %v3850 = vld [vmem:[#allocation2] sm:$0xff]
        %v3851 = vld [vmem:[#allocation2 + $0x8] sm:$0xff]
        %v3852 = vld [vmem:[#allocation2 + $0x10] sm:$0xff]
        %v3853 = vld [vmem:[#allocation2 + $0x18] sm:$0xff]
        %v3854 = vld [vmem:[#allocation2 + $0x20] sm:$0xff]
        %v3855 = vld [vmem:[#allocation2 + $0x28] sm:$0xff]
        %v3856 = vld [vmem:[#allocation2 + $0x30] sm:$0xff]
        %v3857 = vld [vmem:[#allocation2 + $0x38] sm:$0xff]
        %v3858 = vld [vmem:[#allocation2 + $0x40] sm:$0xff]
        %v3859 = vld [vmem:[#allocation2 + $0x48] sm:$0xff]
        %v3860 = vld [vmem:[#allocation2 + $0x50] sm:$0xff]
        %v3861 = vld [vmem:[#allocation2 + $0x58] sm:$0xff]
        %v3862 = vld [vmem:[#allocation2 + $0x60] sm:$0xff]
        %v3863 = vld [vmem:[#allocation2 + $0x68] sm:$0xff]
        %v3864 = vld [vmem:[#allocation2 + $0x70] sm:$0xff]
        %v3865 = vld [vmem:[#allocation2 + $0x78] sm:$0xff]
        %v3866 = vld [vmem:[#allocation2 + $0x80] sm:$0xff]
        %v3867 = vld [vmem:[#allocation2 + $0x88] sm:$0xff]
        %v3868 = vld [vmem:[#allocation2 + $0x90] sm:$0xff]
        %v3869 = vld [vmem:[#allocation2 + $0x98] sm:$0xff]
        %v3870 = vld [vmem:[#allocation2 + $0xa0] sm:$0xff]
        %v3871 = vld [vmem:[#allocation2 + $0xa8] sm:$0xff]
        %v3872 = vld [vmem:[#allocation2 + $0xb0] sm:$0xff]
        %v3873 = vld [vmem:[#allocation2 + $0xb8] sm:$0xff]
        %v3874 = vld [vmem:[#allocation2 + $0xc0] sm:$0xff]
        %v3875 = vld [vmem:[#allocation2 + $0xc8] sm:$0xff]
        %v3876 = vld [vmem:[#allocation2 + $0xd0] sm:$0x3f]
        %v3877 = vld [vmem:[#allocation2 + $0xd8] sm:$0x3f]
        %v3878 = vpack.c.bf16 %v3852, %v3850
        %v3879 = vpack.c.bf16 %v3853, %v3851
        %v3880 = vpack.c.bf16 %v3856, %v3854
        %v3881 = vpack.c.bf16 %v3857, %v3855
        %v3882 = vpack.c.bf16 %v3860, %v3858
        %v3883 = vpack.c.bf16 %v3861, %v3859
        %v3884 = vpack.c.bf16 %v3864, %v3862
        %v3885 = vpack.c.bf16 %v3865, %v3863
        %v3886 = vpack.c.bf16 %v3868, %v3866
        %v3887 = vpack.c.bf16 %v3869, %v3867
        %v3888 = vpack.c.bf16 %v3872, %v3870
        %v3889 = vpack.c.bf16 %v3873, %v3871
        %v3890 = vpack.c.bf16 %v3876, %v3874
        %v3891 = vpack.c.bf16 %v3877, %v3875
        %v3892 = vld [vmem:[%s2] sm:$0xff]
        %v3893 = vld [vmem:[%s2 + $0x8] sm:$0xf]
        %v3894 = vld [vmem:[%s2 + $0xc] sm:$0xff]
        %v3895 = vld [vmem:[%s2 + $0x14] sm:$0xf]
        %v3896 = vld [vmem:[%s2 + $0x18] sm:$0xff]
        %v3897 = vld [vmem:[%s2 + $0x20] sm:$0xf]
        %v3898 = vld [vmem:[%s2 + $0x24] sm:$0xff]
        %v3899 = vld [vmem:[%s2 + $0x2c] sm:$0xf]
        %v3900 = vld [vmem:[%s2 + $0x30] sm:$0xff]
        %v3901 = vld [vmem:[%s2 + $0x38] sm:$0xf]
        %v3902 = vld [vmem:[%s2 + $0x3c] sm:$0xff]
        %v3903 = vld [vmem:[%s2 + $0x44] sm:$0xf]
        %v3904 = vld [vmem:[%s2 + $0x48] sm:$0xff]
        %v3905 = vld [vmem:[%s2 + $0x50] sm:$0xf]
        %v3906 = vld [vmem:[%s2 + $0x54] sm:$0xff]
        %v3907 = vld [vmem:[%s2 + $0x5c] sm:$0xf]
        %v3908 = vld [vmem:[%s2 + $0x60] sm:$0xff]
        %v3909 = vld [vmem:[%s2 + $0x68] sm:$0xf]
        %v3910 = vld [vmem:[%s2 + $0x6c] sm:$0xff]
        %v3911 = vld [vmem:[%s2 + $0x74] sm:$0xf]
        %v3912 = vld [vmem:[%s2 + $0x78] sm:$0xff]
        %v3913 = vld [vmem:[%s2 + $0x80] sm:$0xf]
        %v3914 = vld [vmem:[%s2 + $0x84] sm:$0xff]
        %v3915 = vld [vmem:[%s2 + $0x8c] sm:$0xf]
        %v3916 = vld [vmem:[%s2 + $0x90] sm:$0xff]
        %v3917 = vld [vmem:[%s2 + $0x98] sm:$0xf]
        %v3918 = vld [vmem:[%s2 + $0x9c] sm:$0xff]
        %v3919 = vld [vmem:[%s2 + $0xa4] sm:$0xf]
        %v3920 = vld [vmem:[%s2 + $0xa8] sm:$0xff]
        %v3921 = vld [vmem:[%s2 + $0xb0] sm:$0xf]
        %v3922 = vld [vmem:[%s2 + $0xb4] sm:$0xff]
        %v3923 = vld [vmem:[%s2 + $0xbc] sm:$0xf]
        %v3924 = vld [vmem:[%s2 + $0xc0] sm:$0xff]
        %v3925 = vld [vmem:[%s2 + $0xc8] sm:$0xf]
        %v3926 = vld [vmem:[%s2 + $0xcc] sm:$0xff]
        %v3927 = vld [vmem:[%s2 + $0xd4] sm:$0xf]
        %v3928 = vld [vmem:[%s2 + $0xd8] sm:$0xff]
        %v3929 = vld [vmem:[%s2 + $0xe0] sm:$0xf]
        %v3930 = vld [vmem:[%s2 + $0xe4] sm:$0xff]
        %v3931 = vld [vmem:[%s2 + $0xec] sm:$0xf]
        %v3932 = vld [vmem:[%s2 + $0xf0] sm:$0xff]
        %v3933 = vld [vmem:[%s2 + $0xf8] sm:$0xf]
        %v3934 = vld [vmem:[%s2 + $0xfc] sm:$0xff]
        %v3935 = vld [vmem:[%s2 + $0x104] sm:$0xf]
        %v3936 = vld [vmem:[%s2 + $0x108] sm:$0xff]
        %v3937 = vld [vmem:[%s2 + $0x110] sm:$0xf]
        %v3938 = vld [vmem:[%s2 + $0x114] sm:$0xff]
        %v3939 = vld [vmem:[%s2 + $0x11c] sm:$0xf]
        %v3940 = vld [vmem:[#allocation2] sm:$0xfe]
        %v3941 = vld [vmem:[#allocation2 + $0x8] sm:$0xfe]
        %v3942 = vld [vmem:[#allocation2 + $0xd0] sm:$0x7f]
        %v3943 = vld [vmem:[#allocation2 + $0xd8] sm:$0x7f]
        %v3944 = vpack.c.bf16 %v3852, %v3940
        %v3945 = vpack.c.bf16 %v3853, %v3941
        %v3946 = vpack.c.bf16 %v3942, %v3874
        %v3947 = vpack.c.bf16 %v3943, %v3875
        %s3948 = scalar_lea.vmem %s2, 288
        %v3949 = vld [vmem:[%s3948] sm:$0xff]
        %v3950 = vld [vmem:[%s3948 + $0x8] sm:$0xf]
        %v3951 = vld [vmem:[%s3948 + $0xc] sm:$0xff]
        %v3952 = vld [vmem:[%s3948 + $0x14] sm:$0xf]
        %v3953 = vld [vmem:[%s3948 + $0x18] sm:$0xff]
        %v3954 = vld [vmem:[%s3948 + $0x20] sm:$0xf]
        %v3955 = vld [vmem:[%s3948 + $0x24] sm:$0xff]
        %v3956 = vld [vmem:[%s3948 + $0x2c] sm:$0xf]
        %v3957 = vld [vmem:[%s3948 + $0x30] sm:$0xff]
        %v3958 = vld [vmem:[%s3948 + $0x38] sm:$0xf]
        %v3959 = vld [vmem:[%s3948 + $0x3c] sm:$0xff]
        %v3960 = vld [vmem:[%s3948 + $0x44] sm:$0xf]
        %v3961 = vld [vmem:[%s3948 + $0x48] sm:$0xff]
        %v3962 = vld [vmem:[%s3948 + $0x50] sm:$0xf]
        %v3963 = vld [vmem:[%s3948 + $0x54] sm:$0xff]
        %v3964 = vld [vmem:[%s3948 + $0x5c] sm:$0xf]
        %v3965 = vld [vmem:[%s3948 + $0x60] sm:$0xff]
        %v3966 = vld [vmem:[%s3948 + $0x68] sm:$0xf]
        %v3967 = vld [vmem:[%s3948 + $0x6c] sm:$0xff]
        %v3968 = vld [vmem:[%s3948 + $0x74] sm:$0xf]
        %v3969 = vld [vmem:[%s3948 + $0x78] sm:$0xff]
        %v3970 = vld [vmem:[%s3948 + $0x80] sm:$0xf]
        %v3971 = vld [vmem:[%s3948 + $0x84] sm:$0xff]
        %v3972 = vld [vmem:[%s3948 + $0x8c] sm:$0xf]
        %v3973 = vld [vmem:[%s3948 + $0x90] sm:$0xff]
        %v3974 = vld [vmem:[%s3948 + $0x98] sm:$0xf]
        %v3975 = vld [vmem:[%s3948 + $0x9c] sm:$0xff]
        %v3976 = vld [vmem:[%s3948 + $0xa4] sm:$0xf]
        %v3977 = vld [vmem:[%s3948 + $0xa8] sm:$0xff]
        %v3978 = vld [vmem:[%s3948 + $0xb0] sm:$0xf]
        %v3979 = vld [vmem:[%s3948 + $0xb4] sm:$0xff]
        %v3980 = vld [vmem:[%s3948 + $0xbc] sm:$0xf]
        %v3981 = vld [vmem:[%s3948 + $0xc0] sm:$0xff]
        %v3982 = vld [vmem:[%s3948 + $0xc8] sm:$0xf]
        %v3983 = vld [vmem:[%s3948 + $0xcc] sm:$0xff]
        %v3984 = vld [vmem:[%s3948 + $0xd4] sm:$0xf]
        %v3985 = vld [vmem:[%s3948 + $0xd8] sm:$0xff]
        %v3986 = vld [vmem:[%s3948 + $0xe0] sm:$0xf]
        %v3987 = vld [vmem:[%s3948 + $0xe4] sm:$0xff]
        %v3988 = vld [vmem:[%s3948 + $0xec] sm:$0xf]
        %v3989 = vld [vmem:[%s3948 + $0xf0] sm:$0xff]
        %v3990 = vld [vmem:[%s3948 + $0xf8] sm:$0xf]
        %v3991 = vld [vmem:[%s3948 + $0xfc] sm:$0xff]
        %v3992 = vld [vmem:[%s3948 + $0x104] sm:$0xf]
        %v3993 = vld [vmem:[%s3948 + $0x108] sm:$0xff]
        %v3994 = vld [vmem:[%s3948 + $0x110] sm:$0xf]
        %v3995 = vld [vmem:[%s3948 + $0x114] sm:$0xff]
        %v3996 = vld [vmem:[%s3948 + $0x11c] sm:$0xf]
        %vm3997 = vsmask.f32 7424
        %v3999 = vshrl.u32 %v3944, 16
        %v4001 = vshll.u32 %v3944, 16
        %v4003 = vrot.slane %v4001, 1
        %v4004 = vor.u32 %v3999, %v4003
        %v4006 = vshll.u32 %v3880, 16
        %v4008 = vrot.slane %v4006, 1
        %v4009 = vsel %vm3997, %v4004, %v4008
        %v4011 = vshrl.u32 %v3945, 16
        %v4013 = vshll.u32 %v3945, 16
        %v4015 = vrot.slane %v4013, 1
        %v4016 = vor.u32 %v4011, %v4015
        %v4018 = vshll.u32 %v3881, 16
        %v4020 = vrot.slane %v4018, 1
        %v4021 = vsel %vm3997, %v4016, %v4020
        %v4022 = vshrl.u32 %v3880, 16
        %v4024 = vor.u32 %v4022, %v4008
        %v4026 = vshll.u32 %v3882, 16
        %v4028 = vrot.slane %v4026, 1
        %v4029 = vsel %vm3997, %v4024, %v4028
        %v4030 = vshrl.u32 %v3881, 16
        %v4032 = vor.u32 %v4030, %v4020
        %v4034 = vshll.u32 %v3883, 16
        %v4036 = vrot.slane %v4034, 1
        %v4037 = vsel %vm3997, %v4032, %v4036
        %v4038 = vshrl.u32 %v3882, 16
        %v4040 = vor.u32 %v4038, %v4028
        %v4042 = vshll.u32 %v3884, 16
        %v4044 = vrot.slane %v4042, 1
        %v4045 = vsel %vm3997, %v4040, %v4044
        %v4046 = vshrl.u32 %v3883, 16
        %v4048 = vor.u32 %v4046, %v4036
        %v4050 = vshll.u32 %v3885, 16
        %v4052 = vrot.slane %v4050, 1
        %v4053 = vsel %vm3997, %v4048, %v4052
        %v4054 = vshrl.u32 %v3884, 16
        %v4056 = vor.u32 %v4054, %v4044
        %v4058 = vshll.u32 %v3886, 16
        %v4060 = vrot.slane %v4058, 1
        %v4061 = vsel %vm3997, %v4056, %v4060
        %v4062 = vshrl.u32 %v3885, 16
        %v4064 = vor.u32 %v4062, %v4052
        %v4066 = vshll.u32 %v3887, 16
        %v4068 = vrot.slane %v4066, 1
        %v4069 = vsel %vm3997, %v4064, %v4068
        %v4070 = vshrl.u32 %v3886, 16
        %v4072 = vor.u32 %v4070, %v4060
        %v4074 = vshll.u32 %v3888, 16
        %v4076 = vrot.slane %v4074, 1
        %v4077 = vsel %vm3997, %v4072, %v4076
        %v4078 = vshrl.u32 %v3887, 16
        %v4080 = vor.u32 %v4078, %v4068
        %v4082 = vshll.u32 %v3889, 16
        %v4084 = vrot.slane %v4082, 1
        %v4085 = vsel %vm3997, %v4080, %v4084
        %v4086 = vshrl.u32 %v3888, 16
        %v4088 = vor.u32 %v4086, %v4076
        %v4090 = vshll.u32 %v3946, 16
        %v4092 = vrot.slane %v4090, 1
        %v4093 = vsel %vm3997, %v4088, %v4092
        %v4094 = vshrl.u32 %v3889, 16
        %v4096 = vor.u32 %v4094, %v4084
        %v4098 = vshll.u32 %v3947, 16
        %v4100 = vrot.slane %v4098, 1
        %v4101 = vsel %vm3997, %v4096, %v4100
        %v4102 = vshrl.u32 %v3946, 16
        %v4104 = vor.u32 %v4102, %v4092
        %v4105 = vshrl.u32 %v3947, 16
        %v4107 = vor.u32 %v4105, %v4100
        %v4163 = vunpack.c.l.b16 %v3949
        %v4164 = vunpack.c.h.b16 %v3949
        %v4165 = vunpack.c.l.b16 %v3950
        %v4166 = vunpack.c.l.b16 %v3951
        %v4167 = vunpack.c.h.b16 %v3951
        %v4168 = vunpack.c.l.b16 %v3952
        %v4169 = vunpack.c.l.b16 %v3953
        %v4170 = vunpack.c.h.b16 %v3953
        %v4171 = vunpack.c.l.b16 %v3954
        %v4172 = vunpack.c.l.b16 %v3955
        %v4173 = vunpack.c.h.b16 %v3955
        %v4174 = vunpack.c.l.b16 %v3956
        %v4175 = vunpack.c.l.b16 %v3957
        %v4176 = vunpack.c.h.b16 %v3957
        %v4177 = vunpack.c.l.b16 %v3958
        %v4178 = vunpack.c.l.b16 %v3959
        %v4179 = vunpack.c.h.b16 %v3959
        %v4180 = vunpack.c.l.b16 %v3960
        %v4181 = vunpack.c.l.b16 %v3961
        %v4182 = vunpack.c.h.b16 %v3961
        %v4183 = vunpack.c.l.b16 %v3962
        %v4184 = vunpack.c.l.b16 %v3963
        %v4185 = vunpack.c.h.b16 %v3963
        %v4186 = vunpack.c.l.b16 %v3964
        %v4187 = vunpack.c.l.b16 %v3965
        %v4188 = vunpack.c.h.b16 %v3965
        %v4189 = vunpack.c.l.b16 %v3966
        %v4190 = vunpack.c.l.b16 %v3967
        %v4191 = vunpack.c.h.b16 %v3967
        %v4192 = vunpack.c.l.b16 %v3968
        %v4193 = vunpack.c.l.b16 %v3969
        %v4194 = vunpack.c.h.b16 %v3969
        %v4195 = vunpack.c.l.b16 %v3970
        %v4196 = vunpack.c.l.b16 %v3971
        %v4197 = vunpack.c.h.b16 %v3971
        %v4198 = vunpack.c.l.b16 %v3972
        %v4199 = vunpack.c.l.b16 %v3973
        %v4200 = vunpack.c.h.b16 %v3973
        %v4201 = vunpack.c.l.b16 %v3974
        %v4202 = vunpack.c.l.b16 %v3975
        %v4203 = vunpack.c.h.b16 %v3975
        %v4204 = vunpack.c.l.b16 %v3976
        %v4205 = vunpack.c.l.b16 %v3977
        %v4206 = vunpack.c.h.b16 %v3977
        %v4207 = vunpack.c.l.b16 %v3978
        %v4208 = vunpack.c.l.b16 %v3979
        %v4209 = vunpack.c.h.b16 %v3979
        %v4210 = vunpack.c.l.b16 %v3980
        %v4211 = vunpack.c.l.b16 %v3981
        %v4212 = vunpack.c.h.b16 %v3981
        %v4213 = vunpack.c.l.b16 %v3982
        %v4214 = vunpack.c.l.b16 %v3983
        %v4215 = vunpack.c.h.b16 %v3983
        %v4216 = vunpack.c.l.b16 %v3984
        %v4217 = vunpack.c.l.b16 %v3985
        %v4218 = vunpack.c.h.b16 %v3985
        %v4219 = vunpack.c.l.b16 %v3986
        %v4220 = vunpack.c.l.b16 %v3987
        %v4221 = vunpack.c.h.b16 %v3987
        %v4222 = vunpack.c.l.b16 %v3988
        %v4223 = vunpack.c.l.b16 %v3989
        %v4224 = vunpack.c.h.b16 %v3989
        %v4225 = vunpack.c.l.b16 %v3990
        %v4226 = vunpack.c.l.b16 %v3991
        %v4227 = vunpack.c.h.b16 %v3991
        %v4228 = vunpack.c.l.b16 %v3992
        %v4229 = vunpack.c.l.b16 %v3993
        %v4230 = vunpack.c.h.b16 %v3993
        %v4231 = vunpack.c.l.b16 %v3994
        %v4232 = vunpack.c.l.b16 %v3995
        %v4233 = vunpack.c.h.b16 %v3995
        %v4234 = vunpack.c.l.b16 %v3996
        %v4235 = vpack.c.b16 %v4166, %v4163
        %v4236 = vpack.c.b16 %v4167, %v4164
        %v4237 = vpack.c.b16 %v4168, %v4165
        %v4238 = vpack.c.b16 %v4172, %v4169
        %v4239 = vpack.c.b16 %v4173, %v4170
        %v4240 = vpack.c.b16 %v4174, %v4171
        %v4241 = vpack.c.b16 %v4178, %v4175
        %v4242 = vpack.c.b16 %v4179, %v4176
        %v4243 = vpack.c.b16 %v4180, %v4177
        %v4244 = vpack.c.b16 %v4184, %v4181
        %v4245 = vpack.c.b16 %v4185, %v4182
        %v4246 = vpack.c.b16 %v4186, %v4183
        %v4247 = vpack.c.b16 %v4190, %v4187
        %v4248 = vpack.c.b16 %v4191, %v4188
        %v4249 = vpack.c.b16 %v4192, %v4189
        %v4250 = vpack.c.b16 %v4196, %v4193
        %v4251 = vpack.c.b16 %v4197, %v4194
        %v4252 = vpack.c.b16 %v4198, %v4195
        %v4253 = vpack.c.b16 %v4202, %v4199
        %v4254 = vpack.c.b16 %v4203, %v4200
        %v4255 = vpack.c.b16 %v4204, %v4201
        %v4256 = vpack.c.b16 %v4208, %v4205
        %v4257 = vpack.c.b16 %v4209, %v4206
        %v4258 = vpack.c.b16 %v4210, %v4207
        %v4259 = vpack.c.b16 %v4214, %v4211
        %v4260 = vpack.c.b16 %v4215, %v4212
        %v4261 = vpack.c.b16 %v4216, %v4213
        %v4262 = vpack.c.b16 %v4220, %v4217
        %v4263 = vpack.c.b16 %v4221, %v4218
        %v4264 = vpack.c.b16 %v4222, %v4219
        %v4265 = vpack.c.b16 %v4226, %v4223
        %v4266 = vpack.c.b16 %v4227, %v4224
        %v4267 = vpack.c.b16 %v4228, %v4225
        %v4268 = vpack.c.b16 %v4232, %v4229
        %v4269 = vpack.c.b16 %v4233, %v4230
        %v4270 = vpack.c.b16 %v4234, %v4231
        %v4308 = vsel %vm3822, %v4021, 0
        %v4311 = vsel %vm3822, %v4037, 0
        %v4314 = vsel %vm3822, %v4053, 0
        %v4317 = vsel %vm3822, %v4069, 0
        %v4320 = vsel %vm3822, %v4085, 0
        %v4323 = vsel %vm3822, %v4101, 0
        %v4326 = vsel %vm3822, %v4107, 0
        %4328 = vmatprep.subr.bf16.mxu0 %v4257
        %4329 = vmatpush1.bf16.msra.mxu0 %v4256
        %4330 = vmatprep.subr.bf16.mxu0 %v4254
        %4331 = vmatpush1.bf16.msra.mxu0 %v4253
        %4332 = vmatprep.subr.bf16.mxu0 %v4251
        %4333 = vmatpush1.bf16.msra.mxu0 %v4250
        %4334 = vmatprep.subr.bf16.mxu0 %v4248
        %4335 = vmatpush1.bf16.msra.mxu0 %v4247
        %4336 = vmatprep.subr.bf16.mxu0 %v4245
        %4337 = vmatpush1.bf16.msra.mxu0 %v4244
        %4338 = vmatprep.subr.bf16.mxu0 %v4242
        %4339 = vmatpush1.bf16.msra.mxu0 %v4241
        %4340 = vmatprep.subr.bf16.mxu0 %v4239
        %4341 = vmatpush1.bf16.msra.mxu0 %v4238
        %4342 = vmatprep.subr.bf16.mxu0 %v4236
        %4343 = vmatpush1.bf16.msra.mxu0 %v4235
        %4344 = vmatprep.subr.bf16.mxu0 0
        %4345 = vmatpush2.bf16.msra.mxu0 0
        %4346 = vmatprep.subr.bf16.mxu0 0
        %4347 = vmatpush2.bf16.msra.mxu0 0
        %4348 = vmatprep.subr.bf16.mxu0 0
        %4349 = vmatpush2.bf16.msra.mxu0 0
        %4350 = vmatprep.subr.bf16.mxu0 0
        %4351 = vmatpush2.bf16.msra.mxu0 0
        %4352 = vmatprep.subr.bf16.mxu0 %v4269
        %4353 = vmatpush2.bf16.msra.mxu0 %v4268
        %4354 = vmatprep.subr.bf16.mxu0 %v4266
        %4355 = vmatpush2.bf16.msra.mxu0 %v4265
        %4356 = vmatprep.subr.bf16.mxu0 %v4263
        %4357 = vmatpush2.bf16.msra.mxu0 %v4262
        %4358 = vmatprep.subr.bf16.mxu0 %v4260
        %4359 = vmatpush2.bf16.msra.mxu0 %v4259
        %4360 = vmatprep.mubr.bf16.mxu0 %v4308
        %4361 = vmatmul.mubr.bf16.gmra.mxu0 %v4009
        %v4362 = vpop.f32.mrf.mxu0
        %v4363 = vadd.f32 0.0, %v4362
        %v4364 = vpop.f32.mrf.mxu0
        %v4365 = vadd.f32 0.0, %v4364
        %v4366 = vpop.f32.mrf.mxu0
        %v4367 = vadd.f32 0.0, %v4366
        %v4368 = vpop.f32.mrf.mxu0
        %v4369 = vadd.f32 0.0, %v4368
        %4370 = vmatprep.mubr.bf16.mxu0 %v4311
        %4371 = vmatmul.mubr.bf16.gmra.mxu0 %v4029
        %v4372 = vpop.f32.mrf.mxu0
        %v4373 = vadd.f32 0.0, %v4372
        %v4374 = vpop.f32.mrf.mxu0
        %v4375 = vadd.f32 0.0, %v4374
        %v4376 = vpop.f32.mrf.mxu0
        %v4377 = vadd.f32 0.0, %v4376
        %v4378 = vpop.f32.mrf.mxu0
        %v4379 = vadd.f32 0.0, %v4378
        %4380 = vmatprep.mubr.bf16.mxu0 %v4314
        %4381 = vmatmul.mubr.bf16.gmra.mxu0 %v4045
        %v4382 = vpop.f32.mrf.mxu0
        %v4383 = vadd.f32 0.0, %v4382
        %v4384 = vpop.f32.mrf.mxu0
        %v4385 = vadd.f32 0.0, %v4384
        %v4386 = vpop.f32.mrf.mxu0
        %v4387 = vadd.f32 0.0, %v4386
        %v4388 = vpop.f32.mrf.mxu0
        %v4389 = vadd.f32 0.0, %v4388
        %4390 = vmatprep.mubr.bf16.mxu0 %v4317
        %4391 = vmatmul.mubr.bf16.gmra.mxu0 %v4061
        %v4392 = vpop.f32.mrf.mxu0
        %v4393 = vadd.f32 0.0, %v4392
        %v4394 = vpop.f32.mrf.mxu0
        %v4395 = vadd.f32 0.0, %v4394
        %v4396 = vpop.f32.mrf.mxu0
        %v4397 = vadd.f32 0.0, %v4396
        %v4398 = vpop.f32.mrf.mxu0
        %v4399 = vadd.f32 0.0, %v4398
        %4400 = vmatprep.mubr.bf16.mxu0 %v4320
        %4401 = vmatmul.mubr.bf16.gmra.mxu0 %v4077
        %v4402 = vpop.f32.mrf.mxu0
        %v4403 = vadd.f32 0.0, %v4402
        %v4404 = vpop.f32.mrf.mxu0
        %v4405 = vadd.f32 0.0, %v4404
        %v4406 = vpop.f32.mrf.mxu0
        %v4407 = vadd.f32 0.0, %v4406
        %v4408 = vpop.f32.mrf.mxu0
        %v4409 = vadd.f32 0.0, %v4408
        %4410 = vmatprep.mubr.bf16.mxu0 %v4323
        %4411 = vmatmul.mubr.bf16.gmra.mxu0 %v4093
        %v4412 = vpop.f32.mrf.mxu0
        %v4413 = vadd.f32 0.0, %v4412
        %v4414 = vpop.f32.mrf.mxu0
        %v4415 = vadd.f32 0.0, %v4414
        %v4416 = vpop.f32.mrf.mxu0
        %v4417 = vadd.f32 0.0, %v4416
        %v4418 = vpop.f32.mrf.mxu0
        %v4419 = vadd.f32 0.0, %v4418
        %4420 = vmatprep.mubr.bf16.mxu0 %v4326
        %4421 = vmatmul.mubr.bf16.gmra.mxu0 %v4104
        %v4422 = vpop.f32.mrf.mxu0
        %v4423 = vadd.f32 0.0, %v4422
        %v4424 = vpop.f32.mrf.mxu0
        %v4425 = vadd.f32 0.0, %v4424
        %v4426 = vpop.f32.mrf.mxu0
        %v4427 = vadd.f32 0.0, %v4426
        %v4428 = vpop.f32.mrf.mxu0
        %v4429 = vadd.f32 0.0, %v4428
        %4430 = vdwg.mxu0
        %4431 = vmatprep.subr.bf16.mxu0 0
        %4432 = vmatpush1.bf16.msra.mxu0 %v4258
        %4433 = vmatprep.subr.bf16.mxu0 0
        %4434 = vmatpush1.bf16.msra.mxu0 %v4255
        %4435 = vmatprep.subr.bf16.mxu0 0
        %4436 = vmatpush1.bf16.msra.mxu0 %v4252
        %4437 = vmatprep.subr.bf16.mxu0 0
        %4438 = vmatpush1.bf16.msra.mxu0 %v4249
        %4439 = vmatprep.subr.bf16.mxu0 0
        %4440 = vmatpush1.bf16.msra.mxu0 %v4246
        %4441 = vmatprep.subr.bf16.mxu0 0
        %4442 = vmatpush1.bf16.msra.mxu0 %v4243
        %4443 = vmatprep.subr.bf16.mxu0 0
        %4444 = vmatpush1.bf16.msra.mxu0 %v4240
        %4445 = vmatprep.subr.bf16.mxu0 0
        %4446 = vmatpush1.bf16.msra.mxu0 %v4237
        %4447 = vmatprep.subr.bf16.mxu0 0
        %4448 = vmatpush2.bf16.msra.mxu0 0
        %4449 = vmatprep.subr.bf16.mxu0 0
        %4450 = vmatpush2.bf16.msra.mxu0 0
        %4451 = vmatprep.subr.bf16.mxu0 0
        %4452 = vmatpush2.bf16.msra.mxu0 0
        %4453 = vmatprep.subr.bf16.mxu0 0
        %4454 = vmatpush2.bf16.msra.mxu0 0
        %4455 = vmatprep.subr.bf16.mxu0 0
        %4456 = vmatpush2.bf16.msra.mxu0 %v4270
        %4457 = vmatprep.subr.bf16.mxu0 0
        %4458 = vmatpush2.bf16.msra.mxu0 %v4267
        %4459 = vmatprep.subr.bf16.mxu0 0
        %4460 = vmatpush2.bf16.msra.mxu0 %v4264
        %4461 = vmatprep.subr.bf16.mxu0 0
        %4462 = vmatpush2.bf16.msra.mxu0 %v4261
        %4463 = vmatprep.mubr.bf16.mxu0 %v4308
        %4464 = vmatmul.mubr.bf16.gmra.mxu0 %v4009
        %v4465 = vpop.f32.mrf.mxu0
        %v4466 = vadd.f32 0.0, %v4465
        %v4467 = vpop.f32.mrf.mxu0
        %v4468 = vpop.f32.mrf.mxu0
        %v4469 = vadd.f32 0.0, %v4468
        %v4470 = vpop.f32.mrf.mxu0
        %4471 = vmatprep.mubr.bf16.mxu0 %v4311
        %4472 = vmatmul.mubr.bf16.gmra.mxu0 %v4029
        %v4473 = vpop.f32.mrf.mxu0
        %v4474 = vadd.f32 0.0, %v4473
        %v4475 = vpop.f32.mrf.mxu0
        %v4476 = vpop.f32.mrf.mxu0
        %v4477 = vadd.f32 0.0, %v4476
        %v4478 = vpop.f32.mrf.mxu0
        %4479 = vmatprep.mubr.bf16.mxu0 %v4314
        %4480 = vmatmul.mubr.bf16.gmra.mxu0 %v4045
        %v4481 = vpop.f32.mrf.mxu0
        %v4482 = vadd.f32 0.0, %v4481
        %v4483 = vpop.f32.mrf.mxu0
        %v4484 = vpop.f32.mrf.mxu0
        %v4485 = vadd.f32 0.0, %v4484
        %v4486 = vpop.f32.mrf.mxu0
        %4487 = vmatprep.mubr.bf16.mxu0 %v4317
        %4488 = vmatmul.mubr.bf16.gmra.mxu0 %v4061
        %v4489 = vpop.f32.mrf.mxu0
        %v4490 = vadd.f32 0.0, %v4489
        %v4491 = vpop.f32.mrf.mxu0
        %v4492 = vpop.f32.mrf.mxu0
        %v4493 = vadd.f32 0.0, %v4492
        %v4494 = vpop.f32.mrf.mxu0
        %4495 = vmatprep.mubr.bf16.mxu0 %v4320
        %4496 = vmatmul.mubr.bf16.gmra.mxu0 %v4077
        %v4497 = vpop.f32.mrf.mxu0
        %v4498 = vadd.f32 0.0, %v4497
        %v4499 = vpop.f32.mrf.mxu0
        %v4500 = vpop.f32.mrf.mxu0
        %v4501 = vadd.f32 0.0, %v4500
        %v4502 = vpop.f32.mrf.mxu0
        %4503 = vmatprep.mubr.bf16.mxu0 %v4323
        %4504 = vmatmul.mubr.bf16.gmra.mxu0 %v4093
        %v4505 = vpop.f32.mrf.mxu0
        %v4506 = vadd.f32 0.0, %v4505
        %v4507 = vpop.f32.mrf.mxu0
        %v4508 = vpop.f32.mrf.mxu0
        %v4509 = vadd.f32 0.0, %v4508
        %v4510 = vpop.f32.mrf.mxu0
        %4511 = vmatprep.mubr.bf16.mxu0 %v4326
        %4512 = vmatmul.mubr.bf16.gmra.mxu0 %v4104
        %v4513 = vpop.f32.mrf.mxu0
        %v4514 = vadd.f32 0.0, %v4513
        %v4515 = vpop.f32.mrf.mxu0
        %v4516 = vpop.f32.mrf.mxu0
        %v4517 = vadd.f32 0.0, %v4516
        %v4518 = vpop.f32.mrf.mxu0
        %4519 = vdwg.mxu0
        %v4568 = vunpack.c.l.b16 %v3892
        %v4569 = vunpack.c.h.b16 %v3892
        %v4570 = vunpack.c.l.b16 %v3893
        %v4571 = vunpack.c.l.b16 %v3894
        %v4572 = vunpack.c.h.b16 %v3894
        %v4573 = vunpack.c.l.b16 %v3895
        %v4574 = vunpack.c.l.b16 %v3896
        %v4575 = vunpack.c.h.b16 %v3896
        %v4576 = vunpack.c.l.b16 %v3897
        %v4577 = vunpack.c.l.b16 %v3898
        %v4578 = vunpack.c.h.b16 %v3898
        %v4579 = vunpack.c.l.b16 %v3899
        %v4580 = vunpack.c.l.b16 %v3900
        %v4581 = vunpack.c.h.b16 %v3900
        %v4582 = vunpack.c.l.b16 %v3901
        %v4583 = vunpack.c.l.b16 %v3902
        %v4584 = vunpack.c.h.b16 %v3902
        %v4585 = vunpack.c.l.b16 %v3903
        %v4586 = vunpack.c.l.b16 %v3904
        %v4587 = vunpack.c.h.b16 %v3904
        %v4588 = vunpack.c.l.b16 %v3905
        %v4589 = vunpack.c.l.b16 %v3906
        %v4590 = vunpack.c.h.b16 %v3906
        %v4591 = vunpack.c.l.b16 %v3907
        %v4592 = vunpack.c.l.b16 %v3908
        %v4593 = vunpack.c.h.b16 %v3908
        %v4594 = vunpack.c.l.b16 %v3909
        %v4595 = vunpack.c.l.b16 %v3910
        %v4596 = vunpack.c.h.b16 %v3910
        %v4597 = vunpack.c.l.b16 %v3911
        %v4598 = vunpack.c.l.b16 %v3912
        %v4599 = vunpack.c.h.b16 %v3912
        %v4600 = vunpack.c.l.b16 %v3913
        %v4601 = vunpack.c.l.b16 %v3914
        %v4602 = vunpack.c.h.b16 %v3914
        %v4603 = vunpack.c.l.b16 %v3915
        %v4604 = vunpack.c.l.b16 %v3916
        %v4605 = vunpack.c.h.b16 %v3916
        %v4606 = vunpack.c.l.b16 %v3917
        %v4607 = vunpack.c.l.b16 %v3918
        %v4608 = vunpack.c.h.b16 %v3918
        %v4609 = vunpack.c.l.b16 %v3919
        %v4610 = vunpack.c.l.b16 %v3920
        %v4611 = vunpack.c.h.b16 %v3920
        %v4612 = vunpack.c.l.b16 %v3921
        %v4613 = vunpack.c.l.b16 %v3922
        %v4614 = vunpack.c.h.b16 %v3922
        %v4615 = vunpack.c.l.b16 %v3923
        %v4616 = vunpack.c.l.b16 %v3924
        %v4617 = vunpack.c.h.b16 %v3924
        %v4618 = vunpack.c.l.b16 %v3925
        %v4619 = vunpack.c.l.b16 %v3926
        %v4620 = vunpack.c.h.b16 %v3926
        %v4621 = vunpack.c.l.b16 %v3927
        %v4622 = vunpack.c.l.b16 %v3928
        %v4623 = vunpack.c.h.b16 %v3928
        %v4624 = vunpack.c.l.b16 %v3929
        %v4625 = vunpack.c.l.b16 %v3930
        %v4626 = vunpack.c.h.b16 %v3930
        %v4627 = vunpack.c.l.b16 %v3931
        %v4628 = vunpack.c.l.b16 %v3932
        %v4629 = vunpack.c.h.b16 %v3932
        %v4630 = vunpack.c.l.b16 %v3933
        %v4631 = vunpack.c.l.b16 %v3934
        %v4632 = vunpack.c.h.b16 %v3934
        %v4633 = vunpack.c.l.b16 %v3935
        %v4634 = vunpack.c.l.b16 %v3936
        %v4635 = vunpack.c.h.b16 %v3936
        %v4636 = vunpack.c.l.b16 %v3937
        %v4637 = vunpack.c.l.b16 %v3938
        %v4638 = vunpack.c.h.b16 %v3938
        %v4639 = vunpack.c.l.b16 %v3939
        %v4640 = vpack.c.b16 %v4571, %v4568
        %v4641 = vpack.c.b16 %v4572, %v4569
        %v4642 = vpack.c.b16 %v4573, %v4570
        %v4643 = vpack.c.b16 %v4577, %v4574
        %v4644 = vpack.c.b16 %v4578, %v4575
        %v4645 = vpack.c.b16 %v4579, %v4576
        %v4646 = vpack.c.b16 %v4583, %v4580
        %v4647 = vpack.c.b16 %v4584, %v4581
        %v4648 = vpack.c.b16 %v4585, %v4582
        %v4649 = vpack.c.b16 %v4589, %v4586
        %v4650 = vpack.c.b16 %v4590, %v4587
        %v4651 = vpack.c.b16 %v4591, %v4588
        %v4652 = vpack.c.b16 %v4595, %v4592
        %v4653 = vpack.c.b16 %v4596, %v4593
        %v4654 = vpack.c.b16 %v4597, %v4594
        %v4655 = vpack.c.b16 %v4601, %v4598
        %v4656 = vpack.c.b16 %v4602, %v4599
        %v4657 = vpack.c.b16 %v4603, %v4600
        %v4658 = vpack.c.b16 %v4607, %v4604
        %v4659 = vpack.c.b16 %v4608, %v4605
        %v4660 = vpack.c.b16 %v4609, %v4606
        %v4661 = vpack.c.b16 %v4613, %v4610
        %v4662 = vpack.c.b16 %v4614, %v4611
        %v4663 = vpack.c.b16 %v4615, %v4612
        %v4664 = vpack.c.b16 %v4619, %v4616
        %v4665 = vpack.c.b16 %v4620, %v4617
        %v4666 = vpack.c.b16 %v4621, %v4618
        %v4667 = vpack.c.b16 %v4625, %v4622
        %v4668 = vpack.c.b16 %v4626, %v4623
        %v4669 = vpack.c.b16 %v4627, %v4624
        %v4670 = vpack.c.b16 %v4631, %v4628
        %v4671 = vpack.c.b16 %v4632, %v4629
        %v4672 = vpack.c.b16 %v4633, %v4630
        %v4673 = vpack.c.b16 %v4637, %v4634
        %v4674 = vpack.c.b16 %v4638, %v4635
        %v4675 = vpack.c.b16 %v4639, %v4636
        %v4713 = vsel %vm3822, %v3879, 0
        %v4715 = vsel %vm3822, %v3881, 0
        %v4717 = vsel %vm3822, %v3883, 0
        %v4719 = vsel %vm3822, %v3885, 0
        %v4721 = vsel %vm3822, %v3887, 0
        %v4723 = vsel %vm3822, %v3889, 0
        %v4726 = vsel %vm3822, %v3891, 0
        %4728 = vmatprep.subr.bf16.mxu0 %v4662
        %4729 = vmatpush1.bf16.msra.mxu0 %v4661
        %4730 = vmatprep.subr.bf16.mxu0 %v4659
        %4731 = vmatpush1.bf16.msra.mxu0 %v4658
        %4732 = vmatprep.subr.bf16.mxu0 %v4656
        %4733 = vmatpush1.bf16.msra.mxu0 %v4655
        %4734 = vmatprep.subr.bf16.mxu0 %v4653
        %4735 = vmatpush1.bf16.msra.mxu0 %v4652
        %4736 = vmatprep.subr.bf16.mxu0 %v4650
        %4737 = vmatpush1.bf16.msra.mxu0 %v4649
        %4738 = vmatprep.subr.bf16.mxu0 %v4647
        %4739 = vmatpush1.bf16.msra.mxu0 %v4646
        %4740 = vmatprep.subr.bf16.mxu0 %v4644
        %4741 = vmatpush1.bf16.msra.mxu0 %v4643
        %4742 = vmatprep.subr.bf16.mxu0 %v4641
        %4743 = vmatpush1.bf16.msra.mxu0 %v4640
        %4744 = vmatprep.subr.bf16.mxu0 0
        %4745 = vmatpush2.bf16.msra.mxu0 0
        %4746 = vmatprep.subr.bf16.mxu0 0
        %4747 = vmatpush2.bf16.msra.mxu0 0
        %4748 = vmatprep.subr.bf16.mxu0 0
        %4749 = vmatpush2.bf16.msra.mxu0 0
        %4750 = vmatprep.subr.bf16.mxu0 0
        %4751 = vmatpush2.bf16.msra.mxu0 0
        %4752 = vmatprep.subr.bf16.mxu0 %v4674
        %4753 = vmatpush2.bf16.msra.mxu0 %v4673
        %4754 = vmatprep.subr.bf16.mxu0 %v4671
        %4755 = vmatpush2.bf16.msra.mxu0 %v4670
        %4756 = vmatprep.subr.bf16.mxu0 %v4668
        %4757 = vmatpush2.bf16.msra.mxu0 %v4667
        %4758 = vmatprep.subr.bf16.mxu0 %v4665
        %4759 = vmatpush2.bf16.msra.mxu0 %v4664
        %4760 = vmatprep.mubr.bf16.mxu0 %v4713
        %4761 = vmatmul.mubr.bf16.gmra.mxu0 %v3878
        %v4762 = vpop.f32.mrf.mxu0
        %v4763 = vadd.f32 %v4363, %v4762
        %v4764 = vpop.f32.mrf.mxu0
        %v4765 = vadd.f32 %v4365, %v4764
        %v4766 = vpop.f32.mrf.mxu0
        %v4767 = vadd.f32 %v4367, %v4766
        %v4768 = vpop.f32.mrf.mxu0
        %v4769 = vadd.f32 %v4369, %v4768
        %4770 = vmatprep.mubr.bf16.mxu0 %v4715
        %4771 = vmatmul.mubr.bf16.gmra.mxu0 %v3880
        %v4772 = vpop.f32.mrf.mxu0
        %v4773 = vadd.f32 %v4373, %v4772
        %v4774 = vpop.f32.mrf.mxu0
        %v4775 = vadd.f32 %v4375, %v4774
        %v4776 = vpop.f32.mrf.mxu0
        %v4777 = vadd.f32 %v4377, %v4776
        %v4778 = vpop.f32.mrf.mxu0
        %v4779 = vadd.f32 %v4379, %v4778
        %4780 = vmatprep.mubr.bf16.mxu0 %v4717
        %4781 = vmatmul.mubr.bf16.gmra.mxu0 %v3882
        %v4782 = vpop.f32.mrf.mxu0
        %v4783 = vadd.f32 %v4383, %v4782
        %v4784 = vpop.f32.mrf.mxu0
        %v4785 = vadd.f32 %v4385, %v4784
        %v4786 = vpop.f32.mrf.mxu0
        %v4787 = vadd.f32 %v4387, %v4786
        %v4788 = vpop.f32.mrf.mxu0
        %v4789 = vadd.f32 %v4389, %v4788
        %4790 = vmatprep.mubr.bf16.mxu0 %v4719
        %4791 = vmatmul.mubr.bf16.gmra.mxu0 %v3884
        %v4792 = vpop.f32.mrf.mxu0
        %v4793 = vadd.f32 %v4393, %v4792
        %v4794 = vpop.f32.mrf.mxu0
        %v4795 = vadd.f32 %v4395, %v4794
        %v4796 = vpop.f32.mrf.mxu0
        %v4797 = vadd.f32 %v4397, %v4796
        %v4798 = vpop.f32.mrf.mxu0
        %v4799 = vadd.f32 %v4399, %v4798
        %4800 = vmatprep.mubr.bf16.mxu0 %v4721
        %4801 = vmatmul.mubr.bf16.gmra.mxu0 %v3886
        %v4802 = vpop.f32.mrf.mxu0
        %v4803 = vadd.f32 %v4403, %v4802
        %v4804 = vpop.f32.mrf.mxu0
        %v4805 = vadd.f32 %v4405, %v4804
        %v4806 = vpop.f32.mrf.mxu0
        %v4807 = vadd.f32 %v4407, %v4806
        %v4808 = vpop.f32.mrf.mxu0
        %v4809 = vadd.f32 %v4409, %v4808
        %4810 = vmatprep.mubr.bf16.mxu0 %v4723
        %4811 = vmatmul.mubr.bf16.gmra.mxu0 %v3888
        %v4812 = vpop.f32.mrf.mxu0
        %v4813 = vadd.f32 %v4413, %v4812
        %v4814 = vpop.f32.mrf.mxu0
        %v4815 = vadd.f32 %v4415, %v4814
        %v4816 = vpop.f32.mrf.mxu0
        %v4817 = vadd.f32 %v4417, %v4816
        %v4818 = vpop.f32.mrf.mxu0
        %v4819 = vadd.f32 %v4419, %v4818
        %4820 = vmatprep.mubr.bf16.mxu0 %v4726
        %4821 = vmatmul.mubr.bf16.gmra.mxu0 %v3890
        %v4822 = vpop.f32.mrf.mxu0
        %v4823 = vadd.f32 %v4423, %v4822
        %v4824 = vpop.f32.mrf.mxu0
        %v4825 = vadd.f32 %v4425, %v4824
        %v4826 = vpop.f32.mrf.mxu0
        %v4827 = vadd.f32 %v4427, %v4826
        %v4828 = vpop.f32.mrf.mxu0
        %v4829 = vadd.f32 %v4429, %v4828
        %4830 = vdwg.mxu0
        %4831 = vmatprep.subr.bf16.mxu0 0
        %4832 = vmatpush1.bf16.msra.mxu0 %v4663
        %4833 = vmatprep.subr.bf16.mxu0 0
        %4834 = vmatpush1.bf16.msra.mxu0 %v4660
        %4835 = vmatprep.subr.bf16.mxu0 0
        %4836 = vmatpush1.bf16.msra.mxu0 %v4657
        %4837 = vmatprep.subr.bf16.mxu0 0
        %4838 = vmatpush1.bf16.msra.mxu0 %v4654
        %4839 = vmatprep.subr.bf16.mxu0 0
        %4840 = vmatpush1.bf16.msra.mxu0 %v4651
        %4841 = vmatprep.subr.bf16.mxu0 0
        %4842 = vmatpush1.bf16.msra.mxu0 %v4648
        %4843 = vmatprep.subr.bf16.mxu0 0
        %4844 = vmatpush1.bf16.msra.mxu0 %v4645
        %4845 = vmatprep.subr.bf16.mxu0 0
        %4846 = vmatpush1.bf16.msra.mxu0 %v4642
        %4847 = vmatprep.subr.bf16.mxu0 0
        %4848 = vmatpush2.bf16.msra.mxu0 0
        %4849 = vmatprep.subr.bf16.mxu0 0
        %4850 = vmatpush2.bf16.msra.mxu0 0
        %4851 = vmatprep.subr.bf16.mxu0 0
        %4852 = vmatpush2.bf16.msra.mxu0 0
        %4853 = vmatprep.subr.bf16.mxu0 0
        %4854 = vmatpush2.bf16.msra.mxu0 0
        %4855 = vmatprep.subr.bf16.mxu0 0
        %4856 = vmatpush2.bf16.msra.mxu0 %v4675
        %4857 = vmatprep.subr.bf16.mxu0 0
        %4858 = vmatpush2.bf16.msra.mxu0 %v4672
        %4859 = vmatprep.subr.bf16.mxu0 0
        %4860 = vmatpush2.bf16.msra.mxu0 %v4669
        %4861 = vmatprep.subr.bf16.mxu0 0
        %4862 = vmatpush2.bf16.msra.mxu0 %v4666
        %4863 = vmatprep.mubr.bf16.mxu0 %v4713
        %4864 = vmatmul.mubr.bf16.gmra.mxu0 %v3878
        %v4865 = vpop.f32.mrf.mxu0
        %v4866 = vadd.f32 %v4466, %v4865
        %v4867 = vpop.f32.mrf.mxu0
        %v4868 = vpop.f32.mrf.mxu0
        %v4869 = vadd.f32 %v4469, %v4868
        %v4870 = vpop.f32.mrf.mxu0
        %4871 = vmatprep.mubr.bf16.mxu0 %v4715
        %4872 = vmatmul.mubr.bf16.gmra.mxu0 %v3880
        %v4873 = vpop.f32.mrf.mxu0
        %v4874 = vadd.f32 %v4474, %v4873
        %v4875 = vpop.f32.mrf.mxu0
        %v4876 = vpop.f32.mrf.mxu0
        %v4877 = vadd.f32 %v4477, %v4876
        %v4878 = vpop.f32.mrf.mxu0
        %4879 = vmatprep.mubr.bf16.mxu0 %v4717
        %4880 = vmatmul.mubr.bf16.gmra.mxu0 %v3882
        %v4881 = vpop.f32.mrf.mxu0
        %v4882 = vadd.f32 %v4482, %v4881
        %v4883 = vpop.f32.mrf.mxu0
        %v4884 = vpop.f32.mrf.mxu0
        %v4885 = vadd.f32 %v4485, %v4884
        %v4886 = vpop.f32.mrf.mxu0
        %4887 = vmatprep.mubr.bf16.mxu0 %v4719
        %4888 = vmatmul.mubr.bf16.gmra.mxu0 %v3884
        %v4889 = vpop.f32.mrf.mxu0
        %v4890 = vadd.f32 %v4490, %v4889
        %v4891 = vpop.f32.mrf.mxu0
        %v4892 = vpop.f32.mrf.mxu0
        %v4893 = vadd.f32 %v4493, %v4892
        %v4894 = vpop.f32.mrf.mxu0
        %4895 = vmatprep.mubr.bf16.mxu0 %v4721
        %4896 = vmatmul.mubr.bf16.gmra.mxu0 %v3886
        %v4897 = vpop.f32.mrf.mxu0
        %v4898 = vadd.f32 %v4498, %v4897
        %v4899 = vpop.f32.mrf.mxu0
        %v4900 = vpop.f32.mrf.mxu0
        %v4901 = vadd.f32 %v4501, %v4900
        %v4902 = vpop.f32.mrf.mxu0
        %4903 = vmatprep.mubr.bf16.mxu0 %v4723
        %4904 = vmatmul.mubr.bf16.gmra.mxu0 %v3888
        %v4905 = vpop.f32.mrf.mxu0
        %v4906 = vadd.f32 %v4506, %v4905
        %v4907 = vpop.f32.mrf.mxu0
        %v4908 = vpop.f32.mrf.mxu0
        %v4909 = vadd.f32 %v4509, %v4908
        %v4910 = vpop.f32.mrf.mxu0
        %4911 = vmatprep.mubr.bf16.mxu0 %v4726
        %4912 = vmatmul.mubr.bf16.gmra.mxu0 %v3890
        %v4913 = vpop.f32.mrf.mxu0
        %v4914 = vadd.f32 %v4514, %v4913
        %v4915 = vpop.f32.mrf.mxu0
        %v4916 = vpop.f32.mrf.mxu0
        %v4917 = vadd.f32 %v4517, %v4916
        %v4918 = vpop.f32.mrf.mxu0
        %4919 = vdwg.mxu0
        %v4920 = vld [vmem:[#allocation2] sm:$0xfc]
        %v4921 = vld [vmem:[#allocation2 + $0x8] sm:$0xfc]
        %v4922 = vld [vmem:[#allocation2 + $0xd0] sm:$0xff]
        %v4923 = vld [vmem:[#allocation2 + $0xd8] sm:$0xff]
        %v4924 = vpack.c.bf16 %v3852, %v4920
        %v4925 = vpack.c.bf16 %v3853, %v4921
        %v4926 = vpack.c.bf16 %v4922, %v3874
        %v4927 = vpack.c.bf16 %v4923, %v3875
        %s4928 = scalar_lea.vmem %s2, 576
        %v4929 = vld [vmem:[%s4928] sm:$0xff]
        %v4930 = vld [vmem:[%s4928 + $0x8] sm:$0xf]
        %v4931 = vld [vmem:[%s4928 + $0xc] sm:$0xff]
        %v4932 = vld [vmem:[%s4928 + $0x14] sm:$0xf]
        %v4933 = vld [vmem:[%s4928 + $0x18] sm:$0xff]
        %v4934 = vld [vmem:[%s4928 + $0x20] sm:$0xf]
        %v4935 = vld [vmem:[%s4928 + $0x24] sm:$0xff]
        %v4936 = vld [vmem:[%s4928 + $0x2c] sm:$0xf]
        %v4937 = vld [vmem:[%s4928 + $0x30] sm:$0xff]
        %v4938 = vld [vmem:[%s4928 + $0x38] sm:$0xf]
        %v4939 = vld [vmem:[%s4928 + $0x3c] sm:$0xff]
        %v4940 = vld [vmem:[%s4928 + $0x44] sm:$0xf]
        %v4941 = vld [vmem:[%s4928 + $0x48] sm:$0xff]
        %v4942 = vld [vmem:[%s4928 + $0x50] sm:$0xf]
        %v4943 = vld [vmem:[%s4928 + $0x54] sm:$0xff]
        %v4944 = vld [vmem:[%s4928 + $0x5c] sm:$0xf]
        %v4945 = vld [vmem:[%s4928 + $0x60] sm:$0xff]
        %v4946 = vld [vmem:[%s4928 + $0x68] sm:$0xf]
        %v4947 = vld [vmem:[%s4928 + $0x6c] sm:$0xff]
        %v4948 = vld [vmem:[%s4928 + $0x74] sm:$0xf]
        %v4949 = vld [vmem:[%s4928 + $0x78] sm:$0xff]
        %v4950 = vld [vmem:[%s4928 + $0x80] sm:$0xf]
        %v4951 = vld [vmem:[%s4928 + $0x84] sm:$0xff]
        %v4952 = vld [vmem:[%s4928 + $0x8c] sm:$0xf]
        %v4953 = vld [vmem:[%s4928 + $0x90] sm:$0xff]
        %v4954 = vld [vmem:[%s4928 + $0x98] sm:$0xf]
        %v4955 = vld [vmem:[%s4928 + $0x9c] sm:$0xff]
        %v4956 = vld [vmem:[%s4928 + $0xa4] sm:$0xf]
        %v4957 = vld [vmem:[%s4928 + $0xa8] sm:$0xff]
        %v4958 = vld [vmem:[%s4928 + $0xb0] sm:$0xf]
        %v4959 = vld [vmem:[%s4928 + $0xb4] sm:$0xff]
        %v4960 = vld [vmem:[%s4928 + $0xbc] sm:$0xf]
        %v4961 = vld [vmem:[%s4928 + $0xc0] sm:$0xff]
        %v4962 = vld [vmem:[%s4928 + $0xc8] sm:$0xf]
        %v4963 = vld [vmem:[%s4928 + $0xcc] sm:$0xff]
        %v4964 = vld [vmem:[%s4928 + $0xd4] sm:$0xf]
        %v4965 = vld [vmem:[%s4928 + $0xd8] sm:$0xff]
        %v4966 = vld [vmem:[%s4928 + $0xe0] sm:$0xf]
        %v4967 = vld [vmem:[%s4928 + $0xe4] sm:$0xff]
        %v4968 = vld [vmem:[%s4928 + $0xec] sm:$0xf]
        %v4969 = vld [vmem:[%s4928 + $0xf0] sm:$0xff]
        %v4970 = vld [vmem:[%s4928 + $0xf8] sm:$0xf]
        %v4971 = vld [vmem:[%s4928 + $0xfc] sm:$0xff]
        %v4972 = vld [vmem:[%s4928 + $0x104] sm:$0xf]
        %v4973 = vld [vmem:[%s4928 + $0x108] sm:$0xff]
        %v4974 = vld [vmem:[%s4928 + $0x110] sm:$0xf]
        %v4975 = vld [vmem:[%s4928 + $0x114] sm:$0xff]
        %v4976 = vld [vmem:[%s4928 + $0x11c] sm:$0xf]
        %vm4991 = vcmask 1046528
        %v4992 = vrot.slane %v4924, 1
        %v4993 = vrot.slane %v3880, 1
        %v4994 = vsel %vm4991, %v4992, %v4993
        %v4995 = vrot.slane %v4925, 1
        %v4996 = vrot.slane %v3881, 1
        %v4997 = vsel %vm4991, %v4995, %v4996
        %v4998 = vrot.slane %v3882, 1
        %v4999 = vsel %vm4991, %v4993, %v4998
        %v5000 = vrot.slane %v3883, 1
        %v5001 = vsel %vm4991, %v4996, %v5000
        %v5002 = vrot.slane %v3884, 1
        %v5003 = vsel %vm4991, %v4998, %v5002
        %v5004 = vrot.slane %v3885, 1
        %v5005 = vsel %vm4991, %v5000, %v5004
        %v5006 = vrot.slane %v3886, 1
        %v5007 = vsel %vm4991, %v5002, %v5006
        %v5008 = vrot.slane %v3887, 1
        %v5009 = vsel %vm4991, %v5004, %v5008
        %v5010 = vrot.slane %v3888, 1
        %v5011 = vsel %vm4991, %v5006, %v5010
        %v5012 = vrot.slane %v3889, 1
        %v5013 = vsel %vm4991, %v5008, %v5012
        %v5014 = vrot.slane %v4926, 1
        %v5015 = vsel %vm4991, %v5010, %v5014
        %v5016 = vrot.slane %v4927, 1
        %v5017 = vsel %vm4991, %v5012, %v5016
        %v5073 = vunpack.c.l.b16 %v4929
        %v5074 = vunpack.c.h.b16 %v4929
        %v5075 = vunpack.c.l.b16 %v4930
        %v5076 = vunpack.c.l.b16 %v4931
        %v5077 = vunpack.c.h.b16 %v4931
        %v5078 = vunpack.c.l.b16 %v4932
        %v5079 = vunpack.c.l.b16 %v4933
        %v5080 = vunpack.c.h.b16 %v4933
        %v5081 = vunpack.c.l.b16 %v4934
        %v5082 = vunpack.c.l.b16 %v4935
        %v5083 = vunpack.c.h.b16 %v4935
        %v5084 = vunpack.c.l.b16 %v4936
        %v5085 = vunpack.c.l.b16 %v4937
        %v5086 = vunpack.c.h.b16 %v4937
        %v5087 = vunpack.c.l.b16 %v4938
        %v5088 = vunpack.c.l.b16 %v4939
        %v5089 = vunpack.c.h.b16 %v4939
        %v5090 = vunpack.c.l.b16 %v4940
        %v5091 = vunpack.c.l.b16 %v4941
        %v5092 = vunpack.c.h.b16 %v4941
        %v5093 = vunpack.c.l.b16 %v4942
        %v5094 = vunpack.c.l.b16 %v4943
        %v5095 = vunpack.c.h.b16 %v4943
        %v5096 = vunpack.c.l.b16 %v4944
        %v5097 = vunpack.c.l.b16 %v4945
        %v5098 = vunpack.c.h.b16 %v4945
        %v5099 = vunpack.c.l.b16 %v4946
        %v5100 = vunpack.c.l.b16 %v4947
        %v5101 = vunpack.c.h.b16 %v4947
        %v5102 = vunpack.c.l.b16 %v4948
        %v5103 = vunpack.c.l.b16 %v4949
        %v5104 = vunpack.c.h.b16 %v4949
        %v5105 = vunpack.c.l.b16 %v4950
        %v5106 = vunpack.c.l.b16 %v4951
        %v5107 = vunpack.c.h.b16 %v4951
        %v5108 = vunpack.c.l.b16 %v4952
        %v5109 = vunpack.c.l.b16 %v4953
        %v5110 = vunpack.c.h.b16 %v4953
        %v5111 = vunpack.c.l.b16 %v4954
        %v5112 = vunpack.c.l.b16 %v4955
        %v5113 = vunpack.c.h.b16 %v4955
        %v5114 = vunpack.c.l.b16 %v4956
        %v5115 = vunpack.c.l.b16 %v4957
        %v5116 = vunpack.c.h.b16 %v4957
        %v5117 = vunpack.c.l.b16 %v4958
        %v5118 = vunpack.c.l.b16 %v4959
        %v5119 = vunpack.c.h.b16 %v4959
        %v5120 = vunpack.c.l.b16 %v4960
        %v5121 = vunpack.c.l.b16 %v4961
        %v5122 = vunpack.c.h.b16 %v4961
        %v5123 = vunpack.c.l.b16 %v4962
        %v5124 = vunpack.c.l.b16 %v4963
        %v5125 = vunpack.c.h.b16 %v4963
        %v5126 = vunpack.c.l.b16 %v4964
        %v5127 = vunpack.c.l.b16 %v4965
        %v5128 = vunpack.c.h.b16 %v4965
        %v5129 = vunpack.c.l.b16 %v4966
        %v5130 = vunpack.c.l.b16 %v4967
        %v5131 = vunpack.c.h.b16 %v4967
        %v5132 = vunpack.c.l.b16 %v4968
        %v5133 = vunpack.c.l.b16 %v4969
        %v5134 = vunpack.c.h.b16 %v4969
        %v5135 = vunpack.c.l.b16 %v4970
        %v5136 = vunpack.c.l.b16 %v4971
        %v5137 = vunpack.c.h.b16 %v4971
        %v5138 = vunpack.c.l.b16 %v4972
        %v5139 = vunpack.c.l.b16 %v4973
        %v5140 = vunpack.c.h.b16 %v4973
        %v5141 = vunpack.c.l.b16 %v4974
        %v5142 = vunpack.c.l.b16 %v4975
        %v5143 = vunpack.c.h.b16 %v4975
        %v5144 = vunpack.c.l.b16 %v4976
        %v5145 = vpack.c.b16 %v5076, %v5073
        %v5146 = vpack.c.b16 %v5077, %v5074
        %v5147 = vpack.c.b16 %v5078, %v5075
        %v5148 = vpack.c.b16 %v5082, %v5079
        %v5149 = vpack.c.b16 %v5083, %v5080
        %v5150 = vpack.c.b16 %v5084, %v5081
        %v5151 = vpack.c.b16 %v5088, %v5085
        %v5152 = vpack.c.b16 %v5089, %v5086
        %v5153 = vpack.c.b16 %v5090, %v5087
        %v5154 = vpack.c.b16 %v5094, %v5091
        %v5155 = vpack.c.b16 %v5095, %v5092
        %v5156 = vpack.c.b16 %v5096, %v5093
        %v5157 = vpack.c.b16 %v5100, %v5097
        %v5158 = vpack.c.b16 %v5101, %v5098
        %v5159 = vpack.c.b16 %v5102, %v5099
        %v5160 = vpack.c.b16 %v5106, %v5103
        %v5161 = vpack.c.b16 %v5107, %v5104
        %v5162 = vpack.c.b16 %v5108, %v5105
        %v5163 = vpack.c.b16 %v5112, %v5109
        %v5164 = vpack.c.b16 %v5113, %v5110
        %v5165 = vpack.c.b16 %v5114, %v5111
        %v5166 = vpack.c.b16 %v5118, %v5115
        %v5167 = vpack.c.b16 %v5119, %v5116
        %v5168 = vpack.c.b16 %v5120, %v5117
        %v5169 = vpack.c.b16 %v5124, %v5121
        %v5170 = vpack.c.b16 %v5125, %v5122
        %v5171 = vpack.c.b16 %v5126, %v5123
        %v5172 = vpack.c.b16 %v5130, %v5127
        %v5173 = vpack.c.b16 %v5131, %v5128
        %v5174 = vpack.c.b16 %v5132, %v5129
        %v5175 = vpack.c.b16 %v5136, %v5133
        %v5176 = vpack.c.b16 %v5137, %v5134
        %v5177 = vpack.c.b16 %v5138, %v5135
        %v5178 = vpack.c.b16 %v5142, %v5139
        %v5179 = vpack.c.b16 %v5143, %v5140
        %v5180 = vpack.c.b16 %v5144, %v5141
        %v5218 = vsel %vm3822, %v4997, 0
        %v5221 = vsel %vm3822, %v5001, 0
        %v5224 = vsel %vm3822, %v5005, 0
        %v5227 = vsel %vm3822, %v5009, 0
        %v5230 = vsel %vm3822, %v5013, 0
        %v5233 = vsel %vm3822, %v5017, 0
        %v5236 = vsel %vm3822, %v5016, 0
        %5238 = vmatprep.subr.bf16.mxu0 %v5167
        %5239 = vmatpush1.bf16.msra.mxu0 %v5166
        %5240 = vmatprep.subr.bf16.mxu0 %v5164
        %5241 = vmatpush1.bf16.msra.mxu0 %v5163
        %5242 = vmatprep.subr.bf16.mxu0 %v5161
        %5243 = vmatpush1.bf16.msra.mxu0 %v5160
        %5244 = vmatprep.subr.bf16.mxu0 %v5158
        %5245 = vmatpush1.bf16.msra.mxu0 %v5157
        %5246 = vmatprep.subr.bf16.mxu0 %v5155
        %5247 = vmatpush1.bf16.msra.mxu0 %v5154
        %5248 = vmatprep.subr.bf16.mxu0 %v5152
        %5249 = vmatpush1.bf16.msra.mxu0 %v5151
        %5250 = vmatprep.subr.bf16.mxu0 %v5149
        %5251 = vmatpush1.bf16.msra.mxu0 %v5148
        %5252 = vmatprep.subr.bf16.mxu0 %v5146
        %5253 = vmatpush1.bf16.msra.mxu0 %v5145
        %5254 = vmatprep.subr.bf16.mxu0 0
        %5255 = vmatpush2.bf16.msra.mxu0 0
        %5256 = vmatprep.subr.bf16.mxu0 0
        %5257 = vmatpush2.bf16.msra.mxu0 0
        %5258 = vmatprep.subr.bf16.mxu0 0
        %5259 = vmatpush2.bf16.msra.mxu0 0
        %5260 = vmatprep.subr.bf16.mxu0 0
        %5261 = vmatpush2.bf16.msra.mxu0 0
        %5262 = vmatprep.subr.bf16.mxu0 %v5179
        %5263 = vmatpush2.bf16.msra.mxu0 %v5178
        %5264 = vmatprep.subr.bf16.mxu0 %v5176
        %5265 = vmatpush2.bf16.msra.mxu0 %v5175
        %5266 = vmatprep.subr.bf16.mxu0 %v5173
        %5267 = vmatpush2.bf16.msra.mxu0 %v5172
        %5268 = vmatprep.subr.bf16.mxu0 %v5170
        %5269 = vmatpush2.bf16.msra.mxu0 %v5169
        %5270 = vmatprep.mubr.bf16.mxu0 %v5218
        %5271 = vmatmul.mubr.bf16.gmra.mxu0 %v4994
        %v5272 = vpop.f32.mrf.mxu0
        %v5273 = vadd.f32 0.0, %v5272
        %v5274 = vpop.f32.mrf.mxu0
        %v5275 = vadd.f32 0.0, %v5274
        %v5276 = vpop.f32.mrf.mxu0
        %v5277 = vadd.f32 0.0, %v5276
        %v5278 = vpop.f32.mrf.mxu0
        %v5279 = vadd.f32 0.0, %v5278
        %5280 = vmatprep.mubr.bf16.mxu0 %v5221
        %5281 = vmatmul.mubr.bf16.gmra.mxu0 %v4999
        %v5282 = vpop.f32.mrf.mxu0
        %v5283 = vadd.f32 0.0, %v5282
        %v5284 = vpop.f32.mrf.mxu0
        %v5285 = vadd.f32 0.0, %v5284
        %v5286 = vpop.f32.mrf.mxu0
        %v5287 = vadd.f32 0.0, %v5286
        %v5288 = vpop.f32.mrf.mxu0
        %v5289 = vadd.f32 0.0, %v5288
        %5290 = vmatprep.mubr.bf16.mxu0 %v5224
        %5291 = vmatmul.mubr.bf16.gmra.mxu0 %v5003
        %v5292 = vpop.f32.mrf.mxu0
        %v5293 = vadd.f32 0.0, %v5292
        %v5294 = vpop.f32.mrf.mxu0
        %v5295 = vadd.f32 0.0, %v5294
        %v5296 = vpop.f32.mrf.mxu0
        %v5297 = vadd.f32 0.0, %v5296
        %v5298 = vpop.f32.mrf.mxu0
        %v5299 = vadd.f32 0.0, %v5298
        %5300 = vmatprep.mubr.bf16.mxu0 %v5227
        %5301 = vmatmul.mubr.bf16.gmra.mxu0 %v5007
        %v5302 = vpop.f32.mrf.mxu0
        %v5303 = vadd.f32 0.0, %v5302
        %v5304 = vpop.f32.mrf.mxu0
        %v5305 = vadd.f32 0.0, %v5304
        %v5306 = vpop.f32.mrf.mxu0
        %v5307 = vadd.f32 0.0, %v5306
        %v5308 = vpop.f32.mrf.mxu0
        %v5309 = vadd.f32 0.0, %v5308
        %5310 = vmatprep.mubr.bf16.mxu0 %v5230
        %5311 = vmatmul.mubr.bf16.gmra.mxu0 %v5011
        %v5312 = vpop.f32.mrf.mxu0
        %v5313 = vadd.f32 0.0, %v5312
        %v5314 = vpop.f32.mrf.mxu0
        %v5315 = vadd.f32 0.0, %v5314
        %v5316 = vpop.f32.mrf.mxu0
        %v5317 = vadd.f32 0.0, %v5316
        %v5318 = vpop.f32.mrf.mxu0
        %v5319 = vadd.f32 0.0, %v5318
        %5320 = vmatprep.mubr.bf16.mxu0 %v5233
        %5321 = vmatmul.mubr.bf16.gmra.mxu0 %v5015
        %v5322 = vpop.f32.mrf.mxu0
        %v5323 = vadd.f32 0.0, %v5322
        %v5324 = vpop.f32.mrf.mxu0
        %v5325 = vadd.f32 0.0, %v5324
        %v5326 = vpop.f32.mrf.mxu0
        %v5327 = vadd.f32 0.0, %v5326
        %v5328 = vpop.f32.mrf.mxu0
        %v5329 = vadd.f32 0.0, %v5328
        %5330 = vmatprep.mubr.bf16.mxu0 %v5236
        %5331 = vmatmul.mubr.bf16.gmra.mxu0 %v5014
        %v5332 = vpop.f32.mrf.mxu0
        %v5333 = vadd.f32 0.0, %v5332
        %v5334 = vpop.f32.mrf.mxu0
        %v5335 = vadd.f32 0.0, %v5334
        %v5336 = vpop.f32.mrf.mxu0
        %v5337 = vadd.f32 0.0, %v5336
        %v5338 = vpop.f32.mrf.mxu0
        %v5339 = vadd.f32 0.0, %v5338
        %5340 = vdwg.mxu0
        %5341 = vmatprep.subr.bf16.mxu0 0
        %5342 = vmatpush1.bf16.msra.mxu0 %v5168
        %5343 = vmatprep.subr.bf16.mxu0 0
        %5344 = vmatpush1.bf16.msra.mxu0 %v5165
        %5345 = vmatprep.subr.bf16.mxu0 0
        %5346 = vmatpush1.bf16.msra.mxu0 %v5162
        %5347 = vmatprep.subr.bf16.mxu0 0
        %5348 = vmatpush1.bf16.msra.mxu0 %v5159
        %5349 = vmatprep.subr.bf16.mxu0 0
        %5350 = vmatpush1.bf16.msra.mxu0 %v5156
        %5351 = vmatprep.subr.bf16.mxu0 0
        %5352 = vmatpush1.bf16.msra.mxu0 %v5153
        %5353 = vmatprep.subr.bf16.mxu0 0
        %5354 = vmatpush1.bf16.msra.mxu0 %v5150
        %5355 = vmatprep.subr.bf16.mxu0 0
        %5356 = vmatpush1.bf16.msra.mxu0 %v5147
        %5357 = vmatprep.subr.bf16.mxu0 0
        %5358 = vmatpush2.bf16.msra.mxu0 0
        %5359 = vmatprep.subr.bf16.mxu0 0
        %5360 = vmatpush2.bf16.msra.mxu0 0
        %5361 = vmatprep.subr.bf16.mxu0 0
        %5362 = vmatpush2.bf16.msra.mxu0 0
        %5363 = vmatprep.subr.bf16.mxu0 0
        %5364 = vmatpush2.bf16.msra.mxu0 0
        %5365 = vmatprep.subr.bf16.mxu0 0
        %5366 = vmatpush2.bf16.msra.mxu0 %v5180
        %5367 = vmatprep.subr.bf16.mxu0 0
        %5368 = vmatpush2.bf16.msra.mxu0 %v5177
        %5369 = vmatprep.subr.bf16.mxu0 0
        %5370 = vmatpush2.bf16.msra.mxu0 %v5174
        %5371 = vmatprep.subr.bf16.mxu0 0
        %5372 = vmatpush2.bf16.msra.mxu0 %v5171
        %5373 = vmatprep.mubr.bf16.mxu0 %v5218
        %5374 = vmatmul.mubr.bf16.gmra.mxu0 %v4994
        %v5375 = vpop.f32.mrf.mxu0
        %v5376 = vadd.f32 0.0, %v5375
        %v5377 = vpop.f32.mrf.mxu0
        %v5378 = vpop.f32.mrf.mxu0
        %v5379 = vadd.f32 0.0, %v5378
        %v5380 = vpop.f32.mrf.mxu0
        %5381 = vmatprep.mubr.bf16.mxu0 %v5221
        %5382 = vmatmul.mubr.bf16.gmra.mxu0 %v4999
        %v5383 = vpop.f32.mrf.mxu0
        %v5384 = vadd.f32 0.0, %v5383
        %v5385 = vpop.f32.mrf.mxu0
        %v5386 = vpop.f32.mrf.mxu0
        %v5387 = vadd.f32 0.0, %v5386
        %v5388 = vpop.f32.mrf.mxu0
        %5389 = vmatprep.mubr.bf16.mxu0 %v5224
        %5390 = vmatmul.mubr.bf16.gmra.mxu0 %v5003
        %v5391 = vpop.f32.mrf.mxu0
        %v5392 = vadd.f32 0.0, %v5391
        %v5393 = vpop.f32.mrf.mxu0
        %v5394 = vpop.f32.mrf.mxu0
        %v5395 = vadd.f32 0.0, %v5394
        %v5396 = vpop.f32.mrf.mxu0
        %5397 = vmatprep.mubr.bf16.mxu0 %v5227
        %5398 = vmatmul.mubr.bf16.gmra.mxu0 %v5007
        %v5399 = vpop.f32.mrf.mxu0
        %v5400 = vadd.f32 0.0, %v5399
        %v5401 = vpop.f32.mrf.mxu0
        %v5402 = vpop.f32.mrf.mxu0
        %v5403 = vadd.f32 0.0, %v5402
        %v5404 = vpop.f32.mrf.mxu0
        %5405 = vmatprep.mubr.bf16.mxu0 %v5230
        %5406 = vmatmul.mubr.bf16.gmra.mxu0 %v5011
        %v5407 = vpop.f32.mrf.mxu0
        %v5408 = vadd.f32 0.0, %v5407
        %v5409 = vpop.f32.mrf.mxu0
        %v5410 = vpop.f32.mrf.mxu0
        %v5411 = vadd.f32 0.0, %v5410
        %v5412 = vpop.f32.mrf.mxu0
        %5413 = vmatprep.mubr.bf16.mxu0 %v5233
        %5414 = vmatmul.mubr.bf16.gmra.mxu0 %v5015
        %v5415 = vpop.f32.mrf.mxu0
        %v5416 = vadd.f32 0.0, %v5415
        %v5417 = vpop.f32.mrf.mxu0
        %v5418 = vpop.f32.mrf.mxu0
        %v5419 = vadd.f32 0.0, %v5418
        %v5420 = vpop.f32.mrf.mxu0
        %5421 = vmatprep.mubr.bf16.mxu0 %v5236
        %5422 = vmatmul.mubr.bf16.gmra.mxu0 %v5014
        %v5423 = vpop.f32.mrf.mxu0
        %v5424 = vadd.f32 0.0, %v5423
        %v5425 = vpop.f32.mrf.mxu0
        %v5426 = vpop.f32.mrf.mxu0
        %v5427 = vadd.f32 0.0, %v5426
        %v5428 = vpop.f32.mrf.mxu0
        %5429 = vdwg.mxu0
        %v5430 = vadd.f32 %v4763, %v5273
        %v5431 = vadd.f32 %v4765, %v5275
        %v5432 = vadd.f32 %v4866, %v5376
        %v5433 = vadd.f32 %v4767, %v5277
        %v5434 = vadd.f32 %v4769, %v5279
        %v5435 = vadd.f32 %v4869, %v5379
        %v5436 = vadd.f32 %v4773, %v5283
        %v5437 = vadd.f32 %v4775, %v5285
        %v5438 = vadd.f32 %v4874, %v5384
        %v5439 = vadd.f32 %v4777, %v5287
        %v5440 = vadd.f32 %v4779, %v5289
        %v5441 = vadd.f32 %v4877, %v5387
        %v5442 = vadd.f32 %v4783, %v5293
        %v5443 = vadd.f32 %v4785, %v5295
        %v5444 = vadd.f32 %v4882, %v5392
        %v5445 = vadd.f32 %v4787, %v5297
        %v5446 = vadd.f32 %v4789, %v5299
        %v5447 = vadd.f32 %v4885, %v5395
        %v5448 = vadd.f32 %v4793, %v5303
        %v5449 = vadd.f32 %v4795, %v5305
        %v5450 = vadd.f32 %v4890, %v5400
        %v5451 = vadd.f32 %v4797, %v5307
        %v5452 = vadd.f32 %v4799, %v5309
        %v5453 = vadd.f32 %v4893, %v5403
        %v5454 = vadd.f32 %v4803, %v5313
        %v5455 = vadd.f32 %v4805, %v5315
        %v5456 = vadd.f32 %v4898, %v5408
        %v5457 = vadd.f32 %v4807, %v5317
        %v5458 = vadd.f32 %v4809, %v5319
        %v5459 = vadd.f32 %v4901, %v5411
        %v5460 = vadd.f32 %v4813, %v5323
        %v5461 = vadd.f32 %v4815, %v5325
        %v5462 = vadd.f32 %v4906, %v5416
        %v5463 = vadd.f32 %v4817, %v5327
        %v5464 = vadd.f32 %v4819, %v5329
        %v5465 = vadd.f32 %v4909, %v5419
        %v5466 = vadd.f32 %v4823, %v5333
        %v5467 = vadd.f32 %v4825, %v5335
        %v5468 = vadd.f32 %v4914, %v5424
        %v5469 = vadd.f32 %v4827, %v5337
        %v5470 = vadd.f32 %v4829, %v5339
        %v5471 = vadd.f32 %v4917, %v5427
        %v5472 = vld [vmem:[%s5] sm:$0x7]
        %v5474 = vlaneseq
        %v5475 = vshrl.u32 %v5474, 7
        %v5476 = vsub.s32 0, %v5475
        %v5477 = vrot.slane %v5472, %v5476
        %v5478 = vlaneseq
        %v5479 = vshrl.u32 %v5478, 7
        %v5480 = vsub.s32 1, %v5479
        %v5481 = vrot.slane %v5472, %v5480
        %v5482 = vlaneseq
        %v5483 = vshrl.u32 %v5482, 7
        %v5484 = vsub.s32 2, %v5483
        %v5485 = vrot.slane %v5472, %v5484
        %v5489 = vadd.f32 %v5430, %v5477
        %v5490 = vadd.f32 %v5431, %v5481
        %v5491 = vadd.f32 %v5432, %v5485
        %v5492 = vadd.f32 %v5433, %v5477
        %v5493 = vadd.f32 %v5434, %v5481
        %v5494 = vadd.f32 %v5435, %v5485
        %v5495 = vadd.f32 %v5436, %v5477
        %v5496 = vadd.f32 %v5437, %v5481
        %v5497 = vadd.f32 %v5438, %v5485
        %v5498 = vadd.f32 %v5439, %v5477
        %v5499 = vadd.f32 %v5440, %v5481
        %v5500 = vadd.f32 %v5441, %v5485
        %v5501 = vadd.f32 %v5442, %v5477
        %v5502 = vadd.f32 %v5443, %v5481
        %v5503 = vadd.f32 %v5444, %v5485
        %v5504 = vadd.f32 %v5445, %v5477
        %v5505 = vadd.f32 %v5446, %v5481
        %v5506 = vadd.f32 %v5447, %v5485
        %v5507 = vadd.f32 %v5448, %v5477
        %v5508 = vadd.f32 %v5449, %v5481
        %v5509 = vadd.f32 %v5450, %v5485
        %v5510 = vadd.f32 %v5451, %v5477
        %v5511 = vadd.f32 %v5452, %v5481
        %v5512 = vadd.f32 %v5453, %v5485
        %v5513 = vadd.f32 %v5454, %v5477
        %v5514 = vadd.f32 %v5455, %v5481
        %v5515 = vadd.f32 %v5456, %v5485
        %v5516 = vadd.f32 %v5457, %v5477
        %v5517 = vadd.f32 %v5458, %v5481
        %v5518 = vadd.f32 %v5459, %v5485
        %v5519 = vadd.f32 %v5460, %v5477
        %v5520 = vadd.f32 %v5461, %v5481
        %v5521 = vadd.f32 %v5462, %v5485
        %v5522 = vadd.f32 %v5463, %v5477
        %v5523 = vadd.f32 %v5464, %v5481
        %v5524 = vadd.f32 %v5465, %v5485
        %v5525 = vadd.f32 %v5466, %v5477
        %v5526 = vadd.f32 %v5467, %v5481
        %v5527 = vadd.f32 %v5468, %v5485
        %v5528 = vadd.f32 %v5469, %v5477
        %v5529 = vadd.f32 %v5470, %v5481
        %v5530 = vadd.f32 %v5471, %v5485
        %v5531 = vmax.f32 %v5489, 0.0
        %v5532 = vmax.f32 %v5490, 0.0
        %v5533 = vmax.f32 %v5491, 0.0
        %v5534 = vmax.f32 %v5492, 0.0
        %v5535 = vmax.f32 %v5493, 0.0
        %v5536 = vmax.f32 %v5494, 0.0
        %v5537 = vmax.f32 %v5495, 0.0
        %v5538 = vmax.f32 %v5496, 0.0
        %v5539 = vmax.f32 %v5497, 0.0
        %v5540 = vmax.f32 %v5498, 0.0
        %v5541 = vmax.f32 %v5499, 0.0
        %v5542 = vmax.f32 %v5500, 0.0
        %v5543 = vmax.f32 %v5501, 0.0
        %v5544 = vmax.f32 %v5502, 0.0
        %v5545 = vmax.f32 %v5503, 0.0
        %v5546 = vmax.f32 %v5504, 0.0
        %v5547 = vmax.f32 %v5505, 0.0
        %v5548 = vmax.f32 %v5506, 0.0
        %v5549 = vmax.f32 %v5507, 0.0
        %v5550 = vmax.f32 %v5508, 0.0
        %v5551 = vmax.f32 %v5509, 0.0
        %v5552 = vmax.f32 %v5510, 0.0
        %v5553 = vmax.f32 %v5511, 0.0
        %v5554 = vmax.f32 %v5512, 0.0
        %v5555 = vmax.f32 %v5513, 0.0
        %v5556 = vmax.f32 %v5514, 0.0
        %v5557 = vmax.f32 %v5515, 0.0
        %v5558 = vmax.f32 %v5516, 0.0
        %v5559 = vmax.f32 %v5517, 0.0
        %v5560 = vmax.f32 %v5518, 0.0
        %v5561 = vmax.f32 %v5519, 0.0
        %v5562 = vmax.f32 %v5520, 0.0
        %v5563 = vmax.f32 %v5521, 0.0
        %v5564 = vmax.f32 %v5522, 0.0
        %v5565 = vmax.f32 %v5523, 0.0
        %v5566 = vmax.f32 %v5524, 0.0
        %v5567 = vmax.f32 %v5525, 0.0
        %v5568 = vmax.f32 %v5526, 0.0
        %v5569 = vmax.f32 %v5527, 0.0
        %v5570 = vmax.f32 %v5528, 0.0
        %v5571 = vmax.f32 %v5529, 0.0
        %v5572 = vmax.f32 %v5530, 0.0
        %v5573 = vpack.c.bf16 %v5534, %v5531
        %v5574 = vpack.c.bf16 %v5535, %v5532
        %v5575 = vpack.c.bf16 %v5536, %v5533
        %v5576 = vpack.c.bf16 %v5540, %v5537
        %v5577 = vpack.c.bf16 %v5541, %v5538
        %v5578 = vpack.c.bf16 %v5542, %v5539
        %v5579 = vpack.c.bf16 %v5546, %v5543
        %v5580 = vpack.c.bf16 %v5547, %v5544
        %v5581 = vpack.c.bf16 %v5548, %v5545
        %v5582 = vpack.c.bf16 %v5552, %v5549
        %v5583 = vpack.c.bf16 %v5553, %v5550
        %v5584 = vpack.c.bf16 %v5554, %v5551
        %v5585 = vpack.c.bf16 %v5558, %v5555
        %v5586 = vpack.c.bf16 %v5559, %v5556
        %v5587 = vpack.c.bf16 %v5560, %v5557
        %v5588 = vpack.c.bf16 %v5564, %v5561
        %v5589 = vpack.c.bf16 %v5565, %v5562
        %v5590 = vpack.c.bf16 %v5566, %v5563
        %v5591 = vpack.c.bf16 %v5570, %v5567
        %v5592 = vpack.c.bf16 %v5571, %v5568
        %v5593 = vpack.c.bf16 %v5572, %v5569
        %v5594 = vld [vmem:[%s9] sm:$0xf]
        %v5595 = vld [vmem:[%s9 + $0x4] sm:$0xf]
        %v5596 = vld [vmem:[%s9 + $0x8] sm:$0xf]
        %v5597 = vld [vmem:[%s9 + $0xc] sm:$0xf]
        %v5598 = vld [vmem:[%s9 + $0x10] sm:$0xf]
        %v5599 = vld [vmem:[%s9 + $0x14] sm:$0xf]
        %v5600 = vld [vmem:[%s9 + $0x18] sm:$0xf]
        %v5601 = vld [vmem:[%s9 + $0x1c] sm:$0xf]
        %v5610 = vunpack.c.l.b16 %v5594
        %v5611 = vunpack.c.l.b16 %v5595
        %v5612 = vunpack.c.l.b16 %v5596
        %v5613 = vunpack.c.l.b16 %v5597
        %v5614 = vunpack.c.l.b16 %v5598
        %v5615 = vunpack.c.l.b16 %v5599
        %v5616 = vunpack.c.l.b16 %v5600
        %v5617 = vunpack.c.l.b16 %v5601
        %v5618 = vpack.c.b16 %v5611, %v5610
        %v5619 = vpack.c.b16 %v5613, %v5612
        %v5620 = vpack.c.b16 %v5615, %v5614
        %v5621 = vpack.c.b16 %v5617, %v5616
        %vm5622 = vcmask 900096
        %v5624 = vsel %vm5622, %v5618, 0
        %v5627 = vsel %vm5622, %v5619, 0
        %v5630 = vsel %vm5622, %v5620, 0
        %v5633 = vsel %vm5622, %v5621, 0
        %v5636 = vsel %vm2248, %v5591, 0
        %v5639 = vsel %vm2248, %v5592, 0
        %v5642 = vsel %vm2248, %v5593, 0
        %5644 = vmatprep.subr.bf16.mxu0 0
        %5645 = vmatpush1.bf16.msra.mxu0 0
        %5646 = vmatprep.subr.bf16.mxu0 %v5639
        %5647 = vmatpush1.bf16.msra.mxu0 %v5636
        %5648 = vmatprep.subr.bf16.mxu0 %v5589
        %5649 = vmatpush1.bf16.msra.mxu0 %v5588
        %5650 = vmatprep.subr.bf16.mxu0 %v5586
        %5651 = vmatpush1.bf16.msra.mxu0 %v5585
        %5652 = vmatprep.subr.bf16.mxu0 %v5583
        %5653 = vmatpush1.bf16.msra.mxu0 %v5582
        %5654 = vmatprep.subr.bf16.mxu0 %v5580
        %5655 = vmatpush1.bf16.msra.mxu0 %v5579
        %5656 = vmatprep.subr.bf16.mxu0 %v5577
        %5657 = vmatpush1.bf16.msra.mxu0 %v5576
        %5658 = vmatprep.subr.bf16.mxu0 %v5574
        %5659 = vmatpush1.bf16.msra.mxu0 %v5573
        %5660 = vmatprep.subr.bf16.mxu0 0
        %5661 = vmatpush2.bf16.msra.mxu0 0
        %5662 = vmatprep.subr.bf16.mxu0 0
        %5663 = vmatpush2.bf16.msra.mxu0 0
        %5664 = vmatprep.subr.bf16.mxu0 0
        %5665 = vmatpush2.bf16.msra.mxu0 0
        %5666 = vmatprep.subr.bf16.mxu0 0
        %5667 = vmatpush2.bf16.msra.mxu0 0
        %5668 = vmatprep.subr.bf16.mxu0 0
        %5669 = vmatpush2.bf16.msra.mxu0 0
        %5670 = vmatprep.subr.bf16.mxu0 0
        %5671 = vmatpush2.bf16.msra.mxu0 0
        %5672 = vmatprep.subr.bf16.mxu0 0
        %5673 = vmatpush2.bf16.msra.mxu0 0
        %5674 = vmatprep.subr.bf16.mxu0 0
        %5675 = vmatpush2.bf16.msra.mxu0 0
        %5676 = vmatprep.mubr.bf16.mxu0 0
        %5677 = vmatmul.mubr.bf16.gmra.mxu0 %v5624
        %v5678 = vpop.f32.mrf.mxu0
        %v5679 = vadd.f32 0.0, %v5678
        %v5680 = vpop.f32.mrf.mxu0
        %v5681 = vadd.f32 0.0, %v5680
        %v5682 = vpop.f32.mrf.mxu0
        %v5683 = vadd.f32 0.0, %v5682
        %v5684 = vpop.f32.mrf.mxu0
        %v5685 = vadd.f32 0.0, %v5684
        %5686 = vmatprep.mubr.bf16.mxu0 0
        %5687 = vmatmul.mubr.bf16.gmra.mxu0 %v5627
        %v5688 = vpop.f32.mrf.mxu0
        %v5689 = vadd.f32 0.0, %v5688
        %v5690 = vpop.f32.mrf.mxu0
        %v5691 = vadd.f32 0.0, %v5690
        %v5692 = vpop.f32.mrf.mxu0
        %v5693 = vadd.f32 0.0, %v5692
        %v5694 = vpop.f32.mrf.mxu0
        %v5695 = vadd.f32 0.0, %v5694
        %5696 = vmatprep.mubr.bf16.mxu0 0
        %5697 = vmatmul.mubr.bf16.gmra.mxu0 %v5630
        %v5698 = vpop.f32.mrf.mxu0
        %v5699 = vadd.f32 0.0, %v5698
        %v5700 = vpop.f32.mrf.mxu0
        %v5701 = vadd.f32 0.0, %v5700
        %v5702 = vpop.f32.mrf.mxu0
        %v5703 = vadd.f32 0.0, %v5702
        %v5704 = vpop.f32.mrf.mxu0
        %v5705 = vadd.f32 0.0, %v5704
        %5706 = vmatprep.mubr.bf16.mxu0 0
        %5707 = vmatmul.mubr.bf16.gmra.mxu0 %v5633
        %v5708 = vpop.f32.mrf.mxu0
        %v5709 = vadd.f32 0.0, %v5708
        %v5710 = vpop.f32.mrf.mxu0
        %v5711 = vadd.f32 0.0, %v5710
        %v5712 = vpop.f32.mrf.mxu0
        %v5713 = vadd.f32 0.0, %v5712
        %v5714 = vpop.f32.mrf.mxu0
        %v5715 = vadd.f32 0.0, %v5714
        %5716 = vdwg.mxu0
        %5717 = vmatprep.subr.bf16.mxu0 0
        %5718 = vmatpush1.bf16.msra.mxu0 0
        %5719 = vmatprep.subr.bf16.mxu0 0
        %5720 = vmatpush1.bf16.msra.mxu0 %v5642
        %5721 = vmatprep.subr.bf16.mxu0 0
        %5722 = vmatpush1.bf16.msra.mxu0 %v5590
        %5723 = vmatprep.subr.bf16.mxu0 0
        %5724 = vmatpush1.bf16.msra.mxu0 %v5587
        %5725 = vmatprep.subr.bf16.mxu0 0
        %5726 = vmatpush1.bf16.msra.mxu0 %v5584
        %5727 = vmatprep.subr.bf16.mxu0 0
        %5728 = vmatpush1.bf16.msra.mxu0 %v5581
        %5729 = vmatprep.subr.bf16.mxu0 0
        %5730 = vmatpush1.bf16.msra.mxu0 %v5578
        %5731 = vmatprep.subr.bf16.mxu0 0
        %5732 = vmatpush1.bf16.msra.mxu0 %v5575
        %5733 = vmatprep.subr.bf16.mxu0 0
        %5734 = vmatpush2.bf16.msra.mxu0 0
        %5735 = vmatprep.subr.bf16.mxu0 0
        %5736 = vmatpush2.bf16.msra.mxu0 0
        %5737 = vmatprep.subr.bf16.mxu0 0
        %5738 = vmatpush2.bf16.msra.mxu0 0
        %5739 = vmatprep.subr.bf16.mxu0 0
        %5740 = vmatpush2.bf16.msra.mxu0 0
        %5741 = vmatprep.subr.bf16.mxu0 0
        %5742 = vmatpush2.bf16.msra.mxu0 0
        %5743 = vmatprep.subr.bf16.mxu0 0
        %5744 = vmatpush2.bf16.msra.mxu0 0
        %5745 = vmatprep.subr.bf16.mxu0 0
        %5746 = vmatpush2.bf16.msra.mxu0 0
        %5747 = vmatprep.subr.bf16.mxu0 0
        %5748 = vmatpush2.bf16.msra.mxu0 0
        %5749 = vmatprep.mubr.bf16.mxu0 0
        %5750 = vmatmul.mubr.bf16.gmra.mxu0 %v5624
        %v5751 = vpop.f32.mrf.mxu0
        %v5752 = vadd.f32 0.0, %v5751
        %v5753 = vpop.f32.mrf.mxu0
        %v5754 = vpop.f32.mrf.mxu0
        %v5755 = vadd.f32 0.0, %v5754
        %v5756 = vpop.f32.mrf.mxu0
        %5757 = vmatprep.mubr.bf16.mxu0 0
        %5758 = vmatmul.mubr.bf16.gmra.mxu0 %v5627
        %v5759 = vpop.f32.mrf.mxu0
        %v5760 = vadd.f32 0.0, %v5759
        %v5761 = vpop.f32.mrf.mxu0
        %v5762 = vpop.f32.mrf.mxu0
        %v5763 = vadd.f32 0.0, %v5762
        %v5764 = vpop.f32.mrf.mxu0
        %5765 = vmatprep.mubr.bf16.mxu0 0
        %5766 = vmatmul.mubr.bf16.gmra.mxu0 %v5630
        %v5767 = vpop.f32.mrf.mxu0
        %v5768 = vadd.f32 0.0, %v5767
        %v5769 = vpop.f32.mrf.mxu0
        %v5770 = vpop.f32.mrf.mxu0
        %v5771 = vadd.f32 0.0, %v5770
        %v5772 = vpop.f32.mrf.mxu0
        %5773 = vmatprep.mubr.bf16.mxu0 0
        %5774 = vmatmul.mubr.bf16.gmra.mxu0 %v5633
        %v5775 = vpop.f32.mrf.mxu0
        %v5776 = vadd.f32 0.0, %v5775
        %v5777 = vpop.f32.mrf.mxu0
        %v5778 = vpop.f32.mrf.mxu0
        %v5779 = vadd.f32 0.0, %v5778
        %v5780 = vpop.f32.mrf.mxu0
        %5781 = vdwg.mxu0
        %s5782 = scalar_lea.vmem %s9, 32
        %v5783 = vld [vmem:[%s5782] sm:$0xf]
        %v5784 = vld [vmem:[%s5782 + $0x4] sm:$0xf]
        %v5785 = vld [vmem:[%s5782 + $0x8] sm:$0xf]
        %v5786 = vld [vmem:[%s5782 + $0xc] sm:$0xf]
        %v5787 = vld [vmem:[%s5782 + $0x10] sm:$0xf]
        %v5788 = vld [vmem:[%s5782 + $0x14] sm:$0xf]
        %v5789 = vld [vmem:[%s5782 + $0x18] sm:$0xf]
        %v5790 = vld [vmem:[%s5782 + $0x1c] sm:$0xf]
        %v5799 = vunpack.c.l.b16 %v5783
        %v5800 = vunpack.c.l.b16 %v5784
        %v5801 = vunpack.c.l.b16 %v5785
        %v5802 = vunpack.c.l.b16 %v5786
        %v5803 = vunpack.c.l.b16 %v5787
        %v5804 = vunpack.c.l.b16 %v5788
        %v5805 = vunpack.c.l.b16 %v5789
        %v5806 = vunpack.c.l.b16 %v5790
        %v5807 = vpack.c.b16 %v5800, %v5799
        %v5808 = vpack.c.b16 %v5802, %v5801
        %v5809 = vpack.c.b16 %v5804, %v5803
        %v5810 = vpack.c.b16 %v5806, %v5805
        %v5812 = vsel %vm5622, %v5807, 0
        %v5815 = vsel %vm5622, %v5808, 0
        %v5818 = vsel %vm5622, %v5809, 0
        %v5821 = vsel %vm5622, %v5810, 0
        %5823 = vmatprep.subr.bf16.mxu0 0
        %5824 = vmatpush1.bf16.msra.mxu0 0
        %5825 = vmatprep.subr.bf16.mxu0 %v5639
        %5826 = vmatpush1.bf16.msra.mxu0 %v5636
        %5827 = vmatprep.subr.bf16.mxu0 %v5589
        %5828 = vmatpush1.bf16.msra.mxu0 %v5588
        %5829 = vmatprep.subr.bf16.mxu0 %v5586
        %5830 = vmatpush1.bf16.msra.mxu0 %v5585
        %5831 = vmatprep.subr.bf16.mxu0 %v5583
        %5832 = vmatpush1.bf16.msra.mxu0 %v5582
        %5833 = vmatprep.subr.bf16.mxu0 %v5580
        %5834 = vmatpush1.bf16.msra.mxu0 %v5579
        %5835 = vmatprep.subr.bf16.mxu0 %v5577
        %5836 = vmatpush1.bf16.msra.mxu0 %v5576
        %5837 = vmatprep.subr.bf16.mxu0 %v5574
        %5838 = vmatpush1.bf16.msra.mxu0 %v5573
        %5839 = vmatprep.subr.bf16.mxu0 0
        %5840 = vmatpush2.bf16.msra.mxu0 0
        %5841 = vmatprep.subr.bf16.mxu0 0
        %5842 = vmatpush2.bf16.msra.mxu0 0
        %5843 = vmatprep.subr.bf16.mxu0 0
        %5844 = vmatpush2.bf16.msra.mxu0 0
        %5845 = vmatprep.subr.bf16.mxu0 0
        %5846 = vmatpush2.bf16.msra.mxu0 0
        %5847 = vmatprep.subr.bf16.mxu0 0
        %5848 = vmatpush2.bf16.msra.mxu0 0
        %5849 = vmatprep.subr.bf16.mxu0 0
        %5850 = vmatpush2.bf16.msra.mxu0 0
        %5851 = vmatprep.subr.bf16.mxu0 0
        %5852 = vmatpush2.bf16.msra.mxu0 0
        %5853 = vmatprep.subr.bf16.mxu0 0
        %5854 = vmatpush2.bf16.msra.mxu0 0
        %5855 = vmatprep.mubr.bf16.mxu0 0
        %5856 = vmatmul.mubr.bf16.gmra.mxu0 %v5812
        %v5857 = vpop.f32.mrf.mxu0
        %v5858 = vadd.f32 0.0, %v5857
        %v5859 = vpop.f32.mrf.mxu0
        %v5860 = vadd.f32 0.0, %v5859
        %v5861 = vpop.f32.mrf.mxu0
        %v5862 = vadd.f32 0.0, %v5861
        %v5863 = vpop.f32.mrf.mxu0
        %v5864 = vadd.f32 0.0, %v5863
        %5865 = vmatprep.mubr.bf16.mxu0 0
        %5866 = vmatmul.mubr.bf16.gmra.mxu0 %v5815
        %v5867 = vpop.f32.mrf.mxu0
        %v5868 = vadd.f32 0.0, %v5867
        %v5869 = vpop.f32.mrf.mxu0
        %v5870 = vadd.f32 0.0, %v5869
        %v5871 = vpop.f32.mrf.mxu0
        %v5872 = vadd.f32 0.0, %v5871
        %v5873 = vpop.f32.mrf.mxu0
        %v5874 = vadd.f32 0.0, %v5873
        %5875 = vmatprep.mubr.bf16.mxu0 0
        %5876 = vmatmul.mubr.bf16.gmra.mxu0 %v5818
        %v5877 = vpop.f32.mrf.mxu0
        %v5878 = vadd.f32 0.0, %v5877
        %v5879 = vpop.f32.mrf.mxu0
        %v5880 = vadd.f32 0.0, %v5879
        %v5881 = vpop.f32.mrf.mxu0
        %v5882 = vadd.f32 0.0, %v5881
        %v5883 = vpop.f32.mrf.mxu0
        %v5884 = vadd.f32 0.0, %v5883
        %5885 = vmatprep.mubr.bf16.mxu0 0
        %5886 = vmatmul.mubr.bf16.gmra.mxu0 %v5821
        %v5887 = vpop.f32.mrf.mxu0
        %v5888 = vadd.f32 0.0, %v5887
        %v5889 = vpop.f32.mrf.mxu0
        %v5890 = vadd.f32 0.0, %v5889
        %v5891 = vpop.f32.mrf.mxu0
        %v5892 = vadd.f32 0.0, %v5891
        %v5893 = vpop.f32.mrf.mxu0
        %v5894 = vadd.f32 0.0, %v5893
        %5895 = vdwg.mxu0
        %5896 = vmatprep.subr.bf16.mxu0 0
        %5897 = vmatpush1.bf16.msra.mxu0 0
        %5898 = vmatprep.subr.bf16.mxu0 0
        %5899 = vmatpush1.bf16.msra.mxu0 %v5642
        %5900 = vmatprep.subr.bf16.mxu0 0
        %5901 = vmatpush1.bf16.msra.mxu0 %v5590
        %5902 = vmatprep.subr.bf16.mxu0 0
        %5903 = vmatpush1.bf16.msra.mxu0 %v5587
        %5904 = vmatprep.subr.bf16.mxu0 0
        %5905 = vmatpush1.bf16.msra.mxu0 %v5584
        %5906 = vmatprep.subr.bf16.mxu0 0
        %5907 = vmatpush1.bf16.msra.mxu0 %v5581
        %5908 = vmatprep.subr.bf16.mxu0 0
        %5909 = vmatpush1.bf16.msra.mxu0 %v5578
        %5910 = vmatprep.subr.bf16.mxu0 0
        %5911 = vmatpush1.bf16.msra.mxu0 %v5575
        %5912 = vmatprep.subr.bf16.mxu0 0
        %5913 = vmatpush2.bf16.msra.mxu0 0
        %5914 = vmatprep.subr.bf16.mxu0 0
        %5915 = vmatpush2.bf16.msra.mxu0 0
        %5916 = vmatprep.subr.bf16.mxu0 0
        %5917 = vmatpush2.bf16.msra.mxu0 0
        %5918 = vmatprep.subr.bf16.mxu0 0
        %5919 = vmatpush2.bf16.msra.mxu0 0
        %5920 = vmatprep.subr.bf16.mxu0 0
        %5921 = vmatpush2.bf16.msra.mxu0 0
        %5922 = vmatprep.subr.bf16.mxu0 0
        %5923 = vmatpush2.bf16.msra.mxu0 0
        %5924 = vmatprep.subr.bf16.mxu0 0
        %5925 = vmatpush2.bf16.msra.mxu0 0
        %5926 = vmatprep.subr.bf16.mxu0 0
        %5927 = vmatpush2.bf16.msra.mxu0 0
        %5928 = vmatprep.mubr.bf16.mxu0 0
        %5929 = vmatmul.mubr.bf16.gmra.mxu0 %v5812
        %v5930 = vpop.f32.mrf.mxu0
        %v5931 = vadd.f32 0.0, %v5930
        %v5932 = vpop.f32.mrf.mxu0
        %v5933 = vpop.f32.mrf.mxu0
        %v5934 = vadd.f32 0.0, %v5933
        %v5935 = vpop.f32.mrf.mxu0
        %5936 = vmatprep.mubr.bf16.mxu0 0
        %5937 = vmatmul.mubr.bf16.gmra.mxu0 %v5815
        %v5938 = vpop.f32.mrf.mxu0
        %v5939 = vadd.f32 0.0, %v5938
        %v5940 = vpop.f32.mrf.mxu0
        %v5941 = vpop.f32.mrf.mxu0
        %v5942 = vadd.f32 0.0, %v5941
        %v5943 = vpop.f32.mrf.mxu0
        %5944 = vmatprep.mubr.bf16.mxu0 0
        %5945 = vmatmul.mubr.bf16.gmra.mxu0 %v5818
        %v5946 = vpop.f32.mrf.mxu0
        %v5947 = vadd.f32 0.0, %v5946
        %v5948 = vpop.f32.mrf.mxu0
        %v5949 = vpop.f32.mrf.mxu0
        %v5950 = vadd.f32 0.0, %v5949
        %v5951 = vpop.f32.mrf.mxu0
        %5952 = vmatprep.mubr.bf16.mxu0 0
        %5953 = vmatmul.mubr.bf16.gmra.mxu0 %v5821
        %v5954 = vpop.f32.mrf.mxu0
        %v5955 = vadd.f32 0.0, %v5954
        %v5956 = vpop.f32.mrf.mxu0
        %v5957 = vpop.f32.mrf.mxu0
        %v5958 = vadd.f32 0.0, %v5957
        %v5959 = vpop.f32.mrf.mxu0
        %5960 = vdwg.mxu0
        %v5961 = vmax.f32 %v5679, %v5858
        %v5962 = vmax.f32 %v5681, %v5860
        %v5963 = vmax.f32 %v5752, %v5931
        %v5964 = vmax.f32 %v5683, %v5862
        %v5965 = vmax.f32 %v5685, %v5864
        %v5966 = vmax.f32 %v5755, %v5934
        %v5967 = vmax.f32 %v5689, %v5868
        %v5968 = vmax.f32 %v5691, %v5870
        %v5969 = vmax.f32 %v5760, %v5939
        %v5970 = vmax.f32 %v5693, %v5872
        %v5971 = vmax.f32 %v5695, %v5874
        %v5972 = vmax.f32 %v5763, %v5942
        %v5973 = vmax.f32 %v5699, %v5878
        %v5974 = vmax.f32 %v5701, %v5880
        %v5975 = vmax.f32 %v5768, %v5947
        %v5976 = vmax.f32 %v5703, %v5882
        %v5977 = vmax.f32 %v5705, %v5884
        %v5978 = vmax.f32 %v5771, %v5950
        %v5979 = vmax.f32 %v5709, %v5888
        %v5980 = vmax.f32 %v5711, %v5890
        %v5981 = vmax.f32 %v5776, %v5955
        %v5982 = vmax.f32 %v5713, %v5892
        %v5983 = vmax.f32 %v5715, %v5894
        %v5984 = vmax.f32 %v5779, %v5958
        %v5985 = vpack.c.bf16 %v5964, %v5961
        %v5986 = vpack.c.bf16 %v5965, %v5962
        %v5987 = vpack.c.bf16 %v5966, %v5963
        %v5988 = vpack.c.bf16 %v5970, %v5967
        %v5989 = vpack.c.bf16 %v5971, %v5968
        %v5990 = vpack.c.bf16 %v5972, %v5969
        %v5991 = vpack.c.bf16 %v5976, %v5973
        %v5992 = vpack.c.bf16 %v5977, %v5974
        %v5993 = vpack.c.bf16 %v5978, %v5975
        %v5994 = vpack.c.bf16 %v5982, %v5979
        %v5995 = vpack.c.bf16 %v5983, %v5980
        %v5996 = vpack.c.bf16 %v5984, %v5981
        %v5997 = vld [vmem:[%s10] sm:$0xff]
        %v5998 = vld [vmem:[%s10 + $0x8] sm:$0xff]
        %v5999 = vld [vmem:[%s10 + $0x10] sm:$0xff]
        %v6000 = vld [vmem:[%s10 + $0x18] sm:$0xff]
        %v6001 = vld [vmem:[%s10 + $0x20] sm:$0xff]
        %v6002 = vld [vmem:[%s10 + $0x28] sm:$0xff]
        %v6003 = vld [vmem:[%s10 + $0x30] sm:$0xff]
        %v6004 = vld [vmem:[%s10 + $0x38] sm:$0xff]
        %v6005 = vld [vmem:[%s10 + $0x40] sm:$0xff]
        %v6006 = vld [vmem:[%s10 + $0x48] sm:$0xff]
        %v6007 = vld [vmem:[%s10 + $0x50] sm:$0xff]
        %v6008 = vld [vmem:[%s10 + $0x58] sm:$0xff]
        %v6009 = vld [vmem:[%s10 + $0x60] sm:$0xff]
        %v6010 = vld [vmem:[%s10 + $0x68] sm:$0xff]
        %v6011 = vld [vmem:[%s10 + $0x70] sm:$0xff]
        %v6012 = vld [vmem:[%s10 + $0x78] sm:$0xff]
        %v6013 = vld [vmem:[%s10 + $0x80] sm:$0xff]
        %v6014 = vld [vmem:[%s10 + $0x88] sm:$0xff]
        %v6015 = vld [vmem:[%s10 + $0x90] sm:$0xff]
        %v6016 = vld [vmem:[%s10 + $0x98] sm:$0xff]
        %v6017 = vld [vmem:[%s10 + $0xa0] sm:$0xff]
        %v6018 = vld [vmem:[%s10 + $0xa8] sm:$0xff]
        %v6019 = vld [vmem:[%s10 + $0xb0] sm:$0xff]
        %v6020 = vld [vmem:[%s10 + $0xb8] sm:$0xff]
        %v6021 = vld [vmem:[%s10 + $0xc0] sm:$0xff]
        %v6022 = vld [vmem:[%s10 + $0xc8] sm:$0xff]
        %v6023 = vld [vmem:[%s10 + $0xd0] sm:$0xff]
        %v6024 = vld [vmem:[%s10 + $0xd8] sm:$0xff]
        %v6025 = vld [vmem:[%s10 + $0xe0] sm:$0xff]
        %v6026 = vld [vmem:[%s10 + $0xe8] sm:$0xff]
        %v6027 = vld [vmem:[%s10 + $0xf0] sm:$0xff]
        %v6028 = vld [vmem:[%s10 + $0xf8] sm:$0xff]
        %v6029 = vld [vmem:[%s10 + $0x100] sm:$0xff]
        %v6030 = vld [vmem:[%s10 + $0x108] sm:$0xff]
        %v6031 = vld [vmem:[%s10 + $0x110] sm:$0xff]
        %v6032 = vld [vmem:[%s10 + $0x118] sm:$0xff]
        %v6033 = vld [vmem:[%s10 + $0x120] sm:$0xff]
        %v6034 = vld [vmem:[%s10 + $0x128] sm:$0xff]
        %v6035 = vld [vmem:[%s10 + $0x130] sm:$0xff]
        %v6036 = vld [vmem:[%s10 + $0x138] sm:$0xff]
        %v6037 = vld [vmem:[%s10 + $0x140] sm:$0xff]
        %v6038 = vld [vmem:[%s10 + $0x148] sm:$0xff]
        %v6039 = vld [vmem:[%s10 + $0x150] sm:$0xff]
        %v6040 = vld [vmem:[%s10 + $0x158] sm:$0xff]
        %v6041 = vld [vmem:[%s10 + $0x160] sm:$0xff]
        %v6042 = vld [vmem:[%s10 + $0x168] sm:$0xff]
        %v6043 = vld [vmem:[%s10 + $0x170] sm:$0xff]
        %v6044 = vld [vmem:[%s10 + $0x178] sm:$0xff]
        %v6093 = vunpack.c.l.b16 %v5997
        %v6094 = vunpack.c.h.b16 %v5997
        %v6095 = vunpack.c.l.b16 %v5998
        %v6096 = vunpack.c.h.b16 %v5998
        %v6097 = vunpack.c.l.b16 %v5999
        %v6098 = vunpack.c.h.b16 %v5999
        %v6099 = vunpack.c.l.b16 %v6000
        %v6100 = vunpack.c.h.b16 %v6000
        %v6101 = vunpack.c.l.b16 %v6001
        %v6102 = vunpack.c.h.b16 %v6001
        %v6103 = vunpack.c.l.b16 %v6002
        %v6104 = vunpack.c.h.b16 %v6002
        %v6105 = vunpack.c.l.b16 %v6003
        %v6106 = vunpack.c.h.b16 %v6003
        %v6107 = vunpack.c.l.b16 %v6004
        %v6108 = vunpack.c.h.b16 %v6004
        %v6109 = vunpack.c.l.b16 %v6005
        %v6110 = vunpack.c.h.b16 %v6005
        %v6111 = vunpack.c.l.b16 %v6006
        %v6112 = vunpack.c.h.b16 %v6006
        %v6113 = vunpack.c.l.b16 %v6007
        %v6114 = vunpack.c.h.b16 %v6007
        %v6115 = vunpack.c.l.b16 %v6008
        %v6116 = vunpack.c.h.b16 %v6008
        %v6117 = vunpack.c.l.b16 %v6009
        %v6118 = vunpack.c.h.b16 %v6009
        %v6119 = vunpack.c.l.b16 %v6010
        %v6120 = vunpack.c.h.b16 %v6010
        %v6121 = vunpack.c.l.b16 %v6011
        %v6122 = vunpack.c.h.b16 %v6011
        %v6123 = vunpack.c.l.b16 %v6012
        %v6124 = vunpack.c.h.b16 %v6012
        %v6125 = vunpack.c.l.b16 %v6013
        %v6126 = vunpack.c.h.b16 %v6013
        %v6127 = vunpack.c.l.b16 %v6014
        %v6128 = vunpack.c.h.b16 %v6014
        %v6129 = vunpack.c.l.b16 %v6015
        %v6130 = vunpack.c.h.b16 %v6015
        %v6131 = vunpack.c.l.b16 %v6016
        %v6132 = vunpack.c.h.b16 %v6016
        %v6133 = vunpack.c.l.b16 %v6017
        %v6134 = vunpack.c.h.b16 %v6017
        %v6135 = vunpack.c.l.b16 %v6018
        %v6136 = vunpack.c.h.b16 %v6018
        %v6137 = vunpack.c.l.b16 %v6019
        %v6138 = vunpack.c.h.b16 %v6019
        %v6139 = vunpack.c.l.b16 %v6020
        %v6140 = vunpack.c.h.b16 %v6020
        %v6141 = vunpack.c.l.b16 %v6021
        %v6142 = vunpack.c.h.b16 %v6021
        %v6143 = vunpack.c.l.b16 %v6022
        %v6144 = vunpack.c.h.b16 %v6022
        %v6145 = vunpack.c.l.b16 %v6023
        %v6146 = vunpack.c.h.b16 %v6023
        %v6147 = vunpack.c.l.b16 %v6024
        %v6148 = vunpack.c.h.b16 %v6024
        %v6149 = vunpack.c.l.b16 %v6025
        %v6150 = vunpack.c.h.b16 %v6025
        %v6151 = vunpack.c.l.b16 %v6026
        %v6152 = vunpack.c.h.b16 %v6026
        %v6153 = vunpack.c.l.b16 %v6027
        %v6154 = vunpack.c.h.b16 %v6027
        %v6155 = vunpack.c.l.b16 %v6028
        %v6156 = vunpack.c.h.b16 %v6028
        %v6157 = vunpack.c.l.b16 %v6029
        %v6158 = vunpack.c.h.b16 %v6029
        %v6159 = vunpack.c.l.b16 %v6030
        %v6160 = vunpack.c.h.b16 %v6030
        %v6161 = vunpack.c.l.b16 %v6031
        %v6162 = vunpack.c.h.b16 %v6031
        %v6163 = vunpack.c.l.b16 %v6032
        %v6164 = vunpack.c.h.b16 %v6032
        %v6165 = vunpack.c.l.b16 %v6033
        %v6166 = vunpack.c.h.b16 %v6033
        %v6167 = vunpack.c.l.b16 %v6034
        %v6168 = vunpack.c.h.b16 %v6034
        %v6169 = vunpack.c.l.b16 %v6035
        %v6170 = vunpack.c.h.b16 %v6035
        %v6171 = vunpack.c.l.b16 %v6036
        %v6172 = vunpack.c.h.b16 %v6036
        %v6173 = vunpack.c.l.b16 %v6037
        %v6174 = vunpack.c.h.b16 %v6037
        %v6175 = vunpack.c.l.b16 %v6038
        %v6176 = vunpack.c.h.b16 %v6038
        %v6177 = vunpack.c.l.b16 %v6039
        %v6178 = vunpack.c.h.b16 %v6039
        %v6179 = vunpack.c.l.b16 %v6040
        %v6180 = vunpack.c.h.b16 %v6040
        %v6181 = vunpack.c.l.b16 %v6041
        %v6182 = vunpack.c.h.b16 %v6041
        %v6183 = vunpack.c.l.b16 %v6042
        %v6184 = vunpack.c.h.b16 %v6042
        %v6185 = vunpack.c.l.b16 %v6043
        %v6186 = vunpack.c.h.b16 %v6043
        %v6187 = vunpack.c.l.b16 %v6044
        %v6188 = vunpack.c.h.b16 %v6044
        %v6189 = vpack.c.b16 %v6095, %v6093
        %v6190 = vpack.c.b16 %v6096, %v6094
        %v6191 = vpack.c.b16 %v6099, %v6097
        %v6192 = vpack.c.b16 %v6100, %v6098
        %v6193 = vpack.c.b16 %v6103, %v6101
        %v6194 = vpack.c.b16 %v6104, %v6102
        %v6195 = vpack.c.b16 %v6107, %v6105
        %v6196 = vpack.c.b16 %v6108, %v6106
        %v6197 = vpack.c.b16 %v6111, %v6109
        %v6198 = vpack.c.b16 %v6112, %v6110
        %v6199 = vpack.c.b16 %v6115, %v6113
        %v6200 = vpack.c.b16 %v6116, %v6114
        %v6201 = vpack.c.b16 %v6119, %v6117
        %v6202 = vpack.c.b16 %v6120, %v6118
        %v6203 = vpack.c.b16 %v6123, %v6121
        %v6204 = vpack.c.b16 %v6124, %v6122
        %v6205 = vpack.c.b16 %v6127, %v6125
        %v6206 = vpack.c.b16 %v6128, %v6126
        %v6207 = vpack.c.b16 %v6131, %v6129
        %v6208 = vpack.c.b16 %v6132, %v6130
        %v6209 = vpack.c.b16 %v6135, %v6133
        %v6210 = vpack.c.b16 %v6136, %v6134
        %v6211 = vpack.c.b16 %v6139, %v6137
        %v6212 = vpack.c.b16 %v6140, %v6138
        %v6213 = vpack.c.b16 %v6143, %v6141
        %v6214 = vpack.c.b16 %v6144, %v6142
        %v6215 = vpack.c.b16 %v6147, %v6145
        %v6216 = vpack.c.b16 %v6148, %v6146
        %v6217 = vpack.c.b16 %v6151, %v6149
        %v6218 = vpack.c.b16 %v6152, %v6150
        %v6219 = vpack.c.b16 %v6155, %v6153
        %v6220 = vpack.c.b16 %v6156, %v6154
        %v6221 = vpack.c.b16 %v6159, %v6157
        %v6222 = vpack.c.b16 %v6160, %v6158
        %v6223 = vpack.c.b16 %v6163, %v6161
        %v6224 = vpack.c.b16 %v6164, %v6162
        %v6225 = vpack.c.b16 %v6167, %v6165
        %v6226 = vpack.c.b16 %v6168, %v6166
        %v6227 = vpack.c.b16 %v6171, %v6169
        %v6228 = vpack.c.b16 %v6172, %v6170
        %v6229 = vpack.c.b16 %v6175, %v6173
        %v6230 = vpack.c.b16 %v6176, %v6174
        %v6231 = vpack.c.b16 %v6179, %v6177
        %v6232 = vpack.c.b16 %v6180, %v6178
        %v6233 = vpack.c.b16 %v6183, %v6181
        %v6234 = vpack.c.b16 %v6184, %v6182
        %v6235 = vpack.c.b16 %v6187, %v6185
        %v6236 = vpack.c.b16 %v6188, %v6186
        %6285 = vmatprep.subr.bf16.mxu0 %v6204
        %6286 = vmatpush1.bf16.msra.mxu0 %v6203
        %6287 = vmatprep.subr.bf16.mxu0 %v6202
        %6288 = vmatpush1.bf16.msra.mxu0 %v6201
        %6289 = vmatprep.subr.bf16.mxu0 %v6200
        %6290 = vmatpush1.bf16.msra.mxu0 %v6199
        %6291 = vmatprep.subr.bf16.mxu0 %v6198
        %6292 = vmatpush1.bf16.msra.mxu0 %v6197
        %6293 = vmatprep.subr.bf16.mxu0 %v6196
        %6294 = vmatpush1.bf16.msra.mxu0 %v6195
        %6295 = vmatprep.subr.bf16.mxu0 %v6194
        %6296 = vmatpush1.bf16.msra.mxu0 %v6193
        %6297 = vmatprep.subr.bf16.mxu0 %v6192
        %6298 = vmatpush1.bf16.msra.mxu0 %v6191
        %6299 = vmatprep.subr.bf16.mxu0 %v6190
        %6300 = vmatpush1.bf16.msra.mxu0 %v6189
        %6301 = vmatprep.subr.bf16.mxu0 %v6220
        %6302 = vmatpush2.bf16.msra.mxu0 %v6219
        %6303 = vmatprep.subr.bf16.mxu0 %v6218
        %6304 = vmatpush2.bf16.msra.mxu0 %v6217
        %6305 = vmatprep.subr.bf16.mxu0 %v6216
        %6306 = vmatpush2.bf16.msra.mxu0 %v6215
        %6307 = vmatprep.subr.bf16.mxu0 %v6214
        %6308 = vmatpush2.bf16.msra.mxu0 %v6213
        %6309 = vmatprep.subr.bf16.mxu0 %v6212
        %6310 = vmatpush2.bf16.msra.mxu0 %v6211
        %6311 = vmatprep.subr.bf16.mxu0 %v6210
        %6312 = vmatpush2.bf16.msra.mxu0 %v6209
        %6313 = vmatprep.subr.bf16.mxu0 %v6208
        %6314 = vmatpush2.bf16.msra.mxu0 %v6207
        %6315 = vmatprep.subr.bf16.mxu0 %v6206
        %6316 = vmatpush2.bf16.msra.mxu0 %v6205
        %6317 = vmatprep.mubr.bf16.mxu0 %v5986
        %6318 = vmatmul.mubr.bf16.gmra.mxu0 %v5985
        %v6319 = vpop.f32.mrf.mxu0
        %v6320 = vadd.f32 0.0, %v6319
        %v6321 = vpop.f32.mrf.mxu0
        %v6322 = vadd.f32 0.0, %v6321
        %v6323 = vpop.f32.mrf.mxu0
        %v6324 = vadd.f32 0.0, %v6323
        %v6325 = vpop.f32.mrf.mxu0
        %v6326 = vadd.f32 0.0, %v6325
        %6327 = vmatprep.mubr.bf16.mxu0 %v5989
        %6328 = vmatmul.mubr.bf16.gmra.mxu0 %v5988
        %v6329 = vpop.f32.mrf.mxu0
        %v6330 = vadd.f32 0.0, %v6329
        %v6331 = vpop.f32.mrf.mxu0
        %v6332 = vadd.f32 0.0, %v6331
        %v6333 = vpop.f32.mrf.mxu0
        %v6334 = vadd.f32 0.0, %v6333
        %v6335 = vpop.f32.mrf.mxu0
        %v6336 = vadd.f32 0.0, %v6335
        %6337 = vmatprep.mubr.bf16.mxu0 %v5992
        %6338 = vmatmul.mubr.bf16.gmra.mxu0 %v5991
        %v6339 = vpop.f32.mrf.mxu0
        %v6340 = vadd.f32 0.0, %v6339
        %v6341 = vpop.f32.mrf.mxu0
        %v6342 = vadd.f32 0.0, %v6341
        %v6343 = vpop.f32.mrf.mxu0
        %v6344 = vadd.f32 0.0, %v6343
        %v6345 = vpop.f32.mrf.mxu0
        %v6346 = vadd.f32 0.0, %v6345
        %6347 = vmatprep.mubr.bf16.mxu0 %v5995
        %6348 = vmatmul.mubr.bf16.gmra.mxu0 %v5994
        %v6349 = vpop.f32.mrf.mxu0
        %v6350 = vadd.f32 0.0, %v6349
        %v6351 = vpop.f32.mrf.mxu0
        %v6352 = vadd.f32 0.0, %v6351
        %v6353 = vpop.f32.mrf.mxu0
        %v6354 = vadd.f32 0.0, %v6353
        %v6355 = vpop.f32.mrf.mxu0
        %v6356 = vadd.f32 0.0, %v6355
        %6357 = vdwg.mxu0
        %6358 = vmatprep.subr.bf16.mxu0 %v6236
        %6359 = vmatpush1.bf16.msra.mxu0 %v6235
        %6360 = vmatprep.subr.bf16.mxu0 %v6234
        %6361 = vmatpush1.bf16.msra.mxu0 %v6233
        %6362 = vmatprep.subr.bf16.mxu0 %v6232
        %6363 = vmatpush1.bf16.msra.mxu0 %v6231
        %6364 = vmatprep.subr.bf16.mxu0 %v6230
        %6365 = vmatpush1.bf16.msra.mxu0 %v6229
        %6366 = vmatprep.subr.bf16.mxu0 %v6228
        %6367 = vmatpush1.bf16.msra.mxu0 %v6227
        %6368 = vmatprep.subr.bf16.mxu0 %v6226
        %6369 = vmatpush1.bf16.msra.mxu0 %v6225
        %6370 = vmatprep.subr.bf16.mxu0 %v6224
        %6371 = vmatpush1.bf16.msra.mxu0 %v6223
        %6372 = vmatprep.subr.bf16.mxu0 %v6222
        %6373 = vmatpush1.bf16.msra.mxu0 %v6221
        %6374 = vmatprep.subr.bf16.mxu0 0
        %6375 = vmatpush2.bf16.msra.mxu0 0
        %6376 = vmatprep.subr.bf16.mxu0 0
        %6377 = vmatpush2.bf16.msra.mxu0 0
        %6378 = vmatprep.subr.bf16.mxu0 0
        %6379 = vmatpush2.bf16.msra.mxu0 0
        %6380 = vmatprep.subr.bf16.mxu0 0
        %6381 = vmatpush2.bf16.msra.mxu0 0
        %6382 = vmatprep.subr.bf16.mxu0 0
        %6383 = vmatpush2.bf16.msra.mxu0 0
        %6384 = vmatprep.subr.bf16.mxu0 0
        %6385 = vmatpush2.bf16.msra.mxu0 0
        %6386 = vmatprep.subr.bf16.mxu0 0
        %6387 = vmatpush2.bf16.msra.mxu0 0
        %6388 = vmatprep.subr.bf16.mxu0 0
        %6389 = vmatpush2.bf16.msra.mxu0 0
        %6390 = vmatprep.mubr.bf16.mxu0 0
        %6391 = vmatmul.mubr.bf16.gmra.mxu0 %v5987
        %v6392 = vpop.f32.mrf.mxu0
        %v6393 = vadd.f32 %v6320, %v6392
        %v6394 = vpop.f32.mrf.mxu0
        %v6395 = vadd.f32 %v6322, %v6394
        %v6396 = vpop.f32.mrf.mxu0
        %v6397 = vadd.f32 %v6324, %v6396
        %v6398 = vpop.f32.mrf.mxu0
        %v6399 = vadd.f32 %v6326, %v6398
        %6400 = vmatprep.mubr.bf16.mxu0 0
        %6401 = vmatmul.mubr.bf16.gmra.mxu0 %v5990
        %v6402 = vpop.f32.mrf.mxu0
        %v6403 = vadd.f32 %v6330, %v6402
        %v6404 = vpop.f32.mrf.mxu0
        %v6405 = vadd.f32 %v6332, %v6404
        %v6406 = vpop.f32.mrf.mxu0
        %v6407 = vadd.f32 %v6334, %v6406
        %v6408 = vpop.f32.mrf.mxu0
        %v6409 = vadd.f32 %v6336, %v6408
        %6410 = vmatprep.mubr.bf16.mxu0 0
        %6411 = vmatmul.mubr.bf16.gmra.mxu0 %v5993
        %v6412 = vpop.f32.mrf.mxu0
        %v6413 = vadd.f32 %v6340, %v6412
        %v6414 = vpop.f32.mrf.mxu0
        %v6415 = vadd.f32 %v6342, %v6414
        %v6416 = vpop.f32.mrf.mxu0
        %v6417 = vadd.f32 %v6344, %v6416
        %v6418 = vpop.f32.mrf.mxu0
        %v6419 = vadd.f32 %v6346, %v6418
        %6420 = vmatprep.mubr.bf16.mxu0 0
        %6421 = vmatmul.mubr.bf16.gmra.mxu0 %v5996
        %v6422 = vpop.f32.mrf.mxu0
        %v6423 = vadd.f32 %v6350, %v6422
        %v6424 = vpop.f32.mrf.mxu0
        %v6425 = vadd.f32 %v6352, %v6424
        %v6426 = vpop.f32.mrf.mxu0
        %v6427 = vadd.f32 %v6354, %v6426
        %v6428 = vpop.f32.mrf.mxu0
        %v6429 = vadd.f32 %v6356, %v6428
        %6430 = vdwg.mxu0
        %s6431 = scalar_lea.vmem %s10, 384
        %v6432 = vld [vmem:[%s6431] sm:$0xff]
        %v6433 = vld [vmem:[%s6431 + $0x8] sm:$0xff]
        %v6434 = vld [vmem:[%s6431 + $0x10] sm:$0xff]
        %v6435 = vld [vmem:[%s6431 + $0x18] sm:$0xff]
        %v6436 = vld [vmem:[%s6431 + $0x20] sm:$0xff]
        %v6437 = vld [vmem:[%s6431 + $0x28] sm:$0xff]
        %v6438 = vld [vmem:[%s6431 + $0x30] sm:$0xff]
        %v6439 = vld [vmem:[%s6431 + $0x38] sm:$0xff]
        %v6440 = vld [vmem:[%s6431 + $0x40] sm:$0xff]
        %v6441 = vld [vmem:[%s6431 + $0x48] sm:$0xff]
        %v6442 = vld [vmem:[%s6431 + $0x50] sm:$0xff]
        %v6443 = vld [vmem:[%s6431 + $0x58] sm:$0xff]
        %v6444 = vld [vmem:[%s6431 + $0x60] sm:$0xff]
        %v6445 = vld [vmem:[%s6431 + $0x68] sm:$0xff]
        %v6446 = vld [vmem:[%s6431 + $0x70] sm:$0xff]
        %v6447 = vld [vmem:[%s6431 + $0x78] sm:$0xff]
        %v6448 = vld [vmem:[%s6431 + $0x80] sm:$0xff]
        %v6449 = vld [vmem:[%s6431 + $0x88] sm:$0xff]
        %v6450 = vld [vmem:[%s6431 + $0x90] sm:$0xff]
        %v6451 = vld [vmem:[%s6431 + $0x98] sm:$0xff]
        %v6452 = vld [vmem:[%s6431 + $0xa0] sm:$0xff]
        %v6453 = vld [vmem:[%s6431 + $0xa8] sm:$0xff]
        %v6454 = vld [vmem:[%s6431 + $0xb0] sm:$0xff]
        %v6455 = vld [vmem:[%s6431 + $0xb8] sm:$0xff]
        %v6456 = vld [vmem:[%s6431 + $0xc0] sm:$0xff]
        %v6457 = vld [vmem:[%s6431 + $0xc8] sm:$0xff]
        %v6458 = vld [vmem:[%s6431 + $0xd0] sm:$0xff]
        %v6459 = vld [vmem:[%s6431 + $0xd8] sm:$0xff]
        %v6460 = vld [vmem:[%s6431 + $0xe0] sm:$0xff]
        %v6461 = vld [vmem:[%s6431 + $0xe8] sm:$0xff]
        %v6462 = vld [vmem:[%s6431 + $0xf0] sm:$0xff]
        %v6463 = vld [vmem:[%s6431 + $0xf8] sm:$0xff]
        %v6464 = vld [vmem:[%s6431 + $0x100] sm:$0xff]
        %v6465 = vld [vmem:[%s6431 + $0x108] sm:$0xff]
        %v6466 = vld [vmem:[%s6431 + $0x110] sm:$0xff]
        %v6467 = vld [vmem:[%s6431 + $0x118] sm:$0xff]
        %v6468 = vld [vmem:[%s6431 + $0x120] sm:$0xff]
        %v6469 = vld [vmem:[%s6431 + $0x128] sm:$0xff]
        %v6470 = vld [vmem:[%s6431 + $0x130] sm:$0xff]
        %v6471 = vld [vmem:[%s6431 + $0x138] sm:$0xff]
        %v6472 = vld [vmem:[%s6431 + $0x140] sm:$0xff]
        %v6473 = vld [vmem:[%s6431 + $0x148] sm:$0xff]
        %v6474 = vld [vmem:[%s6431 + $0x150] sm:$0xff]
        %v6475 = vld [vmem:[%s6431 + $0x158] sm:$0xff]
        %v6476 = vld [vmem:[%s6431 + $0x160] sm:$0xff]
        %v6477 = vld [vmem:[%s6431 + $0x168] sm:$0xff]
        %v6478 = vld [vmem:[%s6431 + $0x170] sm:$0xff]
        %v6479 = vld [vmem:[%s6431 + $0x178] sm:$0xff]
        %v6528 = vunpack.c.l.b16 %v6432
        %v6529 = vunpack.c.h.b16 %v6432
        %v6530 = vunpack.c.l.b16 %v6433
        %v6531 = vunpack.c.h.b16 %v6433
        %v6532 = vunpack.c.l.b16 %v6434
        %v6533 = vunpack.c.h.b16 %v6434
        %v6534 = vunpack.c.l.b16 %v6435
        %v6535 = vunpack.c.h.b16 %v6435
        %v6536 = vunpack.c.l.b16 %v6436
        %v6537 = vunpack.c.h.b16 %v6436
        %v6538 = vunpack.c.l.b16 %v6437
        %v6539 = vunpack.c.h.b16 %v6437
        %v6540 = vunpack.c.l.b16 %v6438
        %v6541 = vunpack.c.h.b16 %v6438
        %v6542 = vunpack.c.l.b16 %v6439
        %v6543 = vunpack.c.h.b16 %v6439
        %v6544 = vunpack.c.l.b16 %v6440
        %v6545 = vunpack.c.h.b16 %v6440
        %v6546 = vunpack.c.l.b16 %v6441
        %v6547 = vunpack.c.h.b16 %v6441
        %v6548 = vunpack.c.l.b16 %v6442
        %v6549 = vunpack.c.h.b16 %v6442
        %v6550 = vunpack.c.l.b16 %v6443
        %v6551 = vunpack.c.h.b16 %v6443
        %v6552 = vunpack.c.l.b16 %v6444
        %v6553 = vunpack.c.h.b16 %v6444
        %v6554 = vunpack.c.l.b16 %v6445
        %v6555 = vunpack.c.h.b16 %v6445
        %v6556 = vunpack.c.l.b16 %v6446
        %v6557 = vunpack.c.h.b16 %v6446
        %v6558 = vunpack.c.l.b16 %v6447
        %v6559 = vunpack.c.h.b16 %v6447
        %v6560 = vunpack.c.l.b16 %v6448
        %v6561 = vunpack.c.h.b16 %v6448
        %v6562 = vunpack.c.l.b16 %v6449
        %v6563 = vunpack.c.h.b16 %v6449
        %v6564 = vunpack.c.l.b16 %v6450
        %v6565 = vunpack.c.h.b16 %v6450
        %v6566 = vunpack.c.l.b16 %v6451
        %v6567 = vunpack.c.h.b16 %v6451
        %v6568 = vunpack.c.l.b16 %v6452
        %v6569 = vunpack.c.h.b16 %v6452
        %v6570 = vunpack.c.l.b16 %v6453
        %v6571 = vunpack.c.h.b16 %v6453
        %v6572 = vunpack.c.l.b16 %v6454
        %v6573 = vunpack.c.h.b16 %v6454
        %v6574 = vunpack.c.l.b16 %v6455
        %v6575 = vunpack.c.h.b16 %v6455
        %v6576 = vunpack.c.l.b16 %v6456
        %v6577 = vunpack.c.h.b16 %v6456
        %v6578 = vunpack.c.l.b16 %v6457
        %v6579 = vunpack.c.h.b16 %v6457
        %v6580 = vunpack.c.l.b16 %v6458
        %v6581 = vunpack.c.h.b16 %v6458
        %v6582 = vunpack.c.l.b16 %v6459
        %v6583 = vunpack.c.h.b16 %v6459
        %v6584 = vunpack.c.l.b16 %v6460
        %v6585 = vunpack.c.h.b16 %v6460
        %v6586 = vunpack.c.l.b16 %v6461
        %v6587 = vunpack.c.h.b16 %v6461
        %v6588 = vunpack.c.l.b16 %v6462
        %v6589 = vunpack.c.h.b16 %v6462
        %v6590 = vunpack.c.l.b16 %v6463
        %v6591 = vunpack.c.h.b16 %v6463
        %v6592 = vunpack.c.l.b16 %v6464
        %v6593 = vunpack.c.h.b16 %v6464
        %v6594 = vunpack.c.l.b16 %v6465
        %v6595 = vunpack.c.h.b16 %v6465
        %v6596 = vunpack.c.l.b16 %v6466
        %v6597 = vunpack.c.h.b16 %v6466
        %v6598 = vunpack.c.l.b16 %v6467
        %v6599 = vunpack.c.h.b16 %v6467
        %v6600 = vunpack.c.l.b16 %v6468
        %v6601 = vunpack.c.h.b16 %v6468
        %v6602 = vunpack.c.l.b16 %v6469
        %v6603 = vunpack.c.h.b16 %v6469
        %v6604 = vunpack.c.l.b16 %v6470
        %v6605 = vunpack.c.h.b16 %v6470
        %v6606 = vunpack.c.l.b16 %v6471
        %v6607 = vunpack.c.h.b16 %v6471
        %v6608 = vunpack.c.l.b16 %v6472
        %v6609 = vunpack.c.h.b16 %v6472
        %v6610 = vunpack.c.l.b16 %v6473
        %v6611 = vunpack.c.h.b16 %v6473
        %v6612 = vunpack.c.l.b16 %v6474
        %v6613 = vunpack.c.h.b16 %v6474
        %v6614 = vunpack.c.l.b16 %v6475
        %v6615 = vunpack.c.h.b16 %v6475
        %v6616 = vunpack.c.l.b16 %v6476
        %v6617 = vunpack.c.h.b16 %v6476
        %v6618 = vunpack.c.l.b16 %v6477
        %v6619 = vunpack.c.h.b16 %v6477
        %v6620 = vunpack.c.l.b16 %v6478
        %v6621 = vunpack.c.h.b16 %v6478
        %v6622 = vunpack.c.l.b16 %v6479
        %v6623 = vunpack.c.h.b16 %v6479
        %v6624 = vpack.c.b16 %v6530, %v6528
        %v6625 = vpack.c.b16 %v6531, %v6529
        %v6626 = vpack.c.b16 %v6534, %v6532
        %v6627 = vpack.c.b16 %v6535, %v6533
        %v6628 = vpack.c.b16 %v6538, %v6536
        %v6629 = vpack.c.b16 %v6539, %v6537
        %v6630 = vpack.c.b16 %v6542, %v6540
        %v6631 = vpack.c.b16 %v6543, %v6541
        %v6632 = vpack.c.b16 %v6546, %v6544
        %v6633 = vpack.c.b16 %v6547, %v6545
        %v6634 = vpack.c.b16 %v6550, %v6548
        %v6635 = vpack.c.b16 %v6551, %v6549
        %v6636 = vpack.c.b16 %v6554, %v6552
        %v6637 = vpack.c.b16 %v6555, %v6553
        %v6638 = vpack.c.b16 %v6558, %v6556
        %v6639 = vpack.c.b16 %v6559, %v6557
        %v6640 = vpack.c.b16 %v6562, %v6560
        %v6641 = vpack.c.b16 %v6563, %v6561
        %v6642 = vpack.c.b16 %v6566, %v6564
        %v6643 = vpack.c.b16 %v6567, %v6565
        %v6644 = vpack.c.b16 %v6570, %v6568
        %v6645 = vpack.c.b16 %v6571, %v6569
        %v6646 = vpack.c.b16 %v6574, %v6572
        %v6647 = vpack.c.b16 %v6575, %v6573
        %v6648 = vpack.c.b16 %v6578, %v6576
        %v6649 = vpack.c.b16 %v6579, %v6577
        %v6650 = vpack.c.b16 %v6582, %v6580
        %v6651 = vpack.c.b16 %v6583, %v6581
        %v6652 = vpack.c.b16 %v6586, %v6584
        %v6653 = vpack.c.b16 %v6587, %v6585
        %v6654 = vpack.c.b16 %v6590, %v6588
        %v6655 = vpack.c.b16 %v6591, %v6589
        %v6656 = vpack.c.b16 %v6594, %v6592
        %v6657 = vpack.c.b16 %v6595, %v6593
        %v6658 = vpack.c.b16 %v6598, %v6596
        %v6659 = vpack.c.b16 %v6599, %v6597
        %v6660 = vpack.c.b16 %v6602, %v6600
        %v6661 = vpack.c.b16 %v6603, %v6601
        %v6662 = vpack.c.b16 %v6606, %v6604
        %v6663 = vpack.c.b16 %v6607, %v6605
        %v6664 = vpack.c.b16 %v6610, %v6608
        %v6665 = vpack.c.b16 %v6611, %v6609
        %v6666 = vpack.c.b16 %v6614, %v6612
        %v6667 = vpack.c.b16 %v6615, %v6613
        %v6668 = vpack.c.b16 %v6618, %v6616
        %v6669 = vpack.c.b16 %v6619, %v6617
        %v6670 = vpack.c.b16 %v6622, %v6620
        %v6671 = vpack.c.b16 %v6623, %v6621
        %6720 = vmatprep.subr.bf16.mxu0 %v6639
        %6721 = vmatpush1.bf16.msra.mxu0 %v6638
        %6722 = vmatprep.subr.bf16.mxu0 %v6637
        %6723 = vmatpush1.bf16.msra.mxu0 %v6636
        %6724 = vmatprep.subr.bf16.mxu0 %v6635
        %6725 = vmatpush1.bf16.msra.mxu0 %v6634
        %6726 = vmatprep.subr.bf16.mxu0 %v6633
        %6727 = vmatpush1.bf16.msra.mxu0 %v6632
        %6728 = vmatprep.subr.bf16.mxu0 %v6631
        %6729 = vmatpush1.bf16.msra.mxu0 %v6630
        %6730 = vmatprep.subr.bf16.mxu0 %v6629
        %6731 = vmatpush1.bf16.msra.mxu0 %v6628
        %6732 = vmatprep.subr.bf16.mxu0 %v6627
        %6733 = vmatpush1.bf16.msra.mxu0 %v6626
        %6734 = vmatprep.subr.bf16.mxu0 %v6625
        %6735 = vmatpush1.bf16.msra.mxu0 %v6624
        %6736 = vmatprep.subr.bf16.mxu0 %v6655
        %6737 = vmatpush2.bf16.msra.mxu0 %v6654
        %6738 = vmatprep.subr.bf16.mxu0 %v6653
        %6739 = vmatpush2.bf16.msra.mxu0 %v6652
        %6740 = vmatprep.subr.bf16.mxu0 %v6651
        %6741 = vmatpush2.bf16.msra.mxu0 %v6650
        %6742 = vmatprep.subr.bf16.mxu0 %v6649
        %6743 = vmatpush2.bf16.msra.mxu0 %v6648
        %6744 = vmatprep.subr.bf16.mxu0 %v6647
        %6745 = vmatpush2.bf16.msra.mxu0 %v6646
        %6746 = vmatprep.subr.bf16.mxu0 %v6645
        %6747 = vmatpush2.bf16.msra.mxu0 %v6644
        %6748 = vmatprep.subr.bf16.mxu0 %v6643
        %6749 = vmatpush2.bf16.msra.mxu0 %v6642
        %6750 = vmatprep.subr.bf16.mxu0 %v6641
        %6751 = vmatpush2.bf16.msra.mxu0 %v6640
        %6752 = vmatprep.mubr.bf16.mxu0 %v5986
        %6753 = vmatmul.mubr.bf16.gmra.mxu0 %v5985
        %v6754 = vpop.f32.mrf.mxu0
        %v6755 = vadd.f32 0.0, %v6754
        %v6756 = vpop.f32.mrf.mxu0
        %v6757 = vadd.f32 0.0, %v6756
        %v6758 = vpop.f32.mrf.mxu0
        %v6759 = vadd.f32 0.0, %v6758
        %v6760 = vpop.f32.mrf.mxu0
        %v6761 = vadd.f32 0.0, %v6760
        %6762 = vmatprep.mubr.bf16.mxu0 %v5989
        %6763 = vmatmul.mubr.bf16.gmra.mxu0 %v5988
        %v6764 = vpop.f32.mrf.mxu0
        %v6765 = vadd.f32 0.0, %v6764
        %v6766 = vpop.f32.mrf.mxu0
        %v6767 = vadd.f32 0.0, %v6766
        %v6768 = vpop.f32.mrf.mxu0
        %v6769 = vadd.f32 0.0, %v6768
        %v6770 = vpop.f32.mrf.mxu0
        %v6771 = vadd.f32 0.0, %v6770
        %6772 = vmatprep.mubr.bf16.mxu0 %v5992
        %6773 = vmatmul.mubr.bf16.gmra.mxu0 %v5991
        %v6774 = vpop.f32.mrf.mxu0
        %v6775 = vadd.f32 0.0, %v6774
        %v6776 = vpop.f32.mrf.mxu0
        %v6777 = vadd.f32 0.0, %v6776
        %v6778 = vpop.f32.mrf.mxu0
        %v6779 = vadd.f32 0.0, %v6778
        %v6780 = vpop.f32.mrf.mxu0
        %v6781 = vadd.f32 0.0, %v6780
        %6782 = vmatprep.mubr.bf16.mxu0 %v5995
        %6783 = vmatmul.mubr.bf16.gmra.mxu0 %v5994
        %v6784 = vpop.f32.mrf.mxu0
        %v6785 = vadd.f32 0.0, %v6784
        %v6786 = vpop.f32.mrf.mxu0
        %v6787 = vadd.f32 0.0, %v6786
        %v6788 = vpop.f32.mrf.mxu0
        %v6789 = vadd.f32 0.0, %v6788
        %v6790 = vpop.f32.mrf.mxu0
        %v6791 = vadd.f32 0.0, %v6790
        %6792 = vdwg.mxu0
        %6793 = vmatprep.subr.bf16.mxu0 %v6671
        %6794 = vmatpush1.bf16.msra.mxu0 %v6670
        %6795 = vmatprep.subr.bf16.mxu0 %v6669
        %6796 = vmatpush1.bf16.msra.mxu0 %v6668
        %6797 = vmatprep.subr.bf16.mxu0 %v6667
        %6798 = vmatpush1.bf16.msra.mxu0 %v6666
        %6799 = vmatprep.subr.bf16.mxu0 %v6665
        %6800 = vmatpush1.bf16.msra.mxu0 %v6664
        %6801 = vmatprep.subr.bf16.mxu0 %v6663
        %6802 = vmatpush1.bf16.msra.mxu0 %v6662
        %6803 = vmatprep.subr.bf16.mxu0 %v6661
        %6804 = vmatpush1.bf16.msra.mxu0 %v6660
        %6805 = vmatprep.subr.bf16.mxu0 %v6659
        %6806 = vmatpush1.bf16.msra.mxu0 %v6658
        %6807 = vmatprep.subr.bf16.mxu0 %v6657
        %6808 = vmatpush1.bf16.msra.mxu0 %v6656
        %6809 = vmatprep.subr.bf16.mxu0 0
        %6810 = vmatpush2.bf16.msra.mxu0 0
        %6811 = vmatprep.subr.bf16.mxu0 0
        %6812 = vmatpush2.bf16.msra.mxu0 0
        %6813 = vmatprep.subr.bf16.mxu0 0
        %6814 = vmatpush2.bf16.msra.mxu0 0
        %6815 = vmatprep.subr.bf16.mxu0 0
        %6816 = vmatpush2.bf16.msra.mxu0 0
        %6817 = vmatprep.subr.bf16.mxu0 0
        %6818 = vmatpush2.bf16.msra.mxu0 0
        %6819 = vmatprep.subr.bf16.mxu0 0
        %6820 = vmatpush2.bf16.msra.mxu0 0
        %6821 = vmatprep.subr.bf16.mxu0 0
        %6822 = vmatpush2.bf16.msra.mxu0 0
        %6823 = vmatprep.subr.bf16.mxu0 0
        %6824 = vmatpush2.bf16.msra.mxu0 0
        %6825 = vmatprep.mubr.bf16.mxu0 0
        %6826 = vmatmul.mubr.bf16.gmra.mxu0 %v5987
        %v6827 = vpop.f32.mrf.mxu0
        %v6828 = vadd.f32 %v6755, %v6827
        %v6829 = vpop.f32.mrf.mxu0
        %v6830 = vadd.f32 %v6757, %v6829
        %v6831 = vpop.f32.mrf.mxu0
        %v6832 = vadd.f32 %v6759, %v6831
        %v6833 = vpop.f32.mrf.mxu0
        %v6834 = vadd.f32 %v6761, %v6833
        %6835 = vmatprep.mubr.bf16.mxu0 0
        %6836 = vmatmul.mubr.bf16.gmra.mxu0 %v5990
        %v6837 = vpop.f32.mrf.mxu0
        %v6838 = vadd.f32 %v6765, %v6837
        %v6839 = vpop.f32.mrf.mxu0
        %v6840 = vadd.f32 %v6767, %v6839
        %v6841 = vpop.f32.mrf.mxu0
        %v6842 = vadd.f32 %v6769, %v6841
        %v6843 = vpop.f32.mrf.mxu0
        %v6844 = vadd.f32 %v6771, %v6843
        %6845 = vmatprep.mubr.bf16.mxu0 0
        %6846 = vmatmul.mubr.bf16.gmra.mxu0 %v5993
        %v6847 = vpop.f32.mrf.mxu0
        %v6848 = vadd.f32 %v6775, %v6847
        %v6849 = vpop.f32.mrf.mxu0
        %v6850 = vadd.f32 %v6777, %v6849
        %v6851 = vpop.f32.mrf.mxu0
        %v6852 = vadd.f32 %v6779, %v6851
        %v6853 = vpop.f32.mrf.mxu0
        %v6854 = vadd.f32 %v6781, %v6853
        %6855 = vmatprep.mubr.bf16.mxu0 0
        %6856 = vmatmul.mubr.bf16.gmra.mxu0 %v5996
        %v6857 = vpop.f32.mrf.mxu0
        %v6858 = vadd.f32 %v6785, %v6857
        %v6859 = vpop.f32.mrf.mxu0
        %v6860 = vadd.f32 %v6787, %v6859
        %v6861 = vpop.f32.mrf.mxu0
        %v6862 = vadd.f32 %v6789, %v6861
        %v6863 = vpop.f32.mrf.mxu0
        %v6864 = vadd.f32 %v6791, %v6863
        %6865 = vdwg.mxu0
        %v6866 = vmax.f32 %v6393, %v6828
        %v6867 = vmax.f32 %v6395, %v6830
        %v6868 = vmax.f32 %v6397, %v6832
        %v6869 = vmax.f32 %v6399, %v6834
        %v6870 = vmax.f32 %v6403, %v6838
        %v6871 = vmax.f32 %v6405, %v6840
        %v6872 = vmax.f32 %v6407, %v6842
        %v6873 = vmax.f32 %v6409, %v6844
        %v6874 = vmax.f32 %v6413, %v6848
        %v6875 = vmax.f32 %v6415, %v6850
        %v6876 = vmax.f32 %v6417, %v6852
        %v6877 = vmax.f32 %v6419, %v6854
        %v6878 = vmax.f32 %v6423, %v6858
        %v6879 = vmax.f32 %v6425, %v6860
        %v6880 = vmax.f32 %v6427, %v6862
        %v6881 = vmax.f32 %v6429, %v6864
        %6882 = vst [vmem:[#allocation3] sm:$0xff] %v6866
        %6883 = vst.msk [vmem:[#allocation3 + $0x8] sm:$0xff] %vm3822, %v6867
        %6884 = vst [vmem:[#allocation3 + $0x10] sm:$0xff] %v6868
        %6885 = vst.msk [vmem:[#allocation3 + $0x18] sm:$0xff] %vm3822, %v6869
        %6886 = vst [vmem:[#allocation3 + $0x20] sm:$0xff] %v6870
        %6887 = vst.msk [vmem:[#allocation3 + $0x28] sm:$0xff] %vm3822, %v6871
        %6888 = vst [vmem:[#allocation3 + $0x30] sm:$0xff] %v6872
        %6889 = vst.msk [vmem:[#allocation3 + $0x38] sm:$0xff] %vm3822, %v6873
        %6890 = vst [vmem:[#allocation3 + $0x40] sm:$0xff] %v6874
        %6891 = vst.msk [vmem:[#allocation3 + $0x48] sm:$0xff] %vm3822, %v6875
        %6892 = vst [vmem:[#allocation3 + $0x50] sm:$0xff] %v6876
        %6893 = vst.msk [vmem:[#allocation3 + $0x58] sm:$0xff] %vm3822, %v6877
        %6894 = vst [vmem:[#allocation3 + $0x60] sm:$0xff] %v6878
        %6895 = vst.msk [vmem:[#allocation3 + $0x68] sm:$0xff] %vm3822, %v6879
        %6896 = vst [vmem:[#allocation3 + $0x70] sm:$0xff] %v6880
        %6897 = vst.msk [vmem:[#allocation3 + $0x78] sm:$0xff] %vm3822, %v6881
        %v6898 = vld [vmem:[#allocation3] sm:$0xff]
        %v6899 = vld [vmem:[#allocation3 + $0x8] sm:$0xff]
        %v6900 = vld [vmem:[#allocation3 + $0x10] sm:$0xff]
        %v6901 = vld [vmem:[#allocation3 + $0x18] sm:$0xff]
        %v6902 = vld [vmem:[#allocation3 + $0x20] sm:$0xff]
        %v6903 = vld [vmem:[#allocation3 + $0x28] sm:$0xff]
        %v6904 = vld [vmem:[#allocation3 + $0x30] sm:$0xff]
        %v6905 = vld [vmem:[#allocation3 + $0x38] sm:$0xff]
        %v6906 = vld [vmem:[#allocation3 + $0x40] sm:$0xff]
        %v6907 = vld [vmem:[#allocation3 + $0x48] sm:$0xff]
        %v6908 = vld [vmem:[#allocation3 + $0x50] sm:$0xff]
        %v6909 = vld [vmem:[#allocation3 + $0x58] sm:$0xff]
        %v6910 = vld [vmem:[#allocation3 + $0x60] sm:$0xff]
        %v6911 = vld [vmem:[#allocation3 + $0x68] sm:$0xff]
        %v6912 = vld [vmem:[#allocation3 + $0x70] sm:$0x3f]
        %v6913 = vld [vmem:[#allocation3 + $0x78] sm:$0x3f]
        %v6914 = vpack.c.bf16 %v6900, %v6898
        %v6915 = vpack.c.bf16 %v6901, %v6899
        %v6916 = vpack.c.bf16 %v6904, %v6902
        %v6917 = vpack.c.bf16 %v6905, %v6903
        %v6918 = vpack.c.bf16 %v6908, %v6906
        %v6919 = vpack.c.bf16 %v6909, %v6907
        %v6920 = vpack.c.bf16 %v6912, %v6910
        %v6921 = vpack.c.bf16 %v6913, %v6911
        %v6922 = vld [vmem:[%s3] sm:$0xff]
        %v6923 = vld [vmem:[%s3 + $0x8] sm:$0xff]
        %v6924 = vld [vmem:[%s3 + $0x10] sm:$0xff]
        %v6925 = vld [vmem:[%s3 + $0x18] sm:$0xff]
        %v6926 = vld [vmem:[%s3 + $0x20] sm:$0xff]
        %v6927 = vld [vmem:[%s3 + $0x28] sm:$0xff]
        %v6928 = vld [vmem:[%s3 + $0x30] sm:$0xff]
        %v6929 = vld [vmem:[%s3 + $0x38] sm:$0xff]
        %v6930 = vld [vmem:[%s3 + $0x40] sm:$0xff]
        %v6931 = vld [vmem:[%s3 + $0x48] sm:$0xff]
        %v6932 = vld [vmem:[%s3 + $0x50] sm:$0xff]
        %v6933 = vld [vmem:[%s3 + $0x58] sm:$0xff]
        %v6934 = vld [vmem:[%s3 + $0x60] sm:$0xff]
        %v6935 = vld [vmem:[%s3 + $0x68] sm:$0xff]
        %v6936 = vld [vmem:[%s3 + $0x70] sm:$0xff]
        %v6937 = vld [vmem:[%s3 + $0x78] sm:$0xff]
        %v6938 = vld [vmem:[%s3 + $0x80] sm:$0xff]
        %v6939 = vld [vmem:[%s3 + $0x88] sm:$0xff]
        %v6940 = vld [vmem:[%s3 + $0x90] sm:$0xff]
        %v6941 = vld [vmem:[%s3 + $0x98] sm:$0xff]
        %v6942 = vld [vmem:[%s3 + $0xa0] sm:$0xff]
        %v6943 = vld [vmem:[%s3 + $0xa8] sm:$0xff]
        %v6944 = vld [vmem:[%s3 + $0xb0] sm:$0xff]
        %v6945 = vld [vmem:[%s3 + $0xb8] sm:$0xff]
        %v6946 = vld [vmem:[#allocation3] sm:$0xfe]
        %v6947 = vld [vmem:[#allocation3 + $0x8] sm:$0xfe]
        %v6948 = vld [vmem:[#allocation3 + $0x70] sm:$0x7f]
        %v6949 = vld [vmem:[#allocation3 + $0x78] sm:$0x7f]
        %v6950 = vpack.c.bf16 %v6900, %v6946
        %v6951 = vpack.c.bf16 %v6901, %v6947
        %v6952 = vpack.c.bf16 %v6948, %v6910
        %v6953 = vpack.c.bf16 %v6949, %v6911
        %s6954 = scalar_lea.vmem %s3, 192
        %v6955 = vld [vmem:[%s6954] sm:$0xff]
        %v6956 = vld [vmem:[%s6954 + $0x8] sm:$0xff]
        %v6957 = vld [vmem:[%s6954 + $0x10] sm:$0xff]
        %v6958 = vld [vmem:[%s6954 + $0x18] sm:$0xff]
        %v6959 = vld [vmem:[%s6954 + $0x20] sm:$0xff]
        %v6960 = vld [vmem:[%s6954 + $0x28] sm:$0xff]
        %v6961 = vld [vmem:[%s6954 + $0x30] sm:$0xff]
        %v6962 = vld [vmem:[%s6954 + $0x38] sm:$0xff]
        %v6963 = vld [vmem:[%s6954 + $0x40] sm:$0xff]
        %v6964 = vld [vmem:[%s6954 + $0x48] sm:$0xff]
        %v6965 = vld [vmem:[%s6954 + $0x50] sm:$0xff]
        %v6966 = vld [vmem:[%s6954 + $0x58] sm:$0xff]
        %v6967 = vld [vmem:[%s6954 + $0x60] sm:$0xff]
        %v6968 = vld [vmem:[%s6954 + $0x68] sm:$0xff]
        %v6969 = vld [vmem:[%s6954 + $0x70] sm:$0xff]
        %v6970 = vld [vmem:[%s6954 + $0x78] sm:$0xff]
        %v6971 = vld [vmem:[%s6954 + $0x80] sm:$0xff]
        %v6972 = vld [vmem:[%s6954 + $0x88] sm:$0xff]
        %v6973 = vld [vmem:[%s6954 + $0x90] sm:$0xff]
        %v6974 = vld [vmem:[%s6954 + $0x98] sm:$0xff]
        %v6975 = vld [vmem:[%s6954 + $0xa0] sm:$0xff]
        %v6976 = vld [vmem:[%s6954 + $0xa8] sm:$0xff]
        %v6977 = vld [vmem:[%s6954 + $0xb0] sm:$0xff]
        %v6978 = vld [vmem:[%s6954 + $0xb8] sm:$0xff]
        %v6980 = vshrl.u32 %v6950, 16
        %v6982 = vshll.u32 %v6950, 16
        %v6984 = vrot.slane %v6982, 1
        %v6985 = vor.u32 %v6980, %v6984
        %v6987 = vshll.u32 %v6916, 16
        %v6989 = vrot.slane %v6987, 1
        %v6990 = vsel %vm3997, %v6985, %v6989
        %v6992 = vshrl.u32 %v6951, 16
        %v6994 = vshll.u32 %v6951, 16
        %v6996 = vrot.slane %v6994, 1
        %v6997 = vor.u32 %v6992, %v6996
        %v6999 = vshll.u32 %v6917, 16
        %v7001 = vrot.slane %v6999, 1
        %v7002 = vsel %vm3997, %v6997, %v7001
        %v7003 = vshrl.u32 %v6916, 16
        %v7005 = vor.u32 %v7003, %v6989
        %v7007 = vshll.u32 %v6918, 16
        %v7009 = vrot.slane %v7007, 1
        %v7010 = vsel %vm3997, %v7005, %v7009
        %v7011 = vshrl.u32 %v6917, 16
        %v7013 = vor.u32 %v7011, %v7001
        %v7015 = vshll.u32 %v6919, 16
        %v7017 = vrot.slane %v7015, 1
        %v7018 = vsel %vm3997, %v7013, %v7017
        %v7019 = vshrl.u32 %v6918, 16
        %v7021 = vor.u32 %v7019, %v7009
        %v7023 = vshll.u32 %v6952, 16
        %v7025 = vrot.slane %v7023, 1
        %v7026 = vsel %vm3997, %v7021, %v7025
        %v7027 = vshrl.u32 %v6919, 16
        %v7029 = vor.u32 %v7027, %v7017
        %v7031 = vshll.u32 %v6953, 16
        %v7033 = vrot.slane %v7031, 1
        %v7034 = vsel %vm3997, %v7029, %v7033
        %v7035 = vshrl.u32 %v6952, 16
        %v7037 = vor.u32 %v7035, %v7025
        %v7038 = vshrl.u32 %v6953, 16
        %v7040 = vor.u32 %v7038, %v7033
        %v7069 = vunpack.c.l.b16 %v6955
        %v7070 = vunpack.c.h.b16 %v6955
        %v7071 = vunpack.c.l.b16 %v6956
        %v7072 = vunpack.c.h.b16 %v6956
        %v7073 = vunpack.c.l.b16 %v6957
        %v7074 = vunpack.c.h.b16 %v6957
        %v7075 = vunpack.c.l.b16 %v6958
        %v7076 = vunpack.c.h.b16 %v6958
        %v7077 = vunpack.c.l.b16 %v6959
        %v7078 = vunpack.c.h.b16 %v6959
        %v7079 = vunpack.c.l.b16 %v6960
        %v7080 = vunpack.c.h.b16 %v6960
        %v7081 = vunpack.c.l.b16 %v6961
        %v7082 = vunpack.c.h.b16 %v6961
        %v7083 = vunpack.c.l.b16 %v6962
        %v7084 = vunpack.c.h.b16 %v6962
        %v7085 = vunpack.c.l.b16 %v6963
        %v7086 = vunpack.c.h.b16 %v6963
        %v7087 = vunpack.c.l.b16 %v6964
        %v7088 = vunpack.c.h.b16 %v6964
        %v7089 = vunpack.c.l.b16 %v6965
        %v7090 = vunpack.c.h.b16 %v6965
        %v7091 = vunpack.c.l.b16 %v6966
        %v7092 = vunpack.c.h.b16 %v6966
        %v7093 = vunpack.c.l.b16 %v6967
        %v7094 = vunpack.c.h.b16 %v6967
        %v7095 = vunpack.c.l.b16 %v6968
        %v7096 = vunpack.c.h.b16 %v6968
        %v7097 = vunpack.c.l.b16 %v6969
        %v7098 = vunpack.c.h.b16 %v6969
        %v7099 = vunpack.c.l.b16 %v6970
        %v7100 = vunpack.c.h.b16 %v6970
        %v7101 = vunpack.c.l.b16 %v6971
        %v7102 = vunpack.c.h.b16 %v6971
        %v7103 = vunpack.c.l.b16 %v6972
        %v7104 = vunpack.c.h.b16 %v6972
        %v7105 = vunpack.c.l.b16 %v6973
        %v7106 = vunpack.c.h.b16 %v6973
        %v7107 = vunpack.c.l.b16 %v6974
        %v7108 = vunpack.c.h.b16 %v6974
        %v7109 = vunpack.c.l.b16 %v6975
        %v7110 = vunpack.c.h.b16 %v6975
        %v7111 = vunpack.c.l.b16 %v6976
        %v7112 = vunpack.c.h.b16 %v6976
        %v7113 = vunpack.c.l.b16 %v6977
        %v7114 = vunpack.c.h.b16 %v6977
        %v7115 = vunpack.c.l.b16 %v6978
        %v7116 = vunpack.c.h.b16 %v6978
        %v7117 = vpack.c.b16 %v7071, %v7069
        %v7118 = vpack.c.b16 %v7072, %v7070
        %v7119 = vpack.c.b16 %v7075, %v7073
        %v7120 = vpack.c.b16 %v7076, %v7074
        %v7121 = vpack.c.b16 %v7079, %v7077
        %v7122 = vpack.c.b16 %v7080, %v7078
        %v7123 = vpack.c.b16 %v7083, %v7081
        %v7124 = vpack.c.b16 %v7084, %v7082
        %v7125 = vpack.c.b16 %v7087, %v7085
        %v7126 = vpack.c.b16 %v7088, %v7086
        %v7127 = vpack.c.b16 %v7091, %v7089
        %v7128 = vpack.c.b16 %v7092, %v7090
        %v7129 = vpack.c.b16 %v7095, %v7093
        %v7130 = vpack.c.b16 %v7096, %v7094
        %v7131 = vpack.c.b16 %v7099, %v7097
        %v7132 = vpack.c.b16 %v7100, %v7098
        %v7133 = vpack.c.b16 %v7103, %v7101
        %v7134 = vpack.c.b16 %v7104, %v7102
        %v7135 = vpack.c.b16 %v7107, %v7105
        %v7136 = vpack.c.b16 %v7108, %v7106
        %v7137 = vpack.c.b16 %v7111, %v7109
        %v7138 = vpack.c.b16 %v7112, %v7110
        %v7139 = vpack.c.b16 %v7115, %v7113
        %v7140 = vpack.c.b16 %v7116, %v7114
        %v7166 = vsel %vm3822, %v7002, 0
        %v7169 = vsel %vm3822, %v7018, 0
        %v7172 = vsel %vm3822, %v7034, 0
        %v7175 = vsel %vm3822, %v7040, 0
        %7177 = vmatprep.subr.bf16.mxu0 %v7132
        %7178 = vmatpush1.bf16.msra.mxu0 %v7131
        %7179 = vmatprep.subr.bf16.mxu0 %v7130
        %7180 = vmatpush1.bf16.msra.mxu0 %v7129
        %7181 = vmatprep.subr.bf16.mxu0 %v7128
        %7182 = vmatpush1.bf16.msra.mxu0 %v7127
        %7183 = vmatprep.subr.bf16.mxu0 %v7126
        %7184 = vmatpush1.bf16.msra.mxu0 %v7125
        %7185 = vmatprep.subr.bf16.mxu0 %v7124
        %7186 = vmatpush1.bf16.msra.mxu0 %v7123
        %7187 = vmatprep.subr.bf16.mxu0 %v7122
        %7188 = vmatpush1.bf16.msra.mxu0 %v7121
        %7189 = vmatprep.subr.bf16.mxu0 %v7120
        %7190 = vmatpush1.bf16.msra.mxu0 %v7119
        %7191 = vmatprep.subr.bf16.mxu0 %v7118
        %7192 = vmatpush1.bf16.msra.mxu0 %v7117
        %7193 = vmatprep.subr.bf16.mxu0 0
        %7194 = vmatpush2.bf16.msra.mxu0 0
        %7195 = vmatprep.subr.bf16.mxu0 0
        %7196 = vmatpush2.bf16.msra.mxu0 0
        %7197 = vmatprep.subr.bf16.mxu0 0
        %7198 = vmatpush2.bf16.msra.mxu0 0
        %7199 = vmatprep.subr.bf16.mxu0 0
        %7200 = vmatpush2.bf16.msra.mxu0 0
        %7201 = vmatprep.subr.bf16.mxu0 %v7140
        %7202 = vmatpush2.bf16.msra.mxu0 %v7139
        %7203 = vmatprep.subr.bf16.mxu0 %v7138
        %7204 = vmatpush2.bf16.msra.mxu0 %v7137
        %7205 = vmatprep.subr.bf16.mxu0 %v7136
        %7206 = vmatpush2.bf16.msra.mxu0 %v7135
        %7207 = vmatprep.subr.bf16.mxu0 %v7134
        %7208 = vmatpush2.bf16.msra.mxu0 %v7133
        %7209 = vmatprep.mubr.bf16.mxu0 %v7166
        %7210 = vmatmul.mubr.bf16.gmra.mxu0 %v6990
        %v7211 = vpop.f32.mrf.mxu0
        %v7212 = vadd.f32 0.0, %v7211
        %v7213 = vpop.f32.mrf.mxu0
        %v7214 = vadd.f32 0.0, %v7213
        %v7215 = vpop.f32.mrf.mxu0
        %v7216 = vadd.f32 0.0, %v7215
        %v7217 = vpop.f32.mrf.mxu0
        %v7218 = vadd.f32 0.0, %v7217
        %7219 = vmatprep.mubr.bf16.mxu0 %v7169
        %7220 = vmatmul.mubr.bf16.gmra.mxu0 %v7010
        %v7221 = vpop.f32.mrf.mxu0
        %v7222 = vadd.f32 0.0, %v7221
        %v7223 = vpop.f32.mrf.mxu0
        %v7224 = vadd.f32 0.0, %v7223
        %v7225 = vpop.f32.mrf.mxu0
        %v7226 = vadd.f32 0.0, %v7225
        %v7227 = vpop.f32.mrf.mxu0
        %v7228 = vadd.f32 0.0, %v7227
        %7229 = vmatprep.mubr.bf16.mxu0 %v7172
        %7230 = vmatmul.mubr.bf16.gmra.mxu0 %v7026
        %v7231 = vpop.f32.mrf.mxu0
        %v7232 = vadd.f32 0.0, %v7231
        %v7233 = vpop.f32.mrf.mxu0
        %v7234 = vadd.f32 0.0, %v7233
        %v7235 = vpop.f32.mrf.mxu0
        %v7236 = vadd.f32 0.0, %v7235
        %v7237 = vpop.f32.mrf.mxu0
        %v7238 = vadd.f32 0.0, %v7237
        %7239 = vmatprep.mubr.bf16.mxu0 %v7175
        %7240 = vmatmul.mubr.bf16.gmra.mxu0 %v7037
        %v7241 = vpop.f32.mrf.mxu0
        %v7242 = vadd.f32 0.0, %v7241
        %v7243 = vpop.f32.mrf.mxu0
        %v7244 = vadd.f32 0.0, %v7243
        %v7245 = vpop.f32.mrf.mxu0
        %v7246 = vadd.f32 0.0, %v7245
        %v7247 = vpop.f32.mrf.mxu0
        %v7248 = vadd.f32 0.0, %v7247
        %7249 = vdwg.mxu0
        %v7274 = vunpack.c.l.b16 %v6922
        %v7275 = vunpack.c.h.b16 %v6922
        %v7276 = vunpack.c.l.b16 %v6923
        %v7277 = vunpack.c.h.b16 %v6923
        %v7278 = vunpack.c.l.b16 %v6924
        %v7279 = vunpack.c.h.b16 %v6924
        %v7280 = vunpack.c.l.b16 %v6925
        %v7281 = vunpack.c.h.b16 %v6925
        %v7282 = vunpack.c.l.b16 %v6926
        %v7283 = vunpack.c.h.b16 %v6926
        %v7284 = vunpack.c.l.b16 %v6927
        %v7285 = vunpack.c.h.b16 %v6927
        %v7286 = vunpack.c.l.b16 %v6928
        %v7287 = vunpack.c.h.b16 %v6928
        %v7288 = vunpack.c.l.b16 %v6929
        %v7289 = vunpack.c.h.b16 %v6929
        %v7290 = vunpack.c.l.b16 %v6930
        %v7291 = vunpack.c.h.b16 %v6930
        %v7292 = vunpack.c.l.b16 %v6931
        %v7293 = vunpack.c.h.b16 %v6931
        %v7294 = vunpack.c.l.b16 %v6932
        %v7295 = vunpack.c.h.b16 %v6932
        %v7296 = vunpack.c.l.b16 %v6933
        %v7297 = vunpack.c.h.b16 %v6933
        %v7298 = vunpack.c.l.b16 %v6934
        %v7299 = vunpack.c.h.b16 %v6934
        %v7300 = vunpack.c.l.b16 %v6935
        %v7301 = vunpack.c.h.b16 %v6935
        %v7302 = vunpack.c.l.b16 %v6936
        %v7303 = vunpack.c.h.b16 %v6936
        %v7304 = vunpack.c.l.b16 %v6937
        %v7305 = vunpack.c.h.b16 %v6937
        %v7306 = vunpack.c.l.b16 %v6938
        %v7307 = vunpack.c.h.b16 %v6938
        %v7308 = vunpack.c.l.b16 %v6939
        %v7309 = vunpack.c.h.b16 %v6939
        %v7310 = vunpack.c.l.b16 %v6940
        %v7311 = vunpack.c.h.b16 %v6940
        %v7312 = vunpack.c.l.b16 %v6941
        %v7313 = vunpack.c.h.b16 %v6941
        %v7314 = vunpack.c.l.b16 %v6942
        %v7315 = vunpack.c.h.b16 %v6942
        %v7316 = vunpack.c.l.b16 %v6943
        %v7317 = vunpack.c.h.b16 %v6943
        %v7318 = vunpack.c.l.b16 %v6944
        %v7319 = vunpack.c.h.b16 %v6944
        %v7320 = vunpack.c.l.b16 %v6945
        %v7321 = vunpack.c.h.b16 %v6945
        %v7322 = vpack.c.b16 %v7276, %v7274
        %v7323 = vpack.c.b16 %v7277, %v7275
        %v7324 = vpack.c.b16 %v7280, %v7278
        %v7325 = vpack.c.b16 %v7281, %v7279
        %v7326 = vpack.c.b16 %v7284, %v7282
        %v7327 = vpack.c.b16 %v7285, %v7283
        %v7328 = vpack.c.b16 %v7288, %v7286
        %v7329 = vpack.c.b16 %v7289, %v7287
        %v7330 = vpack.c.b16 %v7292, %v7290
        %v7331 = vpack.c.b16 %v7293, %v7291
        %v7332 = vpack.c.b16 %v7296, %v7294
        %v7333 = vpack.c.b16 %v7297, %v7295
        %v7334 = vpack.c.b16 %v7300, %v7298
        %v7335 = vpack.c.b16 %v7301, %v7299
        %v7336 = vpack.c.b16 %v7304, %v7302
        %v7337 = vpack.c.b16 %v7305, %v7303
        %v7338 = vpack.c.b16 %v7308, %v7306
        %v7339 = vpack.c.b16 %v7309, %v7307
        %v7340 = vpack.c.b16 %v7312, %v7310
        %v7341 = vpack.c.b16 %v7313, %v7311
        %v7342 = vpack.c.b16 %v7316, %v7314
        %v7343 = vpack.c.b16 %v7317, %v7315
        %v7344 = vpack.c.b16 %v7320, %v7318
        %v7345 = vpack.c.b16 %v7321, %v7319
        %v7371 = vsel %vm3822, %v6915, 0
        %v7373 = vsel %vm3822, %v6917, 0
        %v7375 = vsel %vm3822, %v6919, 0
        %v7378 = vsel %vm3822, %v6921, 0
        %7380 = vmatprep.subr.bf16.mxu0 %v7337
        %7381 = vmatpush1.bf16.msra.mxu0 %v7336
        %7382 = vmatprep.subr.bf16.mxu0 %v7335
        %7383 = vmatpush1.bf16.msra.mxu0 %v7334
        %7384 = vmatprep.subr.bf16.mxu0 %v7333
        %7385 = vmatpush1.bf16.msra.mxu0 %v7332
        %7386 = vmatprep.subr.bf16.mxu0 %v7331
        %7387 = vmatpush1.bf16.msra.mxu0 %v7330
        %7388 = vmatprep.subr.bf16.mxu0 %v7329
        %7389 = vmatpush1.bf16.msra.mxu0 %v7328
        %7390 = vmatprep.subr.bf16.mxu0 %v7327
        %7391 = vmatpush1.bf16.msra.mxu0 %v7326
        %7392 = vmatprep.subr.bf16.mxu0 %v7325
        %7393 = vmatpush1.bf16.msra.mxu0 %v7324
        %7394 = vmatprep.subr.bf16.mxu0 %v7323
        %7395 = vmatpush1.bf16.msra.mxu0 %v7322
        %7396 = vmatprep.subr.bf16.mxu0 0
        %7397 = vmatpush2.bf16.msra.mxu0 0
        %7398 = vmatprep.subr.bf16.mxu0 0
        %7399 = vmatpush2.bf16.msra.mxu0 0
        %7400 = vmatprep.subr.bf16.mxu0 0
        %7401 = vmatpush2.bf16.msra.mxu0 0
        %7402 = vmatprep.subr.bf16.mxu0 0
        %7403 = vmatpush2.bf16.msra.mxu0 0
        %7404 = vmatprep.subr.bf16.mxu0 %v7345
        %7405 = vmatpush2.bf16.msra.mxu0 %v7344
        %7406 = vmatprep.subr.bf16.mxu0 %v7343
        %7407 = vmatpush2.bf16.msra.mxu0 %v7342
        %7408 = vmatprep.subr.bf16.mxu0 %v7341
        %7409 = vmatpush2.bf16.msra.mxu0 %v7340
        %7410 = vmatprep.subr.bf16.mxu0 %v7339
        %7411 = vmatpush2.bf16.msra.mxu0 %v7338
        %7412 = vmatprep.mubr.bf16.mxu0 %v7371
        %7413 = vmatmul.mubr.bf16.gmra.mxu0 %v6914
        %v7414 = vpop.f32.mrf.mxu0
        %v7415 = vadd.f32 %v7212, %v7414
        %v7416 = vpop.f32.mrf.mxu0
        %v7417 = vadd.f32 %v7214, %v7416
        %v7418 = vpop.f32.mrf.mxu0
        %v7419 = vadd.f32 %v7216, %v7418
        %v7420 = vpop.f32.mrf.mxu0
        %v7421 = vadd.f32 %v7218, %v7420
        %7422 = vmatprep.mubr.bf16.mxu0 %v7373
        %7423 = vmatmul.mubr.bf16.gmra.mxu0 %v6916
        %v7424 = vpop.f32.mrf.mxu0
        %v7425 = vadd.f32 %v7222, %v7424
        %v7426 = vpop.f32.mrf.mxu0
        %v7427 = vadd.f32 %v7224, %v7426
        %v7428 = vpop.f32.mrf.mxu0
        %v7429 = vadd.f32 %v7226, %v7428
        %v7430 = vpop.f32.mrf.mxu0
        %v7431 = vadd.f32 %v7228, %v7430
        %7432 = vmatprep.mubr.bf16.mxu0 %v7375
        %7433 = vmatmul.mubr.bf16.gmra.mxu0 %v6918
        %v7434 = vpop.f32.mrf.mxu0
        %v7435 = vadd.f32 %v7232, %v7434
        %v7436 = vpop.f32.mrf.mxu0
        %v7437 = vadd.f32 %v7234, %v7436
        %v7438 = vpop.f32.mrf.mxu0
        %v7439 = vadd.f32 %v7236, %v7438
        %v7440 = vpop.f32.mrf.mxu0
        %v7441 = vadd.f32 %v7238, %v7440
        %7442 = vmatprep.mubr.bf16.mxu0 %v7378
        %7443 = vmatmul.mubr.bf16.gmra.mxu0 %v6920
        %v7444 = vpop.f32.mrf.mxu0
        %v7445 = vadd.f32 %v7242, %v7444
        %v7446 = vpop.f32.mrf.mxu0
        %v7447 = vadd.f32 %v7244, %v7446
        %v7448 = vpop.f32.mrf.mxu0
        %v7449 = vadd.f32 %v7246, %v7448
        %v7450 = vpop.f32.mrf.mxu0
        %v7451 = vadd.f32 %v7248, %v7450
        %7452 = vdwg.mxu0
        %v7453 = vld [vmem:[#allocation3] sm:$0xfc]
        %v7454 = vld [vmem:[#allocation3 + $0x8] sm:$0xfc]
        %v7455 = vld [vmem:[#allocation3 + $0x70] sm:$0xff]
        %v7456 = vld [vmem:[#allocation3 + $0x78] sm:$0xff]
        %v7457 = vpack.c.bf16 %v6900, %v7453
        %v7458 = vpack.c.bf16 %v6901, %v7454
        %v7459 = vpack.c.bf16 %v7455, %v6910
        %v7460 = vpack.c.bf16 %v7456, %v6911
        %s7461 = scalar_lea.vmem %s3, 384
        %v7462 = vld [vmem:[%s7461] sm:$0xff]
        %v7463 = vld [vmem:[%s7461 + $0x8] sm:$0xff]
        %v7464 = vld [vmem:[%s7461 + $0x10] sm:$0xff]
        %v7465 = vld [vmem:[%s7461 + $0x18] sm:$0xff]
        %v7466 = vld [vmem:[%s7461 + $0x20] sm:$0xff]
        %v7467 = vld [vmem:[%s7461 + $0x28] sm:$0xff]
        %v7468 = vld [vmem:[%s7461 + $0x30] sm:$0xff]
        %v7469 = vld [vmem:[%s7461 + $0x38] sm:$0xff]
        %v7470 = vld [vmem:[%s7461 + $0x40] sm:$0xff]
        %v7471 = vld [vmem:[%s7461 + $0x48] sm:$0xff]
        %v7472 = vld [vmem:[%s7461 + $0x50] sm:$0xff]
        %v7473 = vld [vmem:[%s7461 + $0x58] sm:$0xff]
        %v7474 = vld [vmem:[%s7461 + $0x60] sm:$0xff]
        %v7475 = vld [vmem:[%s7461 + $0x68] sm:$0xff]
        %v7476 = vld [vmem:[%s7461 + $0x70] sm:$0xff]
        %v7477 = vld [vmem:[%s7461 + $0x78] sm:$0xff]
        %v7478 = vld [vmem:[%s7461 + $0x80] sm:$0xff]
        %v7479 = vld [vmem:[%s7461 + $0x88] sm:$0xff]
        %v7480 = vld [vmem:[%s7461 + $0x90] sm:$0xff]
        %v7481 = vld [vmem:[%s7461 + $0x98] sm:$0xff]
        %v7482 = vld [vmem:[%s7461 + $0xa0] sm:$0xff]
        %v7483 = vld [vmem:[%s7461 + $0xa8] sm:$0xff]
        %v7484 = vld [vmem:[%s7461 + $0xb0] sm:$0xff]
        %v7485 = vld [vmem:[%s7461 + $0xb8] sm:$0xff]
        %v7494 = vrot.slane %v7457, 1
        %v7495 = vrot.slane %v6916, 1
        %v7496 = vsel %vm4991, %v7494, %v7495
        %v7497 = vrot.slane %v7458, 1
        %v7498 = vrot.slane %v6917, 1
        %v7499 = vsel %vm4991, %v7497, %v7498
        %v7500 = vrot.slane %v6918, 1
        %v7501 = vsel %vm4991, %v7495, %v7500
        %v7502 = vrot.slane %v6919, 1
        %v7503 = vsel %vm4991, %v7498, %v7502
        %v7504 = vrot.slane %v7459, 1
        %v7505 = vsel %vm4991, %v7500, %v7504
        %v7506 = vrot.slane %v7460, 1
        %v7507 = vsel %vm4991, %v7502, %v7506
        %v7536 = vunpack.c.l.b16 %v7462
        %v7537 = vunpack.c.h.b16 %v7462
        %v7538 = vunpack.c.l.b16 %v7463
        %v7539 = vunpack.c.h.b16 %v7463
        %v7540 = vunpack.c.l.b16 %v7464
        %v7541 = vunpack.c.h.b16 %v7464
        %v7542 = vunpack.c.l.b16 %v7465
        %v7543 = vunpack.c.h.b16 %v7465
        %v7544 = vunpack.c.l.b16 %v7466
        %v7545 = vunpack.c.h.b16 %v7466
        %v7546 = vunpack.c.l.b16 %v7467
        %v7547 = vunpack.c.h.b16 %v7467
        %v7548 = vunpack.c.l.b16 %v7468
        %v7549 = vunpack.c.h.b16 %v7468
        %v7550 = vunpack.c.l.b16 %v7469
        %v7551 = vunpack.c.h.b16 %v7469
        %v7552 = vunpack.c.l.b16 %v7470
        %v7553 = vunpack.c.h.b16 %v7470
        %v7554 = vunpack.c.l.b16 %v7471
        %v7555 = vunpack.c.h.b16 %v7471
        %v7556 = vunpack.c.l.b16 %v7472
        %v7557 = vunpack.c.h.b16 %v7472
        %v7558 = vunpack.c.l.b16 %v7473
        %v7559 = vunpack.c.h.b16 %v7473
        %v7560 = vunpack.c.l.b16 %v7474
        %v7561 = vunpack.c.h.b16 %v7474
        %v7562 = vunpack.c.l.b16 %v7475
        %v7563 = vunpack.c.h.b16 %v7475
        %v7564 = vunpack.c.l.b16 %v7476
        %v7565 = vunpack.c.h.b16 %v7476
        %v7566 = vunpack.c.l.b16 %v7477
        %v7567 = vunpack.c.h.b16 %v7477
        %v7568 = vunpack.c.l.b16 %v7478
        %v7569 = vunpack.c.h.b16 %v7478
        %v7570 = vunpack.c.l.b16 %v7479
        %v7571 = vunpack.c.h.b16 %v7479
        %v7572 = vunpack.c.l.b16 %v7480
        %v7573 = vunpack.c.h.b16 %v7480
        %v7574 = vunpack.c.l.b16 %v7481
        %v7575 = vunpack.c.h.b16 %v7481
        %v7576 = vunpack.c.l.b16 %v7482
        %v7577 = vunpack.c.h.b16 %v7482
        %v7578 = vunpack.c.l.b16 %v7483
        %v7579 = vunpack.c.h.b16 %v7483
        %v7580 = vunpack.c.l.b16 %v7484
        %v7581 = vunpack.c.h.b16 %v7484
        %v7582 = vunpack.c.l.b16 %v7485
        %v7583 = vunpack.c.h.b16 %v7485
        %v7584 = vpack.c.b16 %v7538, %v7536
        %v7585 = vpack.c.b16 %v7539, %v7537
        %v7586 = vpack.c.b16 %v7542, %v7540
        %v7587 = vpack.c.b16 %v7543, %v7541
        %v7588 = vpack.c.b16 %v7546, %v7544
        %v7589 = vpack.c.b16 %v7547, %v7545
        %v7590 = vpack.c.b16 %v7550, %v7548
        %v7591 = vpack.c.b16 %v7551, %v7549
        %v7592 = vpack.c.b16 %v7554, %v7552
        %v7593 = vpack.c.b16 %v7555, %v7553
        %v7594 = vpack.c.b16 %v7558, %v7556
        %v7595 = vpack.c.b16 %v7559, %v7557
        %v7596 = vpack.c.b16 %v7562, %v7560
        %v7597 = vpack.c.b16 %v7563, %v7561
        %v7598 = vpack.c.b16 %v7566, %v7564
        %v7599 = vpack.c.b16 %v7567, %v7565
        %v7600 = vpack.c.b16 %v7570, %v7568
        %v7601 = vpack.c.b16 %v7571, %v7569
        %v7602 = vpack.c.b16 %v7574, %v7572
        %v7603 = vpack.c.b16 %v7575, %v7573
        %v7604 = vpack.c.b16 %v7578, %v7576
        %v7605 = vpack.c.b16 %v7579, %v7577
        %v7606 = vpack.c.b16 %v7582, %v7580
        %v7607 = vpack.c.b16 %v7583, %v7581
        %v7633 = vsel %vm3822, %v7499, 0
        %v7636 = vsel %vm3822, %v7503, 0
        %v7639 = vsel %vm3822, %v7507, 0
        %v7642 = vsel %vm3822, %v7506, 0
        %7644 = vmatprep.subr.bf16.mxu0 %v7599
        %7645 = vmatpush1.bf16.msra.mxu0 %v7598
        %7646 = vmatprep.subr.bf16.mxu0 %v7597
        %7647 = vmatpush1.bf16.msra.mxu0 %v7596
        %7648 = vmatprep.subr.bf16.mxu0 %v7595
        %7649 = vmatpush1.bf16.msra.mxu0 %v7594
        %7650 = vmatprep.subr.bf16.mxu0 %v7593
        %7651 = vmatpush1.bf16.msra.mxu0 %v7592
        %7652 = vmatprep.subr.bf16.mxu0 %v7591
        %7653 = vmatpush1.bf16.msra.mxu0 %v7590
        %7654 = vmatprep.subr.bf16.mxu0 %v7589
        %7655 = vmatpush1.bf16.msra.mxu0 %v7588
        %7656 = vmatprep.subr.bf16.mxu0 %v7587
        %7657 = vmatpush1.bf16.msra.mxu0 %v7586
        %7658 = vmatprep.subr.bf16.mxu0 %v7585
        %7659 = vmatpush1.bf16.msra.mxu0 %v7584
        %7660 = vmatprep.subr.bf16.mxu0 0
        %7661 = vmatpush2.bf16.msra.mxu0 0
        %7662 = vmatprep.subr.bf16.mxu0 0
        %7663 = vmatpush2.bf16.msra.mxu0 0
        %7664 = vmatprep.subr.bf16.mxu0 0
        %7665 = vmatpush2.bf16.msra.mxu0 0
        %7666 = vmatprep.subr.bf16.mxu0 0
        %7667 = vmatpush2.bf16.msra.mxu0 0
        %7668 = vmatprep.subr.bf16.mxu0 %v7607
        %7669 = vmatpush2.bf16.msra.mxu0 %v7606
        %7670 = vmatprep.subr.bf16.mxu0 %v7605
        %7671 = vmatpush2.bf16.msra.mxu0 %v7604
        %7672 = vmatprep.subr.bf16.mxu0 %v7603
        %7673 = vmatpush2.bf16.msra.mxu0 %v7602
        %7674 = vmatprep.subr.bf16.mxu0 %v7601
        %7675 = vmatpush2.bf16.msra.mxu0 %v7600
        %7676 = vmatprep.mubr.bf16.mxu0 %v7633
        %7677 = vmatmul.mubr.bf16.gmra.mxu0 %v7496
        %v7678 = vpop.f32.mrf.mxu0
        %v7679 = vadd.f32 0.0, %v7678
        %v7680 = vpop.f32.mrf.mxu0
        %v7681 = vadd.f32 0.0, %v7680
        %v7682 = vpop.f32.mrf.mxu0
        %v7683 = vadd.f32 0.0, %v7682
        %v7684 = vpop.f32.mrf.mxu0
        %v7685 = vadd.f32 0.0, %v7684
        %7686 = vmatprep.mubr.bf16.mxu0 %v7636
        %7687 = vmatmul.mubr.bf16.gmra.mxu0 %v7501
        %v7688 = vpop.f32.mrf.mxu0
        %v7689 = vadd.f32 0.0, %v7688
        %v7690 = vpop.f32.mrf.mxu0
        %v7691 = vadd.f32 0.0, %v7690
        %v7692 = vpop.f32.mrf.mxu0
        %v7693 = vadd.f32 0.0, %v7692
        %v7694 = vpop.f32.mrf.mxu0
        %v7695 = vadd.f32 0.0, %v7694
        %7696 = vmatprep.mubr.bf16.mxu0 %v7639
        %7697 = vmatmul.mubr.bf16.gmra.mxu0 %v7505
        %v7698 = vpop.f32.mrf.mxu0
        %v7699 = vadd.f32 0.0, %v7698
        %v7700 = vpop.f32.mrf.mxu0
        %v7701 = vadd.f32 0.0, %v7700
        %v7702 = vpop.f32.mrf.mxu0
        %v7703 = vadd.f32 0.0, %v7702
        %v7704 = vpop.f32.mrf.mxu0
        %v7705 = vadd.f32 0.0, %v7704
        %7706 = vmatprep.mubr.bf16.mxu0 %v7642
        %7707 = vmatmul.mubr.bf16.gmra.mxu0 %v7504
        %v7708 = vpop.f32.mrf.mxu0
        %v7709 = vadd.f32 0.0, %v7708
        %v7710 = vpop.f32.mrf.mxu0
        %v7711 = vadd.f32 0.0, %v7710
        %v7712 = vpop.f32.mrf.mxu0
        %v7713 = vadd.f32 0.0, %v7712
        %v7714 = vpop.f32.mrf.mxu0
        %v7715 = vadd.f32 0.0, %v7714
        %7716 = vdwg.mxu0
        %v7717 = vadd.f32 %v7415, %v7679
        %v7718 = vadd.f32 %v7417, %v7681
        %v7719 = vadd.f32 %v7419, %v7683
        %v7720 = vadd.f32 %v7421, %v7685
        %v7721 = vadd.f32 %v7425, %v7689
        %v7722 = vadd.f32 %v7427, %v7691
        %v7723 = vadd.f32 %v7429, %v7693
        %v7724 = vadd.f32 %v7431, %v7695
        %v7725 = vadd.f32 %v7435, %v7699
        %v7726 = vadd.f32 %v7437, %v7701
        %v7727 = vadd.f32 %v7439, %v7703
        %v7728 = vadd.f32 %v7441, %v7705
        %v7729 = vadd.f32 %v7445, %v7709
        %v7730 = vadd.f32 %v7447, %v7711
        %v7731 = vadd.f32 %v7449, %v7713
        %v7732 = vadd.f32 %v7451, %v7715
        %v7733 = vld [vmem:[%s6] sm:$0x3]
        %v7735 = vlaneseq
        %v7736 = vshrl.u32 %v7735, 7
        %v7737 = vsub.s32 0, %v7736
        %v7738 = vrot.slane %v7733, %v7737
        %v7739 = vlaneseq
        %v7740 = vshrl.u32 %v7739, 7
        %v7741 = vsub.s32 1, %v7740
        %v7742 = vrot.slane %v7733, %v7741
        %v7745 = vadd.f32 %v7717, %v7738
        %v7746 = vadd.f32 %v7718, %v7742
        %v7747 = vadd.f32 %v7719, %v7738
        %v7748 = vadd.f32 %v7720, %v7742
        %v7749 = vadd.f32 %v7721, %v7738
        %v7750 = vadd.f32 %v7722, %v7742
        %v7751 = vadd.f32 %v7723, %v7738
        %v7752 = vadd.f32 %v7724, %v7742
        %v7753 = vadd.f32 %v7725, %v7738
        %v7754 = vadd.f32 %v7726, %v7742
        %v7755 = vadd.f32 %v7727, %v7738
        %v7756 = vadd.f32 %v7728, %v7742
        %v7757 = vadd.f32 %v7729, %v7738
        %v7758 = vadd.f32 %v7730, %v7742
        %v7759 = vadd.f32 %v7731, %v7738
        %v7760 = vadd.f32 %v7732, %v7742
        %v7761 = vmax.f32 %v7745, 0.0
        %v7762 = vmax.f32 %v7746, 0.0
        %v7763 = vmax.f32 %v7747, 0.0
        %v7764 = vmax.f32 %v7748, 0.0
        %v7765 = vmax.f32 %v7749, 0.0
        %v7766 = vmax.f32 %v7750, 0.0
        %v7767 = vmax.f32 %v7751, 0.0
        %v7768 = vmax.f32 %v7752, 0.0
        %v7769 = vmax.f32 %v7753, 0.0
        %v7770 = vmax.f32 %v7754, 0.0
        %v7771 = vmax.f32 %v7755, 0.0
        %v7772 = vmax.f32 %v7756, 0.0
        %v7773 = vmax.f32 %v7757, 0.0
        %v7774 = vmax.f32 %v7758, 0.0
        %v7775 = vmax.f32 %v7759, 0.0
        %v7776 = vmax.f32 %v7760, 0.0
        %v7777 = vpack.c.bf16 %v7763, %v7761
        %v7778 = vpack.c.bf16 %v7764, %v7762
        %v7779 = vpack.c.bf16 %v7767, %v7765
        %v7780 = vpack.c.bf16 %v7768, %v7766
        %v7781 = vpack.c.bf16 %v7771, %v7769
        %v7782 = vpack.c.bf16 %v7772, %v7770
        %v7783 = vpack.c.bf16 %v7775, %v7773
        %v7784 = vpack.c.bf16 %v7776, %v7774
        %v7785 = vld [vmem:[%s11] sm:$0xf]
        %v7786 = vld [vmem:[%s11 + $0x4] sm:$0xf]
        %v7787 = vld [vmem:[%s11 + $0x8] sm:$0xf]
        %v7791 = vunpack.c.l.b16 %v7785
        %v7792 = vunpack.c.l.b16 %v7786
        %v7793 = vunpack.c.l.b16 %v7787
        %v7794 = vpack.c.b16 %v7792, %v7791
        %v7795 = vpack.c.b16 %v7793, %v7793
        %vm7796 = vcmask 506880
        %v7798 = vsel %vm7796, %v7794, 0
        %v7801 = vsel %vm7796, %v7795, 0
        %v7804 = vsel %vm2248, %v7783, 0
        %v7807 = vsel %vm2248, %v7784, 0
        %7809 = vmatprep.subr.bf16.mxu0 0
        %7810 = vmatpush1.bf16.msra.mxu0 0
        %7811 = vmatprep.subr.bf16.mxu0 0
        %7812 = vmatpush1.bf16.msra.mxu0 0
        %7813 = vmatprep.subr.bf16.mxu0 0
        %7814 = vmatpush1.bf16.msra.mxu0 0
        %7815 = vmatprep.subr.bf16.mxu0 0
        %7816 = vmatpush1.bf16.msra.mxu0 0
        %7817 = vmatprep.subr.bf16.mxu0 %v7807
        %7818 = vmatpush1.bf16.msra.mxu0 %v7804
        %7819 = vmatprep.subr.bf16.mxu0 %v7782
        %7820 = vmatpush1.bf16.msra.mxu0 %v7781
        %7821 = vmatprep.subr.bf16.mxu0 %v7780
        %7822 = vmatpush1.bf16.msra.mxu0 %v7779
        %7823 = vmatprep.subr.bf16.mxu0 %v7778
        %7824 = vmatpush1.bf16.msra.mxu0 %v7777
        %7825 = vmatprep.subr.bf16.mxu0 0
        %7826 = vmatpush2.bf16.msra.mxu0 0
        %7827 = vmatprep.subr.bf16.mxu0 0
        %7828 = vmatpush2.bf16.msra.mxu0 0
        %7829 = vmatprep.subr.bf16.mxu0 0
        %7830 = vmatpush2.bf16.msra.mxu0 0
        %7831 = vmatprep.subr.bf16.mxu0 0
        %7832 = vmatpush2.bf16.msra.mxu0 0
        %7833 = vmatprep.subr.bf16.mxu0 0
        %7834 = vmatpush2.bf16.msra.mxu0 0
        %7835 = vmatprep.subr.bf16.mxu0 0
        %7836 = vmatpush2.bf16.msra.mxu0 0
        %7837 = vmatprep.subr.bf16.mxu0 0
        %7838 = vmatpush2.bf16.msra.mxu0 0
        %7839 = vmatprep.subr.bf16.mxu0 0
        %7840 = vmatpush2.bf16.msra.mxu0 0
        %7841 = vmatprep.mubr.bf16.mxu0 0
        %7842 = vmatmul.mubr.bf16.gmra.mxu0 %v7798
        %v7843 = vpop.f32.mrf.mxu0
        %v7844 = vadd.f32 0.0, %v7843
        %v7845 = vpop.f32.mrf.mxu0
        %v7846 = vadd.f32 0.0, %v7845
        %v7847 = vpop.f32.mrf.mxu0
        %v7848 = vadd.f32 0.0, %v7847
        %v7849 = vpop.f32.mrf.mxu0
        %v7850 = vadd.f32 0.0, %v7849
        %7851 = vmatprep.mubr.bf16.mxu0 0
        %7852 = vmatmul.mubr.bf16.gmra.mxu0 %v7801
        %v7853 = vpop.f32.mrf.mxu0
        %v7854 = vadd.f32 0.0, %v7853
        %v7855 = vpop.f32.mrf.mxu0
        %v7856 = vadd.f32 0.0, %v7855
        %v7857 = vpop.f32.mrf.mxu0
        %v7858 = vpop.f32.mrf.mxu0
        %7859 = vdwg.mxu0
        %s7860 = scalar_lea.vmem %s11, 12
        %v7861 = vld [vmem:[%s7860] sm:$0xf]
        %v7862 = vld [vmem:[%s7860 + $0x4] sm:$0xf]
        %v7863 = vld [vmem:[%s7860 + $0x8] sm:$0xf]
        %v7867 = vunpack.c.l.b16 %v7861
        %v7868 = vunpack.c.l.b16 %v7862
        %v7869 = vunpack.c.l.b16 %v7863
        %v7870 = vpack.c.b16 %v7868, %v7867
        %v7871 = vpack.c.b16 %v7869, %v7869
        %v7873 = vsel %vm7796, %v7870, 0
        %v7876 = vsel %vm7796, %v7871, 0
        %7878 = vmatprep.subr.bf16.mxu0 0
        %7879 = vmatpush1.bf16.msra.mxu0 0
        %7880 = vmatprep.subr.bf16.mxu0 0
        %7881 = vmatpush1.bf16.msra.mxu0 0
        %7882 = vmatprep.subr.bf16.mxu0 0
        %7883 = vmatpush1.bf16.msra.mxu0 0
        %7884 = vmatprep.subr.bf16.mxu0 0
        %7885 = vmatpush1.bf16.msra.mxu0 0
        %7886 = vmatprep.subr.bf16.mxu0 %v7807
        %7887 = vmatpush1.bf16.msra.mxu0 %v7804
        %7888 = vmatprep.subr.bf16.mxu0 %v7782
        %7889 = vmatpush1.bf16.msra.mxu0 %v7781
        %7890 = vmatprep.subr.bf16.mxu0 %v7780
        %7891 = vmatpush1.bf16.msra.mxu0 %v7779
        %7892 = vmatprep.subr.bf16.mxu0 %v7778
        %7893 = vmatpush1.bf16.msra.mxu0 %v7777
        %7894 = vmatprep.subr.bf16.mxu0 0
        %7895 = vmatpush2.bf16.msra.mxu0 0
        %7896 = vmatprep.subr.bf16.mxu0 0
        %7897 = vmatpush2.bf16.msra.mxu0 0
        %7898 = vmatprep.subr.bf16.mxu0 0
        %7899 = vmatpush2.bf16.msra.mxu0 0
        %7900 = vmatprep.subr.bf16.mxu0 0
        %7901 = vmatpush2.bf16.msra.mxu0 0
        %7902 = vmatprep.subr.bf16.mxu0 0
        %7903 = vmatpush2.bf16.msra.mxu0 0
        %7904 = vmatprep.subr.bf16.mxu0 0
        %7905 = vmatpush2.bf16.msra.mxu0 0
        %7906 = vmatprep.subr.bf16.mxu0 0
        %7907 = vmatpush2.bf16.msra.mxu0 0
        %7908 = vmatprep.subr.bf16.mxu0 0
        %7909 = vmatpush2.bf16.msra.mxu0 0
        %7910 = vmatprep.mubr.bf16.mxu0 0
        %7911 = vmatmul.mubr.bf16.gmra.mxu0 %v7873
        %v7912 = vpop.f32.mrf.mxu0
        %v7913 = vadd.f32 0.0, %v7912
        %v7914 = vpop.f32.mrf.mxu0
        %v7915 = vadd.f32 0.0, %v7914
        %v7916 = vpop.f32.mrf.mxu0
        %v7917 = vadd.f32 0.0, %v7916
        %v7918 = vpop.f32.mrf.mxu0
        %v7919 = vadd.f32 0.0, %v7918
        %7920 = vmatprep.mubr.bf16.mxu0 0
        %7921 = vmatmul.mubr.bf16.gmra.mxu0 %v7876
        %v7922 = vpop.f32.mrf.mxu0
        %v7923 = vadd.f32 0.0, %v7922
        %v7924 = vpop.f32.mrf.mxu0
        %v7925 = vadd.f32 0.0, %v7924
        %v7926 = vpop.f32.mrf.mxu0
        %v7927 = vpop.f32.mrf.mxu0
        %7928 = vdwg.mxu0
        %v7929 = vmax.f32 %v7844, %v7913
        %v7930 = vmax.f32 %v7846, %v7915
        %v7931 = vmax.f32 %v7848, %v7917
        %v7932 = vmax.f32 %v7850, %v7919
        %v7933 = vmax.f32 %v7854, %v7923
        %v7934 = vmax.f32 %v7856, %v7925
        %v7935 = vpack.c.bf16 %v7931, %v7929
        %v7936 = vpack.c.bf16 %v7932, %v7930
        %v7937 = vpack.c.bf16 %v7933, %v7933
        %v7938 = vpack.c.bf16 %v7934, %v7934
        %v7939 = vld [vmem:[%s12] sm:$0xf]
        %v7940 = vld [vmem:[%s12 + $0x4] sm:$0xf]
        %v7941 = vld [vmem:[%s12 + $0x8] sm:$0xf]
        %v7942 = vld [vmem:[%s12 + $0xc] sm:$0xf]
        %v7943 = vld [vmem:[%s12 + $0x10] sm:$0xf]
        %v7944 = vld [vmem:[%s12 + $0x14] sm:$0xf]
        %v7945 = vld [vmem:[%s12 + $0x18] sm:$0xf]
        %v7946 = vld [vmem:[%s12 + $0x1c] sm:$0xf]
        %v7947 = vld [vmem:[%s12 + $0x20] sm:$0xf]
        %v7948 = vld [vmem:[%s12 + $0x24] sm:$0xf]
        %v7949 = vld [vmem:[%s12 + $0x28] sm:$0xf]
        %v7950 = vld [vmem:[%s12 + $0x2c] sm:$0xf]
        %v7951 = vld [vmem:[%s12 + $0x30] sm:$0xf]
        %v7952 = vld [vmem:[%s12 + $0x34] sm:$0xf]
        %v7953 = vld [vmem:[%s12 + $0x38] sm:$0xf]
        %v7954 = vld [vmem:[%s12 + $0x3c] sm:$0xf]
        %v7955 = vld [vmem:[%s12 + $0x40] sm:$0xf]
        %v7956 = vld [vmem:[%s12 + $0x44] sm:$0xf]
        %v7957 = vld [vmem:[%s12 + $0x48] sm:$0xf]
        %v7958 = vld [vmem:[%s12 + $0x4c] sm:$0xf]
        %v7959 = vld [vmem:[%s12 + $0x50] sm:$0xf]
        %v7960 = vld [vmem:[%s12 + $0x54] sm:$0xf]
        %v7961 = vld [vmem:[%s12 + $0x58] sm:$0xf]
        %v7962 = vld [vmem:[%s12 + $0x5c] sm:$0xf]
        %v7987 = vunpack.c.l.b16 %v7939
        %v7988 = vunpack.c.l.b16 %v7940
        %v7989 = vunpack.c.l.b16 %v7941
        %v7990 = vunpack.c.l.b16 %v7942
        %v7991 = vunpack.c.l.b16 %v7943
        %v7992 = vunpack.c.l.b16 %v7944
        %v7993 = vunpack.c.l.b16 %v7945
        %v7994 = vunpack.c.l.b16 %v7946
        %v7995 = vunpack.c.l.b16 %v7947
        %v7996 = vunpack.c.l.b16 %v7948
        %v7997 = vunpack.c.l.b16 %v7949
        %v7998 = vunpack.c.l.b16 %v7950
        %v7999 = vunpack.c.l.b16 %v7951
        %v8000 = vunpack.c.l.b16 %v7952
        %v8001 = vunpack.c.l.b16 %v7953
        %v8002 = vunpack.c.l.b16 %v7954
        %v8003 = vunpack.c.l.b16 %v7955
        %v8004 = vunpack.c.l.b16 %v7956
        %v8005 = vunpack.c.l.b16 %v7957
        %v8006 = vunpack.c.l.b16 %v7958
        %v8007 = vunpack.c.l.b16 %v7959
        %v8008 = vunpack.c.l.b16 %v7960
        %v8009 = vunpack.c.l.b16 %v7961
        %v8010 = vunpack.c.l.b16 %v7962
        %v8011 = vpack.c.b16 %v7988, %v7987
        %v8012 = vpack.c.b16 %v7990, %v7989
        %v8013 = vpack.c.b16 %v7992, %v7991
        %v8014 = vpack.c.b16 %v7994, %v7993
        %v8015 = vpack.c.b16 %v7996, %v7995
        %v8016 = vpack.c.b16 %v7998, %v7997
        %v8017 = vpack.c.b16 %v8000, %v7999
        %v8018 = vpack.c.b16 %v8002, %v8001
        %v8019 = vpack.c.b16 %v8004, %v8003
        %v8020 = vpack.c.b16 %v8006, %v8005
        %v8021 = vpack.c.b16 %v8008, %v8007
        %v8022 = vpack.c.b16 %v8010, %v8009
        %v8036 = vsel %vm3822, %v7936, 0
        %v8039 = vsel %vm3822, %v7938, 0
        %8041 = vmatprep.subr.bf16.mxu0 0
        %8042 = vmatpush1.bf16.msra.mxu0 %v8018
        %8043 = vmatprep.subr.bf16.mxu0 0
        %8044 = vmatpush1.bf16.msra.mxu0 %v8017
        %8045 = vmatprep.subr.bf16.mxu0 0
        %8046 = vmatpush1.bf16.msra.mxu0 %v8016
        %8047 = vmatprep.subr.bf16.mxu0 0
        %8048 = vmatpush1.bf16.msra.mxu0 %v8015
        %8049 = vmatprep.subr.bf16.mxu0 0
        %8050 = vmatpush1.bf16.msra.mxu0 %v8014
        %8051 = vmatprep.subr.bf16.mxu0 0
        %8052 = vmatpush1.bf16.msra.mxu0 %v8013
        %8053 = vmatprep.subr.bf16.mxu0 0
        %8054 = vmatpush1.bf16.msra.mxu0 %v8012
        %8055 = vmatprep.subr.bf16.mxu0 0
        %8056 = vmatpush1.bf16.msra.mxu0 %v8011
        %8057 = vmatprep.subr.bf16.mxu0 0
        %8058 = vmatpush2.bf16.msra.mxu0 0
        %8059 = vmatprep.subr.bf16.mxu0 0
        %8060 = vmatpush2.bf16.msra.mxu0 0
        %8061 = vmatprep.subr.bf16.mxu0 0
        %8062 = vmatpush2.bf16.msra.mxu0 0
        %8063 = vmatprep.subr.bf16.mxu0 0
        %8064 = vmatpush2.bf16.msra.mxu0 0
        %8065 = vmatprep.subr.bf16.mxu0 0
        %8066 = vmatpush2.bf16.msra.mxu0 %v8022
        %8067 = vmatprep.subr.bf16.mxu0 0
        %8068 = vmatpush2.bf16.msra.mxu0 %v8021
        %8069 = vmatprep.subr.bf16.mxu0 0
        %8070 = vmatpush2.bf16.msra.mxu0 %v8020
        %8071 = vmatprep.subr.bf16.mxu0 0
        %8072 = vmatpush2.bf16.msra.mxu0 %v8019
        %8073 = vmatprep.mubr.bf16.mxu0 %v8036
        %8074 = vmatmul.mubr.bf16.gmra.mxu0 %v7935
        %v8075 = vpop.f32.mrf.mxu0
        %v8076 = vadd.f32 0.0, %v8075
        %v8077 = vpop.f32.mrf.mxu0
        %v8078 = vpop.f32.mrf.mxu0
        %v8079 = vadd.f32 0.0, %v8078
        %v8080 = vpop.f32.mrf.mxu0
        %8081 = vmatprep.mubr.bf16.mxu0 %v8039
        %8082 = vmatmul.mubr.bf16.gmra.mxu0 %v7937
        %v8083 = vpop.f32.mrf.mxu0
        %v8084 = vadd.f32 0.0, %v8083
        %v8085 = vpop.f32.mrf.mxu0
        %v8086 = vpop.f32.mrf.mxu0
        %v8087 = vpop.f32.mrf.mxu0
        %8088 = vdwg.mxu0
        %s8089 = scalar_lea.vmem %s12, 96
        %v8090 = vld [vmem:[%s8089] sm:$0xf]
        %v8091 = vld [vmem:[%s8089 + $0x4] sm:$0xf]
        %v8092 = vld [vmem:[%s8089 + $0x8] sm:$0xf]
        %v8093 = vld [vmem:[%s8089 + $0xc] sm:$0xf]
        %v8094 = vld [vmem:[%s8089 + $0x10] sm:$0xf]
        %v8095 = vld [vmem:[%s8089 + $0x14] sm:$0xf]
        %v8096 = vld [vmem:[%s8089 + $0x18] sm:$0xf]
        %v8097 = vld [vmem:[%s8089 + $0x1c] sm:$0xf]
        %v8098 = vld [vmem:[%s8089 + $0x20] sm:$0xf]
        %v8099 = vld [vmem:[%s8089 + $0x24] sm:$0xf]
        %v8100 = vld [vmem:[%s8089 + $0x28] sm:$0xf]
        %v8101 = vld [vmem:[%s8089 + $0x2c] sm:$0xf]
        %v8102 = vld [vmem:[%s8089 + $0x30] sm:$0xf]
        %v8103 = vld [vmem:[%s8089 + $0x34] sm:$0xf]
        %v8104 = vld [vmem:[%s8089 + $0x38] sm:$0xf]
        %v8105 = vld [vmem:[%s8089 + $0x3c] sm:$0xf]
        %v8106 = vld [vmem:[%s8089 + $0x40] sm:$0xf]
        %v8107 = vld [vmem:[%s8089 + $0x44] sm:$0xf]
        %v8108 = vld [vmem:[%s8089 + $0x48] sm:$0xf]
        %v8109 = vld [vmem:[%s8089 + $0x4c] sm:$0xf]
        %v8110 = vld [vmem:[%s8089 + $0x50] sm:$0xf]
        %v8111 = vld [vmem:[%s8089 + $0x54] sm:$0xf]
        %v8112 = vld [vmem:[%s8089 + $0x58] sm:$0xf]
        %v8113 = vld [vmem:[%s8089 + $0x5c] sm:$0xf]
        %v8138 = vunpack.c.l.b16 %v8090
        %v8139 = vunpack.c.l.b16 %v8091
        %v8140 = vunpack.c.l.b16 %v8092
        %v8141 = vunpack.c.l.b16 %v8093
        %v8142 = vunpack.c.l.b16 %v8094
        %v8143 = vunpack.c.l.b16 %v8095
        %v8144 = vunpack.c.l.b16 %v8096
        %v8145 = vunpack.c.l.b16 %v8097
        %v8146 = vunpack.c.l.b16 %v8098
        %v8147 = vunpack.c.l.b16 %v8099
        %v8148 = vunpack.c.l.b16 %v8100
        %v8149 = vunpack.c.l.b16 %v8101
        %v8150 = vunpack.c.l.b16 %v8102
        %v8151 = vunpack.c.l.b16 %v8103
        %v8152 = vunpack.c.l.b16 %v8104
        %v8153 = vunpack.c.l.b16 %v8105
        %v8154 = vunpack.c.l.b16 %v8106
        %v8155 = vunpack.c.l.b16 %v8107
        %v8156 = vunpack.c.l.b16 %v8108
        %v8157 = vunpack.c.l.b16 %v8109
        %v8158 = vunpack.c.l.b16 %v8110
        %v8159 = vunpack.c.l.b16 %v8111
        %v8160 = vunpack.c.l.b16 %v8112
        %v8161 = vunpack.c.l.b16 %v8113
        %v8162 = vpack.c.b16 %v8139, %v8138
        %v8163 = vpack.c.b16 %v8141, %v8140
        %v8164 = vpack.c.b16 %v8143, %v8142
        %v8165 = vpack.c.b16 %v8145, %v8144
        %v8166 = vpack.c.b16 %v8147, %v8146
        %v8167 = vpack.c.b16 %v8149, %v8148
        %v8168 = vpack.c.b16 %v8151, %v8150
        %v8169 = vpack.c.b16 %v8153, %v8152
        %v8170 = vpack.c.b16 %v8155, %v8154
        %v8171 = vpack.c.b16 %v8157, %v8156
        %v8172 = vpack.c.b16 %v8159, %v8158
        %v8173 = vpack.c.b16 %v8161, %v8160
        %8186 = vmatprep.subr.bf16.mxu0 0
        %8187 = vmatpush1.bf16.msra.mxu0 %v8169
        %8188 = vmatprep.subr.bf16.mxu0 0
        %8189 = vmatpush1.bf16.msra.mxu0 %v8168
        %8190 = vmatprep.subr.bf16.mxu0 0
        %8191 = vmatpush1.bf16.msra.mxu0 %v8167
        %8192 = vmatprep.subr.bf16.mxu0 0
        %8193 = vmatpush1.bf16.msra.mxu0 %v8166
        %8194 = vmatprep.subr.bf16.mxu0 0
        %8195 = vmatpush1.bf16.msra.mxu0 %v8165
        %8196 = vmatprep.subr.bf16.mxu0 0
        %8197 = vmatpush1.bf16.msra.mxu0 %v8164
        %8198 = vmatprep.subr.bf16.mxu0 0
        %8199 = vmatpush1.bf16.msra.mxu0 %v8163
        %8200 = vmatprep.subr.bf16.mxu0 0
        %8201 = vmatpush1.bf16.msra.mxu0 %v8162
        %8202 = vmatprep.subr.bf16.mxu0 0
        %8203 = vmatpush2.bf16.msra.mxu0 0
        %8204 = vmatprep.subr.bf16.mxu0 0
        %8205 = vmatpush2.bf16.msra.mxu0 0
        %8206 = vmatprep.subr.bf16.mxu0 0
        %8207 = vmatpush2.bf16.msra.mxu0 0
        %8208 = vmatprep.subr.bf16.mxu0 0
        %8209 = vmatpush2.bf16.msra.mxu0 0
        %8210 = vmatprep.subr.bf16.mxu0 0
        %8211 = vmatpush2.bf16.msra.mxu0 %v8173
        %8212 = vmatprep.subr.bf16.mxu0 0
        %8213 = vmatpush2.bf16.msra.mxu0 %v8172
        %8214 = vmatprep.subr.bf16.mxu0 0
        %8215 = vmatpush2.bf16.msra.mxu0 %v8171
        %8216 = vmatprep.subr.bf16.mxu0 0
        %8217 = vmatpush2.bf16.msra.mxu0 %v8170
        %8218 = vmatprep.mubr.bf16.mxu0 %v8036
        %8219 = vmatmul.mubr.bf16.gmra.mxu0 %v7935
        %v8220 = vpop.f32.mrf.mxu0
        %v8221 = vadd.f32 0.0, %v8220
        %v8222 = vpop.f32.mrf.mxu0
        %v8223 = vpop.f32.mrf.mxu0
        %v8224 = vadd.f32 0.0, %v8223
        %v8225 = vpop.f32.mrf.mxu0
        %8226 = vmatprep.mubr.bf16.mxu0 %v8039
        %8227 = vmatmul.mubr.bf16.gmra.mxu0 %v7937
        %v8228 = vpop.f32.mrf.mxu0
        %v8229 = vadd.f32 0.0, %v8228
        %v8230 = vpop.f32.mrf.mxu0
        %v8231 = vpop.f32.mrf.mxu0
        %v8232 = vpop.f32.mrf.mxu0
        %8233 = vdwg.mxu0
        %v8234 = vmax.f32 %v8076, %v8221
        %v8235 = vmax.f32 %v8079, %v8224
        %v8236 = vmax.f32 %v8084, %v8229
        %v8237 = vpack.c.bf16 %v8234, %v8234
        %v8238 = vld [vmem:[%s13] sm:$0xff]
        %v8239 = vld [vmem:[%s13 + $0x8] sm:$0xff]
        %v8240 = vld [vmem:[%s13 + $0x10] sm:$0xff]
        %v8241 = vld [vmem:[%s13 + $0x18] sm:$0xff]
        %v8242 = vld [vmem:[%s13 + $0x20] sm:$0xff]
        %v8243 = vld [vmem:[%s13 + $0x28] sm:$0xff]
        %v8244 = vld [vmem:[%s13 + $0x30] sm:$0xff]
        %v8245 = vld [vmem:[%s13 + $0x38] sm:$0xff]
        %v8246 = vld [vmem:[%s13 + $0x40] sm:$0xff]
        %v8247 = vld [vmem:[%s13 + $0x48] sm:$0xff]
        %v8248 = vld [vmem:[%s13 + $0x50] sm:$0xff]
        %v8249 = vld [vmem:[%s13 + $0x58] sm:$0xff]
        %v8250 = vpack.c.bf16 %v8235, %v8235
        %v8251 = vld [vmem:[%s13 + $0x60] sm:$0xff]
        %v8252 = vld [vmem:[%s13 + $0x68] sm:$0xff]
        %v8253 = vld [vmem:[%s13 + $0x70] sm:$0xff]
        %v8254 = vld [vmem:[%s13 + $0x78] sm:$0xff]
        %v8255 = vld [vmem:[%s13 + $0x80] sm:$0xff]
        %v8256 = vld [vmem:[%s13 + $0x88] sm:$0xff]
        %v8257 = vld [vmem:[%s13 + $0x90] sm:$0xff]
        %v8258 = vld [vmem:[%s13 + $0x98] sm:$0xff]
        %v8259 = vld [vmem:[%s13 + $0xa0] sm:$0xff]
        %v8260 = vld [vmem:[%s13 + $0xa8] sm:$0xff]
        %v8261 = vld [vmem:[%s13 + $0xb0] sm:$0xff]
        %v8262 = vld [vmem:[%s13 + $0xb8] sm:$0xff]
        %v8275 = vunpack.c.l.b16 %v8251
        %v8276 = vunpack.c.h.b16 %v8251
        %v8277 = vunpack.c.l.b16 %v8252
        %v8278 = vunpack.c.h.b16 %v8252
        %v8279 = vunpack.c.l.b16 %v8253
        %v8280 = vunpack.c.h.b16 %v8253
        %v8281 = vunpack.c.l.b16 %v8254
        %v8282 = vunpack.c.h.b16 %v8254
        %v8283 = vunpack.c.l.b16 %v8255
        %v8284 = vunpack.c.h.b16 %v8255
        %v8285 = vunpack.c.l.b16 %v8256
        %v8286 = vunpack.c.h.b16 %v8256
        %v8287 = vunpack.c.l.b16 %v8257
        %v8288 = vunpack.c.h.b16 %v8257
        %v8289 = vunpack.c.l.b16 %v8258
        %v8290 = vunpack.c.h.b16 %v8258
        %v8291 = vunpack.c.l.b16 %v8259
        %v8292 = vunpack.c.h.b16 %v8259
        %v8293 = vunpack.c.l.b16 %v8260
        %v8294 = vunpack.c.h.b16 %v8260
        %v8295 = vunpack.c.l.b16 %v8261
        %v8296 = vunpack.c.h.b16 %v8261
        %v8297 = vunpack.c.l.b16 %v8262
        %v8298 = vunpack.c.h.b16 %v8262
        %v8299 = vpack.c.b16 %v8277, %v8275
        %v8300 = vpack.c.b16 %v8278, %v8276
        %v8301 = vpack.c.b16 %v8281, %v8279
        %v8302 = vpack.c.b16 %v8282, %v8280
        %v8303 = vpack.c.b16 %v8285, %v8283
        %v8304 = vpack.c.b16 %v8286, %v8284
        %v8305 = vpack.c.b16 %v8289, %v8287
        %v8306 = vpack.c.b16 %v8290, %v8288
        %v8307 = vpack.c.b16 %v8293, %v8291
        %v8308 = vpack.c.b16 %v8294, %v8292
        %v8309 = vpack.c.b16 %v8297, %v8295
        %v8310 = vpack.c.b16 %v8298, %v8296
        %vm8323 = vcmask 785408
        %v8325 = vsel %vm8323, %v8250, 0
        %8327 = vmatprep.subr.bf16.mxu0 0
        %8328 = vmatpush1.bf16.msra.mxu0 0
        %8329 = vmatprep.subr.bf16.mxu0 0
        %8330 = vmatpush1.bf16.msra.mxu0 0
        %8331 = vmatprep.subr.bf16.mxu0 %v8310
        %8332 = vmatpush1.bf16.msra.mxu0 %v8309
        %8333 = vmatprep.subr.bf16.mxu0 %v8308
        %8334 = vmatpush1.bf16.msra.mxu0 %v8307
        %8335 = vmatprep.subr.bf16.mxu0 %v8306
        %8336 = vmatpush1.bf16.msra.mxu0 %v8305
        %8337 = vmatprep.subr.bf16.mxu0 %v8304
        %8338 = vmatpush1.bf16.msra.mxu0 %v8303
        %8339 = vmatprep.subr.bf16.mxu0 %v8302
        %8340 = vmatpush1.bf16.msra.mxu0 %v8301
        %8341 = vmatprep.subr.bf16.mxu0 %v8300
        %8342 = vmatpush1.bf16.msra.mxu0 %v8299
        %8343 = vmatprep.subr.bf16.mxu0 0
        %8344 = vmatpush2.bf16.msra.mxu0 0
        %8345 = vmatprep.subr.bf16.mxu0 0
        %8346 = vmatpush2.bf16.msra.mxu0 0
        %8347 = vmatprep.subr.bf16.mxu0 0
        %8348 = vmatpush2.bf16.msra.mxu0 0
        %8349 = vmatprep.subr.bf16.mxu0 0
        %8350 = vmatpush2.bf16.msra.mxu0 0
        %8351 = vmatprep.subr.bf16.mxu0 0
        %8352 = vmatpush2.bf16.msra.mxu0 0
        %8353 = vmatprep.subr.bf16.mxu0 0
        %8354 = vmatpush2.bf16.msra.mxu0 0
        %8355 = vmatprep.subr.bf16.mxu0 0
        %8356 = vmatpush2.bf16.msra.mxu0 0
        %8357 = vmatprep.subr.bf16.mxu0 0
        %8358 = vmatpush2.bf16.msra.mxu0 0
        %8359 = vmatprep.mubr.bf16.mxu0 0
        %8360 = vmatmul.mubr.bf16.gmra.mxu0 %v8325
        %v8361 = vpop.f32.mrf.mxu0
        %v8362 = vadd.f32 0.0, %v8361
        %v8363 = vpop.f32.mrf.mxu0
        %v8364 = vadd.f32 0.0, %v8363
        %v8365 = vpop.f32.mrf.mxu0
        %v8366 = vpop.f32.mrf.mxu0
        %8367 = vdwg.mxu0
        %v8380 = vunpack.c.l.b16 %v8238
        %v8381 = vunpack.c.h.b16 %v8238
        %v8382 = vunpack.c.l.b16 %v8239
        %v8383 = vunpack.c.h.b16 %v8239
        %v8384 = vunpack.c.l.b16 %v8240
        %v8385 = vunpack.c.h.b16 %v8240
        %v8386 = vunpack.c.l.b16 %v8241
        %v8387 = vunpack.c.h.b16 %v8241
        %v8388 = vunpack.c.l.b16 %v8242
        %v8389 = vunpack.c.h.b16 %v8242
        %v8390 = vunpack.c.l.b16 %v8243
        %v8391 = vunpack.c.h.b16 %v8243
        %v8392 = vunpack.c.l.b16 %v8244
        %v8393 = vunpack.c.h.b16 %v8244
        %v8394 = vunpack.c.l.b16 %v8245
        %v8395 = vunpack.c.h.b16 %v8245
        %v8396 = vunpack.c.l.b16 %v8246
        %v8397 = vunpack.c.h.b16 %v8246
        %v8398 = vunpack.c.l.b16 %v8247
        %v8399 = vunpack.c.h.b16 %v8247
        %v8400 = vunpack.c.l.b16 %v8248
        %v8401 = vunpack.c.h.b16 %v8248
        %v8402 = vunpack.c.l.b16 %v8249
        %v8403 = vunpack.c.h.b16 %v8249
        %v8404 = vpack.c.b16 %v8382, %v8380
        %v8405 = vpack.c.b16 %v8383, %v8381
        %v8406 = vpack.c.b16 %v8386, %v8384
        %v8407 = vpack.c.b16 %v8387, %v8385
        %v8408 = vpack.c.b16 %v8390, %v8388
        %v8409 = vpack.c.b16 %v8391, %v8389
        %v8410 = vpack.c.b16 %v8394, %v8392
        %v8411 = vpack.c.b16 %v8395, %v8393
        %v8412 = vpack.c.b16 %v8398, %v8396
        %v8413 = vpack.c.b16 %v8399, %v8397
        %v8414 = vpack.c.b16 %v8402, %v8400
        %v8415 = vpack.c.b16 %v8403, %v8401
        %v8429 = vsel %vm8323, %v8237, 0
        %8431 = vmatprep.subr.bf16.mxu0 0
        %8432 = vmatpush1.bf16.msra.mxu0 0
        %8433 = vmatprep.subr.bf16.mxu0 0
        %8434 = vmatpush1.bf16.msra.mxu0 0
        %8435 = vmatprep.subr.bf16.mxu0 %v8415
        %8436 = vmatpush1.bf16.msra.mxu0 %v8414
        %8437 = vmatprep.subr.bf16.mxu0 %v8413
        %8438 = vmatpush1.bf16.msra.mxu0 %v8412
        %8439 = vmatprep.subr.bf16.mxu0 %v8411
        %8440 = vmatpush1.bf16.msra.mxu0 %v8410
        %8441 = vmatprep.subr.bf16.mxu0 %v8409
        %8442 = vmatpush1.bf16.msra.mxu0 %v8408
        %8443 = vmatprep.subr.bf16.mxu0 %v8407
        %8444 = vmatpush1.bf16.msra.mxu0 %v8406
        %8445 = vmatprep.subr.bf16.mxu0 %v8405
        %8446 = vmatpush1.bf16.msra.mxu0 %v8404
        %8447 = vmatprep.subr.bf16.mxu0 0
        %8448 = vmatpush2.bf16.msra.mxu0 0
        %8449 = vmatprep.subr.bf16.mxu0 0
        %8450 = vmatpush2.bf16.msra.mxu0 0
        %8451 = vmatprep.subr.bf16.mxu0 0
        %8452 = vmatpush2.bf16.msra.mxu0 0
        %8453 = vmatprep.subr.bf16.mxu0 0
        %8454 = vmatpush2.bf16.msra.mxu0 0
        %8455 = vmatprep.subr.bf16.mxu0 0
        %8456 = vmatpush2.bf16.msra.mxu0 0
        %8457 = vmatprep.subr.bf16.mxu0 0
        %8458 = vmatpush2.bf16.msra.mxu0 0
        %8459 = vmatprep.subr.bf16.mxu0 0
        %8460 = vmatpush2.bf16.msra.mxu0 0
        %8461 = vmatprep.subr.bf16.mxu0 0
        %8462 = vmatpush2.bf16.msra.mxu0 0
        %8463 = vmatprep.mubr.bf16.mxu0 0
        %8464 = vmatmul.mubr.bf16.gmra.mxu0 %v8429
        %v8465 = vpop.f32.mrf.mxu0
        %v8466 = vadd.f32 %v8362, %v8465
        %v8467 = vpop.f32.mrf.mxu0
        %v8468 = vadd.f32 %v8364, %v8467
        %v8469 = vpop.f32.mrf.mxu0
        %v8470 = vpop.f32.mrf.mxu0
        %8471 = vdwg.mxu0
        %v8472 = vpack.c.bf16 %v8236, %v8236
        %v8473 = vld [vmem:[%s13 + $0xc0] sm:$0xff]
        %v8474 = vld [vmem:[%s13 + $0xc8] sm:$0xff]
        %v8475 = vld [vmem:[%s13 + $0xd0] sm:$0xff]
        %v8476 = vld [vmem:[%s13 + $0xd8] sm:$0xff]
        %v8477 = vld [vmem:[%s13 + $0xe0] sm:$0xff]
        %v8478 = vld [vmem:[%s13 + $0xe8] sm:$0xff]
        %v8479 = vld [vmem:[%s13 + $0xf0] sm:$0xff]
        %v8480 = vld [vmem:[%s13 + $0xf8] sm:$0xff]
        %v8481 = vld [vmem:[%s13 + $0x100] sm:$0xff]
        %v8482 = vld [vmem:[%s13 + $0x108] sm:$0xff]
        %v8483 = vld [vmem:[%s13 + $0x110] sm:$0xff]
        %v8484 = vld [vmem:[%s13 + $0x118] sm:$0xff]
        %v8497 = vunpack.c.l.b16 %v8473
        %v8498 = vunpack.c.h.b16 %v8473
        %v8499 = vunpack.c.l.b16 %v8474
        %v8500 = vunpack.c.h.b16 %v8474
        %v8501 = vunpack.c.l.b16 %v8475
        %v8502 = vunpack.c.h.b16 %v8475
        %v8503 = vunpack.c.l.b16 %v8476
        %v8504 = vunpack.c.h.b16 %v8476
        %v8505 = vunpack.c.l.b16 %v8477
        %v8506 = vunpack.c.h.b16 %v8477
        %v8507 = vunpack.c.l.b16 %v8478
        %v8508 = vunpack.c.h.b16 %v8478
        %v8509 = vunpack.c.l.b16 %v8479
        %v8510 = vunpack.c.h.b16 %v8479
        %v8511 = vunpack.c.l.b16 %v8480
        %v8512 = vunpack.c.h.b16 %v8480
        %v8513 = vunpack.c.l.b16 %v8481
        %v8514 = vunpack.c.h.b16 %v8481
        %v8515 = vunpack.c.l.b16 %v8482
        %v8516 = vunpack.c.h.b16 %v8482
        %v8517 = vunpack.c.l.b16 %v8483
        %v8518 = vunpack.c.h.b16 %v8483
        %v8519 = vunpack.c.l.b16 %v8484
        %v8520 = vunpack.c.h.b16 %v8484
        %v8521 = vpack.c.b16 %v8499, %v8497
        %v8522 = vpack.c.b16 %v8500, %v8498
        %v8523 = vpack.c.b16 %v8503, %v8501
        %v8524 = vpack.c.b16 %v8504, %v8502
        %v8525 = vpack.c.b16 %v8507, %v8505
        %v8526 = vpack.c.b16 %v8508, %v8506
        %v8527 = vpack.c.b16 %v8511, %v8509
        %v8528 = vpack.c.b16 %v8512, %v8510
        %v8529 = vpack.c.b16 %v8515, %v8513
        %v8530 = vpack.c.b16 %v8516, %v8514
        %v8531 = vpack.c.b16 %v8519, %v8517
        %v8532 = vpack.c.b16 %v8520, %v8518
        %v8546 = vsel %vm8323, %v8472, 0
        %8548 = vmatprep.subr.bf16.mxu0 0
        %8549 = vmatpush1.bf16.msra.mxu0 0
        %8550 = vmatprep.subr.bf16.mxu0 0
        %8551 = vmatpush1.bf16.msra.mxu0 0
        %8552 = vmatprep.subr.bf16.mxu0 %v8532
        %8553 = vmatpush1.bf16.msra.mxu0 %v8531
        %8554 = vmatprep.subr.bf16.mxu0 %v8530
        %8555 = vmatpush1.bf16.msra.mxu0 %v8529
        %8556 = vmatprep.subr.bf16.mxu0 %v8528
        %8557 = vmatpush1.bf16.msra.mxu0 %v8527
        %8558 = vmatprep.subr.bf16.mxu0 %v8526
        %8559 = vmatpush1.bf16.msra.mxu0 %v8525
        %8560 = vmatprep.subr.bf16.mxu0 %v8524
        %8561 = vmatpush1.bf16.msra.mxu0 %v8523
        %8562 = vmatprep.subr.bf16.mxu0 %v8522
        %8563 = vmatpush1.bf16.msra.mxu0 %v8521
        %8564 = vmatprep.subr.bf16.mxu0 0
        %8565 = vmatpush2.bf16.msra.mxu0 0
        %8566 = vmatprep.subr.bf16.mxu0 0
        %8567 = vmatpush2.bf16.msra.mxu0 0
        %8568 = vmatprep.subr.bf16.mxu0 0
        %8569 = vmatpush2.bf16.msra.mxu0 0
        %8570 = vmatprep.subr.bf16.mxu0 0
        %8571 = vmatpush2.bf16.msra.mxu0 0
        %8572 = vmatprep.subr.bf16.mxu0 0
        %8573 = vmatpush2.bf16.msra.mxu0 0
        %8574 = vmatprep.subr.bf16.mxu0 0
        %8575 = vmatpush2.bf16.msra.mxu0 0
        %8576 = vmatprep.subr.bf16.mxu0 0
        %8577 = vmatpush2.bf16.msra.mxu0 0
        %8578 = vmatprep.subr.bf16.mxu0 0
        %8579 = vmatpush2.bf16.msra.mxu0 0
        %8580 = vmatprep.mubr.bf16.mxu0 0
        %8581 = vmatmul.mubr.bf16.gmra.mxu0 %v8546
        %v8582 = vpop.f32.mrf.mxu0
        %v8583 = vadd.f32 0.0, %v8582
        %v8584 = vpop.f32.mrf.mxu0
        %v8585 = vadd.f32 0.0, %v8584
        %v8586 = vpop.f32.mrf.mxu0
        %v8587 = vpop.f32.mrf.mxu0
        %8588 = vdwg.mxu0
        %v8589 = vadd.f32 %v8466, %v8583
        %v8590 = vadd.f32 %v8468, %v8585
        %v8591 = vld [vmem:[%s14] sm:$0x3]
        %v8593 = vlaneseq
        %v8594 = vshrl.u32 %v8593, 7
        %v8595 = vsub.s32 0, %v8594
        %v8596 = vrot.slane %v8591, %v8595
        %v8597 = vlaneseq
        %v8598 = vshrl.u32 %v8597, 7
        %v8599 = vsub.s32 1, %v8598
        %v8600 = vrot.slane %v8591, %v8599
        %v8603 = vadd.f32 %v8589, %v8596
        %v8604 = vadd.f32 %v8590, %v8600
        %v8605 = vmax.f32 %v8603, 0.0
        %v8606 = vmax.f32 %v8604, 0.0
        %v8607 = vpack.c.bf16 %v8605, %v8605
        %v8608 = vpack.c.bf16 %v8606, %v8606
        %v8609 = vld [vmem:[%s15] sm:$0xf]
        %v8610 = vld [vmem:[%s15 + $0x4] sm:$0xf]
        %v8611 = vld [vmem:[%s15 + $0x8] sm:$0xf]
        %v8612 = vld [vmem:[%s15 + $0xc] sm:$0xf]
        %v8613 = vld [vmem:[%s15 + $0x10] sm:$0xf]
        %v8614 = vld [vmem:[%s15 + $0x14] sm:$0xf]
        %v8615 = vld [vmem:[%s15 + $0x18] sm:$0xf]
        %v8616 = vld [vmem:[%s15 + $0x1c] sm:$0xf]
        %v8617 = vld [vmem:[%s15 + $0x20] sm:$0xf]
        %v8618 = vld [vmem:[%s15 + $0x24] sm:$0xf]
        %v8619 = vld [vmem:[%s15 + $0x28] sm:$0xf]
        %v8620 = vld [vmem:[%s15 + $0x2c] sm:$0xf]
        %v8621 = vld [vmem:[%s15 + $0x30] sm:$0xf]
        %v8622 = vld [vmem:[%s15 + $0x34] sm:$0xf]
        %v8623 = vld [vmem:[%s15 + $0x38] sm:$0xf]
        %v8624 = vld [vmem:[%s15 + $0x3c] sm:$0xf]
        %v8625 = vld [vmem:[%s15 + $0x40] sm:$0xf]
        %v8626 = vld [vmem:[%s15 + $0x44] sm:$0xf]
        %v8627 = vld [vmem:[%s15 + $0x48] sm:$0xf]
        %v8628 = vld [vmem:[%s15 + $0x4c] sm:$0xf]
        %v8629 = vld [vmem:[%s15 + $0x50] sm:$0xf]
        %v8630 = vld [vmem:[%s15 + $0x54] sm:$0xf]
        %v8631 = vld [vmem:[%s15 + $0x58] sm:$0xf]
        %v8632 = vld [vmem:[%s15 + $0x5c] sm:$0xf]
        %v8633 = vld [vmem:[%s15 + $0x60] sm:$0xf]
        %v8634 = vld [vmem:[%s15 + $0x64] sm:$0xf]
        %v8635 = vld [vmem:[%s15 + $0x68] sm:$0xf]
        %v8636 = vld [vmem:[%s15 + $0x6c] sm:$0xf]
        %v8637 = vld [vmem:[%s15 + $0x70] sm:$0xf]
        %v8638 = vld [vmem:[%s15 + $0x74] sm:$0xf]
        %v8639 = vld [vmem:[%s15 + $0x78] sm:$0xf]
        %v8640 = vld [vmem:[%s15 + $0x7c] sm:$0xf]
        %v8641 = vld [vmem:[%s16] sm:$0x1]
        %v8643 = vlaneseq
        %v8644 = vshrl.u32 %v8643, 7
        %v8645 = vsub.s32 0, %v8644
        %v8646 = vrot.slane %v8641, %v8645
        %v8680 = vunpack.c.l.b16 %v8609
        %v8681 = vunpack.c.l.b16 %v8610
        %v8682 = vunpack.c.l.b16 %v8611
        %v8683 = vunpack.c.l.b16 %v8612
        %v8684 = vunpack.c.l.b16 %v8613
        %v8685 = vunpack.c.l.b16 %v8614
        %v8686 = vunpack.c.l.b16 %v8615
        %v8687 = vunpack.c.l.b16 %v8616
        %v8688 = vunpack.c.l.b16 %v8617
        %v8689 = vunpack.c.l.b16 %v8618
        %v8690 = vunpack.c.l.b16 %v8619
        %v8691 = vunpack.c.l.b16 %v8620
        %v8692 = vunpack.c.l.b16 %v8621
        %v8693 = vunpack.c.l.b16 %v8622
        %v8694 = vunpack.c.l.b16 %v8623
        %v8695 = vunpack.c.l.b16 %v8624
        %v8696 = vunpack.c.l.b16 %v8625
        %v8697 = vunpack.c.l.b16 %v8626
        %v8698 = vunpack.c.l.b16 %v8627
        %v8699 = vunpack.c.l.b16 %v8628
        %v8700 = vunpack.c.l.b16 %v8629
        %v8701 = vunpack.c.l.b16 %v8630
        %v8702 = vunpack.c.l.b16 %v8631
        %v8703 = vunpack.c.l.b16 %v8632
        %v8704 = vunpack.c.l.b16 %v8633
        %v8705 = vunpack.c.l.b16 %v8634
        %v8706 = vunpack.c.l.b16 %v8635
        %v8707 = vunpack.c.l.b16 %v8636
        %v8708 = vunpack.c.l.b16 %v8637
        %v8709 = vunpack.c.l.b16 %v8638
        %v8710 = vunpack.c.l.b16 %v8639
        %v8711 = vunpack.c.l.b16 %v8640
        %v8712 = vpack.c.b16 %v8681, %v8680
        %v8713 = vpack.c.b16 %v8683, %v8682
        %v8714 = vpack.c.b16 %v8685, %v8684
        %v8715 = vpack.c.b16 %v8687, %v8686
        %v8716 = vpack.c.b16 %v8689, %v8688
        %v8717 = vpack.c.b16 %v8691, %v8690
        %v8718 = vpack.c.b16 %v8693, %v8692
        %v8719 = vpack.c.b16 %v8695, %v8694
        %v8720 = vpack.c.b16 %v8697, %v8696
        %v8721 = vpack.c.b16 %v8699, %v8698
        %v8722 = vpack.c.b16 %v8701, %v8700
        %v8723 = vpack.c.b16 %v8703, %v8702
        %v8724 = vpack.c.b16 %v8705, %v8704
        %v8725 = vpack.c.b16 %v8707, %v8706
        %v8726 = vpack.c.b16 %v8709, %v8708
        %v8727 = vpack.c.b16 %v8711, %v8710
        %8744 = vmatprep.subr.bf16.mxu0 0
        %8745 = vmatpush1.bf16.msra.mxu0 %v8719
        %8746 = vmatprep.subr.bf16.mxu0 0
        %8747 = vmatpush1.bf16.msra.mxu0 %v8718
        %8748 = vmatprep.subr.bf16.mxu0 0
        %8749 = vmatpush1.bf16.msra.mxu0 %v8717
        %8750 = vmatprep.subr.bf16.mxu0 0
        %8751 = vmatpush1.bf16.msra.mxu0 %v8716
        %8752 = vmatprep.subr.bf16.mxu0 0
        %8753 = vmatpush1.bf16.msra.mxu0 %v8715
        %8754 = vmatprep.subr.bf16.mxu0 0
        %8755 = vmatpush1.bf16.msra.mxu0 %v8714
        %8756 = vmatprep.subr.bf16.mxu0 0
        %8757 = vmatpush1.bf16.msra.mxu0 %v8713
        %8758 = vmatprep.subr.bf16.mxu0 0
        %8759 = vmatpush1.bf16.msra.mxu0 %v8712
        %8760 = vmatprep.subr.bf16.mxu0 0
        %8761 = vmatpush2.bf16.msra.mxu0 %v8727
        %8762 = vmatprep.subr.bf16.mxu0 0
        %8763 = vmatpush2.bf16.msra.mxu0 %v8726
        %8764 = vmatprep.subr.bf16.mxu0 0
        %8765 = vmatpush2.bf16.msra.mxu0 %v8725
        %8766 = vmatprep.subr.bf16.mxu0 0
        %8767 = vmatpush2.bf16.msra.mxu0 %v8724
        %8768 = vmatprep.subr.bf16.mxu0 0
        %8769 = vmatpush2.bf16.msra.mxu0 %v8723
        %8770 = vmatprep.subr.bf16.mxu0 0
        %8771 = vmatpush2.bf16.msra.mxu0 %v8722
        %8772 = vmatprep.subr.bf16.mxu0 0
        %8773 = vmatpush2.bf16.msra.mxu0 %v8721
        %8774 = vmatprep.subr.bf16.mxu0 0
        %8775 = vmatpush2.bf16.msra.mxu0 %v8720
        %8776 = vmatprep.mubr.bf16.mxu0 %v8608
        %8777 = vmatmul.mubr.bf16.gmra.mxu0 %v8607
        %v8778 = vpop.f32.mrf.mxu0
        %v8779 = vadd.f32 %v8646, %v8778
        %v8780 = vpop.f32.mrf.mxu0
        %v8781 = vpop.f32.mrf.mxu0
        %v8782 = vpop.f32.mrf.mxu0
        %8783 = vdwg.mxu0
        %v8784 = vmax.f32 %v8779, 0.0
        %v8785 = vpack.c.bf16 %v8784, %v8784
        %v8786 = vld [vmem:[%s17] sm:$0xff]
        %v8787 = vld [vmem:[%s17 + $0x8] sm:$0xff]
        %v8788 = vld [vmem:[%s17 + $0x10] sm:$0xff]
        %v8789 = vld [vmem:[%s17 + $0x18] sm:$0xff]
        %v8790 = vld [vmem:[%s17 + $0x20] sm:$0xff]
        %v8791 = vld [vmem:[%s17 + $0x28] sm:$0xff]
        %v8792 = vld [vmem:[%s17 + $0x30] sm:$0xff]
        %v8793 = vld [vmem:[%s17 + $0x38] sm:$0xff]
        %v8794 = vld [vmem:[%s17 + $0x40] sm:$0xff]
        %v8795 = vld [vmem:[%s17 + $0x48] sm:$0xff]
        %v8796 = vld [vmem:[%s17 + $0x50] sm:$0xff]
        %v8797 = vld [vmem:[%s17 + $0x58] sm:$0xff]
        %v8798 = vld [vmem:[%s17 + $0x60] sm:$0xff]
        %v8799 = vld [vmem:[%s17 + $0x68] sm:$0xff]
        %v8800 = vld [vmem:[%s17 + $0x70] sm:$0xff]
        %v8801 = vld [vmem:[%s17 + $0x78] sm:$0xff]
        %v8802 = vld [vmem:[%s18] sm:$0x3]
        %v8804 = vlaneseq
        %v8805 = vshrl.u32 %v8804, 7
        %v8806 = vsub.s32 0, %v8805
        %v8807 = vrot.slane %v8802, %v8806
        %v8808 = vlaneseq
        %v8809 = vshrl.u32 %v8808, 7
        %v8810 = vsub.s32 1, %v8809
        %v8811 = vrot.slane %v8802, %v8810
        %v8830 = vunpack.c.l.b16 %v8786
        %v8831 = vunpack.c.h.b16 %v8786
        %v8832 = vunpack.c.l.b16 %v8787
        %v8833 = vunpack.c.h.b16 %v8787
        %v8834 = vunpack.c.l.b16 %v8788
        %v8835 = vunpack.c.h.b16 %v8788
        %v8836 = vunpack.c.l.b16 %v8789
        %v8837 = vunpack.c.h.b16 %v8789
        %v8838 = vunpack.c.l.b16 %v8790
        %v8839 = vunpack.c.h.b16 %v8790
        %v8840 = vunpack.c.l.b16 %v8791
        %v8841 = vunpack.c.h.b16 %v8791
        %v8842 = vunpack.c.l.b16 %v8792
        %v8843 = vunpack.c.h.b16 %v8792
        %v8844 = vunpack.c.l.b16 %v8793
        %v8845 = vunpack.c.h.b16 %v8793
        %v8846 = vunpack.c.l.b16 %v8794
        %v8847 = vunpack.c.h.b16 %v8794
        %v8848 = vunpack.c.l.b16 %v8795
        %v8849 = vunpack.c.h.b16 %v8795
        %v8850 = vunpack.c.l.b16 %v8796
        %v8851 = vunpack.c.h.b16 %v8796
        %v8852 = vunpack.c.l.b16 %v8797
        %v8853 = vunpack.c.h.b16 %v8797
        %v8854 = vunpack.c.l.b16 %v8798
        %v8855 = vunpack.c.h.b16 %v8798
        %v8856 = vunpack.c.l.b16 %v8799
        %v8857 = vunpack.c.h.b16 %v8799
        %v8858 = vunpack.c.l.b16 %v8800
        %v8859 = vunpack.c.h.b16 %v8800
        %v8860 = vunpack.c.l.b16 %v8801
        %v8861 = vunpack.c.h.b16 %v8801
        %v8862 = vpack.c.b16 %v8832, %v8830
        %v8863 = vpack.c.b16 %v8833, %v8831
        %v8864 = vpack.c.b16 %v8836, %v8834
        %v8865 = vpack.c.b16 %v8837, %v8835
        %v8866 = vpack.c.b16 %v8840, %v8838
        %v8867 = vpack.c.b16 %v8841, %v8839
        %v8868 = vpack.c.b16 %v8844, %v8842
        %v8869 = vpack.c.b16 %v8845, %v8843
        %v8870 = vpack.c.b16 %v8848, %v8846
        %v8871 = vpack.c.b16 %v8849, %v8847
        %v8872 = vpack.c.b16 %v8852, %v8850
        %v8873 = vpack.c.b16 %v8853, %v8851
        %v8874 = vpack.c.b16 %v8856, %v8854
        %v8875 = vpack.c.b16 %v8857, %v8855
        %v8876 = vpack.c.b16 %v8860, %v8858
        %v8877 = vpack.c.b16 %v8861, %v8859
        %8894 = vmatprep.subr.bf16.mxu0 %v8877
        %8895 = vmatpush1.bf16.msra.mxu0 %v8876
        %8896 = vmatprep.subr.bf16.mxu0 %v8875
        %8897 = vmatpush1.bf16.msra.mxu0 %v8874
        %8898 = vmatprep.subr.bf16.mxu0 %v8873
        %8899 = vmatpush1.bf16.msra.mxu0 %v8872
        %8900 = vmatprep.subr.bf16.mxu0 %v8871
        %8901 = vmatpush1.bf16.msra.mxu0 %v8870
        %8902 = vmatprep.subr.bf16.mxu0 %v8869
        %8903 = vmatpush1.bf16.msra.mxu0 %v8868
        %8904 = vmatprep.subr.bf16.mxu0 %v8867
        %8905 = vmatpush1.bf16.msra.mxu0 %v8866
        %8906 = vmatprep.subr.bf16.mxu0 %v8865
        %8907 = vmatpush1.bf16.msra.mxu0 %v8864
        %8908 = vmatprep.subr.bf16.mxu0 %v8863
        %8909 = vmatpush1.bf16.msra.mxu0 %v8862
        %8910 = vmatprep.subr.bf16.mxu0 0
        %8911 = vmatpush2.bf16.msra.mxu0 0
        %8912 = vmatprep.subr.bf16.mxu0 0
        %8913 = vmatpush2.bf16.msra.mxu0 0
        %8914 = vmatprep.subr.bf16.mxu0 0
        %8915 = vmatpush2.bf16.msra.mxu0 0
        %8916 = vmatprep.subr.bf16.mxu0 0
        %8917 = vmatpush2.bf16.msra.mxu0 0
        %8918 = vmatprep.subr.bf16.mxu0 0
        %8919 = vmatpush2.bf16.msra.mxu0 0
        %8920 = vmatprep.subr.bf16.mxu0 0
        %8921 = vmatpush2.bf16.msra.mxu0 0
        %8922 = vmatprep.subr.bf16.mxu0 0
        %8923 = vmatpush2.bf16.msra.mxu0 0
        %8924 = vmatprep.subr.bf16.mxu0 0
        %8925 = vmatpush2.bf16.msra.mxu0 0
        %8926 = vmatprep.mubr.bf16.mxu0 0
        %8927 = vmatmul.mubr.bf16.gmra.mxu0 %v8785
        %v8928 = vpop.f32.mrf.mxu0
        %v8929 = vadd.f32 %v8807, %v8928
        %v8930 = vpop.f32.mrf.mxu0
        %v8931 = vadd.f32 %v8811, %v8930
        %v8932 = vpop.f32.mrf.mxu0
        %v8933 = vpop.f32.mrf.mxu0
        %8934 = vdwg.mxu0
        %8935 = vst [vmem:[%s596] sm:$0xff] %v8929
        %8936 = vst [vmem:[%s596 + $0x8] sm:$0xff] %v8931
        %s8937 = sand.u32 %s445, 1
        %s8938 = scalar_lea.sflag [#allocation5], %s8937
        %s8939 = sand.u32 %s445, 1
        %s8940 = smul.addr %s8939, 16
        %s8941 = scalar_lea.vmem [#allocation4], %s8940
        // Predicated region
        $region97: #{net_forward.1} parent=95 // pred_check
          %p8942 = pneg %p455
        $region98: #{net_forward.1} parent=95 // pred_check_branch
          %8944 = sbr.rel (%p8942) target = $region100
        $region99: #{net_forward.1} parent=95 // pred_region
          %s8946 = ssub.s32 256, 256
          %8947 = vsyncadd %s8938, %s8946
          %s8948 = smul.addr %s33, 2
          %s8949 = smul.addr %s8948, 128
          %s8950 = scalar_lea.hbm %s19, %s8949
          %s8952 = sshll.u32 %s8941, 4
          %s8953 = int_to_ptr.vmem [resolvable:$true] %s8952
          %8955 = dma.vmem_to_hbm [thread:$0]  %s8953, 256, %s8950, %s8938
        $region100: #{net_forward.1} parent=95 // pred_fallthru
          _
      $region96: #{net_forward.1} parent=5 // pred_fallthru
        _
      %p8956 = scmp.le.s32.totalorder 2, %s28
      // Predicated region
      $region101: #{net_forward.1} parent=5 // pred_check
        %p8957 = pneg %p8956
      $region102: #{net_forward.1} parent=5 // pred_check_branch
        %8959 = sbr.rel (%p8957) target = $region104
      $region103: #{net_forward.1} parent=5 // pred_region
        %s8960 = ssub.s32 %s28, 2
        // Predicated region
        $region105: #{net_forward.1} parent=103 // pred_check
          %p8961 = pneg %p461
        $region106: #{net_forward.1} parent=103 // pred_check_branch
          %8963 = sbr.rel (%p8961) target = $region108
        $region107: #{net_forward.1} parent=103 // pred_region
          %s8964 = sand.u32 %s446, 1
          %s8965 = scalar_lea.sflag [#allocation5], %s8964
          %s8966 = sand.u32 %s446, 1
          %s8967 = smul.addr %s8966, 16
          %s8968 = scalar_lea.vmem [#allocation4], %s8967
          %8969 = dma.done %s8965, 256
        $region108: #{net_forward.1} parent=103 // pred_fallthru
          _
      $region104: #{net_forward.1} parent=5 // pred_fallthru
        _
    $region6: #{net_forward.1} parent=1 // loop_footer
      %s32 = sadd.s32 1, %s28
    $region7: #{net_forward.1} parent=1 // loop_footer_branch
      %27 = sbr.rel target = $region3
    $region8: #{net_forward.1} parent=1 // loop_exit
      _
    %8970 = vsyncpa [#allocation5], 1
    %s8971 = scalar_lea.sflag [#allocation5], 1
    %8972 = vsyncpa %s8971, 1

</llo_original>
